<compile_context>
chip_gen: v6e
topology: v6e:2x2x1
jax: 0.10.0
libtpu: 0.0.40
codegen_flags: <defaults>
</compile_context>

<pallas_src>
import functools

import jax
import jax.numpy as jnp
from jax import lax
from jax.experimental import pallas as pl
from jax.experimental.pallas import tpu as pltpu


# ----------------------------------------------------------------------------
# Filter construction (plain JAX glue — mirrors the module's gabor_impulse_response)
# ----------------------------------------------------------------------------
def gabor_impulse_response(center_frequencies, bandwidths, n_coefficients):
    """Returns (real_filter, imag_filter), each (num_filters, K)."""
    # Exactly mirrors torch.arange(-n // 2, (n + 1) // 2)  (K = n+1 for odd n).
    t = jnp.arange(-n_coefficients // 2, (n_coefficients + 1) // 2).astype(jnp.float32)
    t = t[None, :]                                                     # (1, K)
    normalization = 1.0 / (jnp.sqrt(2.0 * jnp.pi) * bandwidths)        # (F,)
    normalization = normalization[:, None]                             # (F, 1)
    gaussian = jnp.exp(-(t ** 2) / (2.0 * bandwidths[:, None] ** 2))   # (F, K)
    sinusoid_real = jnp.cos(center_frequencies[:, None] * t)           # (F, K)
    sinusoid_imag = jnp.sin(center_frequencies[:, None] * t)           # (F, K)
    real_filter = normalization * gaussian * sinusoid_real
    imag_filter = normalization * gaussian * sinusoid_imag
    return real_filter, imag_filter


# ----------------------------------------------------------------------------
# Pallas kernel: per (row-tile, time-tile) block, strided cross-correlation
#   out[f, n, t] = sum_l w[f, l] * x[n, t*stride + l]
# with the input pre-split into `stride` phases so every tap read is a
# contiguous static slice.
# ----------------------------------------------------------------------------
def _gabor_conv_kernel(w_ref, xmain_ref, xhalo_ref, out_ref, xw_ref, *,
                       num_filters, k_len, tt, tn, stride):
    # w_ref    : (2F, K)                 f32 SMEM  (scalar taps)
    # xmain_ref: (stride, TN, TT)        f32 VMEM  (phase-deinterleaved input)
    # xhalo_ref: (stride, TN, 128)       f32 VMEM  (right halo of the same array)
    # out_ref  : (2F, TN, TT)            f32 VMEM  (filter-major -> lane-dense stores)
    # xw_ref   : (stride, TN, TT + 128)  f32 VMEM  scratch (stitched window)

    # Stitch main + halo into one contiguous window (both stores lane-aligned;
    # this is the only scratch traffic, ~ (TT+128)/128 vregs per phase).
    xw_ref[:, :, :tt] = xmain_ref[...]
    xw_ref[:, :, tt:] = xhalo_ref[...]

    # Per-filter scalar(SMEM)-vector FMAs; accumulators stay in vregs (8, TT)
    # and every output element is written exactly once with a full-slab store.
    # TODO(synk): switch the tap loop to lax.fori_loop for very large n_coefficients.
    for g in range(tn // 8):
        rows = pl.ds(g * 8, 8)
        for f in range(num_filters):
            acc_r = None
            acc_i = None
            for l in range(k_len):
                s = xw_ref[l % stride, rows, pl.ds(l // stride, tt)]
                if acc_r is None:
                    acc_r = s * w_ref[f, l]
                    acc_i = s * w_ref[num_filters + f, l]
                else:
                    acc_r = acc_r + s * w_ref[f, l]
                    acc_i = acc_i + s * w_ref[num_filters + f, l]
            out_ref[f, rows, :] = acc_r
            out_ref[num_filters + f, rows, :] = acc_i


def _choose_time_tile(t_out, cap=1024):
    """Lane-dense (128-multiple) output time tile; even tile count when tiled."""
    t128 = -(-t_out // 128) * 128
    if t128 <= cap:
        return t128
    n_tiles = -(-t128 // cap)
    if n_tiles % 2:
        n_tiles += 1                    # even #time-tiles balances v7x's 2 TCs
    per = -(-t_out // n_tiles)
    return -(-per // 128) * 128


def _gabor_conv1d_pallas(x2, w, t_out, *, num_filters, stride):
    """x2: (N, T_in) f32, w: (2F, K) f32 -> (2F, N_pad, T_pad) f32 where
    out[f, n, t] = sum_l w[f, l] * x2[n, t*stride + l]."""
    n, t_in = x2.shape
    two_f, k = w.shape
    halo = 128
    assert (k - 1) // stride < halo, "filter too long for the 128-lane halo block"

    # Row tiling: 8-sublane groups, up to 32 rows per grid step.
    n_pad8 = -(-n // 8) * 8
    tn = min(32, n_pad8)
    # Time tiling: lane-dense output tiles.
    tt = _choose_time_tile(t_out)
    # Bound the (double-buffered) output block so large F still fits VMEM.
    while two_f * tn * tt * 4 > (4 << 20) and tn > 8:
        tn //= 2
    while two_f * tn * tt * 4 > (4 << 20) and tt > 128:
        tt //= 2
    n_pad = -(-n_pad8 // tn) * tn
    t_tiles = -(-t_out // tt)
    t_pad = t_tiles * tt

    # Phase-deinterleave so strided taps become contiguous slices:
    #   x_ph[r, n, m] = x_padded[n, m*stride + r]     (free reshape for stride=1)
    m_req = t_pad + halo
    l_req = m_req * stride
    assert l_req >= t_in
    x2p = jnp.pad(x2, ((0, n_pad - n), (0, l_req - t_in)))
    x_ph = jnp.transpose(x2p.reshape(n_pad, m_req, stride), (2, 0, 1))

    kernel = functools.partial(_gabor_conv_kernel, num_filters=num_filters,
                               k_len=k, tt=tt, tn=tn, stride=stride)

    out_block = two_f * tn * tt * 4
    in_block = stride * tn * tt * 4
    halo_block = stride * tn * halo * 4
    scratch_bytes = stride * tn * (tt + halo) * 4
    vmem_need = 2 * out_block + 2 * in_block + 2 * halo_block + scratch_bytes
    vmem_limit = int(min(64 << 20, max(vmem_need + (8 << 20), 16 << 20)))

    return pl.pallas_call(
        kernel,
        out_shape=jax.ShapeDtypeStruct((two_f, n_pad, t_pad), jnp.float32),
        grid=(n_pad // tn, t_tiles),
        in_specs=[
            pl.BlockSpec(memory_space=pltpu.MemorySpace.SMEM),              # taps
            pl.BlockSpec((stride, tn, tt), lambda i, j: (0, i, j)),         # main window
            pl.BlockSpec((stride, tn, halo),
                         lambda i, j: (0, i, (j + 1) * (tt // halo))),      # right halo
        ],
        out_specs=pl.BlockSpec((two_f, tn, tt), lambda i, j: (0, i, j)),
        scratch_shapes=[pltpu.VMEM((stride, tn, tt + halo), jnp.float32)],
        compiler_params=pltpu.CompilerParams(
            dimension_semantics=("parallel", "parallel"),
            vmem_limit_bytes=vmem_limit,
        ),
    )(w, x_ph, x_ph)


# ----------------------------------------------------------------------------
# Forward pass wrapper (matches RealImagGaborFilter.forward)
# ----------------------------------------------------------------------------
def gabor_filter_forward(x, center_frequencies, bandwidths, *, num_filters,
                         n_coefficients, causal=False, stride=1):
    b, c, t = x.shape
    real_w, imag_w = gabor_impulse_response(center_frequencies, bandwidths,
                                            n_coefficients)
    w = jnp.concatenate([real_w, imag_w], axis=0).astype(jnp.float32)   # (2F, K)
    k = w.shape[1]

    x2 = x.reshape(b * c, t).astype(jnp.float32)                        # (N, T)
    if causal:
        # Module pads by filter_length - 1 == n_coefficients - 1 (only when causal).
        x2 = jnp.pad(x2, ((0, 0), (n_coefficients - 1, 0)))
    n, t_in = x2.shape
    t_out = (t_in - k) // stride + 1                                    # strided VALID length

    out2f = _gabor_conv1d_pallas(x2, w, t_out, num_filters=num_filters,
                                 stride=stride)                         # (2F, N_pad, T_pad)

    # Single epilogue pass: slice + (F,N,T)->(N,F,T) permute + complex combine
    # fuse into one XLA fusion over the dominant output tensor.
    # TODO(synk): expose the raw (2F, N, T) planes for consumers (e.g. magnitude)
    #             that do not need a complex tensor, to skip this pass entirely.
    real = jnp.transpose(out2f[:num_filters, :n, :t_out], (1, 0, 2))
    imag = jnp.transpose(out2f[num_filters:, :n, :t_out], (1, 0, 2))
    y = lax.complex(real, imag)                                         # (N, F, t_out) c64
    if c > 1:
        y = y.reshape(b, c, num_filters, t_out)
    return y


# ----------------------------------------------------------------------------
# Pure-JAX reference (mirrors the PyTorch module with F.conv1d semantics)
# ----------------------------------------------------------------------------
def _reference(x, cf, bw, num_filters, n_coefficients, causal, stride):
    real_f, imag_f = gabor_impulse_response(cf, bw, n_coefficients)
    w = jnp.concatenate([real_f, imag_f], axis=0)                       # (2F, K)
    b, c, t = x.shape
    xr = x.reshape(b * c, 1, t)
    if causal:
        xr = jnp.pad(xr, ((0, 0), (0, 0), (n_coefficients - 1, 0)))
    out = lax.conv_general_dilated(xr, w[:, None, :], (stride,), "VALID",
                                   dimension_numbers=("NCH", "OIH", "NCH"))
    yc = lax.complex(out[:, :num_filters], out[:, num_filters:])
    if c > 1:
        yc = yc.reshape(b, c, num_filters, -1)
    return yc


# ----------------------------------------------------------------------------
# Demo / self-check
# ----------------------------------------------------------------------------
if __name__ == "__main__":
    key = jax.random.PRNGKey(0)
    B, C, T = 2, 4, 2560                    # small audio snippet, multi-tile time axis
    num_filters = 8
    n_coefficients = 9

    x = jax.random.normal(key, (B, C, T), dtype=jnp.float32)
    center_frequencies = jnp.linspace(0.05 * jnp.pi, 0.45 * jnp.pi,
                                      num_filters).astype(jnp.float32)
    inverse_bandwidths = jnp.linspace(1.5, 4.0, num_filters).astype(jnp.float32)

    for causal, stride in ((False, 1), (True, 2), (False, 3)):
        fwd = jax.jit(functools.partial(
            gabor_filter_forward, num_filters=num_filters,
            n_coefficients=n_coefficients, causal=causal, stride=stride))
        y = jax.block_until_ready(fwd(x, center_frequencies, inverse_bandwidths))
        ref = _reference(x, center_frequencies, inverse_bandwidths,
                         num_filters, n_coefficients, causal, stride)
        err = float(jnp.max(jnp.abs(y - ref)))
        if y.shape != ref.shape or y.dtype != jnp.complex64 or not (err < 2e-3):
            raise RuntimeError(
                f"mismatch (causal={causal}, stride={stride}): "
                f"shape={y.shape} vs {ref.shape}, dtype={y.dtype}, err={err}")

    print("KERNEL_OK")
</pallas_src>

<mosaic_0001>
module attributes {stable_mosaic.version = 11 : i64} {
  func.func @_gabor_conv_kernel(%arg0: i32, %arg1: i32, %arg2: memref<16x10xf32, #tpu.memory_space<smem>>, %arg3: memref<1x8x640xf32, #tpu.memory_space<vmem>>, %arg4: memref<1x8x128xf32, #tpu.memory_space<vmem>>, %arg5: memref<16x8x640xf32, #tpu.memory_space<vmem>>, %arg6: memref<1x8x768xf32, #tpu.memory_space<vmem>>) attributes {dimension_semantics = [#tpu.dimension_semantics<parallel>, #tpu.dimension_semantics<parallel>], iteration_bounds = array<i64: 1, 4>, scalar_prefetch = 0 : i64, scratch_operands = 1 : i64, tpu.core_type = #tpu.core_type<tc>, window_params = [{transform_indices = @transform_0, window_bounds = array<i64: 16, 10>}, {transform_indices = @transform_1, window_bounds = array<i64: 1, 8, 640>}, {transform_indices = @transform_2, window_bounds = array<i64: 1, 8, 128>}, {transform_indices = @transform_3, window_bounds = array<i64: 16, 8, 640>}]} {
    %c0 = arith.constant 0 : index
    %c0_0 = arith.constant 0 : index
    %c0_1 = arith.constant 0 : index
    %0 = vector.load %arg3[%c0, %c0_0, %c0_1] : memref<1x8x640xf32, #tpu.memory_space<vmem>>, vector<1x8x640xf32>
    %c0_2 = arith.constant 0 : index
    %c0_3 = arith.constant 0 : index
    %c0_4 = arith.constant 0 : index
    %1 = vector.load %arg6[%c0_2, %c0_3, %c0_4] : memref<1x8x768xf32, #tpu.memory_space<vmem>>, vector<1x8x640xf32>
    tpu.vector_store %arg6[%c0_2, %c0_3, %c0_4], %0 {strides = array<i32>} : memref<1x8x768xf32, #tpu.memory_space<vmem>>, vector<1x8x640xf32>,
    %c0_5 = arith.constant 0 : index
    %c0_6 = arith.constant 0 : index
    %c0_7 = arith.constant 0 : index
    %2 = vector.load %arg4[%c0_5, %c0_6, %c0_7] : memref<1x8x128xf32, #tpu.memory_space<vmem>>, vector<1x8x128xf32>
    %c0_8 = arith.constant 0 : index
    %c0_9 = arith.constant 0 : index
    %c640 = arith.constant 640 : index
    %3 = vector.load %arg6[%c0_8, %c0_9, %c640] : memref<1x8x768xf32, #tpu.memory_space<vmem>>, vector<1x8x128xf32>
    tpu.vector_store %arg6[%c0_8, %c0_9, %c640], %2 {strides = array<i32>} : memref<1x8x768xf32, #tpu.memory_space<vmem>>, vector<1x8x128xf32>,
    %c0_10 = arith.constant 0 : index
    %c0_11 = arith.constant 0 : index
    %c0_12 = arith.constant 0 : index
    %4 = vector.load %arg6[%c0_10, %c0_11, %c0_12] : memref<1x8x768xf32, #tpu.memory_space<vmem>>, vector<1x8x640xf32>
    %5 = vector.shape_cast %4 : vector<1x8x640xf32> to vector<8x640xf32>
    %c0_13 = arith.constant 0 : index
    %c0_14 = arith.constant 0 : index
    %6 = memref.load %arg2[%c0_13, %c0_14] : memref<16x10xf32, #tpu.memory_space<smem>>
    %7 = vector.broadcast %6 : f32 to vector<8x640xf32>
    %8 = arith.mulf %5, %7 : vector<8x640xf32>
    %c8 = arith.constant 8 : index
    %c0_15 = arith.constant 0 : index
    %9 = memref.load %arg2[%c8, %c0_15] : memref<16x10xf32, #tpu.memory_space<smem>>
    %10 = vector.broadcast %9 : f32 to vector<8x640xf32>
    %11 = arith.mulf %5, %10 : vector<8x640xf32>
    %c0_16 = arith.constant 0 : index
    %c0_17 = arith.constant 0 : index
    %c1 = arith.constant 1 : index
    %12 = vector.load %arg6[%c0_16, %c0_17, %c1] : memref<1x8x768xf32, #tpu.memory_space<vmem>>, vector<1x8x640xf32>
    %13 = vector.shape_cast %12 : vector<1x8x640xf32> to vector<8x640xf32>
    %c0_18 = arith.constant 0 : index
    %c1_19 = arith.constant 1 : index
    %14 = memref.load %arg2[%c0_18, %c1_19] : memref<16x10xf32, #tpu.memory_space<smem>>
    %15 = vector.broadcast %14 : f32 to vector<8x640xf32>
    %16 = arith.mulf %13, %15 : vector<8x640xf32>
    %17 = arith.addf %8, %16 : vector<8x640xf32>
    %c8_20 = arith.constant 8 : index
    %c1_21 = arith.constant 1 : index
    %18 = memref.load %arg2[%c8_20, %c1_21] : memref<16x10xf32, #tpu.memory_space<smem>>
    %19 = vector.broadcast %18 : f32 to vector<8x640xf32>
    %20 = arith.mulf %13, %19 : vector<8x640xf32>
    %21 = arith.addf %11, %20 : vector<8x640xf32>
    %c0_22 = arith.constant 0 : index
    %c0_23 = arith.constant 0 : index
    %c2 = arith.constant 2 : index
    %22 = vector.load %arg6[%c0_22, %c0_23, %c2] : memref<1x8x768xf32, #tpu.memory_space<vmem>>, vector<1x8x640xf32>
    %23 = vector.shape_cast %22 : vector<1x8x640xf32> to vector<8x640xf32>
    %c0_24 = arith.constant 0 : index
    %c2_25 = arith.constant 2 : index
    %24 = memref.load %arg2[%c0_24, %c2_25] : memref<16x10xf32, #tpu.memory_space<smem>>
    %25 = vector.broadcast %24 : f32 to vector<8x640xf32>
    %26 = arith.mulf %23, %25 : vector<8x640xf32>
    %27 = arith.addf %17, %26 : vector<8x640xf32>
    %c8_26 = arith.constant 8 : index
    %c2_27 = arith.constant 2 : index
    %28 = memref.load %arg2[%c8_26, %c2_27] : memref<16x10xf32, #tpu.memory_space<smem>>
    %29 = vector.broadcast %28 : f32 to vector<8x640xf32>
    %30 = arith.mulf %23, %29 : vector<8x640xf32>
    %31 = arith.addf %21, %30 : vector<8x640xf32>
    %c0_28 = arith.constant 0 : index
    %c0_29 = arith.constant 0 : index
    %c3 = arith.constant 3 : index
    %32 = vector.load %arg6[%c0_28, %c0_29, %c3] : memref<1x8x768xf32, #tpu.memory_space<vmem>>, vector<1x8x640xf32>
    %33 = vector.shape_cast %32 : vector<1x8x640xf32> to vector<8x640xf32>
    %c0_30 = arith.constant 0 : index
    %c3_31 = arith.constant 3 : index
    %34 = memref.load %arg2[%c0_30, %c3_31] : memref<16x10xf32, #tpu.memory_space<smem>>
    %35 = vector.broadcast %34 : f32 to vector<8x640xf32>
    %36 = arith.mulf %33, %35 : vector<8x640xf32>
    %37 = arith.addf %27, %36 : vector<8x640xf32>
    %c8_32 = arith.constant 8 : index
    %c3_33 = arith.constant 3 : index
    %38 = memref.load %arg2[%c8_32, %c3_33] : memref<16x10xf32, #tpu.memory_space<smem>>
    %39 = vector.broadcast %38 : f32 to vector<8x640xf32>
    %40 = arith.mulf %33, %39 : vector<8x640xf32>
    %41 = arith.addf %31, %40 : vector<8x640xf32>
    %c0_34 = arith.constant 0 : index
    %c0_35 = arith.constant 0 : index
    %c4 = arith.constant 4 : index
    %42 = vector.load %arg6[%c0_34, %c0_35, %c4] : memref<1x8x768xf32, #tpu.memory_space<vmem>>, vector<1x8x640xf32>
    %43 = vector.shape_cast %42 : vector<1x8x640xf32> to vector<8x640xf32>
    %c0_36 = arith.constant 0 : index
    %c4_37 = arith.constant 4 : index
    %44 = memref.load %arg2[%c0_36, %c4_37] : memref<16x10xf32, #tpu.memory_space<smem>>
    %45 = vector.broadcast %44 : f32 to vector<8x640xf32>
    %46 = arith.mulf %43, %45 : vector<8x640xf32>
    %47 = arith.addf %37, %46 : vector<8x640xf32>
    %c8_38 = arith.constant 8 : index
    %c4_39 = arith.constant 4 : index
    %48 = memref.load %arg2[%c8_38, %c4_39] : memref<16x10xf32, #tpu.memory_space<smem>>
    %49 = vector.broadcast %48 : f32 to vector<8x640xf32>
    %50 = arith.mulf %43, %49 : vector<8x640xf32>
    %51 = arith.addf %41, %50 : vector<8x640xf32>
    %c0_40 = arith.constant 0 : index
    %c0_41 = arith.constant 0 : index
    %c5 = arith.constant 5 : index
    %52 = vector.load %arg6[%c0_40, %c0_41, %c5] : memref<1x8x768xf32, #tpu.memory_space<vmem>>, vector<1x8x640xf32>
    %53 = vector.shape_cast %52 : vector<1x8x640xf32> to vector<8x640xf32>
    %c0_42 = arith.constant 0 : index
    %c5_43 = arith.constant 5 : index
    %54 = memref.load %arg2[%c0_42, %c5_43] : memref<16x10xf32, #tpu.memory_space<smem>>
    %55 = vector.broadcast %54 : f32 to vector<8x640xf32>
    %56 = arith.mulf %53, %55 : vector<8x640xf32>
    %57 = arith.addf %47, %56 : vector<8x640xf32>
    %c8_44 = arith.constant 8 : index
    %c5_45 = arith.constant 5 : index
    %58 = memref.load %arg2[%c8_44, %c5_45] : memref<16x10xf32, #tpu.memory_space<smem>>
    %59 = vector.broadcast %58 : f32 to vector<8x640xf32>
    %60 = arith.mulf %53, %59 : vector<8x640xf32>
    %61 = arith.addf %51, %60 : vector<8x640xf32>
    %c0_46 = arith.constant 0 : index
    %c0_47 = arith.constant 0 : index
    %c6 = arith.constant 6 : index
    %62 = vector.load %arg6[%c0_46, %c0_47, %c6] : memref<1x8x768xf32, #tpu.memory_space<vmem>>, vector<1x8x640xf32>
    %63 = vector.shape_cast %62 : vector<1x8x640xf32> to vector<8x640xf32>
    %c0_48 = arith.constant 0 : index
    %c6_49 = arith.constant 6 : index
    %64 = memref.load %arg2[%c0_48, %c6_49] : memref<16x10xf32, #tpu.memory_space<smem>>
    %65 = vector.broadcast %64 : f32 to vector<8x640xf32>
    %66 = arith.mulf %63, %65 : vector<8x640xf32>
    %67 = arith.addf %57, %66 : vector<8x640xf32>
    %c8_50 = arith.constant 8 : index
    %c6_51 = arith.constant 6 : index
    %68 = memref.load %arg2[%c8_50, %c6_51] : memref<16x10xf32, #tpu.memory_space<smem>>
    %69 = vector.broadcast %68 : f32 to vector<8x640xf32>
    %70 = arith.mulf %63, %69 : vector<8x640xf32>
    %71 = arith.addf %61, %70 : vector<8x640xf32>
    %c0_52 = arith.constant 0 : index
    %c0_53 = arith.constant 0 : index
    %c7 = arith.constant 7 : index
    %72 = vector.load %arg6[%c0_52, %c0_53, %c7] : memref<1x8x768xf32, #tpu.memory_space<vmem>>, vector<1x8x640xf32>
    %73 = vector.shape_cast %72 : vector<1x8x640xf32> to vector<8x640xf32>
    %c0_54 = arith.constant 0 : index
    %c7_55 = arith.constant 7 : index
    %74 = memref.load %arg2[%c0_54, %c7_55] : memref<16x10xf32, #tpu.memory_space<smem>>
    %75 = vector.broadcast %74 : f32 to vector<8x640xf32>
    %76 = arith.mulf %73, %75 : vector<8x640xf32>
    %77 = arith.addf %67, %76 : vector<8x640xf32>
    %c8_56 = arith.constant 8 : index
    %c7_57 = arith.constant 7 : index
    %78 = memref.load %arg2[%c8_56, %c7_57] : memref<16x10xf32, #tpu.memory_space<smem>>
    %79 = vector.broadcast %78 : f32 to vector<8x640xf32>
    %80 = arith.mulf %73, %79 : vector<8x640xf32>
    %81 = arith.addf %71, %80 : vector<8x640xf32>
    %c0_58 = arith.constant 0 : index
    %c0_59 = arith.constant 0 : index
    %c8_60 = arith.constant 8 : index
    %82 = vector.load %arg6[%c0_58, %c0_59, %c8_60] : memref<1x8x768xf32, #tpu.memory_space<vmem>>, vector<1x8x640xf32>
    %83 = vector.shape_cast %82 : vector<1x8x640xf32> to vector<8x640xf32>
    %c0_61 = arith.constant 0 : index
    %c8_62 = arith.constant 8 : index
    %84 = memref.load %arg2[%c0_61, %c8_62] : memref<16x10xf32, #tpu.memory_space<smem>>
    %85 = vector.broadcast %84 : f32 to vector<8x640xf32>
    %86 = arith.mulf %83, %85 : vector<8x640xf32>
    %87 = arith.addf %77, %86 : vector<8x640xf32>
    %c8_63 = arith.constant 8 : index
    %c8_64 = arith.constant 8 : index
    %88 = memref.load %arg2[%c8_63, %c8_64] : memref<16x10xf32, #tpu.memory_space<smem>>
    %89 = vector.broadcast %88 : f32 to vector<8x640xf32>
    %90 = arith.mulf %83, %89 : vector<8x640xf32>
    %91 = arith.addf %81, %90 : vector<8x640xf32>
    %c0_65 = arith.constant 0 : index
    %c0_66 = arith.constant 0 : index
    %c9 = arith.constant 9 : index
    %92 = vector.load %arg6[%c0_65, %c0_66, %c9] : memref<1x8x768xf32, #tpu.memory_space<vmem>>, vector<1x8x640xf32>
    %93 = vector.shape_cast %92 : vector<1x8x640xf32> to vector<8x640xf32>
    %c0_67 = arith.constant 0 : index
    %c9_68 = arith.constant 9 : index
    %94 = memref.load %arg2[%c0_67, %c9_68] : memref<16x10xf32, #tpu.memory_space<smem>>
    %95 = vector.broadcast %94 : f32 to vector<8x640xf32>
    %96 = arith.mulf %93, %95 : vector<8x640xf32>
    %97 = arith.addf %87, %96 : vector<8x640xf32>
    %c8_69 = arith.constant 8 : index
    %c9_70 = arith.constant 9 : index
    %98 = memref.load %arg2[%c8_69, %c9_70] : memref<16x10xf32, #tpu.memory_space<smem>>
    %99 = vector.broadcast %98 : f32 to vector<8x640xf32>
    %100 = arith.mulf %93, %99 : vector<8x640xf32>
    %101 = arith.addf %91, %100 : vector<8x640xf32>
    %c0_71 = arith.constant 0 : index
    %c0_72 = arith.constant 0 : index
    %c0_73 = arith.constant 0 : index
    %102 = vector.load %arg5[%c0_71, %c0_72, %c0_73] : memref<16x8x640xf32, #tpu.memory_space<vmem>>, vector<1x8x640xf32>
    %103 = vector.shape_cast %102 : vector<1x8x640xf32> to vector<8x640xf32>
    %104 = vector.shape_cast %97 : vector<8x640xf32> to vector<1x8x640xf32>
    tpu.vector_store %arg5[%c0_71, %c0_72, %c0_73], %104 {strides = array<i32>} : memref<16x8x640xf32, #tpu.memory_space<vmem>>, vector<1x8x640xf32>,
    %c8_74 = arith.constant 8 : index
    %c0_75 = arith.constant 0 : index
    %c0_76 = arith.constant 0 : index
    %105 = vector.load %arg5[%c8_74, %c0_75, %c0_76] : memref<16x8x640xf32, #tpu.memory_space<vmem>>, vector<1x8x640xf32>
    %106 = vector.shape_cast %105 : vector<1x8x640xf32> to vector<8x640xf32>
    %107 = vector.shape_cast %101 : vector<8x640xf32> to vector<1x8x640xf32>
    tpu.vector_store %arg5[%c8_74, %c0_75, %c0_76], %107 {strides = array<i32>} : memref<16x8x640xf32, #tpu.memory_space<vmem>>, vector<1x8x640xf32>,
    %c0_77 = arith.constant 0 : index
    %c0_78 = arith.constant 0 : index
    %c0_79 = arith.constant 0 : index
    %108 = vector.load %arg6[%c0_77, %c0_78, %c0_79] : memref<1x8x768xf32, #tpu.memory_space<vmem>>, vector<1x8x640xf32>
    %109 = vector.shape_cast %108 : vector<1x8x640xf32> to vector<8x640xf32>
    %c1_80 = arith.constant 1 : index
    %c0_81 = arith.constant 0 : index
    %110 = memref.load %arg2[%c1_80, %c0_81] : memref<16x10xf32, #tpu.memory_space<smem>>
    %111 = vector.broadcast %110 : f32 to vector<8x640xf32>
    %112 = arith.mulf %109, %111 : vector<8x640xf32>
    %c9_82 = arith.constant 9 : index
    %c0_83 = arith.constant 0 : index
    %113 = memref.load %arg2[%c9_82, %c0_83] : memref<16x10xf32, #tpu.memory_space<smem>>
    %114 = vector.broadcast %113 : f32 to vector<8x640xf32>
    %115 = arith.mulf %109, %114 : vector<8x640xf32>
    %c0_84 = arith.constant 0 : index
    %c0_85 = arith.constant 0 : index
    %c1_86 = arith.constant 1 : index
    %116 = vector.load %arg6[%c0_84, %c0_85, %c1_86] : memref<1x8x768xf32, #tpu.memory_space<vmem>>, vector<1x8x640xf32>
    %117 = vector.shape_cast %116 : vector<1x8x640xf32> to vector<8x640xf32>
    %c1_87 = arith.constant 1 : index
    %c1_88 = arith.constant 1 : index
    %118 = memref.load %arg2[%c1_87, %c1_88] : memref<16x10xf32, #tpu.memory_space<smem>>
    %119 = vector.broadcast %118 : f32 to vector<8x640xf32>
    %120 = arith.mulf %117, %119 : vector<8x640xf32>
    %121 = arith.addf %112, %120 : vector<8x640xf32>
    %c9_89 = arith.constant 9 : index
    %c1_90 = arith.constant 1 : index
    %122 = memref.load %arg2[%c9_89, %c1_90] : memref<16x10xf32, #tpu.memory_space<smem>>
    %123 = vector.broadcast %122 : f32 to vector<8x640xf32>
    %124 = arith.mulf %117, %123 : vector<8x640xf32>
    %125 = arith.addf %115, %124 : vector<8x640xf32>
    %c0_91 = arith.constant 0 : index
    %c0_92 = arith.constant 0 : index
    %c2_93 = arith.constant 2 : index
    %126 = vector.load %arg6[%c0_91, %c0_92, %c2_93] : memref<1x8x768xf32, #tpu.memory_space<vmem>>, vector<1x8x640xf32>
    %127 = vector.shape_cast %126 : vector<1x8x640xf32> to vector<8x640xf32>
    %c1_94 = arith.constant 1 : index
    %c2_95 = arith.constant 2 : index
    %128 = memref.load %arg2[%c1_94, %c2_95] : memref<16x10xf32, #tpu.memory_space<smem>>
    %129 = vector.broadcast %128 : f32 to vector<8x640xf32>
    %130 = arith.mulf %127, %129 : vector<8x640xf32>
    %131 = arith.addf %121, %130 : vector<8x640xf32>
    %c9_96 = arith.constant 9 : index
    %c2_97 = arith.constant 2 : index
    %132 = memref.load %arg2[%c9_96, %c2_97] : memref<16x10xf32, #tpu.memory_space<smem>>
    %133 = vector.broadcast %132 : f32 to vector<8x640xf32>
    %134 = arith.mulf %127, %133 : vector<8x640xf32>
    %135 = arith.addf %125, %134 : vector<8x640xf32>
    %c0_98 = arith.constant 0 : index
    %c0_99 = arith.constant 0 : index
    %c3_100 = arith.constant 3 : index
    %136 = vector.load %arg6[%c0_98, %c0_99, %c3_100] : memref<1x8x768xf32, #tpu.memory_space<vmem>>, vector<1x8x640xf32>
    %137 = vector.shape_cast %136 : vector<1x8x640xf32> to vector<8x640xf32>
    %c1_101 = arith.constant 1 : index
    %c3_102 = arith.constant 3 : index
    %138 = memref.load %arg2[%c1_101, %c3_102] : memref<16x10xf32, #tpu.memory_space<smem>>
    %139 = vector.broadcast %138 : f32 to vector<8x640xf32>
    %140 = arith.mulf %137, %139 : vector<8x640xf32>
    %141 = arith.addf %131, %140 : vector<8x640xf32>
    %c9_103 = arith.constant 9 : index
    %c3_104 = arith.constant 3 : index
    %142 = memref.load %arg2[%c9_103, %c3_104] : memref<16x10xf32, #tpu.memory_space<smem>>
    %143 = vector.broadcast %142 : f32 to vector<8x640xf32>
    %144 = arith.mulf %137, %143 : vector<8x640xf32>
    %145 = arith.addf %135, %144 : vector<8x640xf32>
    %c0_105 = arith.constant 0 : index
    %c0_106 = arith.constant 0 : index
    %c4_107 = arith.constant 4 : index
    %146 = vector.load %arg6[%c0_105, %c0_106, %c4_107] : memref<1x8x768xf32, #tpu.memory_space<vmem>>, vector<1x8x640xf32>
    %147 = vector.shape_cast %146 : vector<1x8x640xf32> to vector<8x640xf32>
    %c1_108 = arith.constant 1 : index
    %c4_109 = arith.constant 4 : index
    %148 = memref.load %arg2[%c1_108, %c4_109] : memref<16x10xf32, #tpu.memory_space<smem>>
    %149 = vector.broadcast %148 : f32 to vector<8x640xf32>
    %150 = arith.mulf %147, %149 : vector<8x640xf32>
    %151 = arith.addf %141, %150 : vector<8x640xf32>
    %c9_110 = arith.constant 9 : index
    %c4_111 = arith.constant 4 : index
    %152 = memref.load %arg2[%c9_110, %c4_111] : memref<16x10xf32, #tpu.memory_space<smem>>
    %153 = vector.broadcast %152 : f32 to vector<8x640xf32>
    %154 = arith.mulf %147, %153 : vector<8x640xf32>
    %155 = arith.addf %145, %154 : vector<8x640xf32>
    %c0_112 = arith.constant 0 : index
    %c0_113 = arith.constant 0 : index
    %c5_114 = arith.constant 5 : index
    %156 = vector.load %arg6[%c0_112, %c0_113, %c5_114] : memref<1x8x768xf32, #tpu.memory_space<vmem>>, vector<1x8x640xf32>
    %157 = vector.shape_cast %156 : vector<1x8x640xf32> to vector<8x640xf32>
    %c1_115 = arith.constant 1 : index
    %c5_116 = arith.constant 5 : index
    %158 = memref.load %arg2[%c1_115, %c5_116] : memref<16x10xf32, #tpu.memory_space<smem>>
    %159 = vector.broadcast %158 : f32 to vector<8x640xf32>
    %160 = arith.mulf %157, %159 : vector<8x640xf32>
    %161 = arith.addf %151, %160 : vector<8x640xf32>
    %c9_117 = arith.constant 9 : index
    %c5_118 = arith.constant 5 : index
    %162 = memref.load %arg2[%c9_117, %c5_118] : memref<16x10xf32, #tpu.memory_space<smem>>
    %163 = vector.broadcast %162 : f32 to vector<8x640xf32>
    %164 = arith.mulf %157, %163 : vector<8x640xf32>
    %165 = arith.addf %155, %164 : vector<8x640xf32>
    %c0_119 = arith.constant 0 : index
    %c0_120 = arith.constant 0 : index
    %c6_121 = arith.constant 6 : index
    %166 = vector.load %arg6[%c0_119, %c0_120, %c6_121] : memref<1x8x768xf32, #tpu.memory_space<vmem>>, vector<1x8x640xf32>
    %167 = vector.shape_cast %166 : vector<1x8x640xf32> to vector<8x640xf32>
    %c1_122 = arith.constant 1 : index
    %c6_123 = arith.constant 6 : index
    %168 = memref.load %arg2[%c1_122, %c6_123] : memref<16x10xf32, #tpu.memory_space<smem>>
    %169 = vector.broadcast %168 : f32 to vector<8x640xf32>
    %170 = arith.mulf %167, %169 : vector<8x640xf32>
    %171 = arith.addf %161, %170 : vector<8x640xf32>
    %c9_124 = arith.constant 9 : index
    %c6_125 = arith.constant 6 : index
    %172 = memref.load %arg2[%c9_124, %c6_125] : memref<16x10xf32, #tpu.memory_space<smem>>
    %173 = vector.broadcast %172 : f32 to vector<8x640xf32>
    %174 = arith.mulf %167, %173 : vector<8x640xf32>
    %175 = arith.addf %165, %174 : vector<8x640xf32>
    %c0_126 = arith.constant 0 : index
    %c0_127 = arith.constant 0 : index
    %c7_128 = arith.constant 7 : index
    %176 = vector.load %arg6[%c0_126, %c0_127, %c7_128] : memref<1x8x768xf32, #tpu.memory_space<vmem>>, vector<1x8x640xf32>
    %177 = vector.shape_cast %176 : vector<1x8x640xf32> to vector<8x640xf32>
    %c1_129 = arith.constant 1 : index
    %c7_130 = arith.constant 7 : index
    %178 = memref.load %arg2[%c1_129, %c7_130] : memref<16x10xf32, #tpu.memory_space<smem>>
    %179 = vector.broadcast %178 : f32 to vector<8x640xf32>
    %180 = arith.mulf %177, %179 : vector<8x640xf32>
    %181 = arith.addf %171, %180 : vector<8x640xf32>
    %c9_131 = arith.constant 9 : index
    %c7_132 = arith.constant 7 : index
    %182 = memref.load %arg2[%c9_131, %c7_132] : memref<16x10xf32, #tpu.memory_space<smem>>
    %183 = vector.broadcast %182 : f32 to vector<8x640xf32>
    %184 = arith.mulf %177, %183 : vector<8x640xf32>
    %185 = arith.addf %175, %184 : vector<8x640xf32>
    %c0_133 = arith.constant 0 : index
    %c0_134 = arith.constant 0 : index
    %c8_135 = arith.constant 8 : index
    %186 = vector.load %arg6[%c0_133, %c0_134, %c8_135] : memref<1x8x768xf32, #tpu.memory_space<vmem>>, vector<1x8x640xf32>
    %187 = vector.shape_cast %186 : vector<1x8x640xf32> to vector<8x640xf32>
    %c1_136 = arith.constant 1 : index
    %c8_137 = arith.constant 8 : index
    %188 = memref.load %arg2[%c1_136, %c8_137] : memref<16x10xf32, #tpu.memory_space<smem>>
    %189 = vector.broadcast %188 : f32 to vector<8x640xf32>
    %190 = arith.mulf %187, %189 : vector<8x640xf32>
    %191 = arith.addf %181, %190 : vector<8x640xf32>
    %c9_138 = arith.constant 9 : index
    %c8_139 = arith.constant 8 : index
    %192 = memref.load %arg2[%c9_138, %c8_139] : memref<16x10xf32, #tpu.memory_space<smem>>
    %193 = vector.broadcast %192 : f32 to vector<8x640xf32>
    %194 = arith.mulf %187, %193 : vector<8x640xf32>
    %195 = arith.addf %185, %194 : vector<8x640xf32>
    %c0_140 = arith.constant 0 : index
    %c0_141 = arith.constant 0 : index
    %c9_142 = arith.constant 9 : index
    %196 = vector.load %arg6[%c0_140, %c0_141, %c9_142] : memref<1x8x768xf32, #tpu.memory_space<vmem>>, vector<1x8x640xf32>
    %197 = vector.shape_cast %196 : vector<1x8x640xf32> to vector<8x640xf32>
    %c1_143 = arith.constant 1 : index
    %c9_144 = arith.constant 9 : index
    %198 = memref.load %arg2[%c1_143, %c9_144] : memref<16x10xf32, #tpu.memory_space<smem>>
    %199 = vector.broadcast %198 : f32 to vector<8x640xf32>
    %200 = arith.mulf %197, %199 : vector<8x640xf32>
    %201 = arith.addf %191, %200 : vector<8x640xf32>
    %c9_145 = arith.constant 9 : index
    %c9_146 = arith.constant 9 : index
    %202 = memref.load %arg2[%c9_145, %c9_146] : memref<16x10xf32, #tpu.memory_space<smem>>
    %203 = vector.broadcast %202 : f32 to vector<8x640xf32>
    %204 = arith.mulf %197, %203 : vector<8x640xf32>
    %205 = arith.addf %195, %204 : vector<8x640xf32>
    %c1_147 = arith.constant 1 : index
    %c0_148 = arith.constant 0 : index
    %c0_149 = arith.constant 0 : index
    %206 = vector.load %arg5[%c1_147, %c0_148, %c0_149] : memref<16x8x640xf32, #tpu.memory_space<vmem>>, vector<1x8x640xf32>
    %207 = vector.shape_cast %206 : vector<1x8x640xf32> to vector<8x640xf32>
    %208 = vector.shape_cast %201 : vector<8x640xf32> to vector<1x8x640xf32>
    tpu.vector_store %arg5[%c1_147, %c0_148, %c0_149], %208 {strides = array<i32>} : memref<16x8x640xf32, #tpu.memory_space<vmem>>, vector<1x8x640xf32>,
    %c9_150 = arith.constant 9 : index
    %c0_151 = arith.constant 0 : index
    %c0_152 = arith.constant 0 : index
    %209 = vector.load %arg5[%c9_150, %c0_151, %c0_152] : memref<16x8x640xf32, #tpu.memory_space<vmem>>, vector<1x8x640xf32>
    %210 = vector.shape_cast %209 : vector<1x8x640xf32> to vector<8x640xf32>
    %211 = vector.shape_cast %205 : vector<8x640xf32> to vector<1x8x640xf32>
    tpu.vector_store %arg5[%c9_150, %c0_151, %c0_152], %211 {strides = array<i32>} : memref<16x8x640xf32, #tpu.memory_space<vmem>>, vector<1x8x640xf32>,
    %c0_153 = arith.constant 0 : index
    %c0_154 = arith.constant 0 : index
    %c0_155 = arith.constant 0 : index
    %212 = vector.load %arg6[%c0_153, %c0_154, %c0_155] : memref<1x8x768xf32, #tpu.memory_space<vmem>>, vector<1x8x640xf32>
    %213 = vector.shape_cast %212 : vector<1x8x640xf32> to vector<8x640xf32>
    %c2_156 = arith.constant 2 : index
    %c0_157 = arith.constant 0 : index
    %214 = memref.load %arg2[%c2_156, %c0_157] : memref<16x10xf32, #tpu.memory_space<smem>>
    %215 = vector.broadcast %214 : f32 to vector<8x640xf32>
    %216 = arith.mulf %213, %215 : vector<8x640xf32>
    %c10 = arith.constant 10 : index
    %c0_158 = arith.constant 0 : index
    %217 = memref.load %arg2[%c10, %c0_158] : memref<16x10xf32, #tpu.memory_space<smem>>
    %218 = vector.broadcast %217 : f32 to vector<8x640xf32>
    %219 = arith.mulf %213, %218 : vector<8x640xf32>
    %c0_159 = arith.constant 0 : index
    %c0_160 = arith.constant 0 : index
    %c1_161 = arith.constant 1 : index
    %220 = vector.load %arg6[%c0_159, %c0_160, %c1_161] : memref<1x8x768xf32, #tpu.memory_space<vmem>>, vector<1x8x640xf32>
    %221 = vector.shape_cast %220 : vector<1x8x640xf32> to vector<8x640xf32>
    %c2_162 = arith.constant 2 : index
    %c1_163 = arith.constant 1 : index
    %222 = memref.load %arg2[%c2_162, %c1_163] : memref<16x10xf32, #tpu.memory_space<smem>>
    %223 = vector.broadcast %222 : f32 to vector<8x640xf32>
    %224 = arith.mulf %221, %223 : vector<8x640xf32>
    %225 = arith.addf %216, %224 : vector<8x640xf32>
    %c10_164 = arith.constant 10 : index
    %c1_165 = arith.constant 1 : index
    %226 = memref.load %arg2[%c10_164, %c1_165] : memref<16x10xf32, #tpu.memory_space<smem>>
    %227 = vector.broadcast %226 : f32 to vector<8x640xf32>
    %228 = arith.mulf %221, %227 : vector<8x640xf32>
    %229 = arith.addf %219, %228 : vector<8x640xf32>
    %c0_166 = arith.constant 0 : index
    %c0_167 = arith.constant 0 : index
    %c2_168 = arith.constant 2 : index
    %230 = vector.load %arg6[%c0_166, %c0_167, %c2_168] : memref<1x8x768xf32, #tpu.memory_space<vmem>>, vector<1x8x640xf32>
    %231 = vector.shape_cast %230 : vector<1x8x640xf32> to vector<8x640xf32>
    %c2_169 = arith.constant 2 : index
    %c2_170 = arith.constant 2 : index
    %232 = memref.load %arg2[%c2_169, %c2_170] : memref<16x10xf32, #tpu.memory_space<smem>>
    %233 = vector.broadcast %232 : f32 to vector<8x640xf32>
    %234 = arith.mulf %231, %233 : vector<8x640xf32>
    %235 = arith.addf %225, %234 : vector<8x640xf32>
    %c10_171 = arith.constant 10 : index
    %c2_172 = arith.constant 2 : index
    %236 = memref.load %arg2[%c10_171, %c2_172] : memref<16x10xf32, #tpu.memory_space<smem>>
    %237 = vector.broadcast %236 : f32 to vector<8x640xf32>
    %238 = arith.mulf %231, %237 : vector<8x640xf32>
    %239 = arith.addf %229, %238 : vector<8x640xf32>
    %c0_173 = arith.constant 0 : index
    %c0_174 = arith.constant 0 : index
    %c3_175 = arith.constant 3 : index
    %240 = vector.load %arg6[%c0_173, %c0_174, %c3_175] : memref<1x8x768xf32, #tpu.memory_space<vmem>>, vector<1x8x640xf32>
    %241 = vector.shape_cast %240 : vector<1x8x640xf32> to vector<8x640xf32>
    %c2_176 = arith.constant 2 : index
    %c3_177 = arith.constant 3 : index
    %242 = memref.load %arg2[%c2_176, %c3_177] : memref<16x10xf32, #tpu.memory_space<smem>>
    %243 = vector.broadcast %242 : f32 to vector<8x640xf32>
    %244 = arith.mulf %241, %243 : vector<8x640xf32>
    %245 = arith.addf %235, %244 : vector<8x640xf32>
    %c10_178 = arith.constant 10 : index
    %c3_179 = arith.constant 3 : index
    %246 = memref.load %arg2[%c10_178, %c3_179] : memref<16x10xf32, #tpu.memory_space<smem>>
    %247 = vector.broadcast %246 : f32 to vector<8x640xf32>
    %248 = arith.mulf %241, %247 : vector<8x640xf32>
    %249 = arith.addf %239, %248 : vector<8x640xf32>
    %c0_180 = arith.constant 0 : index
    %c0_181 = arith.constant 0 : index
    %c4_182 = arith.constant 4 : index
    %250 = vector.load %arg6[%c0_180, %c0_181, %c4_182] : memref<1x8x768xf32, #tpu.memory_space<vmem>>, vector<1x8x640xf32>
    %251 = vector.shape_cast %250 : vector<1x8x640xf32> to vector<8x640xf32>
    %c2_183 = arith.constant 2 : index
    %c4_184 = arith.constant 4 : index
    %252 = memref.load %arg2[%c2_183, %c4_184] : memref<16x10xf32, #tpu.memory_space<smem>>
    %253 = vector.broadcast %252 : f32 to vector<8x640xf32>
    %254 = arith.mulf %251, %253 : vector<8x640xf32>
    %255 = arith.addf %245, %254 : vector<8x640xf32>
    %c10_185 = arith.constant 10 : index
    %c4_186 = arith.constant 4 : index
    %256 = memref.load %arg2[%c10_185, %c4_186] : memref<16x10xf32, #tpu.memory_space<smem>>
    %257 = vector.broadcast %256 : f32 to vector<8x640xf32>
    %258 = arith.mulf %251, %257 : vector<8x640xf32>
    %259 = arith.addf %249, %258 : vector<8x640xf32>
    %c0_187 = arith.constant 0 : index
    %c0_188 = arith.constant 0 : index
    %c5_189 = arith.constant 5 : index
    %260 = vector.load %arg6[%c0_187, %c0_188, %c5_189] : memref<1x8x768xf32, #tpu.memory_space<vmem>>, vector<1x8x640xf32>
    %261 = vector.shape_cast %260 : vector<1x8x640xf32> to vector<8x640xf32>
    %c2_190 = arith.constant 2 : index
    %c5_191 = arith.constant 5 : index
    %262 = memref.load %arg2[%c2_190, %c5_191] : memref<16x10xf32, #tpu.memory_space<smem>>
    %263 = vector.broadcast %262 : f32 to vector<8x640xf32>
    %264 = arith.mulf %261, %263 : vector<8x640xf32>
    %265 = arith.addf %255, %264 : vector<8x640xf32>
    %c10_192 = arith.constant 10 : index
    %c5_193 = arith.constant 5 : index
    %266 = memref.load %arg2[%c10_192, %c5_193] : memref<16x10xf32, #tpu.memory_space<smem>>
    %267 = vector.broadcast %266 : f32 to vector<8x640xf32>
    %268 = arith.mulf %261, %267 : vector<8x640xf32>
    %269 = arith.addf %259, %268 : vector<8x640xf32>
    %c0_194 = arith.constant 0 : index
    %c0_195 = arith.constant 0 : index
    %c6_196 = arith.constant 6 : index
    %270 = vector.load %arg6[%c0_194, %c0_195, %c6_196] : memref<1x8x768xf32, #tpu.memory_space<vmem>>, vector<1x8x640xf32>
    %271 = vector.shape_cast %270 : vector<1x8x640xf32> to vector<8x640xf32>
    %c2_197 = arith.constant 2 : index
    %c6_198 = arith.constant 6 : index
    %272 = memref.load %arg2[%c2_197, %c6_198] : memref<16x10xf32, #tpu.memory_space<smem>>
    %273 = vector.broadcast %272 : f32 to vector<8x640xf32>
    %274 = arith.mulf %271, %273 : vector<8x640xf32>
    %275 = arith.addf %265, %274 : vector<8x640xf32>
    %c10_199 = arith.constant 10 : index
    %c6_200 = arith.constant 6 : index
    %276 = memref.load %arg2[%c10_199, %c6_200] : memref<16x10xf32, #tpu.memory_space<smem>>
    %277 = vector.broadcast %276 : f32 to vector<8x640xf32>
    %278 = arith.mulf %271, %277 : vector<8x640xf32>
    %279 = arith.addf %269, %278 : vector<8x640xf32>
    %c0_201 = arith.constant 0 : index
    %c0_202 = arith.constant 0 : index
    %c7_203 = arith.constant 7 : index
    %280 = vector.load %arg6[%c0_201, %c0_202, %c7_203] : memref<1x8x768xf32, #tpu.memory_space<vmem>>, vector<1x8x640xf32>
    %281 = vector.shape_cast %280 : vector<1x8x640xf32> to vector<8x640xf32>
    %c2_204 = arith.constant 2 : index
    %c7_205 = arith.constant 7 : index
    %282 = memref.load %arg2[%c2_204, %c7_205] : memref<16x10xf32, #tpu.memory_space<smem>>
    %283 = vector.broadcast %282 : f32 to vector<8x640xf32>
    %284 = arith.mulf %281, %283 : vector<8x640xf32>
    %285 = arith.addf %275, %284 : vector<8x640xf32>
    %c10_206 = arith.constant 10 : index
    %c7_207 = arith.constant 7 : index
    %286 = memref.load %arg2[%c10_206, %c7_207] : memref<16x10xf32, #tpu.memory_space<smem>>
    %287 = vector.broadcast %286 : f32 to vector<8x640xf32>
    %288 = arith.mulf %281, %287 : vector<8x640xf32>
    %289 = arith.addf %279, %288 : vector<8x640xf32>
    %c0_208 = arith.constant 0 : index
    %c0_209 = arith.constant 0 : index
    %c8_210 = arith.constant 8 : index
    %290 = vector.load %arg6[%c0_208, %c0_209, %c8_210] : memref<1x8x768xf32, #tpu.memory_space<vmem>>, vector<1x8x640xf32>
    %291 = vector.shape_cast %290 : vector<1x8x640xf32> to vector<8x640xf32>
    %c2_211 = arith.constant 2 : index
    %c8_212 = arith.constant 8 : index
    %292 = memref.load %arg2[%c2_211, %c8_212] : memref<16x10xf32, #tpu.memory_space<smem>>
    %293 = vector.broadcast %292 : f32 to vector<8x640xf32>
    %294 = arith.mulf %291, %293 : vector<8x640xf32>
    %295 = arith.addf %285, %294 : vector<8x640xf32>
    %c10_213 = arith.constant 10 : index
    %c8_214 = arith.constant 8 : index
    %296 = memref.load %arg2[%c10_213, %c8_214] : memref<16x10xf32, #tpu.memory_space<smem>>
    %297 = vector.broadcast %296 : f32 to vector<8x640xf32>
    %298 = arith.mulf %291, %297 : vector<8x640xf32>
    %299 = arith.addf %289, %298 : vector<8x640xf32>
    %c0_215 = arith.constant 0 : index
    %c0_216 = arith.constant 0 : index
    %c9_217 = arith.constant 9 : index
    %300 = vector.load %arg6[%c0_215, %c0_216, %c9_217] : memref<1x8x768xf32, #tpu.memory_space<vmem>>, vector<1x8x640xf32>
    %301 = vector.shape_cast %300 : vector<1x8x640xf32> to vector<8x640xf32>
    %c2_218 = arith.constant 2 : index
    %c9_219 = arith.constant 9 : index
    %302 = memref.load %arg2[%c2_218, %c9_219] : memref<16x10xf32, #tpu.memory_space<smem>>
    %303 = vector.broadcast %302 : f32 to vector<8x640xf32>
    %304 = arith.mulf %301, %303 : vector<8x640xf32>
    %305 = arith.addf %295, %304 : vector<8x640xf32>
    %c10_220 = arith.constant 10 : index
    %c9_221 = arith.constant 9 : index
    %306 = memref.load %arg2[%c10_220, %c9_221] : memref<16x10xf32, #tpu.memory_space<smem>>
    %307 = vector.broadcast %306 : f32 to vector<8x640xf32>
    %308 = arith.mulf %301, %307 : vector<8x640xf32>
    %309 = arith.addf %299, %308 : vector<8x640xf32>
    %c2_222 = arith.constant 2 : index
    %c0_223 = arith.constant 0 : index
    %c0_224 = arith.constant 0 : index
    %310 = vector.load %arg5[%c2_222, %c0_223, %c0_224] : memref<16x8x640xf32, #tpu.memory_space<vmem>>, vector<1x8x640xf32>
    %311 = vector.shape_cast %310 : vector<1x8x640xf32> to vector<8x640xf32>
    %312 = vector.shape_cast %305 : vector<8x640xf32> to vector<1x8x640xf32>
    tpu.vector_store %arg5[%c2_222, %c0_223, %c0_224], %312 {strides = array<i32>} : memref<16x8x640xf32, #tpu.memory_space<vmem>>, vector<1x8x640xf32>,
    %c10_225 = arith.constant 10 : index
    %c0_226 = arith.constant 0 : index
    %c0_227 = arith.constant 0 : index
    %313 = vector.load %arg5[%c10_225, %c0_226, %c0_227] : memref<16x8x640xf32, #tpu.memory_space<vmem>>, vector<1x8x640xf32>
    %314 = vector.shape_cast %313 : vector<1x8x640xf32> to vector<8x640xf32>
    %315 = vector.shape_cast %309 : vector<8x640xf32> to vector<1x8x640xf32>
    tpu.vector_store %arg5[%c10_225, %c0_226, %c0_227], %315 {strides = array<i32>} : memref<16x8x640xf32, #tpu.memory_space<vmem>>, vector<1x8x640xf32>,
    %c0_228 = arith.constant 0 : index
    %c0_229 = arith.constant 0 : index
    %c0_230 = arith.constant 0 : index
    %316 = vector.load %arg6[%c0_228, %c0_229, %c0_230] : memref<1x8x768xf32, #tpu.memory_space<vmem>>, vector<1x8x640xf32>
    %317 = vector.shape_cast %316 : vector<1x8x640xf32> to vector<8x640xf32>
    %c3_231 = arith.constant 3 : index
    %c0_232 = arith.constant 0 : index
    %318 = memref.load %arg2[%c3_231, %c0_232] : memref<16x10xf32, #tpu.memory_space<smem>>
    %319 = vector.broadcast %318 : f32 to vector<8x640xf32>
    %320 = arith.mulf %317, %319 : vector<8x640xf32>
    %c11 = arith.constant 11 : index
    %c0_233 = arith.constant 0 : index
    %321 = memref.load %arg2[%c11, %c0_233] : memref<16x10xf32, #tpu.memory_space<smem>>
    %322 = vector.broadcast %321 : f32 to vector<8x640xf32>
    %323 = arith.mulf %317, %322 : vector<8x640xf32>
    %c0_234 = arith.constant 0 : index
    %c0_235 = arith.constant 0 : index
    %c1_236 = arith.constant 1 : index
    %324 = vector.load %arg6[%c0_234, %c0_235, %c1_236] : memref<1x8x768xf32, #tpu.memory_space<vmem>>, vector<1x8x640xf32>
    %325 = vector.shape_cast %324 : vector<1x8x640xf32> to vector<8x640xf32>
    %c3_237 = arith.constant 3 : index
    %c1_238 = arith.constant 1 : index
    %326 = memref.load %arg2[%c3_237, %c1_238] : memref<16x10xf32, #tpu.memory_space<smem>>
    %327 = vector.broadcast %326 : f32 to vector<8x640xf32>
    %328 = arith.mulf %325, %327 : vector<8x640xf32>
    %329 = arith.addf %320, %328 : vector<8x640xf32>
    %c11_239 = arith.constant 11 : index
    %c1_240 = arith.constant 1 : index
    %330 = memref.load %arg2[%c11_239, %c1_240] : memref<16x10xf32, #tpu.memory_space<smem>>
    %331 = vector.broadcast %330 : f32 to vector<8x640xf32>
    %332 = arith.mulf %325, %331 : vector<8x640xf32>
    %333 = arith.addf %323, %332 : vector<8x640xf32>
    %c0_241 = arith.constant 0 : index
    %c0_242 = arith.constant 0 : index
    %c2_243 = arith.constant 2 : index
    %334 = vector.load %arg6[%c0_241, %c0_242, %c2_243] : memref<1x8x768xf32, #tpu.memory_space<vmem>>, vector<1x8x640xf32>
    %335 = vector.shape_cast %334 : vector<1x8x640xf32> to vector<8x640xf32>
    %c3_244 = arith.constant 3 : index
    %c2_245 = arith.constant 2 : index
    %336 = memref.load %arg2[%c3_244, %c2_245] : memref<16x10xf32, #tpu.memory_space<smem>>
    %337 = vector.broadcast %336 : f32 to vector<8x640xf32>
    %338 = arith.mulf %335, %337 : vector<8x640xf32>
    %339 = arith.addf %329, %338 : vector<8x640xf32>
    %c11_246 = arith.constant 11 : index
    %c2_247 = arith.constant 2 : index
    %340 = memref.load %arg2[%c11_246, %c2_247] : memref<16x10xf32, #tpu.memory_space<smem>>
    %341 = vector.broadcast %340 : f32 to vector<8x640xf32>
    %342 = arith.mulf %335, %341 : vector<8x640xf32>
    %343 = arith.addf %333, %342 : vector<8x640xf32>
    %c0_248 = arith.constant 0 : index
    %c0_249 = arith.constant 0 : index
    %c3_250 = arith.constant 3 : index
    %344 = vector.load %arg6[%c0_248, %c0_249, %c3_250] : memref<1x8x768xf32, #tpu.memory_space<vmem>>, vector<1x8x640xf32>
    %345 = vector.shape_cast %344 : vector<1x8x640xf32> to vector<8x640xf32>
    %c3_251 = arith.constant 3 : index
    %c3_252 = arith.constant 3 : index
    %346 = memref.load %arg2[%c3_251, %c3_252] : memref<16x10xf32, #tpu.memory_space<smem>>
    %347 = vector.broadcast %346 : f32 to vector<8x640xf32>
    %348 = arith.mulf %345, %347 : vector<8x640xf32>
    %349 = arith.addf %339, %348 : vector<8x640xf32>
    %c11_253 = arith.constant 11 : index
    %c3_254 = arith.constant 3 : index
    %350 = memref.load %arg2[%c11_253, %c3_254] : memref<16x10xf32, #tpu.memory_space<smem>>
    %351 = vector.broadcast %350 : f32 to vector<8x640xf32>
    %352 = arith.mulf %345, %351 : vector<8x640xf32>
    %353 = arith.addf %343, %352 : vector<8x640xf32>
    %c0_255 = arith.constant 0 : index
    %c0_256 = arith.constant 0 : index
    %c4_257 = arith.constant 4 : index
    %354 = vector.load %arg6[%c0_255, %c0_256, %c4_257] : memref<1x8x768xf32, #tpu.memory_space<vmem>>, vector<1x8x640xf32>
    %355 = vector.shape_cast %354 : vector<1x8x640xf32> to vector<8x640xf32>
    %c3_258 = arith.constant 3 : index
    %c4_259 = arith.constant 4 : index
    %356 = memref.load %arg2[%c3_258, %c4_259] : memref<16x10xf32, #tpu.memory_space<smem>>
    %357 = vector.broadcast %356 : f32 to vector<8x640xf32>
    %358 = arith.mulf %355, %357 : vector<8x640xf32>
    %359 = arith.addf %349, %358 : vector<8x640xf32>
    %c11_260 = arith.constant 11 : index
    %c4_261 = arith.constant 4 : index
    %360 = memref.load %arg2[%c11_260, %c4_261] : memref<16x10xf32, #tpu.memory_space<smem>>
    %361 = vector.broadcast %360 : f32 to vector<8x640xf32>
    %362 = arith.mulf %355, %361 : vector<8x640xf32>
    %363 = arith.addf %353, %362 : vector<8x640xf32>
    %c0_262 = arith.constant 0 : index
    %c0_263 = arith.constant 0 : index
    %c5_264 = arith.constant 5 : index
    %364 = vector.load %arg6[%c0_262, %c0_263, %c5_264] : memref<1x8x768xf32, #tpu.memory_space<vmem>>, vector<1x8x640xf32>
    %365 = vector.shape_cast %364 : vector<1x8x640xf32> to vector<8x640xf32>
    %c3_265 = arith.constant 3 : index
    %c5_266 = arith.constant 5 : index
    %366 = memref.load %arg2[%c3_265, %c5_266] : memref<16x10xf32, #tpu.memory_space<smem>>
    %367 = vector.broadcast %366 : f32 to vector<8x640xf32>
    %368 = arith.mulf %365, %367 : vector<8x640xf32>
    %369 = arith.addf %359, %368 : vector<8x640xf32>
    %c11_267 = arith.constant 11 : index
    %c5_268 = arith.constant 5 : index
    %370 = memref.load %arg2[%c11_267, %c5_268] : memref<16x10xf32, #tpu.memory_space<smem>>
    %371 = vector.broadcast %370 : f32 to vector<8x640xf32>
    %372 = arith.mulf %365, %371 : vector<8x640xf32>
    %373 = arith.addf %363, %372 : vector<8x640xf32>
    %c0_269 = arith.constant 0 : index
    %c0_270 = arith.constant 0 : index
    %c6_271 = arith.constant 6 : index
    %374 = vector.load %arg6[%c0_269, %c0_270, %c6_271] : memref<1x8x768xf32, #tpu.memory_space<vmem>>, vector<1x8x640xf32>
    %375 = vector.shape_cast %374 : vector<1x8x640xf32> to vector<8x640xf32>
    %c3_272 = arith.constant 3 : index
    %c6_273 = arith.constant 6 : index
    %376 = memref.load %arg2[%c3_272, %c6_273] : memref<16x10xf32, #tpu.memory_space<smem>>
    %377 = vector.broadcast %376 : f32 to vector<8x640xf32>
    %378 = arith.mulf %375, %377 : vector<8x640xf32>
    %379 = arith.addf %369, %378 : vector<8x640xf32>
    %c11_274 = arith.constant 11 : index
    %c6_275 = arith.constant 6 : index
    %380 = memref.load %arg2[%c11_274, %c6_275] : memref<16x10xf32, #tpu.memory_space<smem>>
    %381 = vector.broadcast %380 : f32 to vector<8x640xf32>
    %382 = arith.mulf %375, %381 : vector<8x640xf32>
    %383 = arith.addf %373, %382 : vector<8x640xf32>
    %c0_276 = arith.constant 0 : index
    %c0_277 = arith.constant 0 : index
    %c7_278 = arith.constant 7 : index
    %384 = vector.load %arg6[%c0_276, %c0_277, %c7_278] : memref<1x8x768xf32, #tpu.memory_space<vmem>>, vector<1x8x640xf32>
    %385 = vector.shape_cast %384 : vector<1x8x640xf32> to vector<8x640xf32>
    %c3_279 = arith.constant 3 : index
    %c7_280 = arith.constant 7 : index
    %386 = memref.load %arg2[%c3_279, %c7_280] : memref<16x10xf32, #tpu.memory_space<smem>>
    %387 = vector.broadcast %386 : f32 to vector<8x640xf32>
    %388 = arith.mulf %385, %387 : vector<8x640xf32>
    %389 = arith.addf %379, %388 : vector<8x640xf32>
    %c11_281 = arith.constant 11 : index
    %c7_282 = arith.constant 7 : index
    %390 = memref.load %arg2[%c11_281, %c7_282] : memref<16x10xf32, #tpu.memory_space<smem>>
    %391 = vector.broadcast %390 : f32 to vector<8x640xf32>
    %392 = arith.mulf %385, %391 : vector<8x640xf32>
    %393 = arith.addf %383, %392 : vector<8x640xf32>
    %c0_283 = arith.constant 0 : index
    %c0_284 = arith.constant 0 : index
    %c8_285 = arith.constant 8 : index
    %394 = vector.load %arg6[%c0_283, %c0_284, %c8_285] : memref<1x8x768xf32, #tpu.memory_space<vmem>>, vector<1x8x640xf32>
    %395 = vector.shape_cast %394 : vector<1x8x640xf32> to vector<8x640xf32>
    %c3_286 = arith.constant 3 : index
    %c8_287 = arith.constant 8 : index
    %396 = memref.load %arg2[%c3_286, %c8_287] : memref<16x10xf32, #tpu.memory_space<smem>>
    %397 = vector.broadcast %396 : f32 to vector<8x640xf32>
    %398 = arith.mulf %395, %397 : vector<8x640xf32>
    %399 = arith.addf %389, %398 : vector<8x640xf32>
    %c11_288 = arith.constant 11 : index
    %c8_289 = arith.constant 8 : index
    %400 = memref.load %arg2[%c11_288, %c8_289] : memref<16x10xf32, #tpu.memory_space<smem>>
    %401 = vector.broadcast %400 : f32 to vector<8x640xf32>
    %402 = arith.mulf %395, %401 : vector<8x640xf32>
    %403 = arith.addf %393, %402 : vector<8x640xf32>
    %c0_290 = arith.constant 0 : index
    %c0_291 = arith.constant 0 : index
    %c9_292 = arith.constant 9 : index
    %404 = vector.load %arg6[%c0_290, %c0_291, %c9_292] : memref<1x8x768xf32, #tpu.memory_space<vmem>>, vector<1x8x640xf32>
    %405 = vector.shape_cast %404 : vector<1x8x640xf32> to vector<8x640xf32>
    %c3_293 = arith.constant 3 : index
    %c9_294 = arith.constant 9 : index
    %406 = memref.load %arg2[%c3_293, %c9_294] : memref<16x10xf32, #tpu.memory_space<smem>>
    %407 = vector.broadcast %406 : f32 to vector<8x640xf32>
    %408 = arith.mulf %405, %407 : vector<8x640xf32>
    %409 = arith.addf %399, %408 : vector<8x640xf32>
    %c11_295 = arith.constant 11 : index
    %c9_296 = arith.constant 9 : index
    %410 = memref.load %arg2[%c11_295, %c9_296] : memref<16x10xf32, #tpu.memory_space<smem>>
    %411 = vector.broadcast %410 : f32 to vector<8x640xf32>
    %412 = arith.mulf %405, %411 : vector<8x640xf32>
    %413 = arith.addf %403, %412 : vector<8x640xf32>
    %c3_297 = arith.constant 3 : index
    %c0_298 = arith.constant 0 : index
    %c0_299 = arith.constant 0 : index
    %414 = vector.load %arg5[%c3_297, %c0_298, %c0_299] : memref<16x8x640xf32, #tpu.memory_space<vmem>>, vector<1x8x640xf32>
    %415 = vector.shape_cast %414 : vector<1x8x640xf32> to vector<8x640xf32>
    %416 = vector.shape_cast %409 : vector<8x640xf32> to vector<1x8x640xf32>
    tpu.vector_store %arg5[%c3_297, %c0_298, %c0_299], %416 {strides = array<i32>} : memref<16x8x640xf32, #tpu.memory_space<vmem>>, vector<1x8x640xf32>,
    %c11_300 = arith.constant 11 : index
    %c0_301 = arith.constant 0 : index
    %c0_302 = arith.constant 0 : index
    %417 = vector.load %arg5[%c11_300, %c0_301, %c0_302] : memref<16x8x640xf32, #tpu.memory_space<vmem>>, vector<1x8x640xf32>
    %418 = vector.shape_cast %417 : vector<1x8x640xf32> to vector<8x640xf32>
    %419 = vector.shape_cast %413 : vector<8x640xf32> to vector<1x8x640xf32>
    tpu.vector_store %arg5[%c11_300, %c0_301, %c0_302], %419 {strides = array<i32>} : memref<16x8x640xf32, #tpu.memory_space<vmem>>, vector<1x8x640xf32>,
    %c0_303 = arith.constant 0 : index
    %c0_304 = arith.constant 0 : index
    %c0_305 = arith.constant 0 : index
    %420 = vector.load %arg6[%c0_303, %c0_304, %c0_305] : memref<1x8x768xf32, #tpu.memory_space<vmem>>, vector<1x8x640xf32>
    %421 = vector.shape_cast %420 : vector<1x8x640xf32> to vector<8x640xf32>
    %c4_306 = arith.constant 4 : index
    %c0_307 = arith.constant 0 : index
    %422 = memref.load %arg2[%c4_306, %c0_307] : memref<16x10xf32, #tpu.memory_space<smem>>
    %423 = vector.broadcast %422 : f32 to vector<8x640xf32>
    %424 = arith.mulf %421, %423 : vector<8x640xf32>
    %c12 = arith.constant 12 : index
    %c0_308 = arith.constant 0 : index
    %425 = memref.load %arg2[%c12, %c0_308] : memref<16x10xf32, #tpu.memory_space<smem>>
    %426 = vector.broadcast %425 : f32 to vector<8x640xf32>
    %427 = arith.mulf %421, %426 : vector<8x640xf32>
    %c0_309 = arith.constant 0 : index
    %c0_310 = arith.constant 0 : index
    %c1_311 = arith.constant 1 : index
    %428 = vector.load %arg6[%c0_309, %c0_310, %c1_311] : memref<1x8x768xf32, #tpu.memory_space<vmem>>, vector<1x8x640xf32>
    %429 = vector.shape_cast %428 : vector<1x8x640xf32> to vector<8x640xf32>
    %c4_312 = arith.constant 4 : index
    %c1_313 = arith.constant 1 : index
    %430 = memref.load %arg2[%c4_312, %c1_313] : memref<16x10xf32, #tpu.memory_space<smem>>
    %431 = vector.broadcast %430 : f32 to vector<8x640xf32>
    %432 = arith.mulf %429, %431 : vector<8x640xf32>
    %433 = arith.addf %424, %432 : vector<8x640xf32>
    %c12_314 = arith.constant 12 : index
    %c1_315 = arith.constant 1 : index
    %434 = memref.load %arg2[%c12_314, %c1_315] : memref<16x10xf32, #tpu.memory_space<smem>>
    %435 = vector.broadcast %434 : f32 to vector<8x640xf32>
    %436 = arith.mulf %429, %435 : vector<8x640xf32>
    %437 = arith.addf %427, %436 : vector<8x640xf32>
    %c0_316 = arith.constant 0 : index
    %c0_317 = arith.constant 0 : index
    %c2_318 = arith.constant 2 : index
    %438 = vector.load %arg6[%c0_316, %c0_317, %c2_318] : memref<1x8x768xf32, #tpu.memory_space<vmem>>, vector<1x8x640xf32>
    %439 = vector.shape_cast %438 : vector<1x8x640xf32> to vector<8x640xf32>
    %c4_319 = arith.constant 4 : index
    %c2_320 = arith.constant 2 : index
    %440 = memref.load %arg2[%c4_319, %c2_320] : memref<16x10xf32, #tpu.memory_space<smem>>
    %441 = vector.broadcast %440 : f32 to vector<8x640xf32>
    %442 = arith.mulf %439, %441 : vector<8x640xf32>
    %443 = arith.addf %433, %442 : vector<8x640xf32>
    %c12_321 = arith.constant 12 : index
    %c2_322 = arith.constant 2 : index
    %444 = memref.load %arg2[%c12_321, %c2_322] : memref<16x10xf32, #tpu.memory_space<smem>>
    %445 = vector.broadcast %444 : f32 to vector<8x640xf32>
    %446 = arith.mulf %439, %445 : vector<8x640xf32>
    %447 = arith.addf %437, %446 : vector<8x640xf32>
    %c0_323 = arith.constant 0 : index
    %c0_324 = arith.constant 0 : index
    %c3_325 = arith.constant 3 : index
    %448 = vector.load %arg6[%c0_323, %c0_324, %c3_325] : memref<1x8x768xf32, #tpu.memory_space<vmem>>, vector<1x8x640xf32>
    %449 = vector.shape_cast %448 : vector<1x8x640xf32> to vector<8x640xf32>
    %c4_326 = arith.constant 4 : index
    %c3_327 = arith.constant 3 : index
    %450 = memref.load %arg2[%c4_326, %c3_327] : memref<16x10xf32, #tpu.memory_space<smem>>
    %451 = vector.broadcast %450 : f32 to vector<8x640xf32>
    %452 = arith.mulf %449, %451 : vector<8x640xf32>
    %453 = arith.addf %443, %452 : vector<8x640xf32>
    %c12_328 = arith.constant 12 : index
    %c3_329 = arith.constant 3 : index
    %454 = memref.load %arg2[%c12_328, %c3_329] : memref<16x10xf32, #tpu.memory_space<smem>>
    %455 = vector.broadcast %454 : f32 to vector<8x640xf32>
    %456 = arith.mulf %449, %455 : vector<8x640xf32>
    %457 = arith.addf %447, %456 : vector<8x640xf32>
    %c0_330 = arith.constant 0 : index
    %c0_331 = arith.constant 0 : index
    %c4_332 = arith.constant 4 : index
    %458 = vector.load %arg6[%c0_330, %c0_331, %c4_332] : memref<1x8x768xf32, #tpu.memory_space<vmem>>, vector<1x8x640xf32>
    %459 = vector.shape_cast %458 : vector<1x8x640xf32> to vector<8x640xf32>
    %c4_333 = arith.constant 4 : index
    %c4_334 = arith.constant 4 : index
    %460 = memref.load %arg2[%c4_333, %c4_334] : memref<16x10xf32, #tpu.memory_space<smem>>
    %461 = vector.broadcast %460 : f32 to vector<8x640xf32>
    %462 = arith.mulf %459, %461 : vector<8x640xf32>
    %463 = arith.addf %453, %462 : vector<8x640xf32>
    %c12_335 = arith.constant 12 : index
    %c4_336 = arith.constant 4 : index
    %464 = memref.load %arg2[%c12_335, %c4_336] : memref<16x10xf32, #tpu.memory_space<smem>>
    %465 = vector.broadcast %464 : f32 to vector<8x640xf32>
    %466 = arith.mulf %459, %465 : vector<8x640xf32>
    %467 = arith.addf %457, %466 : vector<8x640xf32>
    %c0_337 = arith.constant 0 : index
    %c0_338 = arith.constant 0 : index
    %c5_339 = arith.constant 5 : index
    %468 = vector.load %arg6[%c0_337, %c0_338, %c5_339] : memref<1x8x768xf32, #tpu.memory_space<vmem>>, vector<1x8x640xf32>
    %469 = vector.shape_cast %468 : vector<1x8x640xf32> to vector<8x640xf32>
    %c4_340 = arith.constant 4 : index
    %c5_341 = arith.constant 5 : index
    %470 = memref.load %arg2[%c4_340, %c5_341] : memref<16x10xf32, #tpu.memory_space<smem>>
    %471 = vector.broadcast %470 : f32 to vector<8x640xf32>
    %472 = arith.mulf %469, %471 : vector<8x640xf32>
    %473 = arith.addf %463, %472 : vector<8x640xf32>
    %c12_342 = arith.constant 12 : index
    %c5_343 = arith.constant 5 : index
    %474 = memref.load %arg2[%c12_342, %c5_343] : memref<16x10xf32, #tpu.memory_space<smem>>
    %475 = vector.broadcast %474 : f32 to vector<8x640xf32>
    %476 = arith.mulf %469, %475 : vector<8x640xf32>
    %477 = arith.addf %467, %476 : vector<8x640xf32>
    %c0_344 = arith.constant 0 : index
    %c0_345 = arith.constant 0 : index
    %c6_346 = arith.constant 6 : index
    %478 = vector.load %arg6[%c0_344, %c0_345, %c6_346] : memref<1x8x768xf32, #tpu.memory_space<vmem>>, vector<1x8x640xf32>
    %479 = vector.shape_cast %478 : vector<1x8x640xf32> to vector<8x640xf32>
    %c4_347 = arith.constant 4 : index
    %c6_348 = arith.constant 6 : index
    %480 = memref.load %arg2[%c4_347, %c6_348] : memref<16x10xf32, #tpu.memory_space<smem>>
    %481 = vector.broadcast %480 : f32 to vector<8x640xf32>
    %482 = arith.mulf %479, %481 : vector<8x640xf32>
    %483 = arith.addf %473, %482 : vector<8x640xf32>
    %c12_349 = arith.constant 12 : index
    %c6_350 = arith.constant 6 : index
    %484 = memref.load %arg2[%c12_349, %c6_350] : memref<16x10xf32, #tpu.memory_space<smem>>
    %485 = vector.broadcast %484 : f32 to vector<8x640xf32>
    %486 = arith.mulf %479, %485 : vector<8x640xf32>
    %487 = arith.addf %477, %486 : vector<8x640xf32>
    %c0_351 = arith.constant 0 : index
    %c0_352 = arith.constant 0 : index
    %c7_353 = arith.constant 7 : index
    %488 = vector.load %arg6[%c0_351, %c0_352, %c7_353] : memref<1x8x768xf32, #tpu.memory_space<vmem>>, vector<1x8x640xf32>
    %489 = vector.shape_cast %488 : vector<1x8x640xf32> to vector<8x640xf32>
    %c4_354 = arith.constant 4 : index
    %c7_355 = arith.constant 7 : index
    %490 = memref.load %arg2[%c4_354, %c7_355] : memref<16x10xf32, #tpu.memory_space<smem>>
    %491 = vector.broadcast %490 : f32 to vector<8x640xf32>
    %492 = arith.mulf %489, %491 : vector<8x640xf32>
    %493 = arith.addf %483, %492 : vector<8x640xf32>
    %c12_356 = arith.constant 12 : index
    %c7_357 = arith.constant 7 : index
    %494 = memref.load %arg2[%c12_356, %c7_357] : memref<16x10xf32, #tpu.memory_space<smem>>
    %495 = vector.broadcast %494 : f32 to vector<8x640xf32>
    %496 = arith.mulf %489, %495 : vector<8x640xf32>
    %497 = arith.addf %487, %496 : vector<8x640xf32>
    %c0_358 = arith.constant 0 : index
    %c0_359 = arith.constant 0 : index
    %c8_360 = arith.constant 8 : index
    %498 = vector.load %arg6[%c0_358, %c0_359, %c8_360] : memref<1x8x768xf32, #tpu.memory_space<vmem>>, vector<1x8x640xf32>
    %499 = vector.shape_cast %498 : vector<1x8x640xf32> to vector<8x640xf32>
    %c4_361 = arith.constant 4 : index
    %c8_362 = arith.constant 8 : index
    %500 = memref.load %arg2[%c4_361, %c8_362] : memref<16x10xf32, #tpu.memory_space<smem>>
    %501 = vector.broadcast %500 : f32 to vector<8x640xf32>
    %502 = arith.mulf %499, %501 : vector<8x640xf32>
    %503 = arith.addf %493, %502 : vector<8x640xf32>
    %c12_363 = arith.constant 12 : index
    %c8_364 = arith.constant 8 : index
    %504 = memref.load %arg2[%c12_363, %c8_364] : memref<16x10xf32, #tpu.memory_space<smem>>
    %505 = vector.broadcast %504 : f32 to vector<8x640xf32>
    %506 = arith.mulf %499, %505 : vector<8x640xf32>
    %507 = arith.addf %497, %506 : vector<8x640xf32>
    %c0_365 = arith.constant 0 : index
    %c0_366 = arith.constant 0 : index
    %c9_367 = arith.constant 9 : index
    %508 = vector.load %arg6[%c0_365, %c0_366, %c9_367] : memref<1x8x768xf32, #tpu.memory_space<vmem>>, vector<1x8x640xf32>
    %509 = vector.shape_cast %508 : vector<1x8x640xf32> to vector<8x640xf32>
    %c4_368 = arith.constant 4 : index
    %c9_369 = arith.constant 9 : index
    %510 = memref.load %arg2[%c4_368, %c9_369] : memref<16x10xf32, #tpu.memory_space<smem>>
    %511 = vector.broadcast %510 : f32 to vector<8x640xf32>
    %512 = arith.mulf %509, %511 : vector<8x640xf32>
    %513 = arith.addf %503, %512 : vector<8x640xf32>
    %c12_370 = arith.constant 12 : index
    %c9_371 = arith.constant 9 : index
    %514 = memref.load %arg2[%c12_370, %c9_371] : memref<16x10xf32, #tpu.memory_space<smem>>
    %515 = vector.broadcast %514 : f32 to vector<8x640xf32>
    %516 = arith.mulf %509, %515 : vector<8x640xf32>
    %517 = arith.addf %507, %516 : vector<8x640xf32>
    %c4_372 = arith.constant 4 : index
    %c0_373 = arith.constant 0 : index
    %c0_374 = arith.constant 0 : index
    %518 = vector.load %arg5[%c4_372, %c0_373, %c0_374] : memref<16x8x640xf32, #tpu.memory_space<vmem>>, vector<1x8x640xf32>
    %519 = vector.shape_cast %518 : vector<1x8x640xf32> to vector<8x640xf32>
    %520 = vector.shape_cast %513 : vector<8x640xf32> to vector<1x8x640xf32>
    tpu.vector_store %arg5[%c4_372, %c0_373, %c0_374], %520 {strides = array<i32>} : memref<16x8x640xf32, #tpu.memory_space<vmem>>, vector<1x8x640xf32>,
    %c12_375 = arith.constant 12 : index
    %c0_376 = arith.constant 0 : index
    %c0_377 = arith.constant 0 : index
    %521 = vector.load %arg5[%c12_375, %c0_376, %c0_377] : memref<16x8x640xf32, #tpu.memory_space<vmem>>, vector<1x8x640xf32>
    %522 = vector.shape_cast %521 : vector<1x8x640xf32> to vector<8x640xf32>
    %523 = vector.shape_cast %517 : vector<8x640xf32> to vector<1x8x640xf32>
    tpu.vector_store %arg5[%c12_375, %c0_376, %c0_377], %523 {strides = array<i32>} : memref<16x8x640xf32, #tpu.memory_space<vmem>>, vector<1x8x640xf32>,
    %c0_378 = arith.constant 0 : index
    %c0_379 = arith.constant 0 : index
    %c0_380 = arith.constant 0 : index
    %524 = vector.load %arg6[%c0_378, %c0_379, %c0_380] : memref<1x8x768xf32, #tpu.memory_space<vmem>>, vector<1x8x640xf32>
    %525 = vector.shape_cast %524 : vector<1x8x640xf32> to vector<8x640xf32>
    %c5_381 = arith.constant 5 : index
    %c0_382 = arith.constant 0 : index
    %526 = memref.load %arg2[%c5_381, %c0_382] : memref<16x10xf32, #tpu.memory_space<smem>>
    %527 = vector.broadcast %526 : f32 to vector<8x640xf32>
    %528 = arith.mulf %525, %527 : vector<8x640xf32>
    %c13 = arith.constant 13 : index
    %c0_383 = arith.constant 0 : index
    %529 = memref.load %arg2[%c13, %c0_383] : memref<16x10xf32, #tpu.memory_space<smem>>
    %530 = vector.broadcast %529 : f32 to vector<8x640xf32>
    %531 = arith.mulf %525, %530 : vector<8x640xf32>
    %c0_384 = arith.constant 0 : index
    %c0_385 = arith.constant 0 : index
    %c1_386 = arith.constant 1 : index
    %532 = vector.load %arg6[%c0_384, %c0_385, %c1_386] : memref<1x8x768xf32, #tpu.memory_space<vmem>>, vector<1x8x640xf32>
    %533 = vector.shape_cast %532 : vector<1x8x640xf32> to vector<8x640xf32>
    %c5_387 = arith.constant 5 : index
    %c1_388 = arith.constant 1 : index
    %534 = memref.load %arg2[%c5_387, %c1_388] : memref<16x10xf32, #tpu.memory_space<smem>>
    %535 = vector.broadcast %534 : f32 to vector<8x640xf32>
    %536 = arith.mulf %533, %535 : vector<8x640xf32>
    %537 = arith.addf %528, %536 : vector<8x640xf32>
    %c13_389 = arith.constant 13 : index
    %c1_390 = arith.constant 1 : index
    %538 = memref.load %arg2[%c13_389, %c1_390] : memref<16x10xf32, #tpu.memory_space<smem>>
    %539 = vector.broadcast %538 : f32 to vector<8x640xf32>
    %540 = arith.mulf %533, %539 : vector<8x640xf32>
    %541 = arith.addf %531, %540 : vector<8x640xf32>
    %c0_391 = arith.constant 0 : index
    %c0_392 = arith.constant 0 : index
    %c2_393 = arith.constant 2 : index
    %542 = vector.load %arg6[%c0_391, %c0_392, %c2_393] : memref<1x8x768xf32, #tpu.memory_space<vmem>>, vector<1x8x640xf32>
    %543 = vector.shape_cast %542 : vector<1x8x640xf32> to vector<8x640xf32>
    %c5_394 = arith.constant 5 : index
    %c2_395 = arith.constant 2 : index
    %544 = memref.load %arg2[%c5_394, %c2_395] : memref<16x10xf32, #tpu.memory_space<smem>>
    %545 = vector.broadcast %544 : f32 to vector<8x640xf32>
    %546 = arith.mulf %543, %545 : vector<8x640xf32>
    %547 = arith.addf %537, %546 : vector<8x640xf32>
    %c13_396 = arith.constant 13 : index
    %c2_397 = arith.constant 2 : index
    %548 = memref.load %arg2[%c13_396, %c2_397] : memref<16x10xf32, #tpu.memory_space<smem>>
    %549 = vector.broadcast %548 : f32 to vector<8x640xf32>
    %550 = arith.mulf %543, %549 : vector<8x640xf32>
    %551 = arith.addf %541, %550 : vector<8x640xf32>
    %c0_398 = arith.constant 0 : index
    %c0_399 = arith.constant 0 : index
    %c3_400 = arith.constant 3 : index
    %552 = vector.load %arg6[%c0_398, %c0_399, %c3_400] : memref<1x8x768xf32, #tpu.memory_space<vmem>>, vector<1x8x640xf32>
    %553 = vector.shape_cast %552 : vector<1x8x640xf32> to vector<8x640xf32>
    %c5_401 = arith.constant 5 : index
    %c3_402 = arith.constant 3 : index
    %554 = memref.load %arg2[%c5_401, %c3_402] : memref<16x10xf32, #tpu.memory_space<smem>>
    %555 = vector.broadcast %554 : f32 to vector<8x640xf32>
    %556 = arith.mulf %553, %555 : vector<8x640xf32>
    %557 = arith.addf %547, %556 : vector<8x640xf32>
    %c13_403 = arith.constant 13 : index
    %c3_404 = arith.constant 3 : index
    %558 = memref.load %arg2[%c13_403, %c3_404] : memref<16x10xf32, #tpu.memory_space<smem>>
    %559 = vector.broadcast %558 : f32 to vector<8x640xf32>
    %560 = arith.mulf %553, %559 : vector<8x640xf32>
    %561 = arith.addf %551, %560 : vector<8x640xf32>
    %c0_405 = arith.constant 0 : index
    %c0_406 = arith.constant 0 : index
    %c4_407 = arith.constant 4 : index
    %562 = vector.load %arg6[%c0_405, %c0_406, %c4_407] : memref<1x8x768xf32, #tpu.memory_space<vmem>>, vector<1x8x640xf32>
    %563 = vector.shape_cast %562 : vector<1x8x640xf32> to vector<8x640xf32>
    %c5_408 = arith.constant 5 : index
    %c4_409 = arith.constant 4 : index
    %564 = memref.load %arg2[%c5_408, %c4_409] : memref<16x10xf32, #tpu.memory_space<smem>>
    %565 = vector.broadcast %564 : f32 to vector<8x640xf32>
    %566 = arith.mulf %563, %565 : vector<8x640xf32>
    %567 = arith.addf %557, %566 : vector<8x640xf32>
    %c13_410 = arith.constant 13 : index
    %c4_411 = arith.constant 4 : index
    %568 = memref.load %arg2[%c13_410, %c4_411] : memref<16x10xf32, #tpu.memory_space<smem>>
    %569 = vector.broadcast %568 : f32 to vector<8x640xf32>
    %570 = arith.mulf %563, %569 : vector<8x640xf32>
    %571 = arith.addf %561, %570 : vector<8x640xf32>
    %c0_412 = arith.constant 0 : index
    %c0_413 = arith.constant 0 : index
    %c5_414 = arith.constant 5 : index
    %572 = vector.load %arg6[%c0_412, %c0_413, %c5_414] : memref<1x8x768xf32, #tpu.memory_space<vmem>>, vector<1x8x640xf32>
    %573 = vector.shape_cast %572 : vector<1x8x640xf32> to vector<8x640xf32>
    %c5_415 = arith.constant 5 : index
    %c5_416 = arith.constant 5 : index
    %574 = memref.load %arg2[%c5_415, %c5_416] : memref<16x10xf32, #tpu.memory_space<smem>>
    %575 = vector.broadcast %574 : f32 to vector<8x640xf32>
    %576 = arith.mulf %573, %575 : vector<8x640xf32>
    %577 = arith.addf %567, %576 : vector<8x640xf32>
    %c13_417 = arith.constant 13 : index
    %c5_418 = arith.constant 5 : index
    %578 = memref.load %arg2[%c13_417, %c5_418] : memref<16x10xf32, #tpu.memory_space<smem>>
    %579 = vector.broadcast %578 : f32 to vector<8x640xf32>
    %580 = arith.mulf %573, %579 : vector<8x640xf32>
    %581 = arith.addf %571, %580 : vector<8x640xf32>
    %c0_419 = arith.constant 0 : index
    %c0_420 = arith.constant 0 : index
    %c6_421 = arith.constant 6 : index
    %582 = vector.load %arg6[%c0_419, %c0_420, %c6_421] : memref<1x8x768xf32, #tpu.memory_space<vmem>>, vector<1x8x640xf32>
    %583 = vector.shape_cast %582 : vector<1x8x640xf32> to vector<8x640xf32>
    %c5_422 = arith.constant 5 : index
    %c6_423 = arith.constant 6 : index
    %584 = memref.load %arg2[%c5_422, %c6_423] : memref<16x10xf32, #tpu.memory_space<smem>>
    %585 = vector.broadcast %584 : f32 to vector<8x640xf32>
    %586 = arith.mulf %583, %585 : vector<8x640xf32>
    %587 = arith.addf %577, %586 : vector<8x640xf32>
    %c13_424 = arith.constant 13 : index
    %c6_425 = arith.constant 6 : index
    %588 = memref.load %arg2[%c13_424, %c6_425] : memref<16x10xf32, #tpu.memory_space<smem>>
    %589 = vector.broadcast %588 : f32 to vector<8x640xf32>
    %590 = arith.mulf %583, %589 : vector<8x640xf32>
    %591 = arith.addf %581, %590 : vector<8x640xf32>
    %c0_426 = arith.constant 0 : index
    %c0_427 = arith.constant 0 : index
    %c7_428 = arith.constant 7 : index
    %592 = vector.load %arg6[%c0_426, %c0_427, %c7_428] : memref<1x8x768xf32, #tpu.memory_space<vmem>>, vector<1x8x640xf32>
    %593 = vector.shape_cast %592 : vector<1x8x640xf32> to vector<8x640xf32>
    %c5_429 = arith.constant 5 : index
    %c7_430 = arith.constant 7 : index
    %594 = memref.load %arg2[%c5_429, %c7_430] : memref<16x10xf32, #tpu.memory_space<smem>>
    %595 = vector.broadcast %594 : f32 to vector<8x640xf32>
    %596 = arith.mulf %593, %595 : vector<8x640xf32>
    %597 = arith.addf %587, %596 : vector<8x640xf32>
    %c13_431 = arith.constant 13 : index
    %c7_432 = arith.constant 7 : index
    %598 = memref.load %arg2[%c13_431, %c7_432] : memref<16x10xf32, #tpu.memory_space<smem>>
    %599 = vector.broadcast %598 : f32 to vector<8x640xf32>
    %600 = arith.mulf %593, %599 : vector<8x640xf32>
    %601 = arith.addf %591, %600 : vector<8x640xf32>
    %c0_433 = arith.constant 0 : index
    %c0_434 = arith.constant 0 : index
    %c8_435 = arith.constant 8 : index
    %602 = vector.load %arg6[%c0_433, %c0_434, %c8_435] : memref<1x8x768xf32, #tpu.memory_space<vmem>>, vector<1x8x640xf32>
    %603 = vector.shape_cast %602 : vector<1x8x640xf32> to vector<8x640xf32>
    %c5_436 = arith.constant 5 : index
    %c8_437 = arith.constant 8 : index
    %604 = memref.load %arg2[%c5_436, %c8_437] : memref<16x10xf32, #tpu.memory_space<smem>>
    %605 = vector.broadcast %604 : f32 to vector<8x640xf32>
    %606 = arith.mulf %603, %605 : vector<8x640xf32>
    %607 = arith.addf %597, %606 : vector<8x640xf32>
    %c13_438 = arith.constant 13 : index
    %c8_439 = arith.constant 8 : index
    %608 = memref.load %arg2[%c13_438, %c8_439] : memref<16x10xf32, #tpu.memory_space<smem>>
    %609 = vector.broadcast %608 : f32 to vector<8x640xf32>
    %610 = arith.mulf %603, %609 : vector<8x640xf32>
    %611 = arith.addf %601, %610 : vector<8x640xf32>
    %c0_440 = arith.constant 0 : index
    %c0_441 = arith.constant 0 : index
    %c9_442 = arith.constant 9 : index
    %612 = vector.load %arg6[%c0_440, %c0_441, %c9_442] : memref<1x8x768xf32, #tpu.memory_space<vmem>>, vector<1x8x640xf32>
    %613 = vector.shape_cast %612 : vector<1x8x640xf32> to vector<8x640xf32>
    %c5_443 = arith.constant 5 : index
    %c9_444 = arith.constant 9 : index
    %614 = memref.load %arg2[%c5_443, %c9_444] : memref<16x10xf32, #tpu.memory_space<smem>>
    %615 = vector.broadcast %614 : f32 to vector<8x640xf32>
    %616 = arith.mulf %613, %615 : vector<8x640xf32>
    %617 = arith.addf %607, %616 : vector<8x640xf32>
    %c13_445 = arith.constant 13 : index
    %c9_446 = arith.constant 9 : index
    %618 = memref.load %arg2[%c13_445, %c9_446] : memref<16x10xf32, #tpu.memory_space<smem>>
    %619 = vector.broadcast %618 : f32 to vector<8x640xf32>
    %620 = arith.mulf %613, %619 : vector<8x640xf32>
    %621 = arith.addf %611, %620 : vector<8x640xf32>
    %c5_447 = arith.constant 5 : index
    %c0_448 = arith.constant 0 : index
    %c0_449 = arith.constant 0 : index
    %622 = vector.load %arg5[%c5_447, %c0_448, %c0_449] : memref<16x8x640xf32, #tpu.memory_space<vmem>>, vector<1x8x640xf32>
    %623 = vector.shape_cast %622 : vector<1x8x640xf32> to vector<8x640xf32>
    %624 = vector.shape_cast %617 : vector<8x640xf32> to vector<1x8x640xf32>
    tpu.vector_store %arg5[%c5_447, %c0_448, %c0_449], %624 {strides = array<i32>} : memref<16x8x640xf32, #tpu.memory_space<vmem>>, vector<1x8x640xf32>,
    %c13_450 = arith.constant 13 : index
    %c0_451 = arith.constant 0 : index
    %c0_452 = arith.constant 0 : index
    %625 = vector.load %arg5[%c13_450, %c0_451, %c0_452] : memref<16x8x640xf32, #tpu.memory_space<vmem>>, vector<1x8x640xf32>
    %626 = vector.shape_cast %625 : vector<1x8x640xf32> to vector<8x640xf32>
    %627 = vector.shape_cast %621 : vector<8x640xf32> to vector<1x8x640xf32>
    tpu.vector_store %arg5[%c13_450, %c0_451, %c0_452], %627 {strides = array<i32>} : memref<16x8x640xf32, #tpu.memory_space<vmem>>, vector<1x8x640xf32>,
    %c0_453 = arith.constant 0 : index
    %c0_454 = arith.constant 0 : index
    %c0_455 = arith.constant 0 : index
    %628 = vector.load %arg6[%c0_453, %c0_454, %c0_455] : memref<1x8x768xf32, #tpu.memory_space<vmem>>, vector<1x8x640xf32>
    %629 = vector.shape_cast %628 : vector<1x8x640xf32> to vector<8x640xf32>
    %c6_456 = arith.constant 6 : index
    %c0_457 = arith.constant 0 : index
    %630 = memref.load %arg2[%c6_456, %c0_457] : memref<16x10xf32, #tpu.memory_space<smem>>
    %631 = vector.broadcast %630 : f32 to vector<8x640xf32>
    %632 = arith.mulf %629, %631 : vector<8x640xf32>
    %c14 = arith.constant 14 : index
    %c0_458 = arith.constant 0 : index
    %633 = memref.load %arg2[%c14, %c0_458] : memref<16x10xf32, #tpu.memory_space<smem>>
    %634 = vector.broadcast %633 : f32 to vector<8x640xf32>
    %635 = arith.mulf %629, %634 : vector<8x640xf32>
    %c0_459 = arith.constant 0 : index
    %c0_460 = arith.constant 0 : index
    %c1_461 = arith.constant 1 : index
    %636 = vector.load %arg6[%c0_459, %c0_460, %c1_461] : memref<1x8x768xf32, #tpu.memory_space<vmem>>, vector<1x8x640xf32>
    %637 = vector.shape_cast %636 : vector<1x8x640xf32> to vector<8x640xf32>
    %c6_462 = arith.constant 6 : index
    %c1_463 = arith.constant 1 : index
    %638 = memref.load %arg2[%c6_462, %c1_463] : memref<16x10xf32, #tpu.memory_space<smem>>
    %639 = vector.broadcast %638 : f32 to vector<8x640xf32>
    %640 = arith.mulf %637, %639 : vector<8x640xf32>
    %641 = arith.addf %632, %640 : vector<8x640xf32>
    %c14_464 = arith.constant 14 : index
    %c1_465 = arith.constant 1 : index
    %642 = memref.load %arg2[%c14_464, %c1_465] : memref<16x10xf32, #tpu.memory_space<smem>>
    %643 = vector.broadcast %642 : f32 to vector<8x640xf32>
    %644 = arith.mulf %637, %643 : vector<8x640xf32>
    %645 = arith.addf %635, %644 : vector<8x640xf32>
    %c0_466 = arith.constant 0 : index
    %c0_467 = arith.constant 0 : index
    %c2_468 = arith.constant 2 : index
    %646 = vector.load %arg6[%c0_466, %c0_467, %c2_468] : memref<1x8x768xf32, #tpu.memory_space<vmem>>, vector<1x8x640xf32>
    %647 = vector.shape_cast %646 : vector<1x8x640xf32> to vector<8x640xf32>
    %c6_469 = arith.constant 6 : index
    %c2_470 = arith.constant 2 : index
    %648 = memref.load %arg2[%c6_469, %c2_470] : memref<16x10xf32, #tpu.memory_space<smem>>
    %649 = vector.broadcast %648 : f32 to vector<8x640xf32>
    %650 = arith.mulf %647, %649 : vector<8x640xf32>
    %651 = arith.addf %641, %650 : vector<8x640xf32>
    %c14_471 = arith.constant 14 : index
    %c2_472 = arith.constant 2 : index
    %652 = memref.load %arg2[%c14_471, %c2_472] : memref<16x10xf32, #tpu.memory_space<smem>>
    %653 = vector.broadcast %652 : f32 to vector<8x640xf32>
    %654 = arith.mulf %647, %653 : vector<8x640xf32>
    %655 = arith.addf %645, %654 : vector<8x640xf32>
    %c0_473 = arith.constant 0 : index
    %c0_474 = arith.constant 0 : index
    %c3_475 = arith.constant 3 : index
    %656 = vector.load %arg6[%c0_473, %c0_474, %c3_475] : memref<1x8x768xf32, #tpu.memory_space<vmem>>, vector<1x8x640xf32>
    %657 = vector.shape_cast %656 : vector<1x8x640xf32> to vector<8x640xf32>
    %c6_476 = arith.constant 6 : index
    %c3_477 = arith.constant 3 : index
    %658 = memref.load %arg2[%c6_476, %c3_477] : memref<16x10xf32, #tpu.memory_space<smem>>
    %659 = vector.broadcast %658 : f32 to vector<8x640xf32>
    %660 = arith.mulf %657, %659 : vector<8x640xf32>
    %661 = arith.addf %651, %660 : vector<8x640xf32>
    %c14_478 = arith.constant 14 : index
    %c3_479 = arith.constant 3 : index
    %662 = memref.load %arg2[%c14_478, %c3_479] : memref<16x10xf32, #tpu.memory_space<smem>>
    %663 = vector.broadcast %662 : f32 to vector<8x640xf32>
    %664 = arith.mulf %657, %663 : vector<8x640xf32>
    %665 = arith.addf %655, %664 : vector<8x640xf32>
    %c0_480 = arith.constant 0 : index
    %c0_481 = arith.constant 0 : index
    %c4_482 = arith.constant 4 : index
    %666 = vector.load %arg6[%c0_480, %c0_481, %c4_482] : memref<1x8x768xf32, #tpu.memory_space<vmem>>, vector<1x8x640xf32>
    %667 = vector.shape_cast %666 : vector<1x8x640xf32> to vector<8x640xf32>
    %c6_483 = arith.constant 6 : index
    %c4_484 = arith.constant 4 : index
    %668 = memref.load %arg2[%c6_483, %c4_484] : memref<16x10xf32, #tpu.memory_space<smem>>
    %669 = vector.broadcast %668 : f32 to vector<8x640xf32>
    %670 = arith.mulf %667, %669 : vector<8x640xf32>
    %671 = arith.addf %661, %670 : vector<8x640xf32>
    %c14_485 = arith.constant 14 : index
    %c4_486 = arith.constant 4 : index
    %672 = memref.load %arg2[%c14_485, %c4_486] : memref<16x10xf32, #tpu.memory_space<smem>>
    %673 = vector.broadcast %672 : f32 to vector<8x640xf32>
    %674 = arith.mulf %667, %673 : vector<8x640xf32>
    %675 = arith.addf %665, %674 : vector<8x640xf32>
    %c0_487 = arith.constant 0 : index
    %c0_488 = arith.constant 0 : index
    %c5_489 = arith.constant 5 : index
    %676 = vector.load %arg6[%c0_487, %c0_488, %c5_489] : memref<1x8x768xf32, #tpu.memory_space<vmem>>, vector<1x8x640xf32>
    %677 = vector.shape_cast %676 : vector<1x8x640xf32> to vector<8x640xf32>
    %c6_490 = arith.constant 6 : index
    %c5_491 = arith.constant 5 : index
    %678 = memref.load %arg2[%c6_490, %c5_491] : memref<16x10xf32, #tpu.memory_space<smem>>
    %679 = vector.broadcast %678 : f32 to vector<8x640xf32>
    %680 = arith.mulf %677, %679 : vector<8x640xf32>
    %681 = arith.addf %671, %680 : vector<8x640xf32>
    %c14_492 = arith.constant 14 : index
    %c5_493 = arith.constant 5 : index
    %682 = memref.load %arg2[%c14_492, %c5_493] : memref<16x10xf32, #tpu.memory_space<smem>>
    %683 = vector.broadcast %682 : f32 to vector<8x640xf32>
    %684 = arith.mulf %677, %683 : vector<8x640xf32>
    %685 = arith.addf %675, %684 : vector<8x640xf32>
    %c0_494 = arith.constant 0 : index
    %c0_495 = arith.constant 0 : index
    %c6_496 = arith.constant 6 : index
    %686 = vector.load %arg6[%c0_494, %c0_495, %c6_496] : memref<1x8x768xf32, #tpu.memory_space<vmem>>, vector<1x8x640xf32>
    %687 = vector.shape_cast %686 : vector<1x8x640xf32> to vector<8x640xf32>
    %c6_497 = arith.constant 6 : index
    %c6_498 = arith.constant 6 : index
    %688 = memref.load %arg2[%c6_497, %c6_498] : memref<16x10xf32, #tpu.memory_space<smem>>
    %689 = vector.broadcast %688 : f32 to vector<8x640xf32>
    %690 = arith.mulf %687, %689 : vector<8x640xf32>
    %691 = arith.addf %681, %690 : vector<8x640xf32>
    %c14_499 = arith.constant 14 : index
    %c6_500 = arith.constant 6 : index
    %692 = memref.load %arg2[%c14_499, %c6_500] : memref<16x10xf32, #tpu.memory_space<smem>>
    %693 = vector.broadcast %692 : f32 to vector<8x640xf32>
    %694 = arith.mulf %687, %693 : vector<8x640xf32>
    %695 = arith.addf %685, %694 : vector<8x640xf32>
    %c0_501 = arith.constant 0 : index
    %c0_502 = arith.constant 0 : index
    %c7_503 = arith.constant 7 : index
    %696 = vector.load %arg6[%c0_501, %c0_502, %c7_503] : memref<1x8x768xf32, #tpu.memory_space<vmem>>, vector<1x8x640xf32>
    %697 = vector.shape_cast %696 : vector<1x8x640xf32> to vector<8x640xf32>
    %c6_504 = arith.constant 6 : index
    %c7_505 = arith.constant 7 : index
    %698 = memref.load %arg2[%c6_504, %c7_505] : memref<16x10xf32, #tpu.memory_space<smem>>
    %699 = vector.broadcast %698 : f32 to vector<8x640xf32>
    %700 = arith.mulf %697, %699 : vector<8x640xf32>
    %701 = arith.addf %691, %700 : vector<8x640xf32>
    %c14_506 = arith.constant 14 : index
    %c7_507 = arith.constant 7 : index
    %702 = memref.load %arg2[%c14_506, %c7_507] : memref<16x10xf32, #tpu.memory_space<smem>>
    %703 = vector.broadcast %702 : f32 to vector<8x640xf32>
    %704 = arith.mulf %697, %703 : vector<8x640xf32>
    %705 = arith.addf %695, %704 : vector<8x640xf32>
    %c0_508 = arith.constant 0 : index
    %c0_509 = arith.constant 0 : index
    %c8_510 = arith.constant 8 : index
    %706 = vector.load %arg6[%c0_508, %c0_509, %c8_510] : memref<1x8x768xf32, #tpu.memory_space<vmem>>, vector<1x8x640xf32>
    %707 = vector.shape_cast %706 : vector<1x8x640xf32> to vector<8x640xf32>
    %c6_511 = arith.constant 6 : index
    %c8_512 = arith.constant 8 : index
    %708 = memref.load %arg2[%c6_511, %c8_512] : memref<16x10xf32, #tpu.memory_space<smem>>
    %709 = vector.broadcast %708 : f32 to vector<8x640xf32>
    %710 = arith.mulf %707, %709 : vector<8x640xf32>
    %711 = arith.addf %701, %710 : vector<8x640xf32>
    %c14_513 = arith.constant 14 : index
    %c8_514 = arith.constant 8 : index
    %712 = memref.load %arg2[%c14_513, %c8_514] : memref<16x10xf32, #tpu.memory_space<smem>>
    %713 = vector.broadcast %712 : f32 to vector<8x640xf32>
    %714 = arith.mulf %707, %713 : vector<8x640xf32>
    %715 = arith.addf %705, %714 : vector<8x640xf32>
    %c0_515 = arith.constant 0 : index
    %c0_516 = arith.constant 0 : index
    %c9_517 = arith.constant 9 : index
    %716 = vector.load %arg6[%c0_515, %c0_516, %c9_517] : memref<1x8x768xf32, #tpu.memory_space<vmem>>, vector<1x8x640xf32>
    %717 = vector.shape_cast %716 : vector<1x8x640xf32> to vector<8x640xf32>
    %c6_518 = arith.constant 6 : index
    %c9_519 = arith.constant 9 : index
    %718 = memref.load %arg2[%c6_518, %c9_519] : memref<16x10xf32, #tpu.memory_space<smem>>
    %719 = vector.broadcast %718 : f32 to vector<8x640xf32>
    %720 = arith.mulf %717, %719 : vector<8x640xf32>
    %721 = arith.addf %711, %720 : vector<8x640xf32>
    %c14_520 = arith.constant 14 : index
    %c9_521 = arith.constant 9 : index
    %722 = memref.load %arg2[%c14_520, %c9_521] : memref<16x10xf32, #tpu.memory_space<smem>>
    %723 = vector.broadcast %722 : f32 to vector<8x640xf32>
    %724 = arith.mulf %717, %723 : vector<8x640xf32>
    %725 = arith.addf %715, %724 : vector<8x640xf32>
    %c6_522 = arith.constant 6 : index
    %c0_523 = arith.constant 0 : index
    %c0_524 = arith.constant 0 : index
    %726 = vector.load %arg5[%c6_522, %c0_523, %c0_524] : memref<16x8x640xf32, #tpu.memory_space<vmem>>, vector<1x8x640xf32>
    %727 = vector.shape_cast %726 : vector<1x8x640xf32> to vector<8x640xf32>
    %728 = vector.shape_cast %721 : vector<8x640xf32> to vector<1x8x640xf32>
    tpu.vector_store %arg5[%c6_522, %c0_523, %c0_524], %728 {strides = array<i32>} : memref<16x8x640xf32, #tpu.memory_space<vmem>>, vector<1x8x640xf32>,
    %c14_525 = arith.constant 14 : index
    %c0_526 = arith.constant 0 : index
    %c0_527 = arith.constant 0 : index
    %729 = vector.load %arg5[%c14_525, %c0_526, %c0_527] : memref<16x8x640xf32, #tpu.memory_space<vmem>>, vector<1x8x640xf32>
    %730 = vector.shape_cast %729 : vector<1x8x640xf32> to vector<8x640xf32>
    %731 = vector.shape_cast %725 : vector<8x640xf32> to vector<1x8x640xf32>
    tpu.vector_store %arg5[%c14_525, %c0_526, %c0_527], %731 {strides = array<i32>} : memref<16x8x640xf32, #tpu.memory_space<vmem>>, vector<1x8x640xf32>,
    %c0_528 = arith.constant 0 : index
    %c0_529 = arith.constant 0 : index
    %c0_530 = arith.constant 0 : index
    %732 = vector.load %arg6[%c0_528, %c0_529, %c0_530] : memref<1x8x768xf32, #tpu.memory_space<vmem>>, vector<1x8x640xf32>
    %733 = vector.shape_cast %732 : vector<1x8x640xf32> to vector<8x640xf32>
    %c7_531 = arith.constant 7 : index
    %c0_532 = arith.constant 0 : index
    %734 = memref.load %arg2[%c7_531, %c0_532] : memref<16x10xf32, #tpu.memory_space<smem>>
    %735 = vector.broadcast %734 : f32 to vector<8x640xf32>
    %736 = arith.mulf %733, %735 : vector<8x640xf32>
    %c15 = arith.constant 15 : index
    %c0_533 = arith.constant 0 : index
    %737 = memref.load %arg2[%c15, %c0_533] : memref<16x10xf32, #tpu.memory_space<smem>>
    %738 = vector.broadcast %737 : f32 to vector<8x640xf32>
    %739 = arith.mulf %733, %738 : vector<8x640xf32>
    %c0_534 = arith.constant 0 : index
    %c0_535 = arith.constant 0 : index
    %c1_536 = arith.constant 1 : index
    %740 = vector.load %arg6[%c0_534, %c0_535, %c1_536] : memref<1x8x768xf32, #tpu.memory_space<vmem>>, vector<1x8x640xf32>
    %741 = vector.shape_cast %740 : vector<1x8x640xf32> to vector<8x640xf32>
    %c7_537 = arith.constant 7 : index
    %c1_538 = arith.constant 1 : index
    %742 = memref.load %arg2[%c7_537, %c1_538] : memref<16x10xf32, #tpu.memory_space<smem>>
    %743 = vector.broadcast %742 : f32 to vector<8x640xf32>
    %744 = arith.mulf %741, %743 : vector<8x640xf32>
    %745 = arith.addf %736, %744 : vector<8x640xf32>
    %c15_539 = arith.constant 15 : index
    %c1_540 = arith.constant 1 : index
    %746 = memref.load %arg2[%c15_539, %c1_540] : memref<16x10xf32, #tpu.memory_space<smem>>
    %747 = vector.broadcast %746 : f32 to vector<8x640xf32>
    %748 = arith.mulf %741, %747 : vector<8x640xf32>
    %749 = arith.addf %739, %748 : vector<8x640xf32>
    %c0_541 = arith.constant 0 : index
    %c0_542 = arith.constant 0 : index
    %c2_543 = arith.constant 2 : index
    %750 = vector.load %arg6[%c0_541, %c0_542, %c2_543] : memref<1x8x768xf32, #tpu.memory_space<vmem>>, vector<1x8x640xf32>
    %751 = vector.shape_cast %750 : vector<1x8x640xf32> to vector<8x640xf32>
    %c7_544 = arith.constant 7 : index
    %c2_545 = arith.constant 2 : index
    %752 = memref.load %arg2[%c7_544, %c2_545] : memref<16x10xf32, #tpu.memory_space<smem>>
    %753 = vector.broadcast %752 : f32 to vector<8x640xf32>
    %754 = arith.mulf %751, %753 : vector<8x640xf32>
    %755 = arith.addf %745, %754 : vector<8x640xf32>
    %c15_546 = arith.constant 15 : index
    %c2_547 = arith.constant 2 : index
    %756 = memref.load %arg2[%c15_546, %c2_547] : memref<16x10xf32, #tpu.memory_space<smem>>
    %757 = vector.broadcast %756 : f32 to vector<8x640xf32>
    %758 = arith.mulf %751, %757 : vector<8x640xf32>
    %759 = arith.addf %749, %758 : vector<8x640xf32>
    %c0_548 = arith.constant 0 : index
    %c0_549 = arith.constant 0 : index
    %c3_550 = arith.constant 3 : index
    %760 = vector.load %arg6[%c0_548, %c0_549, %c3_550] : memref<1x8x768xf32, #tpu.memory_space<vmem>>, vector<1x8x640xf32>
    %761 = vector.shape_cast %760 : vector<1x8x640xf32> to vector<8x640xf32>
    %c7_551 = arith.constant 7 : index
    %c3_552 = arith.constant 3 : index
    %762 = memref.load %arg2[%c7_551, %c3_552] : memref<16x10xf32, #tpu.memory_space<smem>>
    %763 = vector.broadcast %762 : f32 to vector<8x640xf32>
    %764 = arith.mulf %761, %763 : vector<8x640xf32>
    %765 = arith.addf %755, %764 : vector<8x640xf32>
    %c15_553 = arith.constant 15 : index
    %c3_554 = arith.constant 3 : index
    %766 = memref.load %arg2[%c15_553, %c3_554] : memref<16x10xf32, #tpu.memory_space<smem>>
    %767 = vector.broadcast %766 : f32 to vector<8x640xf32>
    %768 = arith.mulf %761, %767 : vector<8x640xf32>
    %769 = arith.addf %759, %768 : vector<8x640xf32>
    %c0_555 = arith.constant 0 : index
    %c0_556 = arith.constant 0 : index
    %c4_557 = arith.constant 4 : index
    %770 = vector.load %arg6[%c0_555, %c0_556, %c4_557] : memref<1x8x768xf32, #tpu.memory_space<vmem>>, vector<1x8x640xf32>
    %771 = vector.shape_cast %770 : vector<1x8x640xf32> to vector<8x640xf32>
    %c7_558 = arith.constant 7 : index
    %c4_559 = arith.constant 4 : index
    %772 = memref.load %arg2[%c7_558, %c4_559] : memref<16x10xf32, #tpu.memory_space<smem>>
    %773 = vector.broadcast %772 : f32 to vector<8x640xf32>
    %774 = arith.mulf %771, %773 : vector<8x640xf32>
    %775 = arith.addf %765, %774 : vector<8x640xf32>
    %c15_560 = arith.constant 15 : index
    %c4_561 = arith.constant 4 : index
    %776 = memref.load %arg2[%c15_560, %c4_561] : memref<16x10xf32, #tpu.memory_space<smem>>
    %777 = vector.broadcast %776 : f32 to vector<8x640xf32>
    %778 = arith.mulf %771, %777 : vector<8x640xf32>
    %779 = arith.addf %769, %778 : vector<8x640xf32>
    %c0_562 = arith.constant 0 : index
    %c0_563 = arith.constant 0 : index
    %c5_564 = arith.constant 5 : index
    %780 = vector.load %arg6[%c0_562, %c0_563, %c5_564] : memref<1x8x768xf32, #tpu.memory_space<vmem>>, vector<1x8x640xf32>
    %781 = vector.shape_cast %780 : vector<1x8x640xf32> to vector<8x640xf32>
    %c7_565 = arith.constant 7 : index
    %c5_566 = arith.constant 5 : index
    %782 = memref.load %arg2[%c7_565, %c5_566] : memref<16x10xf32, #tpu.memory_space<smem>>
    %783 = vector.broadcast %782 : f32 to vector<8x640xf32>
    %784 = arith.mulf %781, %783 : vector<8x640xf32>
    %785 = arith.addf %775, %784 : vector<8x640xf32>
    %c15_567 = arith.constant 15 : index
    %c5_568 = arith.constant 5 : index
    %786 = memref.load %arg2[%c15_567, %c5_568] : memref<16x10xf32, #tpu.memory_space<smem>>
    %787 = vector.broadcast %786 : f32 to vector<8x640xf32>
    %788 = arith.mulf %781, %787 : vector<8x640xf32>
    %789 = arith.addf %779, %788 : vector<8x640xf32>
    %c0_569 = arith.constant 0 : index
    %c0_570 = arith.constant 0 : index
    %c6_571 = arith.constant 6 : index
    %790 = vector.load %arg6[%c0_569, %c0_570, %c6_571] : memref<1x8x768xf32, #tpu.memory_space<vmem>>, vector<1x8x640xf32>
    %791 = vector.shape_cast %790 : vector<1x8x640xf32> to vector<8x640xf32>
    %c7_572 = arith.constant 7 : index
    %c6_573 = arith.constant 6 : index
    %792 = memref.load %arg2[%c7_572, %c6_573] : memref<16x10xf32, #tpu.memory_space<smem>>
    %793 = vector.broadcast %792 : f32 to vector<8x640xf32>
    %794 = arith.mulf %791, %793 : vector<8x640xf32>
    %795 = arith.addf %785, %794 : vector<8x640xf32>
    %c15_574 = arith.constant 15 : index
    %c6_575 = arith.constant 6 : index
    %796 = memref.load %arg2[%c15_574, %c6_575] : memref<16x10xf32, #tpu.memory_space<smem>>
    %797 = vector.broadcast %796 : f32 to vector<8x640xf32>
    %798 = arith.mulf %791, %797 : vector<8x640xf32>
    %799 = arith.addf %789, %798 : vector<8x640xf32>
    %c0_576 = arith.constant 0 : index
    %c0_577 = arith.constant 0 : index
    %c7_578 = arith.constant 7 : index
    %800 = vector.load %arg6[%c0_576, %c0_577, %c7_578] : memref<1x8x768xf32, #tpu.memory_space<vmem>>, vector<1x8x640xf32>
    %801 = vector.shape_cast %800 : vector<1x8x640xf32> to vector<8x640xf32>
    %c7_579 = arith.constant 7 : index
    %c7_580 = arith.constant 7 : index
    %802 = memref.load %arg2[%c7_579, %c7_580] : memref<16x10xf32, #tpu.memory_space<smem>>
    %803 = vector.broadcast %802 : f32 to vector<8x640xf32>
    %804 = arith.mulf %801, %803 : vector<8x640xf32>
    %805 = arith.addf %795, %804 : vector<8x640xf32>
    %c15_581 = arith.constant 15 : index
    %c7_582 = arith.constant 7 : index
    %806 = memref.load %arg2[%c15_581, %c7_582] : memref<16x10xf32, #tpu.memory_space<smem>>
    %807 = vector.broadcast %806 : f32 to vector<8x640xf32>
    %808 = arith.mulf %801, %807 : vector<8x640xf32>
    %809 = arith.addf %799, %808 : vector<8x640xf32>
    %c0_583 = arith.constant 0 : index
    %c0_584 = arith.constant 0 : index
    %c8_585 = arith.constant 8 : index
    %810 = vector.load %arg6[%c0_583, %c0_584, %c8_585] : memref<1x8x768xf32, #tpu.memory_space<vmem>>, vector<1x8x640xf32>
    %811 = vector.shape_cast %810 : vector<1x8x640xf32> to vector<8x640xf32>
    %c7_586 = arith.constant 7 : index
    %c8_587 = arith.constant 8 : index
    %812 = memref.load %arg2[%c7_586, %c8_587] : memref<16x10xf32, #tpu.memory_space<smem>>
    %813 = vector.broadcast %812 : f32 to vector<8x640xf32>
    %814 = arith.mulf %811, %813 : vector<8x640xf32>
    %815 = arith.addf %805, %814 : vector<8x640xf32>
    %c15_588 = arith.constant 15 : index
    %c8_589 = arith.constant 8 : index
    %816 = memref.load %arg2[%c15_588, %c8_589] : memref<16x10xf32, #tpu.memory_space<smem>>
    %817 = vector.broadcast %816 : f32 to vector<8x640xf32>
    %818 = arith.mulf %811, %817 : vector<8x640xf32>
    %819 = arith.addf %809, %818 : vector<8x640xf32>
    %c0_590 = arith.constant 0 : index
    %c0_591 = arith.constant 0 : index
    %c9_592 = arith.constant 9 : index
    %820 = vector.load %arg6[%c0_590, %c0_591, %c9_592] : memref<1x8x768xf32, #tpu.memory_space<vmem>>, vector<1x8x640xf32>
    %821 = vector.shape_cast %820 : vector<1x8x640xf32> to vector<8x640xf32>
    %c7_593 = arith.constant 7 : index
    %c9_594 = arith.constant 9 : index
    %822 = memref.load %arg2[%c7_593, %c9_594] : memref<16x10xf32, #tpu.memory_space<smem>>
    %823 = vector.broadcast %822 : f32 to vector<8x640xf32>
    %824 = arith.mulf %821, %823 : vector<8x640xf32>
    %825 = arith.addf %815, %824 : vector<8x640xf32>
    %c15_595 = arith.constant 15 : index
    %c9_596 = arith.constant 9 : index
    %826 = memref.load %arg2[%c15_595, %c9_596] : memref<16x10xf32, #tpu.memory_space<smem>>
    %827 = vector.broadcast %826 : f32 to vector<8x640xf32>
    %828 = arith.mulf %821, %827 : vector<8x640xf32>
    %829 = arith.addf %819, %828 : vector<8x640xf32>
    %c7_597 = arith.constant 7 : index
    %c0_598 = arith.constant 0 : index
    %c0_599 = arith.constant 0 : index
    %830 = vector.load %arg5[%c7_597, %c0_598, %c0_599] : memref<16x8x640xf32, #tpu.memory_space<vmem>>, vector<1x8x640xf32>
    %831 = vector.shape_cast %830 : vector<1x8x640xf32> to vector<8x640xf32>
    %832 = vector.shape_cast %825 : vector<8x640xf32> to vector<1x8x640xf32>
    tpu.vector_store %arg5[%c7_597, %c0_598, %c0_599], %832 {strides = array<i32>} : memref<16x8x640xf32, #tpu.memory_space<vmem>>, vector<1x8x640xf32>,
    %c15_600 = arith.constant 15 : index
    %c0_601 = arith.constant 0 : index
    %c0_602 = arith.constant 0 : index
    %833 = vector.load %arg5[%c15_600, %c0_601, %c0_602] : memref<16x8x640xf32, #tpu.memory_space<vmem>>, vector<1x8x640xf32>
    %834 = vector.shape_cast %833 : vector<1x8x640xf32> to vector<8x640xf32>
    %835 = vector.shape_cast %829 : vector<8x640xf32> to vector<1x8x640xf32>
    tpu.vector_store %arg5[%c15_600, %c0_601, %c0_602], %835 {strides = array<i32>} : memref<16x8x640xf32, #tpu.memory_space<vmem>>, vector<1x8x640xf32>,
    return
  }
  func.func @transform_0(%arg0: i32, %arg1: i32) -> (i32, i32) {
    %c0_i32 = arith.constant 0 : i32
    %c0_i32_0 = arith.constant 0 : i32
    %c0_i32_1 = arith.constant 0 : i32
    return %c0_i32, %c0_i32_0 : i32, i32
  }
  func.func @transform_1(%arg0: i32, %arg1: i32) -> (i32, i32, i32) {
    %c0_i32 = arith.constant 0 : i32
    %c0_i32_0 = arith.constant 0 : i32
    return %c0_i32, %arg0, %arg1 : i32, i32, i32
  }
  func.func @transform_2(%arg0: i32, %arg1: i32) -> (i32, i32, i32) {
    %c1_i32 = arith.constant 1 : i32
    %0 = arith.addi %arg1, %c1_i32 : i32
    %c5_i32 = arith.constant 5 : i32
    %1 = arith.muli %0, %c5_i32 : i32
    %c0_i32 = arith.constant 0 : i32
    %c0_i32_0 = arith.constant 0 : i32
    return %c0_i32, %arg0, %1 : i32, i32, i32
  }
  func.func @transform_3(%arg0: i32, %arg1: i32) -> (i32, i32, i32) {
    %c0_i32 = arith.constant 0 : i32
    %c0_i32_0 = arith.constant 0 : i32
    return %c0_i32, %arg0, %arg1 : i32, i32, i32
  }
}

</mosaic_0001>

<llo_original>
// kernel: custom-call
$region0: #{custom-call}
  %s0 = inlined_call_operand.vmem [shape: f32[2,4,8,2551], index: 0, kind: input, shape index: {}]
  %s1 = inlined_call_operand.vmem [shape: f32[2,4,8,2551], index: 1, kind: input, shape index: {}]
  %s2 = inlined_call_operand.hbm [shape: c64[2,4,8,2551], index: 2, kind: output, shape index: {}]
  %s3 = scalar_lea.hbm %s2, 20480
  $region1: #{custom-call} parent=0
    #allocation0 [shape = 's32[1]{0}', space=sflag, size = 0x4, scoped, tag = 'scoped memory for custom-call']
    %4 = vsyncpa [#allocation0], 0
    %s5 = sshll.u32 %s0, 4
    %s6 = int_to_ptr.vmem [resolvable:$true] %s5
    %8 = dma.vmem_to_hbm [thread:$0]  %s6, 20480, %s2, [#allocation0]
    %9 = dma.done [#allocation0], 20480
    %10 = vsyncpa [#allocation0], 1
  $region2: #{custom-call} parent=0
    #allocation1 [shape = 's32[1]{0}', space=sflag, size = 0x4, scoped, tag = 'scoped memory for custom-call']
    %11 = vsyncpa [#allocation1], 0
    %s12 = sshll.u32 %s1, 4
    %s13 = int_to_ptr.vmem [resolvable:$true] %s12
    %15 = dma.vmem_to_hbm [thread:$0]  %s13, 20480, %s3, [#allocation1]
    %16 = dma.done [#allocation1], 20480
    %17 = vsyncpa [#allocation1], 1

// kernel: gabor_filter_forward.1
$region0: #{gabor_filter_forward.1}
  #allocation0 [shape = 'u32[]', space=smem, size = 0x4, offset = 0x4, fixed_abs, tag = 'smem constant byte address 0x4 - core index']
  #allocation1 [shape = 'u32[144,128]{1,0:T(1,128)}', space=vmem, size = 0x12000, scoped, tag = 'internal scratch']
  #allocation2 [shape = 'f32[1,8,768]{2,1,0:T(8,128)}', space=vmem, size = 0x6000, scoped, tag = 'scratch operand']
  %s0 = inlined_call_operand.vmem [shape: f32[16,10], index: 0, kind: input, shape index: {}]
  %s1 = inlined_call_operand.vmem [shape: f32[1,8,2688], index: 1, kind: input, shape index: {}, may-alias: {1,2}]
  %s2 = inlined_call_operand.vmem [shape: f32[1,8,2688], index: 2, kind: input, shape index: {}, may-alias: {1,2}]
  %s3 = inlined_call_operand.vmem [shape: f32[16,8,2560], index: 3, kind: output, shape index: {}]
  %s4 = sld [smem:[#allocation0]]
  $region68: #{gabor_filter_forward.1} parent=0
    _
  %s6 = ssub.s32 1, %s4
  %s7 = scalar_select 0, %s6, %s4
  $region1: #{gabor_filter_forward.1} parent=0
    #allocation3 [shape = 'u8[8192]{0}', space=smem, size = 0x2000, scoped, tag = 'input window, operand 0, single buffered']
    #allocation4 [shape = 's32[2]{0}', space=sflag, size = 0x8, scoped, tag = 'scoped memory for gabor_filter_forward.1']
    #allocation5 [shape = 'u8[655360]{0}', space=vmem, size = 0xa0000, scoped, tag = 'output window, operand 0']
    %8 = vsyncpa [#allocation4], 0
    loop: start=0, step=1, limit=6
    $region2: #{gabor_filter_forward.1} parent=1 // loop_pre_header
      _
    $region3: #{gabor_filter_forward.1} parent=1 // loop_header
      %s10 = sphi 0, %s14
      %p11 = scmp.ge.s32.totalorder %s10, 6
      %s17 = sphi 0, %s29
      %s18 = sphi 0, %s25
      %s19 = sphi 0, %s17
      %s20 = sphi 0, %s18
      %s21 = sphi 0, %s19
      %s22 = sphi 0, %s20
      %s30 = sphi 0, %s30
      %s32 = sphi 0, %s30
      %s33 = sphi 0, %s32
      %s47 = sphi 0, %s33
      %s55 = sphi 0, %s57
      %s58 = sphi 0, %s55
      %s59 = sphi 0, %s58
      %s75 = sphi 0, %s59
      %s87 = sphi 0, %s89
      %s90 = sphi 0, %s87
      %s91 = sphi 0, %s90
      %s107 = sphi 0, %s91
      %s115 = sphi 0, %s117
      %s118 = sphi 0, %s115
      %s119 = sphi 0, %s118
      %s135 = sphi 0, %s119
    $region4: #{gabor_filter_forward.1} parent=1 // loop_header_branch
      %13 = sbr.rel (%p11) target = $region8
    $region5: #{gabor_filter_forward.1} parent=1 // loop_body
      %s15 = ssub.s32 %s10, 1
      %s16 = ssub.s32 %s10, 2
      %s23 = sadd.s32 1, %s18
      %p24 = scmp.ge.s32.totalorder %s23, 4
      %s25 = scalar_select %p24, 0, %s23
      %s26 = sadd.s32 1, %s17
      %s27 = scalar_select %p24, %s26, %s17
      %p28 = scmp.ge.s32.totalorder %s27, 1
      %s29 = scalar_select %p28, 0, %s27
      %s31 = sadd.s32 %s30, 1
      %p34 = scmp.eq.s32.totalorder %s10, 3
      %p35 = scmp.ne.s32.totalorder %s30, %s32
      %p36 = scmp.eq.s32.totalorder %s10, 0
      %p37 = por %p35, %p36
      %p38 = scmp.ne.s32.totalorder %s30, %s32
      %p39 = scmp.eq.s32.totalorder %s15, 3
      %p40 = por %p38, %p39
      %p41 = scmp.ne.s32.totalorder %s32, %s33
      %p42 = scmp.eq.s32.totalorder %s15, 0
      %p43 = por %p41, %p42
      %p44 = scmp.ne.s32.totalorder %s32, %s33
      %p45 = scmp.eq.s32.totalorder %s16, 3
      %p46 = por %p44, %p45
      %p48 = scmp.ne.s32.totalorder %s33, %s47
      %p49 = scmp.eq.s32.totalorder %s16, 0
      %p50 = por %p48, %p49
      %s51 = ssub.s32 %s17, %s29
      %s52 = ssub.s32 %s18, %s25
      %s53 = sor.u32 %s51, %s52
      %p54 = scmp.eq.s32.totalorder %s53, 0
      %s56 = sadd.s32 %s55, 1
      %s57 = scalar_select %p54, %s55, %s56
      %p60 = pneg %p54
      %p61 = scmp.eq.s32.totalorder %s10, 3
      %p62 = por %p60, %p61
      %p63 = scmp.ne.s32.totalorder %s55, %s58
      %p64 = scmp.eq.s32.totalorder %s10, 0
      %p65 = por %p63, %p64
      %p66 = scmp.ne.s32.totalorder %s55, %s58
      %p67 = scmp.eq.s32.totalorder %s15, 3
      %p68 = por %p66, %p67
      %p69 = scmp.ne.s32.totalorder %s58, %s59
      %p70 = scmp.eq.s32.totalorder %s15, 0
      %p71 = por %p69, %p70
      %p72 = scmp.ne.s32.totalorder %s58, %s59
      %p73 = scmp.eq.s32.totalorder %s16, 3
      %p74 = por %p72, %p73
      %p76 = scmp.ne.s32.totalorder %s59, %s75
      %p77 = scmp.eq.s32.totalorder %s16, 0
      %p78 = por %p76, %p77
      %s79 = sadd.s32 %s18, 1
      %s80 = smul.u32 %s79, 5
      %s81 = sadd.s32 %s25, 1
      %s82 = smul.u32 %s81, 5
      %s83 = ssub.s32 %s17, %s29
      %s84 = ssub.s32 %s80, %s82
      %s85 = sor.u32 %s83, %s84
      %p86 = scmp.eq.s32.totalorder %s85, 0
      %s88 = sadd.s32 %s87, 1
      %s89 = scalar_select %p86, %s87, %s88
      %p92 = pneg %p86
      %p93 = scmp.eq.s32.totalorder %s10, 3
      %p94 = por %p92, %p93
      %p95 = scmp.ne.s32.totalorder %s87, %s90
      %p96 = scmp.eq.s32.totalorder %s10, 0
      %p97 = por %p95, %p96
      %p98 = scmp.ne.s32.totalorder %s87, %s90
      %p99 = scmp.eq.s32.totalorder %s15, 3
      %p100 = por %p98, %p99
      %p101 = scmp.ne.s32.totalorder %s90, %s91
      %p102 = scmp.eq.s32.totalorder %s15, 0
      %p103 = por %p101, %p102
      %p104 = scmp.ne.s32.totalorder %s90, %s91
      %p105 = scmp.eq.s32.totalorder %s16, 3
      %p106 = por %p104, %p105
      %p108 = scmp.ne.s32.totalorder %s91, %s107
      %p109 = scmp.eq.s32.totalorder %s16, 0
      %p110 = por %p108, %p109
      %s111 = ssub.s32 %s17, %s29
      %s112 = ssub.s32 %s18, %s25
      %s113 = sor.u32 %s111, %s112
      %p114 = scmp.eq.s32.totalorder %s113, 0
      %s116 = sadd.s32 %s115, 1
      %s117 = scalar_select %p114, %s115, %s116
      %p120 = pneg %p114
      %p121 = scmp.eq.s32.totalorder %s10, 3
      %p122 = por %p120, %p121
      %p123 = scmp.ne.s32.totalorder %s115, %s118
      %p124 = scmp.eq.s32.totalorder %s10, 0
      %p125 = por %p123, %p124
      %p126 = scmp.ne.s32.totalorder %s115, %s118
      %p127 = scmp.eq.s32.totalorder %s15, 3
      %p128 = por %p126, %p127
      %p129 = scmp.ne.s32.totalorder %s118, %s119
      %p130 = scmp.eq.s32.totalorder %s15, 0
      %p131 = por %p129, %p130
      %p132 = scmp.ne.s32.totalorder %s118, %s119
      %p133 = scmp.eq.s32.totalorder %s16, 3
      %p134 = por %p132, %p133
      %p136 = scmp.ne.s32.totalorder %s119, %s135
      %p137 = scmp.eq.s32.totalorder %s16, 0
      %p138 = por %p136, %p137
      %p139 = scmp.le.s32.totalorder 1, %s10
      %p140 = scmp.lt.s32.totalorder %s10, 5
      %p141 = pnand %p139, %p140
      %p142 = pneg %p141
      // Predicated region
      $region9: #{gabor_filter_forward.1} parent=5 // pred_check
        _
      $region10: #{gabor_filter_forward.1} parent=5 // pred_check_branch
        %144 = sbr.rel (%p141) target = $region12
      $region11: #{gabor_filter_forward.1} parent=5 // pred_region
        %s145 = ssub.s32 %s10, 1
        // Predicated region
        $region13: #{gabor_filter_forward.1} parent=11 // pred_check
          %p146 = pneg %p43
        $region14: #{gabor_filter_forward.1} parent=11 // pred_check_branch
          %148 = sbr.rel (%p146) target = $region16
        $region15: #{gabor_filter_forward.1} parent=11 // pred_region
          %s150 = ssub.s32 256, 256
          %151 = vsyncadd [#allocation4], %s150
          %s152 = sshll.u32 %s0, 4
          %s153 = int_to_ptr.vmem [resolvable:$true] %s152
          %158 = dma.vmem_to_smem %s153, 256, [#allocation3], [#allocation4], 128, 128, 8
        $region16: #{gabor_filter_forward.1} parent=11 // pred_fallthru
          _
      $region12: #{gabor_filter_forward.1} parent=5 // pred_fallthru
        _
      %p159 = scmp.lt.s32.totalorder %s10, 4
      // Predicated region
      $region17: #{gabor_filter_forward.1} parent=5 // pred_check
        %p160 = pneg %p159
      $region18: #{gabor_filter_forward.1} parent=5 // pred_check_branch
        %162 = sbr.rel (%p160) target = $region20
      $region19: #{gabor_filter_forward.1} parent=5 // pred_region
        // Predicated region
        $region21: #{gabor_filter_forward.1} parent=19 // pred_check
          %p163 = pneg %p65
        $region22: #{gabor_filter_forward.1} parent=19 // pred_check_branch
          %165 = sbr.rel (%p163) target = $region24
        $region23: #{gabor_filter_forward.1} parent=19 // pred_region
          %s166 = smul.u32 5, %s18
          %s167 = ssub.s32 21, %s166
          %p168 = scmp.lt.s32.totalorder %s167, 5
          %s169 = scalar_select %p168, %s167, 5
          %s170 = smul.u32 128, %s169
          %p171 = scmp.lt.s32.totalorder %s17, 0
          %s172 = scalar_select %p171, %s17, 0
          %p173 = scmp.lt.s32.totalorder %s166, 20
          %s174 = scalar_select %p173, %s166, 20
          %s175 = smul.addr %s172, 21
          %s176 = sadd.s32 %s174, %s175
          %s177 = smul.addr %s176, 8
          %s178 = scalar_lea.vmem %s1, %s177
          %s179 = smul.u32 5, %s18
          %s180 = ssub.s32 21, %s179
          %p181 = scmp.lt.s32.totalorder %s180, 5
          %s182 = scalar_select %p181, %s180, 5
          %s183 = smul.u32 128, %s182
        $region24: #{gabor_filter_forward.1} parent=19 // pred_fallthru
          _
        // Predicated region
        $region25: #{gabor_filter_forward.1} parent=19 // pred_check
          %p184 = pneg %p97
        $region26: #{gabor_filter_forward.1} parent=19 // pred_check_branch
          %186 = sbr.rel (%p184) target = $region28
        $region27: #{gabor_filter_forward.1} parent=19 // pred_region
          %s187 = sadd.s32 %s18, 1
          %s188 = smul.u32 %s187, 5
          %p189 = scmp.lt.s32.totalorder %s17, 0
          %s190 = scalar_select %p189, %s17, 0
          %p191 = scmp.lt.s32.totalorder %s188, 20
          %s192 = scalar_select %p191, %s188, 20
          %s193 = smul.addr %s190, 21
          %s194 = sadd.s32 %s192, %s193
          %s195 = smul.addr %s194, 8
          %s196 = scalar_lea.vmem %s2, %s195
          %s197 = sadd.s32 %s18, 1
          %s198 = smul.u32 %s197, 5
        $region28: #{gabor_filter_forward.1} parent=19 // pred_fallthru
          _
      $region20: #{gabor_filter_forward.1} parent=5 // pred_fallthru
        _
      %p199 = scmp.le.s32.totalorder 1, %s10
      %p200 = scmp.lt.s32.totalorder %s10, 5
      %p201 = pnand %p199, %p200
      %p202 = pneg %p201
      // Predicated region
      $region29: #{gabor_filter_forward.1} parent=5 // pred_check
        _
      $region30: #{gabor_filter_forward.1} parent=5 // pred_check_branch
        %204 = sbr.rel (%p201) target = $region32
      $region31: #{gabor_filter_forward.1} parent=5 // pred_region
        %s205 = ssub.s32 %s10, 1
        // Predicated region
        $region33: #{gabor_filter_forward.1} parent=31 // pred_check
          %p206 = pneg %p43
        $region34: #{gabor_filter_forward.1} parent=31 // pred_check_branch
          %208 = sbr.rel (%p206) target = $region36
        $region35: #{gabor_filter_forward.1} parent=31 // pred_region
          %209 = dma.done [#allocation4], 256
        $region36: #{gabor_filter_forward.1} parent=31 // pred_fallthru
          _
        %210 = sfence
        %p211 = pneg %p43
        %p212 = pneg %p40
        %s213 = smul.u32 5, %s20
        %s214 = ssub.s32 21, %s213
        %p215 = scmp.lt.s32.totalorder %s214, 5
        %s216 = scalar_select %p215, %s214, 5
        %s217 = smul.u32 128, %s216
        %p218 = scmp.lt.s32.totalorder %s19, 0
        %s219 = scalar_select %p218, %s19, 0
        %p220 = scmp.lt.s32.totalorder %s213, 20
        %s221 = scalar_select %p220, %s213, 20
        %s222 = smul.addr %s219, 21
        %s223 = sadd.s32 %s221, %s222
        %s224 = smul.addr %s223, 8
        %s225 = scalar_lea.vmem %s1, %s224
        %p226 = pneg %p71
        %p227 = pneg %p68
        %s228 = sadd.s32 %s20, 1
        %s229 = smul.u32 %s228, 5
        %p230 = scmp.lt.s32.totalorder %s19, 0
        %s231 = scalar_select %p230, %s19, 0
        %p232 = scmp.lt.s32.totalorder %s229, 20
        %s233 = scalar_select %p232, %s229, 20
        %s234 = smul.addr %s231, 21
        %s235 = sadd.s32 %s233, %s234
        %s236 = smul.addr %s235, 8
        %s237 = scalar_lea.vmem %s2, %s236
        %p238 = pneg %p103
        %p239 = pneg %p100
        %p240 = pneg %p131
        %p241 = pneg %p128
        %s242 = sand.u32 %s118, 1
        %s243 = sand.u32 %s118, 1
        %s244 = smul.addr %s243, 640
        %s245 = scalar_lea.vmem [#allocation5], %s244
        %s246 = smul.u32 5, %s20
        %s247 = ssub.s32 21, %s246
        %p248 = scmp.lt.s32.totalorder %s247, 5
        %s249 = scalar_select %p248, %s247, 5
        %s250 = smul.u32 128, %s249
        %p251 = scmp.lt.s32.totalorder %s19, 0
        %s252 = scalar_select %p251, %s19, 0
        %p253 = scmp.lt.s32.totalorder %s246, 20
        %s254 = scalar_select %p253, %s246, 20
        %s255 = smul.addr %s252, 21
        %s256 = sadd.s32 %s254, %s255
        %s257 = smul.addr %s256, 8
        %s258 = scalar_lea.vmem %s1, %s257
        %s259 = smul.u32 5, %s20
        %s260 = ssub.s32 21, %s259
        %p261 = scmp.lt.s32.totalorder %s260, 5
        %s262 = scalar_select %p261, %s260, 5
        %s263 = smul.u32 128, %s262
        %s264 = sadd.s32 %s20, 1
        %s265 = smul.u32 %s264, 5
        %p266 = scmp.lt.s32.totalorder %s19, 0
        %s267 = scalar_select %p266, %s19, 0
        %p268 = scmp.lt.s32.totalorder %s265, 20
        %s269 = scalar_select %p268, %s265, 20
        %s270 = smul.addr %s267, 21
        %s271 = sadd.s32 %s269, %s270
        %s272 = smul.addr %s271, 8
        %s273 = scalar_lea.vmem %s2, %s272
        %s274 = sadd.s32 %s20, 1
        %s275 = smul.u32 %s274, 5
        %s276 = smul.u32 5, %s20
        %v277 = vld [vmem:[%s258] sm:$0xff]
        %v278 = vld [vmem:[%s258 + $0x8] sm:$0xff]
        %v279 = vld [vmem:[%s258 + $0x10] sm:$0xff]
        %v280 = vld [vmem:[%s258 + $0x18] sm:$0xff]
        %v281 = vld [vmem:[%s258 + $0x20] sm:$0xff]
        %282 = vst [vmem:[#allocation2] sm:$0xff] %v277
        %283 = vst [vmem:[#allocation2 + $0x8] sm:$0xff] %v278
        %284 = vst [vmem:[#allocation2 + $0x10] sm:$0xff] %v279
        %285 = vst [vmem:[#allocation2 + $0x18] sm:$0xff] %v280
        %286 = vst [vmem:[#allocation2 + $0x20] sm:$0xff] %v281
        %v287 = vld [vmem:[%s273] sm:$0xff]
        %288 = vst [vmem:[#allocation2 + $0x28] sm:$0xff] %v287
        %v289 = vld [vmem:[#allocation2] sm:$0xff]
        %v290 = vld [vmem:[#allocation2 + $0x8] sm:$0xff]
        %v291 = vld [vmem:[#allocation2 + $0x10] sm:$0xff]
        %v292 = vld [vmem:[#allocation2 + $0x18] sm:$0xff]
        %v293 = vld [vmem:[#allocation2 + $0x20] sm:$0xff]
        %s294 = sld [smem:[#allocation3]]
        %v295 = vstv %s294
        %v296 = vmul.f32 %v289, %v295
        %v297 = vmul.f32 %v290, %v295
        %v298 = vmul.f32 %v291, %v295
        %v299 = vmul.f32 %v292, %v295
        %v300 = vmul.f32 %v293, %v295
        %s301 = sld [smem:[#allocation3 + $0x400]]
        %v302 = vstv %s301
        %v303 = vmul.f32 %v289, %v302
        %v304 = vmul.f32 %v290, %v302
        %v305 = vmul.f32 %v291, %v302
        %v306 = vmul.f32 %v292, %v302
        %v307 = vmul.f32 %v293, %v302
        %v308 = vld [vmem:[#allocation2] sm:$0xff]
        %v309 = vld [vmem:[#allocation2 + $0x8] sm:$0xff]
        %v310 = vld [vmem:[#allocation2 + $0x10] sm:$0xff]
        %v311 = vld [vmem:[#allocation2 + $0x18] sm:$0xff]
        %v312 = vld [vmem:[#allocation2 + $0x20] sm:$0xff]
        %v313 = vld [vmem:[#allocation2 + $0x28] sm:$0xff]
        %s314 = sld [smem:[#allocation3 + $0x1]]
        %v315 = vstv %s314
        %v316 = vmul.f32 %v308, %v315
        %v317 = vmul.f32 %v309, %v315
        %v318 = vmul.f32 %v310, %v315
        %v319 = vmul.f32 %v311, %v315
        %v320 = vmul.f32 %v312, %v315
        %v321 = vmul.f32 %v313, %v315
        %328 = vrot.lane.b32.xlu0 %v316, 127
        %v329 = vpop.permute.xlu0 %328
        %330 = vrot.lane.b32.xlu0 %v317, 127
        %v331 = vpop.permute.xlu0 %330
        %332 = vrot.lane.b32.xlu0 %v318, 127
        %v333 = vpop.permute.xlu0 %332
        %334 = vrot.lane.b32.xlu0 %v319, 127
        %v335 = vpop.permute.xlu0 %334
        %336 = vrot.lane.b32.xlu0 %v320, 127
        %v337 = vpop.permute.xlu0 %336
        %338 = vrot.lane.b32.xlu0 %v321, 127
        %v339 = vpop.permute.xlu0 %338
        %vm340 = vcmask 1039360
        %v341 = vsel %vm340, %v329, %v331
        %v342 = vsel %vm340, %v331, %v333
        %v343 = vsel %vm340, %v333, %v335
        %v344 = vsel %vm340, %v335, %v337
        %v345 = vsel %vm340, %v337, %v339
        %v351 = vadd.f32 %v296, %v341
        %v352 = vadd.f32 %v297, %v342
        %v353 = vadd.f32 %v298, %v343
        %v354 = vadd.f32 %v299, %v344
        %v355 = vadd.f32 %v300, %v345
        %s356 = sld [smem:[#allocation3 + $0x401]]
        %v357 = vstv %s356
        %v358 = vmul.f32 %v308, %v357
        %v359 = vmul.f32 %v309, %v357
        %v360 = vmul.f32 %v310, %v357
        %v361 = vmul.f32 %v311, %v357
        %v362 = vmul.f32 %v312, %v357
        %v363 = vmul.f32 %v313, %v357
        %370 = vrot.lane.b32.xlu0 %v358, 127
        %v371 = vpop.permute.xlu0 %370
        %372 = vrot.lane.b32.xlu0 %v359, 127
        %v373 = vpop.permute.xlu0 %372
        %374 = vrot.lane.b32.xlu0 %v360, 127
        %v375 = vpop.permute.xlu0 %374
        %376 = vrot.lane.b32.xlu0 %v361, 127
        %v377 = vpop.permute.xlu0 %376
        %378 = vrot.lane.b32.xlu0 %v362, 127
        %v379 = vpop.permute.xlu0 %378
        %380 = vrot.lane.b32.xlu0 %v363, 127
        %v381 = vpop.permute.xlu0 %380
        %v382 = vsel %vm340, %v371, %v373
        %v383 = vsel %vm340, %v373, %v375
        %v384 = vsel %vm340, %v375, %v377
        %v385 = vsel %vm340, %v377, %v379
        %v386 = vsel %vm340, %v379, %v381
        %v392 = vadd.f32 %v303, %v382
        %v393 = vadd.f32 %v304, %v383
        %v394 = vadd.f32 %v305, %v384
        %v395 = vadd.f32 %v306, %v385
        %v396 = vadd.f32 %v307, %v386
        %s397 = sld [smem:[#allocation3 + $0x2]]
        %v398 = vstv %s397
        %v399 = vmul.f32 %v308, %v398
        %v400 = vmul.f32 %v309, %v398
        %v401 = vmul.f32 %v310, %v398
        %v402 = vmul.f32 %v311, %v398
        %v403 = vmul.f32 %v312, %v398
        %v404 = vmul.f32 %v313, %v398
        %411 = vrot.lane.b32.xlu0 %v399, 126
        %v412 = vpop.permute.xlu0 %411
        %413 = vrot.lane.b32.xlu0 %v400, 126
        %v414 = vpop.permute.xlu0 %413
        %415 = vrot.lane.b32.xlu0 %v401, 126
        %v416 = vpop.permute.xlu0 %415
        %417 = vrot.lane.b32.xlu0 %v402, 126
        %v418 = vpop.permute.xlu0 %417
        %419 = vrot.lane.b32.xlu0 %v403, 126
        %v420 = vpop.permute.xlu0 %419
        %421 = vrot.lane.b32.xlu0 %v404, 126
        %v422 = vpop.permute.xlu0 %421
        %vm423 = vcmask 1031168
        %v424 = vsel %vm423, %v412, %v414
        %v425 = vsel %vm423, %v414, %v416
        %v426 = vsel %vm423, %v416, %v418
        %v427 = vsel %vm423, %v418, %v420
        %v428 = vsel %vm423, %v420, %v422
        %v434 = vadd.f32 %v351, %v424
        %v435 = vadd.f32 %v352, %v425
        %v436 = vadd.f32 %v353, %v426
        %v437 = vadd.f32 %v354, %v427
        %v438 = vadd.f32 %v355, %v428
        %s439 = sld [smem:[#allocation3 + $0x402]]
        %v440 = vstv %s439
        %v441 = vmul.f32 %v308, %v440
        %v442 = vmul.f32 %v309, %v440
        %v443 = vmul.f32 %v310, %v440
        %v444 = vmul.f32 %v311, %v440
        %v445 = vmul.f32 %v312, %v440
        %v446 = vmul.f32 %v313, %v440
        %453 = vrot.lane.b32.xlu0 %v441, 126
        %v454 = vpop.permute.xlu0 %453
        %455 = vrot.lane.b32.xlu0 %v442, 126
        %v456 = vpop.permute.xlu0 %455
        %457 = vrot.lane.b32.xlu0 %v443, 126
        %v458 = vpop.permute.xlu0 %457
        %459 = vrot.lane.b32.xlu0 %v444, 126
        %v460 = vpop.permute.xlu0 %459
        %461 = vrot.lane.b32.xlu0 %v445, 126
        %v462 = vpop.permute.xlu0 %461
        %463 = vrot.lane.b32.xlu0 %v446, 126
        %v464 = vpop.permute.xlu0 %463
        %v465 = vsel %vm423, %v454, %v456
        %v466 = vsel %vm423, %v456, %v458
        %v467 = vsel %vm423, %v458, %v460
        %v468 = vsel %vm423, %v460, %v462
        %v469 = vsel %vm423, %v462, %v464
        %v475 = vadd.f32 %v392, %v465
        %v476 = vadd.f32 %v393, %v466
        %v477 = vadd.f32 %v394, %v467
        %v478 = vadd.f32 %v395, %v468
        %v479 = vadd.f32 %v396, %v469
        %s480 = sld [smem:[#allocation3 + $0x3]]
        %v481 = vstv %s480
        %v482 = vmul.f32 %v308, %v481
        %v483 = vmul.f32 %v309, %v481
        %v484 = vmul.f32 %v310, %v481
        %v485 = vmul.f32 %v311, %v481
        %v486 = vmul.f32 %v312, %v481
        %v487 = vmul.f32 %v313, %v481
        %494 = vrot.lane.b32.xlu0 %v482, 125
        %v495 = vpop.permute.xlu0 %494
        %496 = vrot.lane.b32.xlu0 %v483, 125
        %v497 = vpop.permute.xlu0 %496
        %498 = vrot.lane.b32.xlu0 %v484, 125
        %v499 = vpop.permute.xlu0 %498
        %500 = vrot.lane.b32.xlu0 %v485, 125
        %v501 = vpop.permute.xlu0 %500
        %502 = vrot.lane.b32.xlu0 %v486, 125
        %v503 = vpop.permute.xlu0 %502
        %504 = vrot.lane.b32.xlu0 %v487, 125
        %v505 = vpop.permute.xlu0 %504
        %vm506 = vcmask 1022976
        %v507 = vsel %vm506, %v495, %v497
        %v508 = vsel %vm506, %v497, %v499
        %v509 = vsel %vm506, %v499, %v501
        %v510 = vsel %vm506, %v501, %v503
        %v511 = vsel %vm506, %v503, %v505
        %v517 = vadd.f32 %v434, %v507
        %v518 = vadd.f32 %v435, %v508
        %v519 = vadd.f32 %v436, %v509
        %v520 = vadd.f32 %v437, %v510
        %v521 = vadd.f32 %v438, %v511
        %s522 = sld [smem:[#allocation3 + $0x403]]
        %v523 = vstv %s522
        %v524 = vmul.f32 %v308, %v523
        %v525 = vmul.f32 %v309, %v523
        %v526 = vmul.f32 %v310, %v523
        %v527 = vmul.f32 %v311, %v523
        %v528 = vmul.f32 %v312, %v523
        %v529 = vmul.f32 %v313, %v523
        %536 = vrot.lane.b32.xlu0 %v524, 125
        %v537 = vpop.permute.xlu0 %536
        %538 = vrot.lane.b32.xlu0 %v525, 125
        %v539 = vpop.permute.xlu0 %538
        %540 = vrot.lane.b32.xlu0 %v526, 125
        %v541 = vpop.permute.xlu0 %540
        %542 = vrot.lane.b32.xlu0 %v527, 125
        %v543 = vpop.permute.xlu0 %542
        %544 = vrot.lane.b32.xlu0 %v528, 125
        %v545 = vpop.permute.xlu0 %544
        %546 = vrot.lane.b32.xlu0 %v529, 125
        %v547 = vpop.permute.xlu0 %546
        %v548 = vsel %vm506, %v537, %v539
        %v549 = vsel %vm506, %v539, %v541
        %v550 = vsel %vm506, %v541, %v543
        %v551 = vsel %vm506, %v543, %v545
        %v552 = vsel %vm506, %v545, %v547
        %v558 = vadd.f32 %v475, %v548
        %v559 = vadd.f32 %v476, %v549
        %v560 = vadd.f32 %v477, %v550
        %v561 = vadd.f32 %v478, %v551
        %v562 = vadd.f32 %v479, %v552
        %s563 = sld [smem:[#allocation3 + $0x4]]
        %v564 = vstv %s563
        %v565 = vmul.f32 %v308, %v564
        %v566 = vmul.f32 %v309, %v564
        %v567 = vmul.f32 %v310, %v564
        %v568 = vmul.f32 %v311, %v564
        %v569 = vmul.f32 %v312, %v564
        %v570 = vmul.f32 %v313, %v564
        %577 = vrot.lane.b32.xlu0 %v565, 124
        %v578 = vpop.permute.xlu0 %577
        %579 = vrot.lane.b32.xlu0 %v566, 124
        %v580 = vpop.permute.xlu0 %579
        %581 = vrot.lane.b32.xlu0 %v567, 124
        %v582 = vpop.permute.xlu0 %581
        %583 = vrot.lane.b32.xlu0 %v568, 124
        %v584 = vpop.permute.xlu0 %583
        %585 = vrot.lane.b32.xlu0 %v569, 124
        %v586 = vpop.permute.xlu0 %585
        %587 = vrot.lane.b32.xlu0 %v570, 124
        %v588 = vpop.permute.xlu0 %587
        %vm589 = vcmask 1014784
        %v590 = vsel %vm589, %v578, %v580
        %v591 = vsel %vm589, %v580, %v582
        %v592 = vsel %vm589, %v582, %v584
        %v593 = vsel %vm589, %v584, %v586
        %v594 = vsel %vm589, %v586, %v588
        %v600 = vadd.f32 %v517, %v590
        %v601 = vadd.f32 %v518, %v591
        %v602 = vadd.f32 %v519, %v592
        %v603 = vadd.f32 %v520, %v593
        %v604 = vadd.f32 %v521, %v594
        %s605 = sld [smem:[#allocation3 + $0x404]]
        %v606 = vstv %s605
        %v607 = vmul.f32 %v308, %v606
        %v608 = vmul.f32 %v309, %v606
        %v609 = vmul.f32 %v310, %v606
        %v610 = vmul.f32 %v311, %v606
        %v611 = vmul.f32 %v312, %v606
        %v612 = vmul.f32 %v313, %v606
        %619 = vrot.lane.b32.xlu0 %v607, 124
        %v620 = vpop.permute.xlu0 %619
        %621 = vrot.lane.b32.xlu0 %v608, 124
        %v622 = vpop.permute.xlu0 %621
        %623 = vrot.lane.b32.xlu0 %v609, 124
        %v624 = vpop.permute.xlu0 %623
        %625 = vrot.lane.b32.xlu0 %v610, 124
        %v626 = vpop.permute.xlu0 %625
        %627 = vrot.lane.b32.xlu0 %v611, 124
        %v628 = vpop.permute.xlu0 %627
        %629 = vrot.lane.b32.xlu0 %v612, 124
        %v630 = vpop.permute.xlu0 %629
        %v631 = vsel %vm589, %v620, %v622
        %v632 = vsel %vm589, %v622, %v624
        %v633 = vsel %vm589, %v624, %v626
        %v634 = vsel %vm589, %v626, %v628
        %v635 = vsel %vm589, %v628, %v630
        %v641 = vadd.f32 %v558, %v631
        %v642 = vadd.f32 %v559, %v632
        %v643 = vadd.f32 %v560, %v633
        %v644 = vadd.f32 %v561, %v634
        %v645 = vadd.f32 %v562, %v635
        %s646 = sld [smem:[#allocation3 + $0x5]]
        %v647 = vstv %s646
        %v648 = vmul.f32 %v308, %v647
        %v649 = vmul.f32 %v309, %v647
        %v650 = vmul.f32 %v310, %v647
        %v651 = vmul.f32 %v311, %v647
        %v652 = vmul.f32 %v312, %v647
        %v653 = vmul.f32 %v313, %v647
        %660 = vrot.lane.b32.xlu0 %v648, 123
        %v661 = vpop.permute.xlu0 %660
        %662 = vrot.lane.b32.xlu0 %v649, 123
        %v663 = vpop.permute.xlu0 %662
        %664 = vrot.lane.b32.xlu0 %v650, 123
        %v665 = vpop.permute.xlu0 %664
        %666 = vrot.lane.b32.xlu0 %v651, 123
        %v667 = vpop.permute.xlu0 %666
        %668 = vrot.lane.b32.xlu0 %v652, 123
        %v669 = vpop.permute.xlu0 %668
        %670 = vrot.lane.b32.xlu0 %v653, 123
        %v671 = vpop.permute.xlu0 %670
        %vm672 = vcmask 1006592
        %v673 = vsel %vm672, %v661, %v663
        %v674 = vsel %vm672, %v663, %v665
        %v675 = vsel %vm672, %v665, %v667
        %v676 = vsel %vm672, %v667, %v669
        %v677 = vsel %vm672, %v669, %v671
        %v683 = vadd.f32 %v600, %v673
        %v684 = vadd.f32 %v601, %v674
        %v685 = vadd.f32 %v602, %v675
        %v686 = vadd.f32 %v603, %v676
        %v687 = vadd.f32 %v604, %v677
        %s688 = sld [smem:[#allocation3 + $0x405]]
        %v689 = vstv %s688
        %v690 = vmul.f32 %v308, %v689
        %v691 = vmul.f32 %v309, %v689
        %v692 = vmul.f32 %v310, %v689
        %v693 = vmul.f32 %v311, %v689
        %v694 = vmul.f32 %v312, %v689
        %v695 = vmul.f32 %v313, %v689
        %702 = vrot.lane.b32.xlu0 %v690, 123
        %v703 = vpop.permute.xlu0 %702
        %704 = vrot.lane.b32.xlu0 %v691, 123
        %v705 = vpop.permute.xlu0 %704
        %706 = vrot.lane.b32.xlu0 %v692, 123
        %v707 = vpop.permute.xlu0 %706
        %708 = vrot.lane.b32.xlu0 %v693, 123
        %v709 = vpop.permute.xlu0 %708
        %710 = vrot.lane.b32.xlu0 %v694, 123
        %v711 = vpop.permute.xlu0 %710
        %712 = vrot.lane.b32.xlu0 %v695, 123
        %v713 = vpop.permute.xlu0 %712
        %v714 = vsel %vm672, %v703, %v705
        %v715 = vsel %vm672, %v705, %v707
        %v716 = vsel %vm672, %v707, %v709
        %v717 = vsel %vm672, %v709, %v711
        %v718 = vsel %vm672, %v711, %v713
        %v724 = vadd.f32 %v641, %v714
        %v725 = vadd.f32 %v642, %v715
        %v726 = vadd.f32 %v643, %v716
        %v727 = vadd.f32 %v644, %v717
        %v728 = vadd.f32 %v645, %v718
        %s729 = sld [smem:[#allocation3 + $0x6]]
        %v730 = vstv %s729
        %v731 = vmul.f32 %v308, %v730
        %v732 = vmul.f32 %v309, %v730
        %v733 = vmul.f32 %v310, %v730
        %v734 = vmul.f32 %v311, %v730
        %v735 = vmul.f32 %v312, %v730
        %v736 = vmul.f32 %v313, %v730
        %743 = vrot.lane.b32.xlu0 %v731, 122
        %v744 = vpop.permute.xlu0 %743
        %745 = vrot.lane.b32.xlu0 %v732, 122
        %v746 = vpop.permute.xlu0 %745
        %747 = vrot.lane.b32.xlu0 %v733, 122
        %v748 = vpop.permute.xlu0 %747
        %749 = vrot.lane.b32.xlu0 %v734, 122
        %v750 = vpop.permute.xlu0 %749
        %751 = vrot.lane.b32.xlu0 %v735, 122
        %v752 = vpop.permute.xlu0 %751
        %753 = vrot.lane.b32.xlu0 %v736, 122
        %v754 = vpop.permute.xlu0 %753
        %vm755 = vcmask 998400
        %v756 = vsel %vm755, %v744, %v746
        %v757 = vsel %vm755, %v746, %v748
        %v758 = vsel %vm755, %v748, %v750
        %v759 = vsel %vm755, %v750, %v752
        %v760 = vsel %vm755, %v752, %v754
        %v766 = vadd.f32 %v683, %v756
        %v767 = vadd.f32 %v684, %v757
        %v768 = vadd.f32 %v685, %v758
        %v769 = vadd.f32 %v686, %v759
        %v770 = vadd.f32 %v687, %v760
        %s771 = sld [smem:[#allocation3 + $0x406]]
        %v772 = vstv %s771
        %v773 = vmul.f32 %v308, %v772
        %v774 = vmul.f32 %v309, %v772
        %v775 = vmul.f32 %v310, %v772
        %v776 = vmul.f32 %v311, %v772
        %v777 = vmul.f32 %v312, %v772
        %v778 = vmul.f32 %v313, %v772
        %785 = vrot.lane.b32.xlu0 %v773, 122
        %v786 = vpop.permute.xlu0 %785
        %787 = vrot.lane.b32.xlu0 %v774, 122
        %v788 = vpop.permute.xlu0 %787
        %789 = vrot.lane.b32.xlu0 %v775, 122
        %v790 = vpop.permute.xlu0 %789
        %791 = vrot.lane.b32.xlu0 %v776, 122
        %v792 = vpop.permute.xlu0 %791
        %793 = vrot.lane.b32.xlu0 %v777, 122
        %v794 = vpop.permute.xlu0 %793
        %795 = vrot.lane.b32.xlu0 %v778, 122
        %v796 = vpop.permute.xlu0 %795
        %v797 = vsel %vm755, %v786, %v788
        %v798 = vsel %vm755, %v788, %v790
        %v799 = vsel %vm755, %v790, %v792
        %v800 = vsel %vm755, %v792, %v794
        %v801 = vsel %vm755, %v794, %v796
        %v807 = vadd.f32 %v724, %v797
        %v808 = vadd.f32 %v725, %v798
        %v809 = vadd.f32 %v726, %v799
        %v810 = vadd.f32 %v727, %v800
        %v811 = vadd.f32 %v728, %v801
        %s812 = sld [smem:[#allocation3 + $0x7]]
        %v813 = vstv %s812
        %v814 = vmul.f32 %v308, %v813
        %v815 = vmul.f32 %v309, %v813
        %v816 = vmul.f32 %v310, %v813
        %v817 = vmul.f32 %v311, %v813
        %v818 = vmul.f32 %v312, %v813
        %v819 = vmul.f32 %v313, %v813
        %826 = vrot.lane.b32.xlu0 %v814, 121
        %v827 = vpop.permute.xlu0 %826
        %828 = vrot.lane.b32.xlu0 %v815, 121
        %v829 = vpop.permute.xlu0 %828
        %830 = vrot.lane.b32.xlu0 %v816, 121
        %v831 = vpop.permute.xlu0 %830
        %832 = vrot.lane.b32.xlu0 %v817, 121
        %v833 = vpop.permute.xlu0 %832
        %834 = vrot.lane.b32.xlu0 %v818, 121
        %v835 = vpop.permute.xlu0 %834
        %836 = vrot.lane.b32.xlu0 %v819, 121
        %v837 = vpop.permute.xlu0 %836
        %vm838 = vcmask 990208
        %v839 = vsel %vm838, %v827, %v829
        %v840 = vsel %vm838, %v829, %v831
        %v841 = vsel %vm838, %v831, %v833
        %v842 = vsel %vm838, %v833, %v835
        %v843 = vsel %vm838, %v835, %v837
        %v849 = vadd.f32 %v766, %v839
        %v850 = vadd.f32 %v767, %v840
        %v851 = vadd.f32 %v768, %v841
        %v852 = vadd.f32 %v769, %v842
        %v853 = vadd.f32 %v770, %v843
        %s854 = sld [smem:[#allocation3 + $0x407]]
        %v855 = vstv %s854
        %v856 = vmul.f32 %v308, %v855
        %v857 = vmul.f32 %v309, %v855
        %v858 = vmul.f32 %v310, %v855
        %v859 = vmul.f32 %v311, %v855
        %v860 = vmul.f32 %v312, %v855
        %v861 = vmul.f32 %v313, %v855
        %868 = vrot.lane.b32.xlu0 %v856, 121
        %v869 = vpop.permute.xlu0 %868
        %870 = vrot.lane.b32.xlu0 %v857, 121
        %v871 = vpop.permute.xlu0 %870
        %872 = vrot.lane.b32.xlu0 %v858, 121
        %v873 = vpop.permute.xlu0 %872
        %874 = vrot.lane.b32.xlu0 %v859, 121
        %v875 = vpop.permute.xlu0 %874
        %876 = vrot.lane.b32.xlu0 %v860, 121
        %v877 = vpop.permute.xlu0 %876
        %878 = vrot.lane.b32.xlu0 %v861, 121
        %v879 = vpop.permute.xlu0 %878
        %v880 = vsel %vm838, %v869, %v871
        %v881 = vsel %vm838, %v871, %v873
        %v882 = vsel %vm838, %v873, %v875
        %v883 = vsel %vm838, %v875, %v877
        %v884 = vsel %vm838, %v877, %v879
        %v890 = vadd.f32 %v807, %v880
        %v891 = vadd.f32 %v808, %v881
        %v892 = vadd.f32 %v809, %v882
        %v893 = vadd.f32 %v810, %v883
        %v894 = vadd.f32 %v811, %v884
        %s895 = sld [smem:[#allocation3 + $0x8]]
        %v896 = vstv %s895
        %v897 = vmul.f32 %v308, %v896
        %v898 = vmul.f32 %v309, %v896
        %v899 = vmul.f32 %v310, %v896
        %v900 = vmul.f32 %v311, %v896
        %v901 = vmul.f32 %v312, %v896
        %v902 = vmul.f32 %v313, %v896
        %909 = vrot.lane.b32.xlu0 %v897, 120
        %v910 = vpop.permute.xlu0 %909
        %911 = vrot.lane.b32.xlu0 %v898, 120
        %v912 = vpop.permute.xlu0 %911
        %913 = vrot.lane.b32.xlu0 %v899, 120
        %v914 = vpop.permute.xlu0 %913
        %915 = vrot.lane.b32.xlu0 %v900, 120
        %v916 = vpop.permute.xlu0 %915
        %917 = vrot.lane.b32.xlu0 %v901, 120
        %v918 = vpop.permute.xlu0 %917
        %919 = vrot.lane.b32.xlu0 %v902, 120
        %v920 = vpop.permute.xlu0 %919
        %vm921 = vcmask 982016
        %v922 = vsel %vm921, %v910, %v912
        %v923 = vsel %vm921, %v912, %v914
        %v924 = vsel %vm921, %v914, %v916
        %v925 = vsel %vm921, %v916, %v918
        %v926 = vsel %vm921, %v918, %v920
        %v932 = vadd.f32 %v849, %v922
        %v933 = vadd.f32 %v850, %v923
        %v934 = vadd.f32 %v851, %v924
        %v935 = vadd.f32 %v852, %v925
        %v936 = vadd.f32 %v853, %v926
        %s937 = sld [smem:[#allocation3 + $0x408]]
        %v938 = vstv %s937
        %v939 = vmul.f32 %v308, %v938
        %v940 = vmul.f32 %v309, %v938
        %v941 = vmul.f32 %v310, %v938
        %v942 = vmul.f32 %v311, %v938
        %v943 = vmul.f32 %v312, %v938
        %v944 = vmul.f32 %v313, %v938
        %951 = vrot.lane.b32.xlu0 %v939, 120
        %v952 = vpop.permute.xlu0 %951
        %953 = vrot.lane.b32.xlu0 %v940, 120
        %v954 = vpop.permute.xlu0 %953
        %955 = vrot.lane.b32.xlu0 %v941, 120
        %v956 = vpop.permute.xlu0 %955
        %957 = vrot.lane.b32.xlu0 %v942, 120
        %v958 = vpop.permute.xlu0 %957
        %959 = vrot.lane.b32.xlu0 %v943, 120
        %v960 = vpop.permute.xlu0 %959
        %961 = vrot.lane.b32.xlu0 %v944, 120
        %v962 = vpop.permute.xlu0 %961
        %v963 = vsel %vm921, %v952, %v954
        %v964 = vsel %vm921, %v954, %v956
        %v965 = vsel %vm921, %v956, %v958
        %v966 = vsel %vm921, %v958, %v960
        %v967 = vsel %vm921, %v960, %v962
        %v973 = vadd.f32 %v890, %v963
        %v974 = vadd.f32 %v891, %v964
        %v975 = vadd.f32 %v892, %v965
        %v976 = vadd.f32 %v893, %v966
        %v977 = vadd.f32 %v894, %v967
        %s978 = sld [smem:[#allocation3 + $0x9]]
        %v979 = vstv %s978
        %v980 = vmul.f32 %v308, %v979
        %v981 = vmul.f32 %v309, %v979
        %v982 = vmul.f32 %v310, %v979
        %v983 = vmul.f32 %v311, %v979
        %v984 = vmul.f32 %v312, %v979
        %v985 = vmul.f32 %v313, %v979
        %992 = vrot.lane.b32.xlu0 %v980, 119
        %v993 = vpop.permute.xlu0 %992
        %994 = vrot.lane.b32.xlu0 %v981, 119
        %v995 = vpop.permute.xlu0 %994
        %996 = vrot.lane.b32.xlu0 %v982, 119
        %v997 = vpop.permute.xlu0 %996
        %998 = vrot.lane.b32.xlu0 %v983, 119
        %v999 = vpop.permute.xlu0 %998
        %1000 = vrot.lane.b32.xlu0 %v984, 119
        %v1001 = vpop.permute.xlu0 %1000
        %1002 = vrot.lane.b32.xlu0 %v985, 119
        %v1003 = vpop.permute.xlu0 %1002
        %vm1004 = vcmask 973824
        %v1005 = vsel %vm1004, %v993, %v995
        %v1006 = vsel %vm1004, %v995, %v997
        %v1007 = vsel %vm1004, %v997, %v999
        %v1008 = vsel %vm1004, %v999, %v1001
        %v1009 = vsel %vm1004, %v1001, %v1003
        %v1015 = vadd.f32 %v932, %v1005
        %v1016 = vadd.f32 %v933, %v1006
        %v1017 = vadd.f32 %v934, %v1007
        %v1018 = vadd.f32 %v935, %v1008
        %v1019 = vadd.f32 %v936, %v1009
        %s1020 = sld [smem:[#allocation3 + $0x409]]
        %v1021 = vstv %s1020
        %v1022 = vmul.f32 %v308, %v1021
        %v1023 = vmul.f32 %v309, %v1021
        %v1024 = vmul.f32 %v310, %v1021
        %v1025 = vmul.f32 %v311, %v1021
        %v1026 = vmul.f32 %v312, %v1021
        %v1027 = vmul.f32 %v313, %v1021
        %1034 = vrot.lane.b32.xlu0 %v1022, 119
        %v1035 = vpop.permute.xlu0 %1034
        %1036 = vrot.lane.b32.xlu0 %v1023, 119
        %v1037 = vpop.permute.xlu0 %1036
        %1038 = vrot.lane.b32.xlu0 %v1024, 119
        %v1039 = vpop.permute.xlu0 %1038
        %1040 = vrot.lane.b32.xlu0 %v1025, 119
        %v1041 = vpop.permute.xlu0 %1040
        %1042 = vrot.lane.b32.xlu0 %v1026, 119
        %v1043 = vpop.permute.xlu0 %1042
        %1044 = vrot.lane.b32.xlu0 %v1027, 119
        %v1045 = vpop.permute.xlu0 %1044
        %v1046 = vsel %vm1004, %v1035, %v1037
        %v1047 = vsel %vm1004, %v1037, %v1039
        %v1048 = vsel %vm1004, %v1039, %v1041
        %v1049 = vsel %vm1004, %v1041, %v1043
        %v1050 = vsel %vm1004, %v1043, %v1045
        %v1056 = vadd.f32 %v973, %v1046
        %v1057 = vadd.f32 %v974, %v1047
        %v1058 = vadd.f32 %v975, %v1048
        %v1059 = vadd.f32 %v976, %v1049
        %v1060 = vadd.f32 %v977, %v1050
        %1061 = vst [vmem:[%s245] sm:$0xff] %v1015
        %1062 = vst [vmem:[%s245 + $0x8] sm:$0xff] %v1016
        %1063 = vst [vmem:[%s245 + $0x10] sm:$0xff] %v1017
        %1064 = vst [vmem:[%s245 + $0x18] sm:$0xff] %v1018
        %1065 = vst [vmem:[%s245 + $0x20] sm:$0xff] %v1019
        %s1066 = scalar_lea.vmem %s245, 320 [#allocation5]
        %1067 = vst [vmem:[%s1066] sm:$0xff] %v1056
        %1068 = vst [vmem:[%s1066 + $0x8] sm:$0xff] %v1057
        %1069 = vst [vmem:[%s1066 + $0x10] sm:$0xff] %v1058
        %1070 = vst [vmem:[%s1066 + $0x18] sm:$0xff] %v1059
        %1071 = vst [vmem:[%s1066 + $0x20] sm:$0xff] %v1060
        %v1072 = vld [vmem:[#allocation2] sm:$0xff]
        %v1073 = vld [vmem:[#allocation2 + $0x8] sm:$0xff]
        %v1074 = vld [vmem:[#allocation2 + $0x10] sm:$0xff]
        %v1075 = vld [vmem:[#allocation2 + $0x18] sm:$0xff]
        %v1076 = vld [vmem:[#allocation2 + $0x20] sm:$0xff]
        %s1077 = sld [smem:[#allocation3 + $0x80]]
        %v1078 = vstv %s1077
        %v1079 = vmul.f32 %v1072, %v1078
        %v1080 = vmul.f32 %v1073, %v1078
        %v1081 = vmul.f32 %v1074, %v1078
        %v1082 = vmul.f32 %v1075, %v1078
        %v1083 = vmul.f32 %v1076, %v1078
        %s1084 = sld [smem:[#allocation3 + $0x480]]
        %v1085 = vstv %s1084
        %v1086 = vmul.f32 %v1072, %v1085
        %v1087 = vmul.f32 %v1073, %v1085
        %v1088 = vmul.f32 %v1074, %v1085
        %v1089 = vmul.f32 %v1075, %v1085
        %v1090 = vmul.f32 %v1076, %v1085
        %v1091 = vld [vmem:[#allocation2] sm:$0xff]
        %v1092 = vld [vmem:[#allocation2 + $0x8] sm:$0xff]
        %v1093 = vld [vmem:[#allocation2 + $0x10] sm:$0xff]
        %v1094 = vld [vmem:[#allocation2 + $0x18] sm:$0xff]
        %v1095 = vld [vmem:[#allocation2 + $0x20] sm:$0xff]
        %v1096 = vld [vmem:[#allocation2 + $0x28] sm:$0xff]
        %s1097 = sld [smem:[#allocation3 + $0x81]]
        %v1098 = vstv %s1097
        %v1099 = vmul.f32 %v1091, %v1098
        %v1100 = vmul.f32 %v1092, %v1098
        %v1101 = vmul.f32 %v1093, %v1098
        %v1102 = vmul.f32 %v1094, %v1098
        %v1103 = vmul.f32 %v1095, %v1098
        %v1104 = vmul.f32 %v1096, %v1098
        %1111 = vrot.lane.b32.xlu0 %v1099, 127
        %v1112 = vpop.permute.xlu0 %1111
        %1113 = vrot.lane.b32.xlu0 %v1100, 127
        %v1114 = vpop.permute.xlu0 %1113
        %1115 = vrot.lane.b32.xlu0 %v1101, 127
        %v1116 = vpop.permute.xlu0 %1115
        %1117 = vrot.lane.b32.xlu0 %v1102, 127
        %v1118 = vpop.permute.xlu0 %1117
        %1119 = vrot.lane.b32.xlu0 %v1103, 127
        %v1120 = vpop.permute.xlu0 %1119
        %1121 = vrot.lane.b32.xlu0 %v1104, 127
        %v1122 = vpop.permute.xlu0 %1121
        %v1123 = vsel %vm340, %v1112, %v1114
        %v1124 = vsel %vm340, %v1114, %v1116
        %v1125 = vsel %vm340, %v1116, %v1118
        %v1126 = vsel %vm340, %v1118, %v1120
        %v1127 = vsel %vm340, %v1120, %v1122
        %v1133 = vadd.f32 %v1079, %v1123
        %v1134 = vadd.f32 %v1080, %v1124
        %v1135 = vadd.f32 %v1081, %v1125
        %v1136 = vadd.f32 %v1082, %v1126
        %v1137 = vadd.f32 %v1083, %v1127
        %s1138 = sld [smem:[#allocation3 + $0x481]]
        %v1139 = vstv %s1138
        %v1140 = vmul.f32 %v1091, %v1139
        %v1141 = vmul.f32 %v1092, %v1139
        %v1142 = vmul.f32 %v1093, %v1139
        %v1143 = vmul.f32 %v1094, %v1139
        %v1144 = vmul.f32 %v1095, %v1139
        %v1145 = vmul.f32 %v1096, %v1139
        %1152 = vrot.lane.b32.xlu0 %v1140, 127
        %v1153 = vpop.permute.xlu0 %1152
        %1154 = vrot.lane.b32.xlu0 %v1141, 127
        %v1155 = vpop.permute.xlu0 %1154
        %1156 = vrot.lane.b32.xlu0 %v1142, 127
        %v1157 = vpop.permute.xlu0 %1156
        %1158 = vrot.lane.b32.xlu0 %v1143, 127
        %v1159 = vpop.permute.xlu0 %1158
        %1160 = vrot.lane.b32.xlu0 %v1144, 127
        %v1161 = vpop.permute.xlu0 %1160
        %1162 = vrot.lane.b32.xlu0 %v1145, 127
        %v1163 = vpop.permute.xlu0 %1162
        %v1164 = vsel %vm340, %v1153, %v1155
        %v1165 = vsel %vm340, %v1155, %v1157
        %v1166 = vsel %vm340, %v1157, %v1159
        %v1167 = vsel %vm340, %v1159, %v1161
        %v1168 = vsel %vm340, %v1161, %v1163
        %v1174 = vadd.f32 %v1086, %v1164
        %v1175 = vadd.f32 %v1087, %v1165
        %v1176 = vadd.f32 %v1088, %v1166
        %v1177 = vadd.f32 %v1089, %v1167
        %v1178 = vadd.f32 %v1090, %v1168
        %s1179 = sld [smem:[#allocation3 + $0x82]]
        %v1180 = vstv %s1179
        %v1181 = vmul.f32 %v1091, %v1180
        %v1182 = vmul.f32 %v1092, %v1180
        %v1183 = vmul.f32 %v1093, %v1180
        %v1184 = vmul.f32 %v1094, %v1180
        %v1185 = vmul.f32 %v1095, %v1180
        %v1186 = vmul.f32 %v1096, %v1180
        %1193 = vrot.lane.b32.xlu0 %v1181, 126
        %v1194 = vpop.permute.xlu0 %1193
        %1195 = vrot.lane.b32.xlu0 %v1182, 126
        %v1196 = vpop.permute.xlu0 %1195
        %1197 = vrot.lane.b32.xlu0 %v1183, 126
        %v1198 = vpop.permute.xlu0 %1197
        %1199 = vrot.lane.b32.xlu0 %v1184, 126
        %v1200 = vpop.permute.xlu0 %1199
        %1201 = vrot.lane.b32.xlu0 %v1185, 126
        %v1202 = vpop.permute.xlu0 %1201
        %1203 = vrot.lane.b32.xlu0 %v1186, 126
        %v1204 = vpop.permute.xlu0 %1203
        %v1205 = vsel %vm423, %v1194, %v1196
        %v1206 = vsel %vm423, %v1196, %v1198
        %v1207 = vsel %vm423, %v1198, %v1200
        %v1208 = vsel %vm423, %v1200, %v1202
        %v1209 = vsel %vm423, %v1202, %v1204
        %v1215 = vadd.f32 %v1133, %v1205
        %v1216 = vadd.f32 %v1134, %v1206
        %v1217 = vadd.f32 %v1135, %v1207
        %v1218 = vadd.f32 %v1136, %v1208
        %v1219 = vadd.f32 %v1137, %v1209
        %s1220 = sld [smem:[#allocation3 + $0x482]]
        %v1221 = vstv %s1220
        %v1222 = vmul.f32 %v1091, %v1221
        %v1223 = vmul.f32 %v1092, %v1221
        %v1224 = vmul.f32 %v1093, %v1221
        %v1225 = vmul.f32 %v1094, %v1221
        %v1226 = vmul.f32 %v1095, %v1221
        %v1227 = vmul.f32 %v1096, %v1221
        %1234 = vrot.lane.b32.xlu0 %v1222, 126
        %v1235 = vpop.permute.xlu0 %1234
        %1236 = vrot.lane.b32.xlu0 %v1223, 126
        %v1237 = vpop.permute.xlu0 %1236
        %1238 = vrot.lane.b32.xlu0 %v1224, 126
        %v1239 = vpop.permute.xlu0 %1238
        %1240 = vrot.lane.b32.xlu0 %v1225, 126
        %v1241 = vpop.permute.xlu0 %1240
        %1242 = vrot.lane.b32.xlu0 %v1226, 126
        %v1243 = vpop.permute.xlu0 %1242
        %1244 = vrot.lane.b32.xlu0 %v1227, 126
        %v1245 = vpop.permute.xlu0 %1244
        %v1246 = vsel %vm423, %v1235, %v1237
        %v1247 = vsel %vm423, %v1237, %v1239
        %v1248 = vsel %vm423, %v1239, %v1241
        %v1249 = vsel %vm423, %v1241, %v1243
        %v1250 = vsel %vm423, %v1243, %v1245
        %v1256 = vadd.f32 %v1174, %v1246
        %v1257 = vadd.f32 %v1175, %v1247
        %v1258 = vadd.f32 %v1176, %v1248
        %v1259 = vadd.f32 %v1177, %v1249
        %v1260 = vadd.f32 %v1178, %v1250
        %s1261 = sld [smem:[#allocation3 + $0x83]]
        %v1262 = vstv %s1261
        %v1263 = vmul.f32 %v1091, %v1262
        %v1264 = vmul.f32 %v1092, %v1262
        %v1265 = vmul.f32 %v1093, %v1262
        %v1266 = vmul.f32 %v1094, %v1262
        %v1267 = vmul.f32 %v1095, %v1262
        %v1268 = vmul.f32 %v1096, %v1262
        %1275 = vrot.lane.b32.xlu0 %v1263, 125
        %v1276 = vpop.permute.xlu0 %1275
        %1277 = vrot.lane.b32.xlu0 %v1264, 125
        %v1278 = vpop.permute.xlu0 %1277
        %1279 = vrot.lane.b32.xlu0 %v1265, 125
        %v1280 = vpop.permute.xlu0 %1279
        %1281 = vrot.lane.b32.xlu0 %v1266, 125
        %v1282 = vpop.permute.xlu0 %1281
        %1283 = vrot.lane.b32.xlu0 %v1267, 125
        %v1284 = vpop.permute.xlu0 %1283
        %1285 = vrot.lane.b32.xlu0 %v1268, 125
        %v1286 = vpop.permute.xlu0 %1285
        %v1287 = vsel %vm506, %v1276, %v1278
        %v1288 = vsel %vm506, %v1278, %v1280
        %v1289 = vsel %vm506, %v1280, %v1282
        %v1290 = vsel %vm506, %v1282, %v1284
        %v1291 = vsel %vm506, %v1284, %v1286
        %v1297 = vadd.f32 %v1215, %v1287
        %v1298 = vadd.f32 %v1216, %v1288
        %v1299 = vadd.f32 %v1217, %v1289
        %v1300 = vadd.f32 %v1218, %v1290
        %v1301 = vadd.f32 %v1219, %v1291
        %s1302 = sld [smem:[#allocation3 + $0x483]]
        %v1303 = vstv %s1302
        %v1304 = vmul.f32 %v1091, %v1303
        %v1305 = vmul.f32 %v1092, %v1303
        %v1306 = vmul.f32 %v1093, %v1303
        %v1307 = vmul.f32 %v1094, %v1303
        %v1308 = vmul.f32 %v1095, %v1303
        %v1309 = vmul.f32 %v1096, %v1303
        %1316 = vrot.lane.b32.xlu0 %v1304, 125
        %v1317 = vpop.permute.xlu0 %1316
        %1318 = vrot.lane.b32.xlu0 %v1305, 125
        %v1319 = vpop.permute.xlu0 %1318
        %1320 = vrot.lane.b32.xlu0 %v1306, 125
        %v1321 = vpop.permute.xlu0 %1320
        %1322 = vrot.lane.b32.xlu0 %v1307, 125
        %v1323 = vpop.permute.xlu0 %1322
        %1324 = vrot.lane.b32.xlu0 %v1308, 125
        %v1325 = vpop.permute.xlu0 %1324
        %1326 = vrot.lane.b32.xlu0 %v1309, 125
        %v1327 = vpop.permute.xlu0 %1326
        %v1328 = vsel %vm506, %v1317, %v1319
        %v1329 = vsel %vm506, %v1319, %v1321
        %v1330 = vsel %vm506, %v1321, %v1323
        %v1331 = vsel %vm506, %v1323, %v1325
        %v1332 = vsel %vm506, %v1325, %v1327
        %v1338 = vadd.f32 %v1256, %v1328
        %v1339 = vadd.f32 %v1257, %v1329
        %v1340 = vadd.f32 %v1258, %v1330
        %v1341 = vadd.f32 %v1259, %v1331
        %v1342 = vadd.f32 %v1260, %v1332
        %s1343 = sld [smem:[#allocation3 + $0x84]]
        %v1344 = vstv %s1343
        %v1345 = vmul.f32 %v1091, %v1344
        %v1346 = vmul.f32 %v1092, %v1344
        %v1347 = vmul.f32 %v1093, %v1344
        %v1348 = vmul.f32 %v1094, %v1344
        %v1349 = vmul.f32 %v1095, %v1344
        %v1350 = vmul.f32 %v1096, %v1344
        %1357 = vrot.lane.b32.xlu0 %v1345, 124
        %v1358 = vpop.permute.xlu0 %1357
        %1359 = vrot.lane.b32.xlu0 %v1346, 124
        %v1360 = vpop.permute.xlu0 %1359
        %1361 = vrot.lane.b32.xlu0 %v1347, 124
        %v1362 = vpop.permute.xlu0 %1361
        %1363 = vrot.lane.b32.xlu0 %v1348, 124
        %v1364 = vpop.permute.xlu0 %1363
        %1365 = vrot.lane.b32.xlu0 %v1349, 124
        %v1366 = vpop.permute.xlu0 %1365
        %1367 = vrot.lane.b32.xlu0 %v1350, 124
        %v1368 = vpop.permute.xlu0 %1367
        %v1369 = vsel %vm589, %v1358, %v1360
        %v1370 = vsel %vm589, %v1360, %v1362
        %v1371 = vsel %vm589, %v1362, %v1364
        %v1372 = vsel %vm589, %v1364, %v1366
        %v1373 = vsel %vm589, %v1366, %v1368
        %v1379 = vadd.f32 %v1297, %v1369
        %v1380 = vadd.f32 %v1298, %v1370
        %v1381 = vadd.f32 %v1299, %v1371
        %v1382 = vadd.f32 %v1300, %v1372
        %v1383 = vadd.f32 %v1301, %v1373
        %s1384 = sld [smem:[#allocation3 + $0x484]]
        %v1385 = vstv %s1384
        %v1386 = vmul.f32 %v1091, %v1385
        %v1387 = vmul.f32 %v1092, %v1385
        %v1388 = vmul.f32 %v1093, %v1385
        %v1389 = vmul.f32 %v1094, %v1385
        %v1390 = vmul.f32 %v1095, %v1385
        %v1391 = vmul.f32 %v1096, %v1385
        %1398 = vrot.lane.b32.xlu0 %v1386, 124
        %v1399 = vpop.permute.xlu0 %1398
        %1400 = vrot.lane.b32.xlu0 %v1387, 124
        %v1401 = vpop.permute.xlu0 %1400
        %1402 = vrot.lane.b32.xlu0 %v1388, 124
        %v1403 = vpop.permute.xlu0 %1402
        %1404 = vrot.lane.b32.xlu0 %v1389, 124
        %v1405 = vpop.permute.xlu0 %1404
        %1406 = vrot.lane.b32.xlu0 %v1390, 124
        %v1407 = vpop.permute.xlu0 %1406
        %1408 = vrot.lane.b32.xlu0 %v1391, 124
        %v1409 = vpop.permute.xlu0 %1408
        %v1410 = vsel %vm589, %v1399, %v1401
        %v1411 = vsel %vm589, %v1401, %v1403
        %v1412 = vsel %vm589, %v1403, %v1405
        %v1413 = vsel %vm589, %v1405, %v1407
        %v1414 = vsel %vm589, %v1407, %v1409
        %v1420 = vadd.f32 %v1338, %v1410
        %v1421 = vadd.f32 %v1339, %v1411
        %v1422 = vadd.f32 %v1340, %v1412
        %v1423 = vadd.f32 %v1341, %v1413
        %v1424 = vadd.f32 %v1342, %v1414
        %s1425 = sld [smem:[#allocation3 + $0x85]]
        %v1426 = vstv %s1425
        %v1427 = vmul.f32 %v1091, %v1426
        %v1428 = vmul.f32 %v1092, %v1426
        %v1429 = vmul.f32 %v1093, %v1426
        %v1430 = vmul.f32 %v1094, %v1426
        %v1431 = vmul.f32 %v1095, %v1426
        %v1432 = vmul.f32 %v1096, %v1426
        %1439 = vrot.lane.b32.xlu0 %v1427, 123
        %v1440 = vpop.permute.xlu0 %1439
        %1441 = vrot.lane.b32.xlu0 %v1428, 123
        %v1442 = vpop.permute.xlu0 %1441
        %1443 = vrot.lane.b32.xlu0 %v1429, 123
        %v1444 = vpop.permute.xlu0 %1443
        %1445 = vrot.lane.b32.xlu0 %v1430, 123
        %v1446 = vpop.permute.xlu0 %1445
        %1447 = vrot.lane.b32.xlu0 %v1431, 123
        %v1448 = vpop.permute.xlu0 %1447
        %1449 = vrot.lane.b32.xlu0 %v1432, 123
        %v1450 = vpop.permute.xlu0 %1449
        %v1451 = vsel %vm672, %v1440, %v1442
        %v1452 = vsel %vm672, %v1442, %v1444
        %v1453 = vsel %vm672, %v1444, %v1446
        %v1454 = vsel %vm672, %v1446, %v1448
        %v1455 = vsel %vm672, %v1448, %v1450
        %v1461 = vadd.f32 %v1379, %v1451
        %v1462 = vadd.f32 %v1380, %v1452
        %v1463 = vadd.f32 %v1381, %v1453
        %v1464 = vadd.f32 %v1382, %v1454
        %v1465 = vadd.f32 %v1383, %v1455
        %s1466 = sld [smem:[#allocation3 + $0x485]]
        %v1467 = vstv %s1466
        %v1468 = vmul.f32 %v1091, %v1467
        %v1469 = vmul.f32 %v1092, %v1467
        %v1470 = vmul.f32 %v1093, %v1467
        %v1471 = vmul.f32 %v1094, %v1467
        %v1472 = vmul.f32 %v1095, %v1467
        %v1473 = vmul.f32 %v1096, %v1467
        %1480 = vrot.lane.b32.xlu0 %v1468, 123
        %v1481 = vpop.permute.xlu0 %1480
        %1482 = vrot.lane.b32.xlu0 %v1469, 123
        %v1483 = vpop.permute.xlu0 %1482
        %1484 = vrot.lane.b32.xlu0 %v1470, 123
        %v1485 = vpop.permute.xlu0 %1484
        %1486 = vrot.lane.b32.xlu0 %v1471, 123
        %v1487 = vpop.permute.xlu0 %1486
        %1488 = vrot.lane.b32.xlu0 %v1472, 123
        %v1489 = vpop.permute.xlu0 %1488
        %1490 = vrot.lane.b32.xlu0 %v1473, 123
        %v1491 = vpop.permute.xlu0 %1490
        %v1492 = vsel %vm672, %v1481, %v1483
        %v1493 = vsel %vm672, %v1483, %v1485
        %v1494 = vsel %vm672, %v1485, %v1487
        %v1495 = vsel %vm672, %v1487, %v1489
        %v1496 = vsel %vm672, %v1489, %v1491
        %v1502 = vadd.f32 %v1420, %v1492
        %v1503 = vadd.f32 %v1421, %v1493
        %v1504 = vadd.f32 %v1422, %v1494
        %v1505 = vadd.f32 %v1423, %v1495
        %v1506 = vadd.f32 %v1424, %v1496
        %s1507 = sld [smem:[#allocation3 + $0x86]]
        %v1508 = vstv %s1507
        %v1509 = vmul.f32 %v1091, %v1508
        %v1510 = vmul.f32 %v1092, %v1508
        %v1511 = vmul.f32 %v1093, %v1508
        %v1512 = vmul.f32 %v1094, %v1508
        %v1513 = vmul.f32 %v1095, %v1508
        %v1514 = vmul.f32 %v1096, %v1508
        %1521 = vrot.lane.b32.xlu0 %v1509, 122
        %v1522 = vpop.permute.xlu0 %1521
        %1523 = vrot.lane.b32.xlu0 %v1510, 122
        %v1524 = vpop.permute.xlu0 %1523
        %1525 = vrot.lane.b32.xlu0 %v1511, 122
        %v1526 = vpop.permute.xlu0 %1525
        %1527 = vrot.lane.b32.xlu0 %v1512, 122
        %v1528 = vpop.permute.xlu0 %1527
        %1529 = vrot.lane.b32.xlu0 %v1513, 122
        %v1530 = vpop.permute.xlu0 %1529
        %1531 = vrot.lane.b32.xlu0 %v1514, 122
        %v1532 = vpop.permute.xlu0 %1531
        %v1533 = vsel %vm755, %v1522, %v1524
        %v1534 = vsel %vm755, %v1524, %v1526
        %v1535 = vsel %vm755, %v1526, %v1528
        %v1536 = vsel %vm755, %v1528, %v1530
        %v1537 = vsel %vm755, %v1530, %v1532
        %v1543 = vadd.f32 %v1461, %v1533
        %v1544 = vadd.f32 %v1462, %v1534
        %v1545 = vadd.f32 %v1463, %v1535
        %v1546 = vadd.f32 %v1464, %v1536
        %v1547 = vadd.f32 %v1465, %v1537
        %s1548 = sld [smem:[#allocation3 + $0x486]]
        %v1549 = vstv %s1548
        %v1550 = vmul.f32 %v1091, %v1549
        %v1551 = vmul.f32 %v1092, %v1549
        %v1552 = vmul.f32 %v1093, %v1549
        %v1553 = vmul.f32 %v1094, %v1549
        %v1554 = vmul.f32 %v1095, %v1549
        %v1555 = vmul.f32 %v1096, %v1549
        %1562 = vrot.lane.b32.xlu0 %v1550, 122
        %v1563 = vpop.permute.xlu0 %1562
        %1564 = vrot.lane.b32.xlu0 %v1551, 122
        %v1565 = vpop.permute.xlu0 %1564
        %1566 = vrot.lane.b32.xlu0 %v1552, 122
        %v1567 = vpop.permute.xlu0 %1566
        %1568 = vrot.lane.b32.xlu0 %v1553, 122
        %v1569 = vpop.permute.xlu0 %1568
        %1570 = vrot.lane.b32.xlu0 %v1554, 122
        %v1571 = vpop.permute.xlu0 %1570
        %1572 = vrot.lane.b32.xlu0 %v1555, 122
        %v1573 = vpop.permute.xlu0 %1572
        %v1574 = vsel %vm755, %v1563, %v1565
        %v1575 = vsel %vm755, %v1565, %v1567
        %v1576 = vsel %vm755, %v1567, %v1569
        %v1577 = vsel %vm755, %v1569, %v1571
        %v1578 = vsel %vm755, %v1571, %v1573
        %v1584 = vadd.f32 %v1502, %v1574
        %v1585 = vadd.f32 %v1503, %v1575
        %v1586 = vadd.f32 %v1504, %v1576
        %v1587 = vadd.f32 %v1505, %v1577
        %v1588 = vadd.f32 %v1506, %v1578
        %s1589 = sld [smem:[#allocation3 + $0x87]]
        %v1590 = vstv %s1589
        %v1591 = vmul.f32 %v1091, %v1590
        %v1592 = vmul.f32 %v1092, %v1590
        %v1593 = vmul.f32 %v1093, %v1590
        %v1594 = vmul.f32 %v1094, %v1590
        %v1595 = vmul.f32 %v1095, %v1590
        %v1596 = vmul.f32 %v1096, %v1590
        %1603 = vrot.lane.b32.xlu0 %v1591, 121
        %v1604 = vpop.permute.xlu0 %1603
        %1605 = vrot.lane.b32.xlu0 %v1592, 121
        %v1606 = vpop.permute.xlu0 %1605
        %1607 = vrot.lane.b32.xlu0 %v1593, 121
        %v1608 = vpop.permute.xlu0 %1607
        %1609 = vrot.lane.b32.xlu0 %v1594, 121
        %v1610 = vpop.permute.xlu0 %1609
        %1611 = vrot.lane.b32.xlu0 %v1595, 121
        %v1612 = vpop.permute.xlu0 %1611
        %1613 = vrot.lane.b32.xlu0 %v1596, 121
        %v1614 = vpop.permute.xlu0 %1613
        %v1615 = vsel %vm838, %v1604, %v1606
        %v1616 = vsel %vm838, %v1606, %v1608
        %v1617 = vsel %vm838, %v1608, %v1610
        %v1618 = vsel %vm838, %v1610, %v1612
        %v1619 = vsel %vm838, %v1612, %v1614
        %v1625 = vadd.f32 %v1543, %v1615
        %v1626 = vadd.f32 %v1544, %v1616
        %v1627 = vadd.f32 %v1545, %v1617
        %v1628 = vadd.f32 %v1546, %v1618
        %v1629 = vadd.f32 %v1547, %v1619
        %s1630 = sld [smem:[#allocation3 + $0x487]]
        %v1631 = vstv %s1630
        %v1632 = vmul.f32 %v1091, %v1631
        %v1633 = vmul.f32 %v1092, %v1631
        %v1634 = vmul.f32 %v1093, %v1631
        %v1635 = vmul.f32 %v1094, %v1631
        %v1636 = vmul.f32 %v1095, %v1631
        %v1637 = vmul.f32 %v1096, %v1631
        %1644 = vrot.lane.b32.xlu0 %v1632, 121
        %v1645 = vpop.permute.xlu0 %1644
        %1646 = vrot.lane.b32.xlu0 %v1633, 121
        %v1647 = vpop.permute.xlu0 %1646
        %1648 = vrot.lane.b32.xlu0 %v1634, 121
        %v1649 = vpop.permute.xlu0 %1648
        %1650 = vrot.lane.b32.xlu0 %v1635, 121
        %v1651 = vpop.permute.xlu0 %1650
        %1652 = vrot.lane.b32.xlu0 %v1636, 121
        %v1653 = vpop.permute.xlu0 %1652
        %1654 = vrot.lane.b32.xlu0 %v1637, 121
        %v1655 = vpop.permute.xlu0 %1654
        %v1656 = vsel %vm838, %v1645, %v1647
        %v1657 = vsel %vm838, %v1647, %v1649
        %v1658 = vsel %vm838, %v1649, %v1651
        %v1659 = vsel %vm838, %v1651, %v1653
        %v1660 = vsel %vm838, %v1653, %v1655
        %v1666 = vadd.f32 %v1584, %v1656
        %v1667 = vadd.f32 %v1585, %v1657
        %v1668 = vadd.f32 %v1586, %v1658
        %v1669 = vadd.f32 %v1587, %v1659
        %v1670 = vadd.f32 %v1588, %v1660
        %s1671 = sld [smem:[#allocation3 + $0x88]]
        %v1672 = vstv %s1671
        %v1673 = vmul.f32 %v1091, %v1672
        %v1674 = vmul.f32 %v1092, %v1672
        %v1675 = vmul.f32 %v1093, %v1672
        %v1676 = vmul.f32 %v1094, %v1672
        %v1677 = vmul.f32 %v1095, %v1672
        %v1678 = vmul.f32 %v1096, %v1672
        %1685 = vrot.lane.b32.xlu0 %v1673, 120
        %v1686 = vpop.permute.xlu0 %1685
        %1687 = vrot.lane.b32.xlu0 %v1674, 120
        %v1688 = vpop.permute.xlu0 %1687
        %1689 = vrot.lane.b32.xlu0 %v1675, 120
        %v1690 = vpop.permute.xlu0 %1689
        %1691 = vrot.lane.b32.xlu0 %v1676, 120
        %v1692 = vpop.permute.xlu0 %1691
        %1693 = vrot.lane.b32.xlu0 %v1677, 120
        %v1694 = vpop.permute.xlu0 %1693
        %1695 = vrot.lane.b32.xlu0 %v1678, 120
        %v1696 = vpop.permute.xlu0 %1695
        %v1697 = vsel %vm921, %v1686, %v1688
        %v1698 = vsel %vm921, %v1688, %v1690
        %v1699 = vsel %vm921, %v1690, %v1692
        %v1700 = vsel %vm921, %v1692, %v1694
        %v1701 = vsel %vm921, %v1694, %v1696
        %v1707 = vadd.f32 %v1625, %v1697
        %v1708 = vadd.f32 %v1626, %v1698
        %v1709 = vadd.f32 %v1627, %v1699
        %v1710 = vadd.f32 %v1628, %v1700
        %v1711 = vadd.f32 %v1629, %v1701
        %s1712 = sld [smem:[#allocation3 + $0x488]]
        %v1713 = vstv %s1712
        %v1714 = vmul.f32 %v1091, %v1713
        %v1715 = vmul.f32 %v1092, %v1713
        %v1716 = vmul.f32 %v1093, %v1713
        %v1717 = vmul.f32 %v1094, %v1713
        %v1718 = vmul.f32 %v1095, %v1713
        %v1719 = vmul.f32 %v1096, %v1713
        %1726 = vrot.lane.b32.xlu0 %v1714, 120
        %v1727 = vpop.permute.xlu0 %1726
        %1728 = vrot.lane.b32.xlu0 %v1715, 120
        %v1729 = vpop.permute.xlu0 %1728
        %1730 = vrot.lane.b32.xlu0 %v1716, 120
        %v1731 = vpop.permute.xlu0 %1730
        %1732 = vrot.lane.b32.xlu0 %v1717, 120
        %v1733 = vpop.permute.xlu0 %1732
        %1734 = vrot.lane.b32.xlu0 %v1718, 120
        %v1735 = vpop.permute.xlu0 %1734
        %1736 = vrot.lane.b32.xlu0 %v1719, 120
        %v1737 = vpop.permute.xlu0 %1736
        %v1738 = vsel %vm921, %v1727, %v1729
        %v1739 = vsel %vm921, %v1729, %v1731
        %v1740 = vsel %vm921, %v1731, %v1733
        %v1741 = vsel %vm921, %v1733, %v1735
        %v1742 = vsel %vm921, %v1735, %v1737
        %v1748 = vadd.f32 %v1666, %v1738
        %v1749 = vadd.f32 %v1667, %v1739
        %v1750 = vadd.f32 %v1668, %v1740
        %v1751 = vadd.f32 %v1669, %v1741
        %v1752 = vadd.f32 %v1670, %v1742
        %s1753 = sld [smem:[#allocation3 + $0x89]]
        %v1754 = vstv %s1753
        %v1755 = vmul.f32 %v1091, %v1754
        %v1756 = vmul.f32 %v1092, %v1754
        %v1757 = vmul.f32 %v1093, %v1754
        %v1758 = vmul.f32 %v1094, %v1754
        %v1759 = vmul.f32 %v1095, %v1754
        %v1760 = vmul.f32 %v1096, %v1754
        %1767 = vrot.lane.b32.xlu0 %v1755, 119
        %v1768 = vpop.permute.xlu0 %1767
        %1769 = vrot.lane.b32.xlu0 %v1756, 119
        %v1770 = vpop.permute.xlu0 %1769
        %1771 = vrot.lane.b32.xlu0 %v1757, 119
        %v1772 = vpop.permute.xlu0 %1771
        %1773 = vrot.lane.b32.xlu0 %v1758, 119
        %v1774 = vpop.permute.xlu0 %1773
        %1775 = vrot.lane.b32.xlu0 %v1759, 119
        %v1776 = vpop.permute.xlu0 %1775
        %1777 = vrot.lane.b32.xlu0 %v1760, 119
        %v1778 = vpop.permute.xlu0 %1777
        %v1779 = vsel %vm1004, %v1768, %v1770
        %v1780 = vsel %vm1004, %v1770, %v1772
        %v1781 = vsel %vm1004, %v1772, %v1774
        %v1782 = vsel %vm1004, %v1774, %v1776
        %v1783 = vsel %vm1004, %v1776, %v1778
        %v1789 = vadd.f32 %v1707, %v1779
        %v1790 = vadd.f32 %v1708, %v1780
        %v1791 = vadd.f32 %v1709, %v1781
        %v1792 = vadd.f32 %v1710, %v1782
        %v1793 = vadd.f32 %v1711, %v1783
        %s1794 = sld [smem:[#allocation3 + $0x489]]
        %v1795 = vstv %s1794
        %v1796 = vmul.f32 %v1091, %v1795
        %v1797 = vmul.f32 %v1092, %v1795
        %v1798 = vmul.f32 %v1093, %v1795
        %v1799 = vmul.f32 %v1094, %v1795
        %v1800 = vmul.f32 %v1095, %v1795
        %v1801 = vmul.f32 %v1096, %v1795
        %1808 = vrot.lane.b32.xlu0 %v1796, 119
        %v1809 = vpop.permute.xlu0 %1808
        %1810 = vrot.lane.b32.xlu0 %v1797, 119
        %v1811 = vpop.permute.xlu0 %1810
        %1812 = vrot.lane.b32.xlu0 %v1798, 119
        %v1813 = vpop.permute.xlu0 %1812
        %1814 = vrot.lane.b32.xlu0 %v1799, 119
        %v1815 = vpop.permute.xlu0 %1814
        %1816 = vrot.lane.b32.xlu0 %v1800, 119
        %v1817 = vpop.permute.xlu0 %1816
        %1818 = vrot.lane.b32.xlu0 %v1801, 119
        %v1819 = vpop.permute.xlu0 %1818
        %v1820 = vsel %vm1004, %v1809, %v1811
        %v1821 = vsel %vm1004, %v1811, %v1813
        %v1822 = vsel %vm1004, %v1813, %v1815
        %v1823 = vsel %vm1004, %v1815, %v1817
        %v1824 = vsel %vm1004, %v1817, %v1819
        %v1830 = vadd.f32 %v1748, %v1820
        %v1831 = vadd.f32 %v1749, %v1821
        %v1832 = vadd.f32 %v1750, %v1822
        %v1833 = vadd.f32 %v1751, %v1823
        %v1834 = vadd.f32 %v1752, %v1824
        %s1835 = scalar_lea.vmem %s245, 40 [#allocation5]
        %1836 = vst [vmem:[%s1835] sm:$0xff] %v1789
        %1837 = vst [vmem:[%s1835 + $0x8] sm:$0xff] %v1790
        %1838 = vst [vmem:[%s1835 + $0x10] sm:$0xff] %v1791
        %1839 = vst [vmem:[%s1835 + $0x18] sm:$0xff] %v1792
        %1840 = vst [vmem:[%s1835 + $0x20] sm:$0xff] %v1793
        %s1841 = scalar_lea.vmem %s245, 360 [#allocation5]
        %1842 = vst [vmem:[%s1841] sm:$0xff] %v1830
        %1843 = vst [vmem:[%s1841 + $0x8] sm:$0xff] %v1831
        %1844 = vst [vmem:[%s1841 + $0x10] sm:$0xff] %v1832
        %1845 = vst [vmem:[%s1841 + $0x18] sm:$0xff] %v1833
        %1846 = vst [vmem:[%s1841 + $0x20] sm:$0xff] %v1834
        %v1847 = vld [vmem:[#allocation2] sm:$0xff]
        %v1848 = vld [vmem:[#allocation2 + $0x8] sm:$0xff]
        %v1849 = vld [vmem:[#allocation2 + $0x10] sm:$0xff]
        %v1850 = vld [vmem:[#allocation2 + $0x18] sm:$0xff]
        %v1851 = vld [vmem:[#allocation2 + $0x20] sm:$0xff]
        %s1852 = sld [smem:[#allocation3 + $0x100]]
        %v1853 = vstv %s1852
        %v1854 = vmul.f32 %v1847, %v1853
        %v1855 = vmul.f32 %v1848, %v1853
        %v1856 = vmul.f32 %v1849, %v1853
        %v1857 = vmul.f32 %v1850, %v1853
        %v1858 = vmul.f32 %v1851, %v1853
        %s1859 = sld [smem:[#allocation3 + $0x500]]
        %v1860 = vstv %s1859
        %v1861 = vmul.f32 %v1847, %v1860
        %v1862 = vmul.f32 %v1848, %v1860
        %v1863 = vmul.f32 %v1849, %v1860
        %v1864 = vmul.f32 %v1850, %v1860
        %v1865 = vmul.f32 %v1851, %v1860
        %v1866 = vld [vmem:[#allocation2] sm:$0xff]
        %v1867 = vld [vmem:[#allocation2 + $0x8] sm:$0xff]
        %v1868 = vld [vmem:[#allocation2 + $0x10] sm:$0xff]
        %v1869 = vld [vmem:[#allocation2 + $0x18] sm:$0xff]
        %v1870 = vld [vmem:[#allocation2 + $0x20] sm:$0xff]
        %v1871 = vld [vmem:[#allocation2 + $0x28] sm:$0xff]
        %s1872 = sld [smem:[#allocation3 + $0x101]]
        %v1873 = vstv %s1872
        %v1874 = vmul.f32 %v1866, %v1873
        %v1875 = vmul.f32 %v1867, %v1873
        %v1876 = vmul.f32 %v1868, %v1873
        %v1877 = vmul.f32 %v1869, %v1873
        %v1878 = vmul.f32 %v1870, %v1873
        %v1879 = vmul.f32 %v1871, %v1873
        %1886 = vrot.lane.b32.xlu0 %v1874, 127
        %v1887 = vpop.permute.xlu0 %1886
        %1888 = vrot.lane.b32.xlu0 %v1875, 127
        %v1889 = vpop.permute.xlu0 %1888
        %1890 = vrot.lane.b32.xlu0 %v1876, 127
        %v1891 = vpop.permute.xlu0 %1890
        %1892 = vrot.lane.b32.xlu0 %v1877, 127
        %v1893 = vpop.permute.xlu0 %1892
        %1894 = vrot.lane.b32.xlu0 %v1878, 127
        %v1895 = vpop.permute.xlu0 %1894
        %1896 = vrot.lane.b32.xlu0 %v1879, 127
        %v1897 = vpop.permute.xlu0 %1896
        %v1898 = vsel %vm340, %v1887, %v1889
        %v1899 = vsel %vm340, %v1889, %v1891
        %v1900 = vsel %vm340, %v1891, %v1893
        %v1901 = vsel %vm340, %v1893, %v1895
        %v1902 = vsel %vm340, %v1895, %v1897
        %v1908 = vadd.f32 %v1854, %v1898
        %v1909 = vadd.f32 %v1855, %v1899
        %v1910 = vadd.f32 %v1856, %v1900
        %v1911 = vadd.f32 %v1857, %v1901
        %v1912 = vadd.f32 %v1858, %v1902
        %s1913 = sld [smem:[#allocation3 + $0x501]]
        %v1914 = vstv %s1913
        %v1915 = vmul.f32 %v1866, %v1914
        %v1916 = vmul.f32 %v1867, %v1914
        %v1917 = vmul.f32 %v1868, %v1914
        %v1918 = vmul.f32 %v1869, %v1914
        %v1919 = vmul.f32 %v1870, %v1914
        %v1920 = vmul.f32 %v1871, %v1914
        %1927 = vrot.lane.b32.xlu0 %v1915, 127
        %v1928 = vpop.permute.xlu0 %1927
        %1929 = vrot.lane.b32.xlu0 %v1916, 127
        %v1930 = vpop.permute.xlu0 %1929
        %1931 = vrot.lane.b32.xlu0 %v1917, 127
        %v1932 = vpop.permute.xlu0 %1931
        %1933 = vrot.lane.b32.xlu0 %v1918, 127
        %v1934 = vpop.permute.xlu0 %1933
        %1935 = vrot.lane.b32.xlu0 %v1919, 127
        %v1936 = vpop.permute.xlu0 %1935
        %1937 = vrot.lane.b32.xlu0 %v1920, 127
        %v1938 = vpop.permute.xlu0 %1937
        %v1939 = vsel %vm340, %v1928, %v1930
        %v1940 = vsel %vm340, %v1930, %v1932
        %v1941 = vsel %vm340, %v1932, %v1934
        %v1942 = vsel %vm340, %v1934, %v1936
        %v1943 = vsel %vm340, %v1936, %v1938
        %v1949 = vadd.f32 %v1861, %v1939
        %v1950 = vadd.f32 %v1862, %v1940
        %v1951 = vadd.f32 %v1863, %v1941
        %v1952 = vadd.f32 %v1864, %v1942
        %v1953 = vadd.f32 %v1865, %v1943
        %s1954 = sld [smem:[#allocation3 + $0x102]]
        %v1955 = vstv %s1954
        %v1956 = vmul.f32 %v1866, %v1955
        %v1957 = vmul.f32 %v1867, %v1955
        %v1958 = vmul.f32 %v1868, %v1955
        %v1959 = vmul.f32 %v1869, %v1955
        %v1960 = vmul.f32 %v1870, %v1955
        %v1961 = vmul.f32 %v1871, %v1955
        %1968 = vrot.lane.b32.xlu0 %v1956, 126
        %v1969 = vpop.permute.xlu0 %1968
        %1970 = vrot.lane.b32.xlu0 %v1957, 126
        %v1971 = vpop.permute.xlu0 %1970
        %1972 = vrot.lane.b32.xlu0 %v1958, 126
        %v1973 = vpop.permute.xlu0 %1972
        %1974 = vrot.lane.b32.xlu0 %v1959, 126
        %v1975 = vpop.permute.xlu0 %1974
        %1976 = vrot.lane.b32.xlu0 %v1960, 126
        %v1977 = vpop.permute.xlu0 %1976
        %1978 = vrot.lane.b32.xlu0 %v1961, 126
        %v1979 = vpop.permute.xlu0 %1978
        %v1980 = vsel %vm423, %v1969, %v1971
        %v1981 = vsel %vm423, %v1971, %v1973
        %v1982 = vsel %vm423, %v1973, %v1975
        %v1983 = vsel %vm423, %v1975, %v1977
        %v1984 = vsel %vm423, %v1977, %v1979
        %v1990 = vadd.f32 %v1908, %v1980
        %v1991 = vadd.f32 %v1909, %v1981
        %v1992 = vadd.f32 %v1910, %v1982
        %v1993 = vadd.f32 %v1911, %v1983
        %v1994 = vadd.f32 %v1912, %v1984
        %s1995 = sld [smem:[#allocation3 + $0x502]]
        %v1996 = vstv %s1995
        %v1997 = vmul.f32 %v1866, %v1996
        %v1998 = vmul.f32 %v1867, %v1996
        %v1999 = vmul.f32 %v1868, %v1996
        %v2000 = vmul.f32 %v1869, %v1996
        %v2001 = vmul.f32 %v1870, %v1996
        %v2002 = vmul.f32 %v1871, %v1996
        %2009 = vrot.lane.b32.xlu0 %v1997, 126
        %v2010 = vpop.permute.xlu0 %2009
        %2011 = vrot.lane.b32.xlu0 %v1998, 126
        %v2012 = vpop.permute.xlu0 %2011
        %2013 = vrot.lane.b32.xlu0 %v1999, 126
        %v2014 = vpop.permute.xlu0 %2013
        %2015 = vrot.lane.b32.xlu0 %v2000, 126
        %v2016 = vpop.permute.xlu0 %2015
        %2017 = vrot.lane.b32.xlu0 %v2001, 126
        %v2018 = vpop.permute.xlu0 %2017
        %2019 = vrot.lane.b32.xlu0 %v2002, 126
        %v2020 = vpop.permute.xlu0 %2019
        %v2021 = vsel %vm423, %v2010, %v2012
        %v2022 = vsel %vm423, %v2012, %v2014
        %v2023 = vsel %vm423, %v2014, %v2016
        %v2024 = vsel %vm423, %v2016, %v2018
        %v2025 = vsel %vm423, %v2018, %v2020
        %v2031 = vadd.f32 %v1949, %v2021
        %v2032 = vadd.f32 %v1950, %v2022
        %v2033 = vadd.f32 %v1951, %v2023
        %v2034 = vadd.f32 %v1952, %v2024
        %v2035 = vadd.f32 %v1953, %v2025
        %s2036 = sld [smem:[#allocation3 + $0x103]]
        %v2037 = vstv %s2036
        %v2038 = vmul.f32 %v1866, %v2037
        %v2039 = vmul.f32 %v1867, %v2037
        %v2040 = vmul.f32 %v1868, %v2037
        %v2041 = vmul.f32 %v1869, %v2037
        %v2042 = vmul.f32 %v1870, %v2037
        %v2043 = vmul.f32 %v1871, %v2037
        %2050 = vrot.lane.b32.xlu0 %v2038, 125
        %v2051 = vpop.permute.xlu0 %2050
        %2052 = vrot.lane.b32.xlu0 %v2039, 125
        %v2053 = vpop.permute.xlu0 %2052
        %2054 = vrot.lane.b32.xlu0 %v2040, 125
        %v2055 = vpop.permute.xlu0 %2054
        %2056 = vrot.lane.b32.xlu0 %v2041, 125
        %v2057 = vpop.permute.xlu0 %2056
        %2058 = vrot.lane.b32.xlu0 %v2042, 125
        %v2059 = vpop.permute.xlu0 %2058
        %2060 = vrot.lane.b32.xlu0 %v2043, 125
        %v2061 = vpop.permute.xlu0 %2060
        %v2062 = vsel %vm506, %v2051, %v2053
        %v2063 = vsel %vm506, %v2053, %v2055
        %v2064 = vsel %vm506, %v2055, %v2057
        %v2065 = vsel %vm506, %v2057, %v2059
        %v2066 = vsel %vm506, %v2059, %v2061
        %v2072 = vadd.f32 %v1990, %v2062
        %v2073 = vadd.f32 %v1991, %v2063
        %v2074 = vadd.f32 %v1992, %v2064
        %v2075 = vadd.f32 %v1993, %v2065
        %v2076 = vadd.f32 %v1994, %v2066
        %s2077 = sld [smem:[#allocation3 + $0x503]]
        %v2078 = vstv %s2077
        %v2079 = vmul.f32 %v1866, %v2078
        %v2080 = vmul.f32 %v1867, %v2078
        %v2081 = vmul.f32 %v1868, %v2078
        %v2082 = vmul.f32 %v1869, %v2078
        %v2083 = vmul.f32 %v1870, %v2078
        %v2084 = vmul.f32 %v1871, %v2078
        %2091 = vrot.lane.b32.xlu0 %v2079, 125
        %v2092 = vpop.permute.xlu0 %2091
        %2093 = vrot.lane.b32.xlu0 %v2080, 125
        %v2094 = vpop.permute.xlu0 %2093
        %2095 = vrot.lane.b32.xlu0 %v2081, 125
        %v2096 = vpop.permute.xlu0 %2095
        %2097 = vrot.lane.b32.xlu0 %v2082, 125
        %v2098 = vpop.permute.xlu0 %2097
        %2099 = vrot.lane.b32.xlu0 %v2083, 125
        %v2100 = vpop.permute.xlu0 %2099
        %2101 = vrot.lane.b32.xlu0 %v2084, 125
        %v2102 = vpop.permute.xlu0 %2101
        %v2103 = vsel %vm506, %v2092, %v2094
        %v2104 = vsel %vm506, %v2094, %v2096
        %v2105 = vsel %vm506, %v2096, %v2098
        %v2106 = vsel %vm506, %v2098, %v2100
        %v2107 = vsel %vm506, %v2100, %v2102
        %v2113 = vadd.f32 %v2031, %v2103
        %v2114 = vadd.f32 %v2032, %v2104
        %v2115 = vadd.f32 %v2033, %v2105
        %v2116 = vadd.f32 %v2034, %v2106
        %v2117 = vadd.f32 %v2035, %v2107
        %s2118 = sld [smem:[#allocation3 + $0x104]]
        %v2119 = vstv %s2118
        %v2120 = vmul.f32 %v1866, %v2119
        %v2121 = vmul.f32 %v1867, %v2119
        %v2122 = vmul.f32 %v1868, %v2119
        %v2123 = vmul.f32 %v1869, %v2119
        %v2124 = vmul.f32 %v1870, %v2119
        %v2125 = vmul.f32 %v1871, %v2119
        %2132 = vrot.lane.b32.xlu0 %v2120, 124
        %v2133 = vpop.permute.xlu0 %2132
        %2134 = vrot.lane.b32.xlu0 %v2121, 124
        %v2135 = vpop.permute.xlu0 %2134
        %2136 = vrot.lane.b32.xlu0 %v2122, 124
        %v2137 = vpop.permute.xlu0 %2136
        %2138 = vrot.lane.b32.xlu0 %v2123, 124
        %v2139 = vpop.permute.xlu0 %2138
        %2140 = vrot.lane.b32.xlu0 %v2124, 124
        %v2141 = vpop.permute.xlu0 %2140
        %2142 = vrot.lane.b32.xlu0 %v2125, 124
        %v2143 = vpop.permute.xlu0 %2142
        %v2144 = vsel %vm589, %v2133, %v2135
        %v2145 = vsel %vm589, %v2135, %v2137
        %v2146 = vsel %vm589, %v2137, %v2139
        %v2147 = vsel %vm589, %v2139, %v2141
        %v2148 = vsel %vm589, %v2141, %v2143
        %v2154 = vadd.f32 %v2072, %v2144
        %v2155 = vadd.f32 %v2073, %v2145
        %v2156 = vadd.f32 %v2074, %v2146
        %v2157 = vadd.f32 %v2075, %v2147
        %v2158 = vadd.f32 %v2076, %v2148
        %s2159 = sld [smem:[#allocation3 + $0x504]]
        %v2160 = vstv %s2159
        %v2161 = vmul.f32 %v1866, %v2160
        %v2162 = vmul.f32 %v1867, %v2160
        %v2163 = vmul.f32 %v1868, %v2160
        %v2164 = vmul.f32 %v1869, %v2160
        %v2165 = vmul.f32 %v1870, %v2160
        %v2166 = vmul.f32 %v1871, %v2160
        %2173 = vrot.lane.b32.xlu0 %v2161, 124
        %v2174 = vpop.permute.xlu0 %2173
        %2175 = vrot.lane.b32.xlu0 %v2162, 124
        %v2176 = vpop.permute.xlu0 %2175
        %2177 = vrot.lane.b32.xlu0 %v2163, 124
        %v2178 = vpop.permute.xlu0 %2177
        %2179 = vrot.lane.b32.xlu0 %v2164, 124
        %v2180 = vpop.permute.xlu0 %2179
        %2181 = vrot.lane.b32.xlu0 %v2165, 124
        %v2182 = vpop.permute.xlu0 %2181
        %2183 = vrot.lane.b32.xlu0 %v2166, 124
        %v2184 = vpop.permute.xlu0 %2183
        %v2185 = vsel %vm589, %v2174, %v2176
        %v2186 = vsel %vm589, %v2176, %v2178
        %v2187 = vsel %vm589, %v2178, %v2180
        %v2188 = vsel %vm589, %v2180, %v2182
        %v2189 = vsel %vm589, %v2182, %v2184
        %v2195 = vadd.f32 %v2113, %v2185
        %v2196 = vadd.f32 %v2114, %v2186
        %v2197 = vadd.f32 %v2115, %v2187
        %v2198 = vadd.f32 %v2116, %v2188
        %v2199 = vadd.f32 %v2117, %v2189
        %s2200 = sld [smem:[#allocation3 + $0x105]]
        %v2201 = vstv %s2200
        %v2202 = vmul.f32 %v1866, %v2201
        %v2203 = vmul.f32 %v1867, %v2201
        %v2204 = vmul.f32 %v1868, %v2201
        %v2205 = vmul.f32 %v1869, %v2201
        %v2206 = vmul.f32 %v1870, %v2201
        %v2207 = vmul.f32 %v1871, %v2201
        %2214 = vrot.lane.b32.xlu0 %v2202, 123
        %v2215 = vpop.permute.xlu0 %2214
        %2216 = vrot.lane.b32.xlu0 %v2203, 123
        %v2217 = vpop.permute.xlu0 %2216
        %2218 = vrot.lane.b32.xlu0 %v2204, 123
        %v2219 = vpop.permute.xlu0 %2218
        %2220 = vrot.lane.b32.xlu0 %v2205, 123
        %v2221 = vpop.permute.xlu0 %2220
        %2222 = vrot.lane.b32.xlu0 %v2206, 123
        %v2223 = vpop.permute.xlu0 %2222
        %2224 = vrot.lane.b32.xlu0 %v2207, 123
        %v2225 = vpop.permute.xlu0 %2224
        %v2226 = vsel %vm672, %v2215, %v2217
        %v2227 = vsel %vm672, %v2217, %v2219
        %v2228 = vsel %vm672, %v2219, %v2221
        %v2229 = vsel %vm672, %v2221, %v2223
        %v2230 = vsel %vm672, %v2223, %v2225
        %v2236 = vadd.f32 %v2154, %v2226
        %v2237 = vadd.f32 %v2155, %v2227
        %v2238 = vadd.f32 %v2156, %v2228
        %v2239 = vadd.f32 %v2157, %v2229
        %v2240 = vadd.f32 %v2158, %v2230
        %s2241 = sld [smem:[#allocation3 + $0x505]]
        %v2242 = vstv %s2241
        %v2243 = vmul.f32 %v1866, %v2242
        %v2244 = vmul.f32 %v1867, %v2242
        %v2245 = vmul.f32 %v1868, %v2242
        %v2246 = vmul.f32 %v1869, %v2242
        %v2247 = vmul.f32 %v1870, %v2242
        %v2248 = vmul.f32 %v1871, %v2242
        %2255 = vrot.lane.b32.xlu0 %v2243, 123
        %v2256 = vpop.permute.xlu0 %2255
        %2257 = vrot.lane.b32.xlu0 %v2244, 123
        %v2258 = vpop.permute.xlu0 %2257
        %2259 = vrot.lane.b32.xlu0 %v2245, 123
        %v2260 = vpop.permute.xlu0 %2259
        %2261 = vrot.lane.b32.xlu0 %v2246, 123
        %v2262 = vpop.permute.xlu0 %2261
        %2263 = vrot.lane.b32.xlu0 %v2247, 123
        %v2264 = vpop.permute.xlu0 %2263
        %2265 = vrot.lane.b32.xlu0 %v2248, 123
        %v2266 = vpop.permute.xlu0 %2265
        %v2267 = vsel %vm672, %v2256, %v2258
        %v2268 = vsel %vm672, %v2258, %v2260
        %v2269 = vsel %vm672, %v2260, %v2262
        %v2270 = vsel %vm672, %v2262, %v2264
        %v2271 = vsel %vm672, %v2264, %v2266
        %v2277 = vadd.f32 %v2195, %v2267
        %v2278 = vadd.f32 %v2196, %v2268
        %v2279 = vadd.f32 %v2197, %v2269
        %v2280 = vadd.f32 %v2198, %v2270
        %v2281 = vadd.f32 %v2199, %v2271
        %s2282 = sld [smem:[#allocation3 + $0x106]]
        %v2283 = vstv %s2282
        %v2284 = vmul.f32 %v1866, %v2283
        %v2285 = vmul.f32 %v1867, %v2283
        %v2286 = vmul.f32 %v1868, %v2283
        %v2287 = vmul.f32 %v1869, %v2283
        %v2288 = vmul.f32 %v1870, %v2283
        %v2289 = vmul.f32 %v1871, %v2283
        %2296 = vrot.lane.b32.xlu0 %v2284, 122
        %v2297 = vpop.permute.xlu0 %2296
        %2298 = vrot.lane.b32.xlu0 %v2285, 122
        %v2299 = vpop.permute.xlu0 %2298
        %2300 = vrot.lane.b32.xlu0 %v2286, 122
        %v2301 = vpop.permute.xlu0 %2300
        %2302 = vrot.lane.b32.xlu0 %v2287, 122
        %v2303 = vpop.permute.xlu0 %2302
        %2304 = vrot.lane.b32.xlu0 %v2288, 122
        %v2305 = vpop.permute.xlu0 %2304
        %2306 = vrot.lane.b32.xlu0 %v2289, 122
        %v2307 = vpop.permute.xlu0 %2306
        %v2308 = vsel %vm755, %v2297, %v2299
        %v2309 = vsel %vm755, %v2299, %v2301
        %v2310 = vsel %vm755, %v2301, %v2303
        %v2311 = vsel %vm755, %v2303, %v2305
        %v2312 = vsel %vm755, %v2305, %v2307
        %v2318 = vadd.f32 %v2236, %v2308
        %v2319 = vadd.f32 %v2237, %v2309
        %v2320 = vadd.f32 %v2238, %v2310
        %v2321 = vadd.f32 %v2239, %v2311
        %v2322 = vadd.f32 %v2240, %v2312
        %s2323 = sld [smem:[#allocation3 + $0x506]]
        %v2324 = vstv %s2323
        %v2325 = vmul.f32 %v1866, %v2324
        %v2326 = vmul.f32 %v1867, %v2324
        %v2327 = vmul.f32 %v1868, %v2324
        %v2328 = vmul.f32 %v1869, %v2324
        %v2329 = vmul.f32 %v1870, %v2324
        %v2330 = vmul.f32 %v1871, %v2324
        %2337 = vrot.lane.b32.xlu0 %v2325, 122
        %v2338 = vpop.permute.xlu0 %2337
        %2339 = vrot.lane.b32.xlu0 %v2326, 122
        %v2340 = vpop.permute.xlu0 %2339
        %2341 = vrot.lane.b32.xlu0 %v2327, 122
        %v2342 = vpop.permute.xlu0 %2341
        %2343 = vrot.lane.b32.xlu0 %v2328, 122
        %v2344 = vpop.permute.xlu0 %2343
        %2345 = vrot.lane.b32.xlu0 %v2329, 122
        %v2346 = vpop.permute.xlu0 %2345
        %2347 = vrot.lane.b32.xlu0 %v2330, 122
        %v2348 = vpop.permute.xlu0 %2347
        %v2349 = vsel %vm755, %v2338, %v2340
        %v2350 = vsel %vm755, %v2340, %v2342
        %v2351 = vsel %vm755, %v2342, %v2344
        %v2352 = vsel %vm755, %v2344, %v2346
        %v2353 = vsel %vm755, %v2346, %v2348
        %v2359 = vadd.f32 %v2277, %v2349
        %v2360 = vadd.f32 %v2278, %v2350
        %v2361 = vadd.f32 %v2279, %v2351
        %v2362 = vadd.f32 %v2280, %v2352
        %v2363 = vadd.f32 %v2281, %v2353
        %s2364 = sld [smem:[#allocation3 + $0x107]]
        %v2365 = vstv %s2364
        %v2366 = vmul.f32 %v1866, %v2365
        %v2367 = vmul.f32 %v1867, %v2365
        %v2368 = vmul.f32 %v1868, %v2365
        %v2369 = vmul.f32 %v1869, %v2365
        %v2370 = vmul.f32 %v1870, %v2365
        %v2371 = vmul.f32 %v1871, %v2365
        %2378 = vrot.lane.b32.xlu0 %v2366, 121
        %v2379 = vpop.permute.xlu0 %2378
        %2380 = vrot.lane.b32.xlu0 %v2367, 121
        %v2381 = vpop.permute.xlu0 %2380
        %2382 = vrot.lane.b32.xlu0 %v2368, 121
        %v2383 = vpop.permute.xlu0 %2382
        %2384 = vrot.lane.b32.xlu0 %v2369, 121
        %v2385 = vpop.permute.xlu0 %2384
        %2386 = vrot.lane.b32.xlu0 %v2370, 121
        %v2387 = vpop.permute.xlu0 %2386
        %2388 = vrot.lane.b32.xlu0 %v2371, 121
        %v2389 = vpop.permute.xlu0 %2388
        %v2390 = vsel %vm838, %v2379, %v2381
        %v2391 = vsel %vm838, %v2381, %v2383
        %v2392 = vsel %vm838, %v2383, %v2385
        %v2393 = vsel %vm838, %v2385, %v2387
        %v2394 = vsel %vm838, %v2387, %v2389
        %v2400 = vadd.f32 %v2318, %v2390
        %v2401 = vadd.f32 %v2319, %v2391
        %v2402 = vadd.f32 %v2320, %v2392
        %v2403 = vadd.f32 %v2321, %v2393
        %v2404 = vadd.f32 %v2322, %v2394
        %s2405 = sld [smem:[#allocation3 + $0x507]]
        %v2406 = vstv %s2405
        %v2407 = vmul.f32 %v1866, %v2406
        %v2408 = vmul.f32 %v1867, %v2406
        %v2409 = vmul.f32 %v1868, %v2406
        %v2410 = vmul.f32 %v1869, %v2406
        %v2411 = vmul.f32 %v1870, %v2406
        %v2412 = vmul.f32 %v1871, %v2406
        %2419 = vrot.lane.b32.xlu0 %v2407, 121
        %v2420 = vpop.permute.xlu0 %2419
        %2421 = vrot.lane.b32.xlu0 %v2408, 121
        %v2422 = vpop.permute.xlu0 %2421
        %2423 = vrot.lane.b32.xlu0 %v2409, 121
        %v2424 = vpop.permute.xlu0 %2423
        %2425 = vrot.lane.b32.xlu0 %v2410, 121
        %v2426 = vpop.permute.xlu0 %2425
        %2427 = vrot.lane.b32.xlu0 %v2411, 121
        %v2428 = vpop.permute.xlu0 %2427
        %2429 = vrot.lane.b32.xlu0 %v2412, 121
        %v2430 = vpop.permute.xlu0 %2429
        %v2431 = vsel %vm838, %v2420, %v2422
        %v2432 = vsel %vm838, %v2422, %v2424
        %v2433 = vsel %vm838, %v2424, %v2426
        %v2434 = vsel %vm838, %v2426, %v2428
        %v2435 = vsel %vm838, %v2428, %v2430
        %v2441 = vadd.f32 %v2359, %v2431
        %v2442 = vadd.f32 %v2360, %v2432
        %v2443 = vadd.f32 %v2361, %v2433
        %v2444 = vadd.f32 %v2362, %v2434
        %v2445 = vadd.f32 %v2363, %v2435
        %s2446 = sld [smem:[#allocation3 + $0x108]]
        %v2447 = vstv %s2446
        %v2448 = vmul.f32 %v1866, %v2447
        %v2449 = vmul.f32 %v1867, %v2447
        %v2450 = vmul.f32 %v1868, %v2447
        %v2451 = vmul.f32 %v1869, %v2447
        %v2452 = vmul.f32 %v1870, %v2447
        %v2453 = vmul.f32 %v1871, %v2447
        %2460 = vrot.lane.b32.xlu0 %v2448, 120
        %v2461 = vpop.permute.xlu0 %2460
        %2462 = vrot.lane.b32.xlu0 %v2449, 120
        %v2463 = vpop.permute.xlu0 %2462
        %2464 = vrot.lane.b32.xlu0 %v2450, 120
        %v2465 = vpop.permute.xlu0 %2464
        %2466 = vrot.lane.b32.xlu0 %v2451, 120
        %v2467 = vpop.permute.xlu0 %2466
        %2468 = vrot.lane.b32.xlu0 %v2452, 120
        %v2469 = vpop.permute.xlu0 %2468
        %2470 = vrot.lane.b32.xlu0 %v2453, 120
        %v2471 = vpop.permute.xlu0 %2470
        %v2472 = vsel %vm921, %v2461, %v2463
        %v2473 = vsel %vm921, %v2463, %v2465
        %v2474 = vsel %vm921, %v2465, %v2467
        %v2475 = vsel %vm921, %v2467, %v2469
        %v2476 = vsel %vm921, %v2469, %v2471
        %v2482 = vadd.f32 %v2400, %v2472
        %v2483 = vadd.f32 %v2401, %v2473
        %v2484 = vadd.f32 %v2402, %v2474
        %v2485 = vadd.f32 %v2403, %v2475
        %v2486 = vadd.f32 %v2404, %v2476
        %s2487 = sld [smem:[#allocation3 + $0x508]]
        %v2488 = vstv %s2487
        %v2489 = vmul.f32 %v1866, %v2488
        %v2490 = vmul.f32 %v1867, %v2488
        %v2491 = vmul.f32 %v1868, %v2488
        %v2492 = vmul.f32 %v1869, %v2488
        %v2493 = vmul.f32 %v1870, %v2488
        %v2494 = vmul.f32 %v1871, %v2488
        %2501 = vrot.lane.b32.xlu0 %v2489, 120
        %v2502 = vpop.permute.xlu0 %2501
        %2503 = vrot.lane.b32.xlu0 %v2490, 120
        %v2504 = vpop.permute.xlu0 %2503
        %2505 = vrot.lane.b32.xlu0 %v2491, 120
        %v2506 = vpop.permute.xlu0 %2505
        %2507 = vrot.lane.b32.xlu0 %v2492, 120
        %v2508 = vpop.permute.xlu0 %2507
        %2509 = vrot.lane.b32.xlu0 %v2493, 120
        %v2510 = vpop.permute.xlu0 %2509
        %2511 = vrot.lane.b32.xlu0 %v2494, 120
        %v2512 = vpop.permute.xlu0 %2511
        %v2513 = vsel %vm921, %v2502, %v2504
        %v2514 = vsel %vm921, %v2504, %v2506
        %v2515 = vsel %vm921, %v2506, %v2508
        %v2516 = vsel %vm921, %v2508, %v2510
        %v2517 = vsel %vm921, %v2510, %v2512
        %v2523 = vadd.f32 %v2441, %v2513
        %v2524 = vadd.f32 %v2442, %v2514
        %v2525 = vadd.f32 %v2443, %v2515
        %v2526 = vadd.f32 %v2444, %v2516
        %v2527 = vadd.f32 %v2445, %v2517
        %s2528 = sld [smem:[#allocation3 + $0x109]]
        %v2529 = vstv %s2528
        %v2530 = vmul.f32 %v1866, %v2529
        %v2531 = vmul.f32 %v1867, %v2529
        %v2532 = vmul.f32 %v1868, %v2529
        %v2533 = vmul.f32 %v1869, %v2529
        %v2534 = vmul.f32 %v1870, %v2529
        %v2535 = vmul.f32 %v1871, %v2529
        %2542 = vrot.lane.b32.xlu0 %v2530, 119
        %v2543 = vpop.permute.xlu0 %2542
        %2544 = vrot.lane.b32.xlu0 %v2531, 119
        %v2545 = vpop.permute.xlu0 %2544
        %2546 = vrot.lane.b32.xlu0 %v2532, 119
        %v2547 = vpop.permute.xlu0 %2546
        %2548 = vrot.lane.b32.xlu0 %v2533, 119
        %v2549 = vpop.permute.xlu0 %2548
        %2550 = vrot.lane.b32.xlu0 %v2534, 119
        %v2551 = vpop.permute.xlu0 %2550
        %2552 = vrot.lane.b32.xlu0 %v2535, 119
        %v2553 = vpop.permute.xlu0 %2552
        %v2554 = vsel %vm1004, %v2543, %v2545
        %v2555 = vsel %vm1004, %v2545, %v2547
        %v2556 = vsel %vm1004, %v2547, %v2549
        %v2557 = vsel %vm1004, %v2549, %v2551
        %v2558 = vsel %vm1004, %v2551, %v2553
        %v2564 = vadd.f32 %v2482, %v2554
        %v2565 = vadd.f32 %v2483, %v2555
        %v2566 = vadd.f32 %v2484, %v2556
        %v2567 = vadd.f32 %v2485, %v2557
        %v2568 = vadd.f32 %v2486, %v2558
        %s2569 = sld [smem:[#allocation3 + $0x509]]
        %v2570 = vstv %s2569
        %v2571 = vmul.f32 %v1866, %v2570
        %v2572 = vmul.f32 %v1867, %v2570
        %v2573 = vmul.f32 %v1868, %v2570
        %v2574 = vmul.f32 %v1869, %v2570
        %v2575 = vmul.f32 %v1870, %v2570
        %v2576 = vmul.f32 %v1871, %v2570
        %2583 = vrot.lane.b32.xlu0 %v2571, 119
        %v2584 = vpop.permute.xlu0 %2583
        %2585 = vrot.lane.b32.xlu0 %v2572, 119
        %v2586 = vpop.permute.xlu0 %2585
        %2587 = vrot.lane.b32.xlu0 %v2573, 119
        %v2588 = vpop.permute.xlu0 %2587
        %2589 = vrot.lane.b32.xlu0 %v2574, 119
        %v2590 = vpop.permute.xlu0 %2589
        %2591 = vrot.lane.b32.xlu0 %v2575, 119
        %v2592 = vpop.permute.xlu0 %2591
        %2593 = vrot.lane.b32.xlu0 %v2576, 119
        %v2594 = vpop.permute.xlu0 %2593
        %v2595 = vsel %vm1004, %v2584, %v2586
        %v2596 = vsel %vm1004, %v2586, %v2588
        %v2597 = vsel %vm1004, %v2588, %v2590
        %v2598 = vsel %vm1004, %v2590, %v2592
        %v2599 = vsel %vm1004, %v2592, %v2594
        %v2605 = vadd.f32 %v2523, %v2595
        %v2606 = vadd.f32 %v2524, %v2596
        %v2607 = vadd.f32 %v2525, %v2597
        %v2608 = vadd.f32 %v2526, %v2598
        %v2609 = vadd.f32 %v2527, %v2599
        %s2610 = scalar_lea.vmem %s245, 80 [#allocation5]
        %2611 = vst [vmem:[%s2610] sm:$0xff] %v2564
        %2612 = vst [vmem:[%s2610 + $0x8] sm:$0xff] %v2565
        %2613 = vst [vmem:[%s2610 + $0x10] sm:$0xff] %v2566
        %2614 = vst [vmem:[%s2610 + $0x18] sm:$0xff] %v2567
        %2615 = vst [vmem:[%s2610 + $0x20] sm:$0xff] %v2568
        %s2616 = scalar_lea.vmem %s245, 400 [#allocation5]
        %2617 = vst [vmem:[%s2616] sm:$0xff] %v2605
        %2618 = vst [vmem:[%s2616 + $0x8] sm:$0xff] %v2606
        %2619 = vst [vmem:[%s2616 + $0x10] sm:$0xff] %v2607
        %2620 = vst [vmem:[%s2616 + $0x18] sm:$0xff] %v2608
        %2621 = vst [vmem:[%s2616 + $0x20] sm:$0xff] %v2609
        %v2622 = vld [vmem:[#allocation2] sm:$0xff]
        %v2623 = vld [vmem:[#allocation2 + $0x8] sm:$0xff]
        %v2624 = vld [vmem:[#allocation2 + $0x10] sm:$0xff]
        %v2625 = vld [vmem:[#allocation2 + $0x18] sm:$0xff]
        %v2626 = vld [vmem:[#allocation2 + $0x20] sm:$0xff]
        %s2627 = sld [smem:[#allocation3 + $0x180]]
        %v2628 = vstv %s2627
        %v2629 = vmul.f32 %v2622, %v2628
        %v2630 = vmul.f32 %v2623, %v2628
        %v2631 = vmul.f32 %v2624, %v2628
        %v2632 = vmul.f32 %v2625, %v2628
        %v2633 = vmul.f32 %v2626, %v2628
        %s2634 = sld [smem:[#allocation3 + $0x580]]
        %v2635 = vstv %s2634
        %v2636 = vmul.f32 %v2622, %v2635
        %v2637 = vmul.f32 %v2623, %v2635
        %v2638 = vmul.f32 %v2624, %v2635
        %v2639 = vmul.f32 %v2625, %v2635
        %v2640 = vmul.f32 %v2626, %v2635
        %v2641 = vld [vmem:[#allocation2] sm:$0xff]
        %v2642 = vld [vmem:[#allocation2 + $0x8] sm:$0xff]
        %v2643 = vld [vmem:[#allocation2 + $0x10] sm:$0xff]
        %v2644 = vld [vmem:[#allocation2 + $0x18] sm:$0xff]
        %v2645 = vld [vmem:[#allocation2 + $0x20] sm:$0xff]
        %v2646 = vld [vmem:[#allocation2 + $0x28] sm:$0xff]
        %s2647 = sld [smem:[#allocation3 + $0x181]]
        %v2648 = vstv %s2647
        %v2649 = vmul.f32 %v2641, %v2648
        %v2650 = vmul.f32 %v2642, %v2648
        %v2651 = vmul.f32 %v2643, %v2648
        %v2652 = vmul.f32 %v2644, %v2648
        %v2653 = vmul.f32 %v2645, %v2648
        %v2654 = vmul.f32 %v2646, %v2648
        %2661 = vrot.lane.b32.xlu0 %v2649, 127
        %v2662 = vpop.permute.xlu0 %2661
        %2663 = vrot.lane.b32.xlu0 %v2650, 127
        %v2664 = vpop.permute.xlu0 %2663
        %2665 = vrot.lane.b32.xlu0 %v2651, 127
        %v2666 = vpop.permute.xlu0 %2665
        %2667 = vrot.lane.b32.xlu0 %v2652, 127
        %v2668 = vpop.permute.xlu0 %2667
        %2669 = vrot.lane.b32.xlu0 %v2653, 127
        %v2670 = vpop.permute.xlu0 %2669
        %2671 = vrot.lane.b32.xlu0 %v2654, 127
        %v2672 = vpop.permute.xlu0 %2671
        %v2673 = vsel %vm340, %v2662, %v2664
        %v2674 = vsel %vm340, %v2664, %v2666
        %v2675 = vsel %vm340, %v2666, %v2668
        %v2676 = vsel %vm340, %v2668, %v2670
        %v2677 = vsel %vm340, %v2670, %v2672
        %v2683 = vadd.f32 %v2629, %v2673
        %v2684 = vadd.f32 %v2630, %v2674
        %v2685 = vadd.f32 %v2631, %v2675
        %v2686 = vadd.f32 %v2632, %v2676
        %v2687 = vadd.f32 %v2633, %v2677
        %s2688 = sld [smem:[#allocation3 + $0x581]]
        %v2689 = vstv %s2688
        %v2690 = vmul.f32 %v2641, %v2689
        %v2691 = vmul.f32 %v2642, %v2689
        %v2692 = vmul.f32 %v2643, %v2689
        %v2693 = vmul.f32 %v2644, %v2689
        %v2694 = vmul.f32 %v2645, %v2689
        %v2695 = vmul.f32 %v2646, %v2689
        %2702 = vrot.lane.b32.xlu0 %v2690, 127
        %v2703 = vpop.permute.xlu0 %2702
        %2704 = vrot.lane.b32.xlu0 %v2691, 127
        %v2705 = vpop.permute.xlu0 %2704
        %2706 = vrot.lane.b32.xlu0 %v2692, 127
        %v2707 = vpop.permute.xlu0 %2706
        %2708 = vrot.lane.b32.xlu0 %v2693, 127
        %v2709 = vpop.permute.xlu0 %2708
        %2710 = vrot.lane.b32.xlu0 %v2694, 127
        %v2711 = vpop.permute.xlu0 %2710
        %2712 = vrot.lane.b32.xlu0 %v2695, 127
        %v2713 = vpop.permute.xlu0 %2712
        %v2714 = vsel %vm340, %v2703, %v2705
        %v2715 = vsel %vm340, %v2705, %v2707
        %v2716 = vsel %vm340, %v2707, %v2709
        %v2717 = vsel %vm340, %v2709, %v2711
        %v2718 = vsel %vm340, %v2711, %v2713
        %v2724 = vadd.f32 %v2636, %v2714
        %v2725 = vadd.f32 %v2637, %v2715
        %v2726 = vadd.f32 %v2638, %v2716
        %v2727 = vadd.f32 %v2639, %v2717
        %v2728 = vadd.f32 %v2640, %v2718
        %s2729 = sld [smem:[#allocation3 + $0x182]]
        %v2730 = vstv %s2729
        %v2731 = vmul.f32 %v2641, %v2730
        %v2732 = vmul.f32 %v2642, %v2730
        %v2733 = vmul.f32 %v2643, %v2730
        %v2734 = vmul.f32 %v2644, %v2730
        %v2735 = vmul.f32 %v2645, %v2730
        %v2736 = vmul.f32 %v2646, %v2730
        %2743 = vrot.lane.b32.xlu0 %v2731, 126
        %v2744 = vpop.permute.xlu0 %2743
        %2745 = vrot.lane.b32.xlu0 %v2732, 126
        %v2746 = vpop.permute.xlu0 %2745
        %2747 = vrot.lane.b32.xlu0 %v2733, 126
        %v2748 = vpop.permute.xlu0 %2747
        %2749 = vrot.lane.b32.xlu0 %v2734, 126
        %v2750 = vpop.permute.xlu0 %2749
        %2751 = vrot.lane.b32.xlu0 %v2735, 126
        %v2752 = vpop.permute.xlu0 %2751
        %2753 = vrot.lane.b32.xlu0 %v2736, 126
        %v2754 = vpop.permute.xlu0 %2753
        %v2755 = vsel %vm423, %v2744, %v2746
        %v2756 = vsel %vm423, %v2746, %v2748
        %v2757 = vsel %vm423, %v2748, %v2750
        %v2758 = vsel %vm423, %v2750, %v2752
        %v2759 = vsel %vm423, %v2752, %v2754
        %v2765 = vadd.f32 %v2683, %v2755
        %v2766 = vadd.f32 %v2684, %v2756
        %v2767 = vadd.f32 %v2685, %v2757
        %v2768 = vadd.f32 %v2686, %v2758
        %v2769 = vadd.f32 %v2687, %v2759
        %s2770 = sld [smem:[#allocation3 + $0x582]]
        %v2771 = vstv %s2770
        %v2772 = vmul.f32 %v2641, %v2771
        %v2773 = vmul.f32 %v2642, %v2771
        %v2774 = vmul.f32 %v2643, %v2771
        %v2775 = vmul.f32 %v2644, %v2771
        %v2776 = vmul.f32 %v2645, %v2771
        %v2777 = vmul.f32 %v2646, %v2771
        %2784 = vrot.lane.b32.xlu0 %v2772, 126
        %v2785 = vpop.permute.xlu0 %2784
        %2786 = vrot.lane.b32.xlu0 %v2773, 126
        %v2787 = vpop.permute.xlu0 %2786
        %2788 = vrot.lane.b32.xlu0 %v2774, 126
        %v2789 = vpop.permute.xlu0 %2788
        %2790 = vrot.lane.b32.xlu0 %v2775, 126
        %v2791 = vpop.permute.xlu0 %2790
        %2792 = vrot.lane.b32.xlu0 %v2776, 126
        %v2793 = vpop.permute.xlu0 %2792
        %2794 = vrot.lane.b32.xlu0 %v2777, 126
        %v2795 = vpop.permute.xlu0 %2794
        %v2796 = vsel %vm423, %v2785, %v2787
        %v2797 = vsel %vm423, %v2787, %v2789
        %v2798 = vsel %vm423, %v2789, %v2791
        %v2799 = vsel %vm423, %v2791, %v2793
        %v2800 = vsel %vm423, %v2793, %v2795
        %v2806 = vadd.f32 %v2724, %v2796
        %v2807 = vadd.f32 %v2725, %v2797
        %v2808 = vadd.f32 %v2726, %v2798
        %v2809 = vadd.f32 %v2727, %v2799
        %v2810 = vadd.f32 %v2728, %v2800
        %s2811 = sld [smem:[#allocation3 + $0x183]]
        %v2812 = vstv %s2811
        %v2813 = vmul.f32 %v2641, %v2812
        %v2814 = vmul.f32 %v2642, %v2812
        %v2815 = vmul.f32 %v2643, %v2812
        %v2816 = vmul.f32 %v2644, %v2812
        %v2817 = vmul.f32 %v2645, %v2812
        %v2818 = vmul.f32 %v2646, %v2812
        %2825 = vrot.lane.b32.xlu0 %v2813, 125
        %v2826 = vpop.permute.xlu0 %2825
        %2827 = vrot.lane.b32.xlu0 %v2814, 125
        %v2828 = vpop.permute.xlu0 %2827
        %2829 = vrot.lane.b32.xlu0 %v2815, 125
        %v2830 = vpop.permute.xlu0 %2829
        %2831 = vrot.lane.b32.xlu0 %v2816, 125
        %v2832 = vpop.permute.xlu0 %2831
        %2833 = vrot.lane.b32.xlu0 %v2817, 125
        %v2834 = vpop.permute.xlu0 %2833
        %2835 = vrot.lane.b32.xlu0 %v2818, 125
        %v2836 = vpop.permute.xlu0 %2835
        %v2837 = vsel %vm506, %v2826, %v2828
        %v2838 = vsel %vm506, %v2828, %v2830
        %v2839 = vsel %vm506, %v2830, %v2832
        %v2840 = vsel %vm506, %v2832, %v2834
        %v2841 = vsel %vm506, %v2834, %v2836
        %v2847 = vadd.f32 %v2765, %v2837
        %v2848 = vadd.f32 %v2766, %v2838
        %v2849 = vadd.f32 %v2767, %v2839
        %v2850 = vadd.f32 %v2768, %v2840
        %v2851 = vadd.f32 %v2769, %v2841
        %s2852 = sld [smem:[#allocation3 + $0x583]]
        %v2853 = vstv %s2852
        %v2854 = vmul.f32 %v2641, %v2853
        %v2855 = vmul.f32 %v2642, %v2853
        %v2856 = vmul.f32 %v2643, %v2853
        %v2857 = vmul.f32 %v2644, %v2853
        %v2858 = vmul.f32 %v2645, %v2853
        %v2859 = vmul.f32 %v2646, %v2853
        %2866 = vrot.lane.b32.xlu0 %v2854, 125
        %v2867 = vpop.permute.xlu0 %2866
        %2868 = vrot.lane.b32.xlu0 %v2855, 125
        %v2869 = vpop.permute.xlu0 %2868
        %2870 = vrot.lane.b32.xlu0 %v2856, 125
        %v2871 = vpop.permute.xlu0 %2870
        %2872 = vrot.lane.b32.xlu0 %v2857, 125
        %v2873 = vpop.permute.xlu0 %2872
        %2874 = vrot.lane.b32.xlu0 %v2858, 125
        %v2875 = vpop.permute.xlu0 %2874
        %2876 = vrot.lane.b32.xlu0 %v2859, 125
        %v2877 = vpop.permute.xlu0 %2876
        %v2878 = vsel %vm506, %v2867, %v2869
        %v2879 = vsel %vm506, %v2869, %v2871
        %v2880 = vsel %vm506, %v2871, %v2873
        %v2881 = vsel %vm506, %v2873, %v2875
        %v2882 = vsel %vm506, %v2875, %v2877
        %v2888 = vadd.f32 %v2806, %v2878
        %v2889 = vadd.f32 %v2807, %v2879
        %v2890 = vadd.f32 %v2808, %v2880
        %v2891 = vadd.f32 %v2809, %v2881
        %v2892 = vadd.f32 %v2810, %v2882
        %s2893 = sld [smem:[#allocation3 + $0x184]]
        %v2894 = vstv %s2893
        %v2895 = vmul.f32 %v2641, %v2894
        %v2896 = vmul.f32 %v2642, %v2894
        %v2897 = vmul.f32 %v2643, %v2894
        %v2898 = vmul.f32 %v2644, %v2894
        %v2899 = vmul.f32 %v2645, %v2894
        %v2900 = vmul.f32 %v2646, %v2894
        %2907 = vrot.lane.b32.xlu0 %v2895, 124
        %v2908 = vpop.permute.xlu0 %2907
        %2909 = vrot.lane.b32.xlu0 %v2896, 124
        %v2910 = vpop.permute.xlu0 %2909
        %2911 = vrot.lane.b32.xlu0 %v2897, 124
        %v2912 = vpop.permute.xlu0 %2911
        %2913 = vrot.lane.b32.xlu0 %v2898, 124
        %v2914 = vpop.permute.xlu0 %2913
        %2915 = vrot.lane.b32.xlu0 %v2899, 124
        %v2916 = vpop.permute.xlu0 %2915
        %2917 = vrot.lane.b32.xlu0 %v2900, 124
        %v2918 = vpop.permute.xlu0 %2917
        %v2919 = vsel %vm589, %v2908, %v2910
        %v2920 = vsel %vm589, %v2910, %v2912
        %v2921 = vsel %vm589, %v2912, %v2914
        %v2922 = vsel %vm589, %v2914, %v2916
        %v2923 = vsel %vm589, %v2916, %v2918
        %v2929 = vadd.f32 %v2847, %v2919
        %v2930 = vadd.f32 %v2848, %v2920
        %v2931 = vadd.f32 %v2849, %v2921
        %v2932 = vadd.f32 %v2850, %v2922
        %v2933 = vadd.f32 %v2851, %v2923
        %s2934 = sld [smem:[#allocation3 + $0x584]]
        %v2935 = vstv %s2934
        %v2936 = vmul.f32 %v2641, %v2935
        %v2937 = vmul.f32 %v2642, %v2935
        %v2938 = vmul.f32 %v2643, %v2935
        %v2939 = vmul.f32 %v2644, %v2935
        %v2940 = vmul.f32 %v2645, %v2935
        %v2941 = vmul.f32 %v2646, %v2935
        %2948 = vrot.lane.b32.xlu0 %v2936, 124
        %v2949 = vpop.permute.xlu0 %2948
        %2950 = vrot.lane.b32.xlu0 %v2937, 124
        %v2951 = vpop.permute.xlu0 %2950
        %2952 = vrot.lane.b32.xlu0 %v2938, 124
        %v2953 = vpop.permute.xlu0 %2952
        %2954 = vrot.lane.b32.xlu0 %v2939, 124
        %v2955 = vpop.permute.xlu0 %2954
        %2956 = vrot.lane.b32.xlu0 %v2940, 124
        %v2957 = vpop.permute.xlu0 %2956
        %2958 = vrot.lane.b32.xlu0 %v2941, 124
        %v2959 = vpop.permute.xlu0 %2958
        %v2960 = vsel %vm589, %v2949, %v2951
        %v2961 = vsel %vm589, %v2951, %v2953
        %v2962 = vsel %vm589, %v2953, %v2955
        %v2963 = vsel %vm589, %v2955, %v2957
        %v2964 = vsel %vm589, %v2957, %v2959
        %v2970 = vadd.f32 %v2888, %v2960
        %v2971 = vadd.f32 %v2889, %v2961
        %v2972 = vadd.f32 %v2890, %v2962
        %v2973 = vadd.f32 %v2891, %v2963
        %v2974 = vadd.f32 %v2892, %v2964
        %s2975 = sld [smem:[#allocation3 + $0x185]]
        %v2976 = vstv %s2975
        %v2977 = vmul.f32 %v2641, %v2976
        %v2978 = vmul.f32 %v2642, %v2976
        %v2979 = vmul.f32 %v2643, %v2976
        %v2980 = vmul.f32 %v2644, %v2976
        %v2981 = vmul.f32 %v2645, %v2976
        %v2982 = vmul.f32 %v2646, %v2976
        %2989 = vrot.lane.b32.xlu0 %v2977, 123
        %v2990 = vpop.permute.xlu0 %2989
        %2991 = vrot.lane.b32.xlu0 %v2978, 123
        %v2992 = vpop.permute.xlu0 %2991
        %2993 = vrot.lane.b32.xlu0 %v2979, 123
        %v2994 = vpop.permute.xlu0 %2993
        %2995 = vrot.lane.b32.xlu0 %v2980, 123
        %v2996 = vpop.permute.xlu0 %2995
        %2997 = vrot.lane.b32.xlu0 %v2981, 123
        %v2998 = vpop.permute.xlu0 %2997
        %2999 = vrot.lane.b32.xlu0 %v2982, 123
        %v3000 = vpop.permute.xlu0 %2999
        %v3001 = vsel %vm672, %v2990, %v2992
        %v3002 = vsel %vm672, %v2992, %v2994
        %v3003 = vsel %vm672, %v2994, %v2996
        %v3004 = vsel %vm672, %v2996, %v2998
        %v3005 = vsel %vm672, %v2998, %v3000
        %v3011 = vadd.f32 %v2929, %v3001
        %v3012 = vadd.f32 %v2930, %v3002
        %v3013 = vadd.f32 %v2931, %v3003
        %v3014 = vadd.f32 %v2932, %v3004
        %v3015 = vadd.f32 %v2933, %v3005
        %s3016 = sld [smem:[#allocation3 + $0x585]]
        %v3017 = vstv %s3016
        %v3018 = vmul.f32 %v2641, %v3017
        %v3019 = vmul.f32 %v2642, %v3017
        %v3020 = vmul.f32 %v2643, %v3017
        %v3021 = vmul.f32 %v2644, %v3017
        %v3022 = vmul.f32 %v2645, %v3017
        %v3023 = vmul.f32 %v2646, %v3017
        %3030 = vrot.lane.b32.xlu0 %v3018, 123
        %v3031 = vpop.permute.xlu0 %3030
        %3032 = vrot.lane.b32.xlu0 %v3019, 123
        %v3033 = vpop.permute.xlu0 %3032
        %3034 = vrot.lane.b32.xlu0 %v3020, 123
        %v3035 = vpop.permute.xlu0 %3034
        %3036 = vrot.lane.b32.xlu0 %v3021, 123
        %v3037 = vpop.permute.xlu0 %3036
        %3038 = vrot.lane.b32.xlu0 %v3022, 123
        %v3039 = vpop.permute.xlu0 %3038
        %3040 = vrot.lane.b32.xlu0 %v3023, 123
        %v3041 = vpop.permute.xlu0 %3040
        %v3042 = vsel %vm672, %v3031, %v3033
        %v3043 = vsel %vm672, %v3033, %v3035
        %v3044 = vsel %vm672, %v3035, %v3037
        %v3045 = vsel %vm672, %v3037, %v3039
        %v3046 = vsel %vm672, %v3039, %v3041
        %v3052 = vadd.f32 %v2970, %v3042
        %v3053 = vadd.f32 %v2971, %v3043
        %v3054 = vadd.f32 %v2972, %v3044
        %v3055 = vadd.f32 %v2973, %v3045
        %v3056 = vadd.f32 %v2974, %v3046
        %s3057 = sld [smem:[#allocation3 + $0x186]]
        %v3058 = vstv %s3057
        %v3059 = vmul.f32 %v2641, %v3058
        %v3060 = vmul.f32 %v2642, %v3058
        %v3061 = vmul.f32 %v2643, %v3058
        %v3062 = vmul.f32 %v2644, %v3058
        %v3063 = vmul.f32 %v2645, %v3058
        %v3064 = vmul.f32 %v2646, %v3058
        %3071 = vrot.lane.b32.xlu0 %v3059, 122
        %v3072 = vpop.permute.xlu0 %3071
        %3073 = vrot.lane.b32.xlu0 %v3060, 122
        %v3074 = vpop.permute.xlu0 %3073
        %3075 = vrot.lane.b32.xlu0 %v3061, 122
        %v3076 = vpop.permute.xlu0 %3075
        %3077 = vrot.lane.b32.xlu0 %v3062, 122
        %v3078 = vpop.permute.xlu0 %3077
        %3079 = vrot.lane.b32.xlu0 %v3063, 122
        %v3080 = vpop.permute.xlu0 %3079
        %3081 = vrot.lane.b32.xlu0 %v3064, 122
        %v3082 = vpop.permute.xlu0 %3081
        %v3083 = vsel %vm755, %v3072, %v3074
        %v3084 = vsel %vm755, %v3074, %v3076
        %v3085 = vsel %vm755, %v3076, %v3078
        %v3086 = vsel %vm755, %v3078, %v3080
        %v3087 = vsel %vm755, %v3080, %v3082
        %v3093 = vadd.f32 %v3011, %v3083
        %v3094 = vadd.f32 %v3012, %v3084
        %v3095 = vadd.f32 %v3013, %v3085
        %v3096 = vadd.f32 %v3014, %v3086
        %v3097 = vadd.f32 %v3015, %v3087
        %s3098 = sld [smem:[#allocation3 + $0x586]]
        %v3099 = vstv %s3098
        %v3100 = vmul.f32 %v2641, %v3099
        %v3101 = vmul.f32 %v2642, %v3099
        %v3102 = vmul.f32 %v2643, %v3099
        %v3103 = vmul.f32 %v2644, %v3099
        %v3104 = vmul.f32 %v2645, %v3099
        %v3105 = vmul.f32 %v2646, %v3099
        %3112 = vrot.lane.b32.xlu0 %v3100, 122
        %v3113 = vpop.permute.xlu0 %3112
        %3114 = vrot.lane.b32.xlu0 %v3101, 122
        %v3115 = vpop.permute.xlu0 %3114
        %3116 = vrot.lane.b32.xlu0 %v3102, 122
        %v3117 = vpop.permute.xlu0 %3116
        %3118 = vrot.lane.b32.xlu0 %v3103, 122
        %v3119 = vpop.permute.xlu0 %3118
        %3120 = vrot.lane.b32.xlu0 %v3104, 122
        %v3121 = vpop.permute.xlu0 %3120
        %3122 = vrot.lane.b32.xlu0 %v3105, 122
        %v3123 = vpop.permute.xlu0 %3122
        %v3124 = vsel %vm755, %v3113, %v3115
        %v3125 = vsel %vm755, %v3115, %v3117
        %v3126 = vsel %vm755, %v3117, %v3119
        %v3127 = vsel %vm755, %v3119, %v3121
        %v3128 = vsel %vm755, %v3121, %v3123
        %v3134 = vadd.f32 %v3052, %v3124
        %v3135 = vadd.f32 %v3053, %v3125
        %v3136 = vadd.f32 %v3054, %v3126
        %v3137 = vadd.f32 %v3055, %v3127
        %v3138 = vadd.f32 %v3056, %v3128
        %s3139 = sld [smem:[#allocation3 + $0x187]]
        %v3140 = vstv %s3139
        %v3141 = vmul.f32 %v2641, %v3140
        %v3142 = vmul.f32 %v2642, %v3140
        %v3143 = vmul.f32 %v2643, %v3140
        %v3144 = vmul.f32 %v2644, %v3140
        %v3145 = vmul.f32 %v2645, %v3140
        %v3146 = vmul.f32 %v2646, %v3140
        %3153 = vrot.lane.b32.xlu0 %v3141, 121
        %v3154 = vpop.permute.xlu0 %3153
        %3155 = vrot.lane.b32.xlu0 %v3142, 121
        %v3156 = vpop.permute.xlu0 %3155
        %3157 = vrot.lane.b32.xlu0 %v3143, 121
        %v3158 = vpop.permute.xlu0 %3157
        %3159 = vrot.lane.b32.xlu0 %v3144, 121
        %v3160 = vpop.permute.xlu0 %3159
        %3161 = vrot.lane.b32.xlu0 %v3145, 121
        %v3162 = vpop.permute.xlu0 %3161
        %3163 = vrot.lane.b32.xlu0 %v3146, 121
        %v3164 = vpop.permute.xlu0 %3163
        %v3165 = vsel %vm838, %v3154, %v3156
        %v3166 = vsel %vm838, %v3156, %v3158
        %v3167 = vsel %vm838, %v3158, %v3160
        %v3168 = vsel %vm838, %v3160, %v3162
        %v3169 = vsel %vm838, %v3162, %v3164
        %v3175 = vadd.f32 %v3093, %v3165
        %v3176 = vadd.f32 %v3094, %v3166
        %v3177 = vadd.f32 %v3095, %v3167
        %v3178 = vadd.f32 %v3096, %v3168
        %v3179 = vadd.f32 %v3097, %v3169
        %s3180 = sld [smem:[#allocation3 + $0x587]]
        %v3181 = vstv %s3180
        %v3182 = vmul.f32 %v2641, %v3181
        %v3183 = vmul.f32 %v2642, %v3181
        %v3184 = vmul.f32 %v2643, %v3181
        %v3185 = vmul.f32 %v2644, %v3181
        %v3186 = vmul.f32 %v2645, %v3181
        %v3187 = vmul.f32 %v2646, %v3181
        %3194 = vrot.lane.b32.xlu0 %v3182, 121
        %v3195 = vpop.permute.xlu0 %3194
        %3196 = vrot.lane.b32.xlu0 %v3183, 121
        %v3197 = vpop.permute.xlu0 %3196
        %3198 = vrot.lane.b32.xlu0 %v3184, 121
        %v3199 = vpop.permute.xlu0 %3198
        %3200 = vrot.lane.b32.xlu0 %v3185, 121
        %v3201 = vpop.permute.xlu0 %3200
        %3202 = vrot.lane.b32.xlu0 %v3186, 121
        %v3203 = vpop.permute.xlu0 %3202
        %3204 = vrot.lane.b32.xlu0 %v3187, 121
        %v3205 = vpop.permute.xlu0 %3204
        %v3206 = vsel %vm838, %v3195, %v3197
        %v3207 = vsel %vm838, %v3197, %v3199
        %v3208 = vsel %vm838, %v3199, %v3201
        %v3209 = vsel %vm838, %v3201, %v3203
        %v3210 = vsel %vm838, %v3203, %v3205
        %v3216 = vadd.f32 %v3134, %v3206
        %v3217 = vadd.f32 %v3135, %v3207
        %v3218 = vadd.f32 %v3136, %v3208
        %v3219 = vadd.f32 %v3137, %v3209
        %v3220 = vadd.f32 %v3138, %v3210
        %s3221 = sld [smem:[#allocation3 + $0x188]]
        %v3222 = vstv %s3221
        %v3223 = vmul.f32 %v2641, %v3222
        %v3224 = vmul.f32 %v2642, %v3222
        %v3225 = vmul.f32 %v2643, %v3222
        %v3226 = vmul.f32 %v2644, %v3222
        %v3227 = vmul.f32 %v2645, %v3222
        %v3228 = vmul.f32 %v2646, %v3222
        %3235 = vrot.lane.b32.xlu0 %v3223, 120
        %v3236 = vpop.permute.xlu0 %3235
        %3237 = vrot.lane.b32.xlu0 %v3224, 120
        %v3238 = vpop.permute.xlu0 %3237
        %3239 = vrot.lane.b32.xlu0 %v3225, 120
        %v3240 = vpop.permute.xlu0 %3239
        %3241 = vrot.lane.b32.xlu0 %v3226, 120
        %v3242 = vpop.permute.xlu0 %3241
        %3243 = vrot.lane.b32.xlu0 %v3227, 120
        %v3244 = vpop.permute.xlu0 %3243
        %3245 = vrot.lane.b32.xlu0 %v3228, 120
        %v3246 = vpop.permute.xlu0 %3245
        %v3247 = vsel %vm921, %v3236, %v3238
        %v3248 = vsel %vm921, %v3238, %v3240
        %v3249 = vsel %vm921, %v3240, %v3242
        %v3250 = vsel %vm921, %v3242, %v3244
        %v3251 = vsel %vm921, %v3244, %v3246
        %v3257 = vadd.f32 %v3175, %v3247
        %v3258 = vadd.f32 %v3176, %v3248
        %v3259 = vadd.f32 %v3177, %v3249
        %v3260 = vadd.f32 %v3178, %v3250
        %v3261 = vadd.f32 %v3179, %v3251
        %s3262 = sld [smem:[#allocation3 + $0x588]]
        %v3263 = vstv %s3262
        %v3264 = vmul.f32 %v2641, %v3263
        %v3265 = vmul.f32 %v2642, %v3263
        %v3266 = vmul.f32 %v2643, %v3263
        %v3267 = vmul.f32 %v2644, %v3263
        %v3268 = vmul.f32 %v2645, %v3263
        %v3269 = vmul.f32 %v2646, %v3263
        %3276 = vrot.lane.b32.xlu0 %v3264, 120
        %v3277 = vpop.permute.xlu0 %3276
        %3278 = vrot.lane.b32.xlu0 %v3265, 120
        %v3279 = vpop.permute.xlu0 %3278
        %3280 = vrot.lane.b32.xlu0 %v3266, 120
        %v3281 = vpop.permute.xlu0 %3280
        %3282 = vrot.lane.b32.xlu0 %v3267, 120
        %v3283 = vpop.permute.xlu0 %3282
        %3284 = vrot.lane.b32.xlu0 %v3268, 120
        %v3285 = vpop.permute.xlu0 %3284
        %3286 = vrot.lane.b32.xlu0 %v3269, 120
        %v3287 = vpop.permute.xlu0 %3286
        %v3288 = vsel %vm921, %v3277, %v3279
        %v3289 = vsel %vm921, %v3279, %v3281
        %v3290 = vsel %vm921, %v3281, %v3283
        %v3291 = vsel %vm921, %v3283, %v3285
        %v3292 = vsel %vm921, %v3285, %v3287
        %v3298 = vadd.f32 %v3216, %v3288
        %v3299 = vadd.f32 %v3217, %v3289
        %v3300 = vadd.f32 %v3218, %v3290
        %v3301 = vadd.f32 %v3219, %v3291
        %v3302 = vadd.f32 %v3220, %v3292
        %s3303 = sld [smem:[#allocation3 + $0x189]]
        %v3304 = vstv %s3303
        %v3305 = vmul.f32 %v2641, %v3304
        %v3306 = vmul.f32 %v2642, %v3304
        %v3307 = vmul.f32 %v2643, %v3304
        %v3308 = vmul.f32 %v2644, %v3304
        %v3309 = vmul.f32 %v2645, %v3304
        %v3310 = vmul.f32 %v2646, %v3304
        %3317 = vrot.lane.b32.xlu0 %v3305, 119
        %v3318 = vpop.permute.xlu0 %3317
        %3319 = vrot.lane.b32.xlu0 %v3306, 119
        %v3320 = vpop.permute.xlu0 %3319
        %3321 = vrot.lane.b32.xlu0 %v3307, 119
        %v3322 = vpop.permute.xlu0 %3321
        %3323 = vrot.lane.b32.xlu0 %v3308, 119
        %v3324 = vpop.permute.xlu0 %3323
        %3325 = vrot.lane.b32.xlu0 %v3309, 119
        %v3326 = vpop.permute.xlu0 %3325
        %3327 = vrot.lane.b32.xlu0 %v3310, 119
        %v3328 = vpop.permute.xlu0 %3327
        %v3329 = vsel %vm1004, %v3318, %v3320
        %v3330 = vsel %vm1004, %v3320, %v3322
        %v3331 = vsel %vm1004, %v3322, %v3324
        %v3332 = vsel %vm1004, %v3324, %v3326
        %v3333 = vsel %vm1004, %v3326, %v3328
        %v3339 = vadd.f32 %v3257, %v3329
        %v3340 = vadd.f32 %v3258, %v3330
        %v3341 = vadd.f32 %v3259, %v3331
        %v3342 = vadd.f32 %v3260, %v3332
        %v3343 = vadd.f32 %v3261, %v3333
        %s3344 = sld [smem:[#allocation3 + $0x589]]
        %v3345 = vstv %s3344
        %v3346 = vmul.f32 %v2641, %v3345
        %v3347 = vmul.f32 %v2642, %v3345
        %v3348 = vmul.f32 %v2643, %v3345
        %v3349 = vmul.f32 %v2644, %v3345
        %v3350 = vmul.f32 %v2645, %v3345
        %v3351 = vmul.f32 %v2646, %v3345
        %3358 = vrot.lane.b32.xlu0 %v3346, 119
        %v3359 = vpop.permute.xlu0 %3358
        %3360 = vrot.lane.b32.xlu0 %v3347, 119
        %v3361 = vpop.permute.xlu0 %3360
        %3362 = vrot.lane.b32.xlu0 %v3348, 119
        %v3363 = vpop.permute.xlu0 %3362
        %3364 = vrot.lane.b32.xlu0 %v3349, 119
        %v3365 = vpop.permute.xlu0 %3364
        %3366 = vrot.lane.b32.xlu0 %v3350, 119
        %v3367 = vpop.permute.xlu0 %3366
        %3368 = vrot.lane.b32.xlu0 %v3351, 119
        %v3369 = vpop.permute.xlu0 %3368
        %v3370 = vsel %vm1004, %v3359, %v3361
        %v3371 = vsel %vm1004, %v3361, %v3363
        %v3372 = vsel %vm1004, %v3363, %v3365
        %v3373 = vsel %vm1004, %v3365, %v3367
        %v3374 = vsel %vm1004, %v3367, %v3369
        %v3380 = vadd.f32 %v3298, %v3370
        %v3381 = vadd.f32 %v3299, %v3371
        %v3382 = vadd.f32 %v3300, %v3372
        %v3383 = vadd.f32 %v3301, %v3373
        %v3384 = vadd.f32 %v3302, %v3374
        %s3385 = scalar_lea.vmem %s245, 120 [#allocation5]
        %3386 = vst [vmem:[%s3385] sm:$0xff] %v3339
        %3387 = vst [vmem:[%s3385 + $0x8] sm:$0xff] %v3340
        %3388 = vst [vmem:[%s3385 + $0x10] sm:$0xff] %v3341
        %3389 = vst [vmem:[%s3385 + $0x18] sm:$0xff] %v3342
        %3390 = vst [vmem:[%s3385 + $0x20] sm:$0xff] %v3343
        %s3391 = scalar_lea.vmem %s245, 440 [#allocation5]
        %3392 = vst [vmem:[%s3391] sm:$0xff] %v3380
        %3393 = vst [vmem:[%s3391 + $0x8] sm:$0xff] %v3381
        %3394 = vst [vmem:[%s3391 + $0x10] sm:$0xff] %v3382
        %3395 = vst [vmem:[%s3391 + $0x18] sm:$0xff] %v3383
        %3396 = vst [vmem:[%s3391 + $0x20] sm:$0xff] %v3384
        %v3397 = vld [vmem:[#allocation2] sm:$0xff]
        %v3398 = vld [vmem:[#allocation2 + $0x8] sm:$0xff]
        %v3399 = vld [vmem:[#allocation2 + $0x10] sm:$0xff]
        %v3400 = vld [vmem:[#allocation2 + $0x18] sm:$0xff]
        %v3401 = vld [vmem:[#allocation2 + $0x20] sm:$0xff]
        %s3402 = sld [smem:[#allocation3 + $0x200]]
        %v3403 = vstv %s3402
        %v3404 = vmul.f32 %v3397, %v3403
        %v3405 = vmul.f32 %v3398, %v3403
        %v3406 = vmul.f32 %v3399, %v3403
        %v3407 = vmul.f32 %v3400, %v3403
        %v3408 = vmul.f32 %v3401, %v3403
        %s3409 = sld [smem:[#allocation3 + $0x600]]
        %v3410 = vstv %s3409
        %v3411 = vmul.f32 %v3397, %v3410
        %v3412 = vmul.f32 %v3398, %v3410
        %v3413 = vmul.f32 %v3399, %v3410
        %v3414 = vmul.f32 %v3400, %v3410
        %v3415 = vmul.f32 %v3401, %v3410
        %v3416 = vld [vmem:[#allocation2] sm:$0xff]
        %v3417 = vld [vmem:[#allocation2 + $0x8] sm:$0xff]
        %v3418 = vld [vmem:[#allocation2 + $0x10] sm:$0xff]
        %v3419 = vld [vmem:[#allocation2 + $0x18] sm:$0xff]
        %v3420 = vld [vmem:[#allocation2 + $0x20] sm:$0xff]
        %v3421 = vld [vmem:[#allocation2 + $0x28] sm:$0xff]
        %s3422 = sld [smem:[#allocation3 + $0x201]]
        %v3423 = vstv %s3422
        %v3424 = vmul.f32 %v3416, %v3423
        %v3425 = vmul.f32 %v3417, %v3423
        %v3426 = vmul.f32 %v3418, %v3423
        %v3427 = vmul.f32 %v3419, %v3423
        %v3428 = vmul.f32 %v3420, %v3423
        %v3429 = vmul.f32 %v3421, %v3423
        %3436 = vrot.lane.b32.xlu0 %v3424, 127
        %v3437 = vpop.permute.xlu0 %3436
        %3438 = vrot.lane.b32.xlu0 %v3425, 127
        %v3439 = vpop.permute.xlu0 %3438
        %3440 = vrot.lane.b32.xlu0 %v3426, 127
        %v3441 = vpop.permute.xlu0 %3440
        %3442 = vrot.lane.b32.xlu0 %v3427, 127
        %v3443 = vpop.permute.xlu0 %3442
        %3444 = vrot.lane.b32.xlu0 %v3428, 127
        %v3445 = vpop.permute.xlu0 %3444
        %3446 = vrot.lane.b32.xlu0 %v3429, 127
        %v3447 = vpop.permute.xlu0 %3446
        %v3448 = vsel %vm340, %v3437, %v3439
        %v3449 = vsel %vm340, %v3439, %v3441
        %v3450 = vsel %vm340, %v3441, %v3443
        %v3451 = vsel %vm340, %v3443, %v3445
        %v3452 = vsel %vm340, %v3445, %v3447
        %v3458 = vadd.f32 %v3404, %v3448
        %v3459 = vadd.f32 %v3405, %v3449
        %v3460 = vadd.f32 %v3406, %v3450
        %v3461 = vadd.f32 %v3407, %v3451
        %v3462 = vadd.f32 %v3408, %v3452
        %s3463 = sld [smem:[#allocation3 + $0x601]]
        %v3464 = vstv %s3463
        %v3465 = vmul.f32 %v3416, %v3464
        %v3466 = vmul.f32 %v3417, %v3464
        %v3467 = vmul.f32 %v3418, %v3464
        %v3468 = vmul.f32 %v3419, %v3464
        %v3469 = vmul.f32 %v3420, %v3464
        %v3470 = vmul.f32 %v3421, %v3464
        %3477 = vrot.lane.b32.xlu0 %v3465, 127
        %v3478 = vpop.permute.xlu0 %3477
        %3479 = vrot.lane.b32.xlu0 %v3466, 127
        %v3480 = vpop.permute.xlu0 %3479
        %3481 = vrot.lane.b32.xlu0 %v3467, 127
        %v3482 = vpop.permute.xlu0 %3481
        %3483 = vrot.lane.b32.xlu0 %v3468, 127
        %v3484 = vpop.permute.xlu0 %3483
        %3485 = vrot.lane.b32.xlu0 %v3469, 127
        %v3486 = vpop.permute.xlu0 %3485
        %3487 = vrot.lane.b32.xlu0 %v3470, 127
        %v3488 = vpop.permute.xlu0 %3487
        %v3489 = vsel %vm340, %v3478, %v3480
        %v3490 = vsel %vm340, %v3480, %v3482
        %v3491 = vsel %vm340, %v3482, %v3484
        %v3492 = vsel %vm340, %v3484, %v3486
        %v3493 = vsel %vm340, %v3486, %v3488
        %v3499 = vadd.f32 %v3411, %v3489
        %v3500 = vadd.f32 %v3412, %v3490
        %v3501 = vadd.f32 %v3413, %v3491
        %v3502 = vadd.f32 %v3414, %v3492
        %v3503 = vadd.f32 %v3415, %v3493
        %s3504 = sld [smem:[#allocation3 + $0x202]]
        %v3505 = vstv %s3504
        %v3506 = vmul.f32 %v3416, %v3505
        %v3507 = vmul.f32 %v3417, %v3505
        %v3508 = vmul.f32 %v3418, %v3505
        %v3509 = vmul.f32 %v3419, %v3505
        %v3510 = vmul.f32 %v3420, %v3505
        %v3511 = vmul.f32 %v3421, %v3505
        %3518 = vrot.lane.b32.xlu0 %v3506, 126
        %v3519 = vpop.permute.xlu0 %3518
        %3520 = vrot.lane.b32.xlu0 %v3507, 126
        %v3521 = vpop.permute.xlu0 %3520
        %3522 = vrot.lane.b32.xlu0 %v3508, 126
        %v3523 = vpop.permute.xlu0 %3522
        %3524 = vrot.lane.b32.xlu0 %v3509, 126
        %v3525 = vpop.permute.xlu0 %3524
        %3526 = vrot.lane.b32.xlu0 %v3510, 126
        %v3527 = vpop.permute.xlu0 %3526
        %3528 = vrot.lane.b32.xlu0 %v3511, 126
        %v3529 = vpop.permute.xlu0 %3528
        %v3530 = vsel %vm423, %v3519, %v3521
        %v3531 = vsel %vm423, %v3521, %v3523
        %v3532 = vsel %vm423, %v3523, %v3525
        %v3533 = vsel %vm423, %v3525, %v3527
        %v3534 = vsel %vm423, %v3527, %v3529
        %v3540 = vadd.f32 %v3458, %v3530
        %v3541 = vadd.f32 %v3459, %v3531
        %v3542 = vadd.f32 %v3460, %v3532
        %v3543 = vadd.f32 %v3461, %v3533
        %v3544 = vadd.f32 %v3462, %v3534
        %s3545 = sld [smem:[#allocation3 + $0x602]]
        %v3546 = vstv %s3545
        %v3547 = vmul.f32 %v3416, %v3546
        %v3548 = vmul.f32 %v3417, %v3546
        %v3549 = vmul.f32 %v3418, %v3546
        %v3550 = vmul.f32 %v3419, %v3546
        %v3551 = vmul.f32 %v3420, %v3546
        %v3552 = vmul.f32 %v3421, %v3546
        %3559 = vrot.lane.b32.xlu0 %v3547, 126
        %v3560 = vpop.permute.xlu0 %3559
        %3561 = vrot.lane.b32.xlu0 %v3548, 126
        %v3562 = vpop.permute.xlu0 %3561
        %3563 = vrot.lane.b32.xlu0 %v3549, 126
        %v3564 = vpop.permute.xlu0 %3563
        %3565 = vrot.lane.b32.xlu0 %v3550, 126
        %v3566 = vpop.permute.xlu0 %3565
        %3567 = vrot.lane.b32.xlu0 %v3551, 126
        %v3568 = vpop.permute.xlu0 %3567
        %3569 = vrot.lane.b32.xlu0 %v3552, 126
        %v3570 = vpop.permute.xlu0 %3569
        %v3571 = vsel %vm423, %v3560, %v3562
        %v3572 = vsel %vm423, %v3562, %v3564
        %v3573 = vsel %vm423, %v3564, %v3566
        %v3574 = vsel %vm423, %v3566, %v3568
        %v3575 = vsel %vm423, %v3568, %v3570
        %v3581 = vadd.f32 %v3499, %v3571
        %v3582 = vadd.f32 %v3500, %v3572
        %v3583 = vadd.f32 %v3501, %v3573
        %v3584 = vadd.f32 %v3502, %v3574
        %v3585 = vadd.f32 %v3503, %v3575
        %s3586 = sld [smem:[#allocation3 + $0x203]]
        %v3587 = vstv %s3586
        %v3588 = vmul.f32 %v3416, %v3587
        %v3589 = vmul.f32 %v3417, %v3587
        %v3590 = vmul.f32 %v3418, %v3587
        %v3591 = vmul.f32 %v3419, %v3587
        %v3592 = vmul.f32 %v3420, %v3587
        %v3593 = vmul.f32 %v3421, %v3587
        %3600 = vrot.lane.b32.xlu0 %v3588, 125
        %v3601 = vpop.permute.xlu0 %3600
        %3602 = vrot.lane.b32.xlu0 %v3589, 125
        %v3603 = vpop.permute.xlu0 %3602
        %3604 = vrot.lane.b32.xlu0 %v3590, 125
        %v3605 = vpop.permute.xlu0 %3604
        %3606 = vrot.lane.b32.xlu0 %v3591, 125
        %v3607 = vpop.permute.xlu0 %3606
        %3608 = vrot.lane.b32.xlu0 %v3592, 125
        %v3609 = vpop.permute.xlu0 %3608
        %3610 = vrot.lane.b32.xlu0 %v3593, 125
        %v3611 = vpop.permute.xlu0 %3610
        %v3612 = vsel %vm506, %v3601, %v3603
        %v3613 = vsel %vm506, %v3603, %v3605
        %v3614 = vsel %vm506, %v3605, %v3607
        %v3615 = vsel %vm506, %v3607, %v3609
        %v3616 = vsel %vm506, %v3609, %v3611
        %v3622 = vadd.f32 %v3540, %v3612
        %v3623 = vadd.f32 %v3541, %v3613
        %v3624 = vadd.f32 %v3542, %v3614
        %v3625 = vadd.f32 %v3543, %v3615
        %v3626 = vadd.f32 %v3544, %v3616
        %s3627 = sld [smem:[#allocation3 + $0x603]]
        %v3628 = vstv %s3627
        %v3629 = vmul.f32 %v3416, %v3628
        %v3630 = vmul.f32 %v3417, %v3628
        %v3631 = vmul.f32 %v3418, %v3628
        %v3632 = vmul.f32 %v3419, %v3628
        %v3633 = vmul.f32 %v3420, %v3628
        %v3634 = vmul.f32 %v3421, %v3628
        %3641 = vrot.lane.b32.xlu0 %v3629, 125
        %v3642 = vpop.permute.xlu0 %3641
        %3643 = vrot.lane.b32.xlu0 %v3630, 125
        %v3644 = vpop.permute.xlu0 %3643
        %3645 = vrot.lane.b32.xlu0 %v3631, 125
        %v3646 = vpop.permute.xlu0 %3645
        %3647 = vrot.lane.b32.xlu0 %v3632, 125
        %v3648 = vpop.permute.xlu0 %3647
        %3649 = vrot.lane.b32.xlu0 %v3633, 125
        %v3650 = vpop.permute.xlu0 %3649
        %3651 = vrot.lane.b32.xlu0 %v3634, 125
        %v3652 = vpop.permute.xlu0 %3651
        %v3653 = vsel %vm506, %v3642, %v3644
        %v3654 = vsel %vm506, %v3644, %v3646
        %v3655 = vsel %vm506, %v3646, %v3648
        %v3656 = vsel %vm506, %v3648, %v3650
        %v3657 = vsel %vm506, %v3650, %v3652
        %v3663 = vadd.f32 %v3581, %v3653
        %v3664 = vadd.f32 %v3582, %v3654
        %v3665 = vadd.f32 %v3583, %v3655
        %v3666 = vadd.f32 %v3584, %v3656
        %v3667 = vadd.f32 %v3585, %v3657
        %s3668 = sld [smem:[#allocation3 + $0x204]]
        %v3669 = vstv %s3668
        %v3670 = vmul.f32 %v3416, %v3669
        %v3671 = vmul.f32 %v3417, %v3669
        %v3672 = vmul.f32 %v3418, %v3669
        %v3673 = vmul.f32 %v3419, %v3669
        %v3674 = vmul.f32 %v3420, %v3669
        %v3675 = vmul.f32 %v3421, %v3669
        %3682 = vrot.lane.b32.xlu0 %v3670, 124
        %v3683 = vpop.permute.xlu0 %3682
        %3684 = vrot.lane.b32.xlu0 %v3671, 124
        %v3685 = vpop.permute.xlu0 %3684
        %3686 = vrot.lane.b32.xlu0 %v3672, 124
        %v3687 = vpop.permute.xlu0 %3686
        %3688 = vrot.lane.b32.xlu0 %v3673, 124
        %v3689 = vpop.permute.xlu0 %3688
        %3690 = vrot.lane.b32.xlu0 %v3674, 124
        %v3691 = vpop.permute.xlu0 %3690
        %3692 = vrot.lane.b32.xlu0 %v3675, 124
        %v3693 = vpop.permute.xlu0 %3692
        %v3694 = vsel %vm589, %v3683, %v3685
        %v3695 = vsel %vm589, %v3685, %v3687
        %v3696 = vsel %vm589, %v3687, %v3689
        %v3697 = vsel %vm589, %v3689, %v3691
        %v3698 = vsel %vm589, %v3691, %v3693
        %v3704 = vadd.f32 %v3622, %v3694
        %v3705 = vadd.f32 %v3623, %v3695
        %v3706 = vadd.f32 %v3624, %v3696
        %v3707 = vadd.f32 %v3625, %v3697
        %v3708 = vadd.f32 %v3626, %v3698
        %s3709 = sld [smem:[#allocation3 + $0x604]]
        %v3710 = vstv %s3709
        %v3711 = vmul.f32 %v3416, %v3710
        %v3712 = vmul.f32 %v3417, %v3710
        %v3713 = vmul.f32 %v3418, %v3710
        %v3714 = vmul.f32 %v3419, %v3710
        %v3715 = vmul.f32 %v3420, %v3710
        %v3716 = vmul.f32 %v3421, %v3710
        %3723 = vrot.lane.b32.xlu0 %v3711, 124
        %v3724 = vpop.permute.xlu0 %3723
        %3725 = vrot.lane.b32.xlu0 %v3712, 124
        %v3726 = vpop.permute.xlu0 %3725
        %3727 = vrot.lane.b32.xlu0 %v3713, 124
        %v3728 = vpop.permute.xlu0 %3727
        %3729 = vrot.lane.b32.xlu0 %v3714, 124
        %v3730 = vpop.permute.xlu0 %3729
        %3731 = vrot.lane.b32.xlu0 %v3715, 124
        %v3732 = vpop.permute.xlu0 %3731
        %3733 = vrot.lane.b32.xlu0 %v3716, 124
        %v3734 = vpop.permute.xlu0 %3733
        %v3735 = vsel %vm589, %v3724, %v3726
        %v3736 = vsel %vm589, %v3726, %v3728
        %v3737 = vsel %vm589, %v3728, %v3730
        %v3738 = vsel %vm589, %v3730, %v3732
        %v3739 = vsel %vm589, %v3732, %v3734
        %v3745 = vadd.f32 %v3663, %v3735
        %v3746 = vadd.f32 %v3664, %v3736
        %v3747 = vadd.f32 %v3665, %v3737
        %v3748 = vadd.f32 %v3666, %v3738
        %v3749 = vadd.f32 %v3667, %v3739
        %s3750 = sld [smem:[#allocation3 + $0x205]]
        %v3751 = vstv %s3750
        %v3752 = vmul.f32 %v3416, %v3751
        %v3753 = vmul.f32 %v3417, %v3751
        %v3754 = vmul.f32 %v3418, %v3751
        %v3755 = vmul.f32 %v3419, %v3751
        %v3756 = vmul.f32 %v3420, %v3751
        %v3757 = vmul.f32 %v3421, %v3751
        %3764 = vrot.lane.b32.xlu0 %v3752, 123
        %v3765 = vpop.permute.xlu0 %3764
        %3766 = vrot.lane.b32.xlu0 %v3753, 123
        %v3767 = vpop.permute.xlu0 %3766
        %3768 = vrot.lane.b32.xlu0 %v3754, 123
        %v3769 = vpop.permute.xlu0 %3768
        %3770 = vrot.lane.b32.xlu0 %v3755, 123
        %v3771 = vpop.permute.xlu0 %3770
        %3772 = vrot.lane.b32.xlu0 %v3756, 123
        %v3773 = vpop.permute.xlu0 %3772
        %3774 = vrot.lane.b32.xlu0 %v3757, 123
        %v3775 = vpop.permute.xlu0 %3774
        %v3776 = vsel %vm672, %v3765, %v3767
        %v3777 = vsel %vm672, %v3767, %v3769
        %v3778 = vsel %vm672, %v3769, %v3771
        %v3779 = vsel %vm672, %v3771, %v3773
        %v3780 = vsel %vm672, %v3773, %v3775
        %v3786 = vadd.f32 %v3704, %v3776
        %v3787 = vadd.f32 %v3705, %v3777
        %v3788 = vadd.f32 %v3706, %v3778
        %v3789 = vadd.f32 %v3707, %v3779
        %v3790 = vadd.f32 %v3708, %v3780
        %s3791 = sld [smem:[#allocation3 + $0x605]]
        %v3792 = vstv %s3791
        %v3793 = vmul.f32 %v3416, %v3792
        %v3794 = vmul.f32 %v3417, %v3792
        %v3795 = vmul.f32 %v3418, %v3792
        %v3796 = vmul.f32 %v3419, %v3792
        %v3797 = vmul.f32 %v3420, %v3792
        %v3798 = vmul.f32 %v3421, %v3792
        %3805 = vrot.lane.b32.xlu0 %v3793, 123
        %v3806 = vpop.permute.xlu0 %3805
        %3807 = vrot.lane.b32.xlu0 %v3794, 123
        %v3808 = vpop.permute.xlu0 %3807
        %3809 = vrot.lane.b32.xlu0 %v3795, 123
        %v3810 = vpop.permute.xlu0 %3809
        %3811 = vrot.lane.b32.xlu0 %v3796, 123
        %v3812 = vpop.permute.xlu0 %3811
        %3813 = vrot.lane.b32.xlu0 %v3797, 123
        %v3814 = vpop.permute.xlu0 %3813
        %3815 = vrot.lane.b32.xlu0 %v3798, 123
        %v3816 = vpop.permute.xlu0 %3815
        %v3817 = vsel %vm672, %v3806, %v3808
        %v3818 = vsel %vm672, %v3808, %v3810
        %v3819 = vsel %vm672, %v3810, %v3812
        %v3820 = vsel %vm672, %v3812, %v3814
        %v3821 = vsel %vm672, %v3814, %v3816
        %v3827 = vadd.f32 %v3745, %v3817
        %v3828 = vadd.f32 %v3746, %v3818
        %v3829 = vadd.f32 %v3747, %v3819
        %v3830 = vadd.f32 %v3748, %v3820
        %v3831 = vadd.f32 %v3749, %v3821
        %s3832 = sld [smem:[#allocation3 + $0x206]]
        %v3833 = vstv %s3832
        %v3834 = vmul.f32 %v3416, %v3833
        %v3835 = vmul.f32 %v3417, %v3833
        %v3836 = vmul.f32 %v3418, %v3833
        %v3837 = vmul.f32 %v3419, %v3833
        %v3838 = vmul.f32 %v3420, %v3833
        %v3839 = vmul.f32 %v3421, %v3833
        %3846 = vrot.lane.b32.xlu0 %v3834, 122
        %v3847 = vpop.permute.xlu0 %3846
        %3848 = vrot.lane.b32.xlu0 %v3835, 122
        %v3849 = vpop.permute.xlu0 %3848
        %3850 = vrot.lane.b32.xlu0 %v3836, 122
        %v3851 = vpop.permute.xlu0 %3850
        %3852 = vrot.lane.b32.xlu0 %v3837, 122
        %v3853 = vpop.permute.xlu0 %3852
        %3854 = vrot.lane.b32.xlu0 %v3838, 122
        %v3855 = vpop.permute.xlu0 %3854
        %3856 = vrot.lane.b32.xlu0 %v3839, 122
        %v3857 = vpop.permute.xlu0 %3856
        %v3858 = vsel %vm755, %v3847, %v3849
        %v3859 = vsel %vm755, %v3849, %v3851
        %v3860 = vsel %vm755, %v3851, %v3853
        %v3861 = vsel %vm755, %v3853, %v3855
        %v3862 = vsel %vm755, %v3855, %v3857
        %v3868 = vadd.f32 %v3786, %v3858
        %v3869 = vadd.f32 %v3787, %v3859
        %v3870 = vadd.f32 %v3788, %v3860
        %v3871 = vadd.f32 %v3789, %v3861
        %v3872 = vadd.f32 %v3790, %v3862
        %s3873 = sld [smem:[#allocation3 + $0x606]]
        %v3874 = vstv %s3873
        %v3875 = vmul.f32 %v3416, %v3874
        %v3876 = vmul.f32 %v3417, %v3874
        %v3877 = vmul.f32 %v3418, %v3874
        %v3878 = vmul.f32 %v3419, %v3874
        %v3879 = vmul.f32 %v3420, %v3874
        %v3880 = vmul.f32 %v3421, %v3874
        %3887 = vrot.lane.b32.xlu0 %v3875, 122
        %v3888 = vpop.permute.xlu0 %3887
        %3889 = vrot.lane.b32.xlu0 %v3876, 122
        %v3890 = vpop.permute.xlu0 %3889
        %3891 = vrot.lane.b32.xlu0 %v3877, 122
        %v3892 = vpop.permute.xlu0 %3891
        %3893 = vrot.lane.b32.xlu0 %v3878, 122
        %v3894 = vpop.permute.xlu0 %3893
        %3895 = vrot.lane.b32.xlu0 %v3879, 122
        %v3896 = vpop.permute.xlu0 %3895
        %3897 = vrot.lane.b32.xlu0 %v3880, 122
        %v3898 = vpop.permute.xlu0 %3897
        %v3899 = vsel %vm755, %v3888, %v3890
        %v3900 = vsel %vm755, %v3890, %v3892
        %v3901 = vsel %vm755, %v3892, %v3894
        %v3902 = vsel %vm755, %v3894, %v3896
        %v3903 = vsel %vm755, %v3896, %v3898
        %v3909 = vadd.f32 %v3827, %v3899
        %v3910 = vadd.f32 %v3828, %v3900
        %v3911 = vadd.f32 %v3829, %v3901
        %v3912 = vadd.f32 %v3830, %v3902
        %v3913 = vadd.f32 %v3831, %v3903
        %s3914 = sld [smem:[#allocation3 + $0x207]]
        %v3915 = vstv %s3914
        %v3916 = vmul.f32 %v3416, %v3915
        %v3917 = vmul.f32 %v3417, %v3915
        %v3918 = vmul.f32 %v3418, %v3915
        %v3919 = vmul.f32 %v3419, %v3915
        %v3920 = vmul.f32 %v3420, %v3915
        %v3921 = vmul.f32 %v3421, %v3915
        %3928 = vrot.lane.b32.xlu0 %v3916, 121
        %v3929 = vpop.permute.xlu0 %3928
        %3930 = vrot.lane.b32.xlu0 %v3917, 121
        %v3931 = vpop.permute.xlu0 %3930
        %3932 = vrot.lane.b32.xlu0 %v3918, 121
        %v3933 = vpop.permute.xlu0 %3932
        %3934 = vrot.lane.b32.xlu0 %v3919, 121
        %v3935 = vpop.permute.xlu0 %3934
        %3936 = vrot.lane.b32.xlu0 %v3920, 121
        %v3937 = vpop.permute.xlu0 %3936
        %3938 = vrot.lane.b32.xlu0 %v3921, 121
        %v3939 = vpop.permute.xlu0 %3938
        %v3940 = vsel %vm838, %v3929, %v3931
        %v3941 = vsel %vm838, %v3931, %v3933
        %v3942 = vsel %vm838, %v3933, %v3935
        %v3943 = vsel %vm838, %v3935, %v3937
        %v3944 = vsel %vm838, %v3937, %v3939
        %v3950 = vadd.f32 %v3868, %v3940
        %v3951 = vadd.f32 %v3869, %v3941
        %v3952 = vadd.f32 %v3870, %v3942
        %v3953 = vadd.f32 %v3871, %v3943
        %v3954 = vadd.f32 %v3872, %v3944
        %s3955 = sld [smem:[#allocation3 + $0x607]]
        %v3956 = vstv %s3955
        %v3957 = vmul.f32 %v3416, %v3956
        %v3958 = vmul.f32 %v3417, %v3956
        %v3959 = vmul.f32 %v3418, %v3956
        %v3960 = vmul.f32 %v3419, %v3956
        %v3961 = vmul.f32 %v3420, %v3956
        %v3962 = vmul.f32 %v3421, %v3956
        %3969 = vrot.lane.b32.xlu0 %v3957, 121
        %v3970 = vpop.permute.xlu0 %3969
        %3971 = vrot.lane.b32.xlu0 %v3958, 121
        %v3972 = vpop.permute.xlu0 %3971
        %3973 = vrot.lane.b32.xlu0 %v3959, 121
        %v3974 = vpop.permute.xlu0 %3973
        %3975 = vrot.lane.b32.xlu0 %v3960, 121
        %v3976 = vpop.permute.xlu0 %3975
        %3977 = vrot.lane.b32.xlu0 %v3961, 121
        %v3978 = vpop.permute.xlu0 %3977
        %3979 = vrot.lane.b32.xlu0 %v3962, 121
        %v3980 = vpop.permute.xlu0 %3979
        %v3981 = vsel %vm838, %v3970, %v3972
        %v3982 = vsel %vm838, %v3972, %v3974
        %v3983 = vsel %vm838, %v3974, %v3976
        %v3984 = vsel %vm838, %v3976, %v3978
        %v3985 = vsel %vm838, %v3978, %v3980
        %v3991 = vadd.f32 %v3909, %v3981
        %v3992 = vadd.f32 %v3910, %v3982
        %v3993 = vadd.f32 %v3911, %v3983
        %v3994 = vadd.f32 %v3912, %v3984
        %v3995 = vadd.f32 %v3913, %v3985
        %s3996 = sld [smem:[#allocation3 + $0x208]]
        %v3997 = vstv %s3996
        %v3998 = vmul.f32 %v3416, %v3997
        %v3999 = vmul.f32 %v3417, %v3997
        %v4000 = vmul.f32 %v3418, %v3997
        %v4001 = vmul.f32 %v3419, %v3997
        %v4002 = vmul.f32 %v3420, %v3997
        %v4003 = vmul.f32 %v3421, %v3997
        %4010 = vrot.lane.b32.xlu0 %v3998, 120
        %v4011 = vpop.permute.xlu0 %4010
        %4012 = vrot.lane.b32.xlu0 %v3999, 120
        %v4013 = vpop.permute.xlu0 %4012
        %4014 = vrot.lane.b32.xlu0 %v4000, 120
        %v4015 = vpop.permute.xlu0 %4014
        %4016 = vrot.lane.b32.xlu0 %v4001, 120
        %v4017 = vpop.permute.xlu0 %4016
        %4018 = vrot.lane.b32.xlu0 %v4002, 120
        %v4019 = vpop.permute.xlu0 %4018
        %4020 = vrot.lane.b32.xlu0 %v4003, 120
        %v4021 = vpop.permute.xlu0 %4020
        %v4022 = vsel %vm921, %v4011, %v4013
        %v4023 = vsel %vm921, %v4013, %v4015
        %v4024 = vsel %vm921, %v4015, %v4017
        %v4025 = vsel %vm921, %v4017, %v4019
        %v4026 = vsel %vm921, %v4019, %v4021
        %v4032 = vadd.f32 %v3950, %v4022
        %v4033 = vadd.f32 %v3951, %v4023
        %v4034 = vadd.f32 %v3952, %v4024
        %v4035 = vadd.f32 %v3953, %v4025
        %v4036 = vadd.f32 %v3954, %v4026
        %s4037 = sld [smem:[#allocation3 + $0x608]]
        %v4038 = vstv %s4037
        %v4039 = vmul.f32 %v3416, %v4038
        %v4040 = vmul.f32 %v3417, %v4038
        %v4041 = vmul.f32 %v3418, %v4038
        %v4042 = vmul.f32 %v3419, %v4038
        %v4043 = vmul.f32 %v3420, %v4038
        %v4044 = vmul.f32 %v3421, %v4038
        %4051 = vrot.lane.b32.xlu0 %v4039, 120
        %v4052 = vpop.permute.xlu0 %4051
        %4053 = vrot.lane.b32.xlu0 %v4040, 120
        %v4054 = vpop.permute.xlu0 %4053
        %4055 = vrot.lane.b32.xlu0 %v4041, 120
        %v4056 = vpop.permute.xlu0 %4055
        %4057 = vrot.lane.b32.xlu0 %v4042, 120
        %v4058 = vpop.permute.xlu0 %4057
        %4059 = vrot.lane.b32.xlu0 %v4043, 120
        %v4060 = vpop.permute.xlu0 %4059
        %4061 = vrot.lane.b32.xlu0 %v4044, 120
        %v4062 = vpop.permute.xlu0 %4061
        %v4063 = vsel %vm921, %v4052, %v4054
        %v4064 = vsel %vm921, %v4054, %v4056
        %v4065 = vsel %vm921, %v4056, %v4058
        %v4066 = vsel %vm921, %v4058, %v4060
        %v4067 = vsel %vm921, %v4060, %v4062
        %v4073 = vadd.f32 %v3991, %v4063
        %v4074 = vadd.f32 %v3992, %v4064
        %v4075 = vadd.f32 %v3993, %v4065
        %v4076 = vadd.f32 %v3994, %v4066
        %v4077 = vadd.f32 %v3995, %v4067
        %s4078 = sld [smem:[#allocation3 + $0x209]]
        %v4079 = vstv %s4078
        %v4080 = vmul.f32 %v3416, %v4079
        %v4081 = vmul.f32 %v3417, %v4079
        %v4082 = vmul.f32 %v3418, %v4079
        %v4083 = vmul.f32 %v3419, %v4079
        %v4084 = vmul.f32 %v3420, %v4079
        %v4085 = vmul.f32 %v3421, %v4079
        %4092 = vrot.lane.b32.xlu0 %v4080, 119
        %v4093 = vpop.permute.xlu0 %4092
        %4094 = vrot.lane.b32.xlu0 %v4081, 119
        %v4095 = vpop.permute.xlu0 %4094
        %4096 = vrot.lane.b32.xlu0 %v4082, 119
        %v4097 = vpop.permute.xlu0 %4096
        %4098 = vrot.lane.b32.xlu0 %v4083, 119
        %v4099 = vpop.permute.xlu0 %4098
        %4100 = vrot.lane.b32.xlu0 %v4084, 119
        %v4101 = vpop.permute.xlu0 %4100
        %4102 = vrot.lane.b32.xlu0 %v4085, 119
        %v4103 = vpop.permute.xlu0 %4102
        %v4104 = vsel %vm1004, %v4093, %v4095
        %v4105 = vsel %vm1004, %v4095, %v4097
        %v4106 = vsel %vm1004, %v4097, %v4099
        %v4107 = vsel %vm1004, %v4099, %v4101
        %v4108 = vsel %vm1004, %v4101, %v4103
        %v4114 = vadd.f32 %v4032, %v4104
        %v4115 = vadd.f32 %v4033, %v4105
        %v4116 = vadd.f32 %v4034, %v4106
        %v4117 = vadd.f32 %v4035, %v4107
        %v4118 = vadd.f32 %v4036, %v4108
        %s4119 = sld [smem:[#allocation3 + $0x609]]
        %v4120 = vstv %s4119
        %v4121 = vmul.f32 %v3416, %v4120
        %v4122 = vmul.f32 %v3417, %v4120
        %v4123 = vmul.f32 %v3418, %v4120
        %v4124 = vmul.f32 %v3419, %v4120
        %v4125 = vmul.f32 %v3420, %v4120
        %v4126 = vmul.f32 %v3421, %v4120
        %4133 = vrot.lane.b32.xlu0 %v4121, 119
        %v4134 = vpop.permute.xlu0 %4133
        %4135 = vrot.lane.b32.xlu0 %v4122, 119
        %v4136 = vpop.permute.xlu0 %4135
        %4137 = vrot.lane.b32.xlu0 %v4123, 119
        %v4138 = vpop.permute.xlu0 %4137
        %4139 = vrot.lane.b32.xlu0 %v4124, 119
        %v4140 = vpop.permute.xlu0 %4139
        %4141 = vrot.lane.b32.xlu0 %v4125, 119
        %v4142 = vpop.permute.xlu0 %4141
        %4143 = vrot.lane.b32.xlu0 %v4126, 119
        %v4144 = vpop.permute.xlu0 %4143
        %v4145 = vsel %vm1004, %v4134, %v4136
        %v4146 = vsel %vm1004, %v4136, %v4138
        %v4147 = vsel %vm1004, %v4138, %v4140
        %v4148 = vsel %vm1004, %v4140, %v4142
        %v4149 = vsel %vm1004, %v4142, %v4144
        %v4155 = vadd.f32 %v4073, %v4145
        %v4156 = vadd.f32 %v4074, %v4146
        %v4157 = vadd.f32 %v4075, %v4147
        %v4158 = vadd.f32 %v4076, %v4148
        %v4159 = vadd.f32 %v4077, %v4149
        %s4160 = scalar_lea.vmem %s245, 160 [#allocation5]
        %4161 = vst [vmem:[%s4160] sm:$0xff] %v4114
        %4162 = vst [vmem:[%s4160 + $0x8] sm:$0xff] %v4115
        %4163 = vst [vmem:[%s4160 + $0x10] sm:$0xff] %v4116
        %4164 = vst [vmem:[%s4160 + $0x18] sm:$0xff] %v4117
        %4165 = vst [vmem:[%s4160 + $0x20] sm:$0xff] %v4118
        %s4166 = scalar_lea.vmem %s245, 480 [#allocation5]
        %4167 = vst [vmem:[%s4166] sm:$0xff] %v4155
        %4168 = vst [vmem:[%s4166 + $0x8] sm:$0xff] %v4156
        %4169 = vst [vmem:[%s4166 + $0x10] sm:$0xff] %v4157
        %4170 = vst [vmem:[%s4166 + $0x18] sm:$0xff] %v4158
        %4171 = vst [vmem:[%s4166 + $0x20] sm:$0xff] %v4159
        %v4172 = vld [vmem:[#allocation2] sm:$0xff]
        %v4173 = vld [vmem:[#allocation2 + $0x8] sm:$0xff]
        %v4174 = vld [vmem:[#allocation2 + $0x10] sm:$0xff]
        %v4175 = vld [vmem:[#allocation2 + $0x18] sm:$0xff]
        %v4176 = vld [vmem:[#allocation2 + $0x20] sm:$0xff]
        %s4177 = sld [smem:[#allocation3 + $0x280]]
        %v4178 = vstv %s4177
        %v4179 = vmul.f32 %v4172, %v4178
        %v4180 = vmul.f32 %v4173, %v4178
        %v4181 = vmul.f32 %v4174, %v4178
        %v4182 = vmul.f32 %v4175, %v4178
        %v4183 = vmul.f32 %v4176, %v4178
        %s4184 = sld [smem:[#allocation3 + $0x680]]
        %v4185 = vstv %s4184
        %v4186 = vmul.f32 %v4172, %v4185
        %v4187 = vmul.f32 %v4173, %v4185
        %v4188 = vmul.f32 %v4174, %v4185
        %v4189 = vmul.f32 %v4175, %v4185
        %v4190 = vmul.f32 %v4176, %v4185
        %v4191 = vld [vmem:[#allocation2] sm:$0xff]
        %v4192 = vld [vmem:[#allocation2 + $0x8] sm:$0xff]
        %v4193 = vld [vmem:[#allocation2 + $0x10] sm:$0xff]
        %v4194 = vld [vmem:[#allocation2 + $0x18] sm:$0xff]
        %v4195 = vld [vmem:[#allocation2 + $0x20] sm:$0xff]
        %v4196 = vld [vmem:[#allocation2 + $0x28] sm:$0xff]
        %s4197 = sld [smem:[#allocation3 + $0x281]]
        %v4198 = vstv %s4197
        %v4199 = vmul.f32 %v4191, %v4198
        %v4200 = vmul.f32 %v4192, %v4198
        %v4201 = vmul.f32 %v4193, %v4198
        %v4202 = vmul.f32 %v4194, %v4198
        %v4203 = vmul.f32 %v4195, %v4198
        %v4204 = vmul.f32 %v4196, %v4198
        %4211 = vrot.lane.b32.xlu0 %v4199, 127
        %v4212 = vpop.permute.xlu0 %4211
        %4213 = vrot.lane.b32.xlu0 %v4200, 127
        %v4214 = vpop.permute.xlu0 %4213
        %4215 = vrot.lane.b32.xlu0 %v4201, 127
        %v4216 = vpop.permute.xlu0 %4215
        %4217 = vrot.lane.b32.xlu0 %v4202, 127
        %v4218 = vpop.permute.xlu0 %4217
        %4219 = vrot.lane.b32.xlu0 %v4203, 127
        %v4220 = vpop.permute.xlu0 %4219
        %4221 = vrot.lane.b32.xlu0 %v4204, 127
        %v4222 = vpop.permute.xlu0 %4221
        %v4223 = vsel %vm340, %v4212, %v4214
        %v4224 = vsel %vm340, %v4214, %v4216
        %v4225 = vsel %vm340, %v4216, %v4218
        %v4226 = vsel %vm340, %v4218, %v4220
        %v4227 = vsel %vm340, %v4220, %v4222
        %v4233 = vadd.f32 %v4179, %v4223
        %v4234 = vadd.f32 %v4180, %v4224
        %v4235 = vadd.f32 %v4181, %v4225
        %v4236 = vadd.f32 %v4182, %v4226
        %v4237 = vadd.f32 %v4183, %v4227
        %s4238 = sld [smem:[#allocation3 + $0x681]]
        %v4239 = vstv %s4238
        %v4240 = vmul.f32 %v4191, %v4239
        %v4241 = vmul.f32 %v4192, %v4239
        %v4242 = vmul.f32 %v4193, %v4239
        %v4243 = vmul.f32 %v4194, %v4239
        %v4244 = vmul.f32 %v4195, %v4239
        %v4245 = vmul.f32 %v4196, %v4239
        %4252 = vrot.lane.b32.xlu0 %v4240, 127
        %v4253 = vpop.permute.xlu0 %4252
        %4254 = vrot.lane.b32.xlu0 %v4241, 127
        %v4255 = vpop.permute.xlu0 %4254
        %4256 = vrot.lane.b32.xlu0 %v4242, 127
        %v4257 = vpop.permute.xlu0 %4256
        %4258 = vrot.lane.b32.xlu0 %v4243, 127
        %v4259 = vpop.permute.xlu0 %4258
        %4260 = vrot.lane.b32.xlu0 %v4244, 127
        %v4261 = vpop.permute.xlu0 %4260
        %4262 = vrot.lane.b32.xlu0 %v4245, 127
        %v4263 = vpop.permute.xlu0 %4262
        %v4264 = vsel %vm340, %v4253, %v4255
        %v4265 = vsel %vm340, %v4255, %v4257
        %v4266 = vsel %vm340, %v4257, %v4259
        %v4267 = vsel %vm340, %v4259, %v4261
        %v4268 = vsel %vm340, %v4261, %v4263
        %v4274 = vadd.f32 %v4186, %v4264
        %v4275 = vadd.f32 %v4187, %v4265
        %v4276 = vadd.f32 %v4188, %v4266
        %v4277 = vadd.f32 %v4189, %v4267
        %v4278 = vadd.f32 %v4190, %v4268
        %s4279 = sld [smem:[#allocation3 + $0x282]]
        %v4280 = vstv %s4279
        %v4281 = vmul.f32 %v4191, %v4280
        %v4282 = vmul.f32 %v4192, %v4280
        %v4283 = vmul.f32 %v4193, %v4280
        %v4284 = vmul.f32 %v4194, %v4280
        %v4285 = vmul.f32 %v4195, %v4280
        %v4286 = vmul.f32 %v4196, %v4280
        %4293 = vrot.lane.b32.xlu0 %v4281, 126
        %v4294 = vpop.permute.xlu0 %4293
        %4295 = vrot.lane.b32.xlu0 %v4282, 126
        %v4296 = vpop.permute.xlu0 %4295
        %4297 = vrot.lane.b32.xlu0 %v4283, 126
        %v4298 = vpop.permute.xlu0 %4297
        %4299 = vrot.lane.b32.xlu0 %v4284, 126
        %v4300 = vpop.permute.xlu0 %4299
        %4301 = vrot.lane.b32.xlu0 %v4285, 126
        %v4302 = vpop.permute.xlu0 %4301
        %4303 = vrot.lane.b32.xlu0 %v4286, 126
        %v4304 = vpop.permute.xlu0 %4303
        %v4305 = vsel %vm423, %v4294, %v4296
        %v4306 = vsel %vm423, %v4296, %v4298
        %v4307 = vsel %vm423, %v4298, %v4300
        %v4308 = vsel %vm423, %v4300, %v4302
        %v4309 = vsel %vm423, %v4302, %v4304
        %v4315 = vadd.f32 %v4233, %v4305
        %v4316 = vadd.f32 %v4234, %v4306
        %v4317 = vadd.f32 %v4235, %v4307
        %v4318 = vadd.f32 %v4236, %v4308
        %v4319 = vadd.f32 %v4237, %v4309
        %s4320 = sld [smem:[#allocation3 + $0x682]]
        %v4321 = vstv %s4320
        %v4322 = vmul.f32 %v4191, %v4321
        %v4323 = vmul.f32 %v4192, %v4321
        %v4324 = vmul.f32 %v4193, %v4321
        %v4325 = vmul.f32 %v4194, %v4321
        %v4326 = vmul.f32 %v4195, %v4321
        %v4327 = vmul.f32 %v4196, %v4321
        %4334 = vrot.lane.b32.xlu0 %v4322, 126
        %v4335 = vpop.permute.xlu0 %4334
        %4336 = vrot.lane.b32.xlu0 %v4323, 126
        %v4337 = vpop.permute.xlu0 %4336
        %4338 = vrot.lane.b32.xlu0 %v4324, 126
        %v4339 = vpop.permute.xlu0 %4338
        %4340 = vrot.lane.b32.xlu0 %v4325, 126
        %v4341 = vpop.permute.xlu0 %4340
        %4342 = vrot.lane.b32.xlu0 %v4326, 126
        %v4343 = vpop.permute.xlu0 %4342
        %4344 = vrot.lane.b32.xlu0 %v4327, 126
        %v4345 = vpop.permute.xlu0 %4344
        %v4346 = vsel %vm423, %v4335, %v4337
        %v4347 = vsel %vm423, %v4337, %v4339
        %v4348 = vsel %vm423, %v4339, %v4341
        %v4349 = vsel %vm423, %v4341, %v4343
        %v4350 = vsel %vm423, %v4343, %v4345
        %v4356 = vadd.f32 %v4274, %v4346
        %v4357 = vadd.f32 %v4275, %v4347
        %v4358 = vadd.f32 %v4276, %v4348
        %v4359 = vadd.f32 %v4277, %v4349
        %v4360 = vadd.f32 %v4278, %v4350
        %s4361 = sld [smem:[#allocation3 + $0x283]]
        %v4362 = vstv %s4361
        %v4363 = vmul.f32 %v4191, %v4362
        %v4364 = vmul.f32 %v4192, %v4362
        %v4365 = vmul.f32 %v4193, %v4362
        %v4366 = vmul.f32 %v4194, %v4362
        %v4367 = vmul.f32 %v4195, %v4362
        %v4368 = vmul.f32 %v4196, %v4362
        %4375 = vrot.lane.b32.xlu0 %v4363, 125
        %v4376 = vpop.permute.xlu0 %4375
        %4377 = vrot.lane.b32.xlu0 %v4364, 125
        %v4378 = vpop.permute.xlu0 %4377
        %4379 = vrot.lane.b32.xlu0 %v4365, 125
        %v4380 = vpop.permute.xlu0 %4379
        %4381 = vrot.lane.b32.xlu0 %v4366, 125
        %v4382 = vpop.permute.xlu0 %4381
        %4383 = vrot.lane.b32.xlu0 %v4367, 125
        %v4384 = vpop.permute.xlu0 %4383
        %4385 = vrot.lane.b32.xlu0 %v4368, 125
        %v4386 = vpop.permute.xlu0 %4385
        %v4387 = vsel %vm506, %v4376, %v4378
        %v4388 = vsel %vm506, %v4378, %v4380
        %v4389 = vsel %vm506, %v4380, %v4382
        %v4390 = vsel %vm506, %v4382, %v4384
        %v4391 = vsel %vm506, %v4384, %v4386
        %v4397 = vadd.f32 %v4315, %v4387
        %v4398 = vadd.f32 %v4316, %v4388
        %v4399 = vadd.f32 %v4317, %v4389
        %v4400 = vadd.f32 %v4318, %v4390
        %v4401 = vadd.f32 %v4319, %v4391
        %s4402 = sld [smem:[#allocation3 + $0x683]]
        %v4403 = vstv %s4402
        %v4404 = vmul.f32 %v4191, %v4403
        %v4405 = vmul.f32 %v4192, %v4403
        %v4406 = vmul.f32 %v4193, %v4403
        %v4407 = vmul.f32 %v4194, %v4403
        %v4408 = vmul.f32 %v4195, %v4403
        %v4409 = vmul.f32 %v4196, %v4403
        %4416 = vrot.lane.b32.xlu0 %v4404, 125
        %v4417 = vpop.permute.xlu0 %4416
        %4418 = vrot.lane.b32.xlu0 %v4405, 125
        %v4419 = vpop.permute.xlu0 %4418
        %4420 = vrot.lane.b32.xlu0 %v4406, 125
        %v4421 = vpop.permute.xlu0 %4420
        %4422 = vrot.lane.b32.xlu0 %v4407, 125
        %v4423 = vpop.permute.xlu0 %4422
        %4424 = vrot.lane.b32.xlu0 %v4408, 125
        %v4425 = vpop.permute.xlu0 %4424
        %4426 = vrot.lane.b32.xlu0 %v4409, 125
        %v4427 = vpop.permute.xlu0 %4426
        %v4428 = vsel %vm506, %v4417, %v4419
        %v4429 = vsel %vm506, %v4419, %v4421
        %v4430 = vsel %vm506, %v4421, %v4423
        %v4431 = vsel %vm506, %v4423, %v4425
        %v4432 = vsel %vm506, %v4425, %v4427
        %v4438 = vadd.f32 %v4356, %v4428
        %v4439 = vadd.f32 %v4357, %v4429
        %v4440 = vadd.f32 %v4358, %v4430
        %v4441 = vadd.f32 %v4359, %v4431
        %v4442 = vadd.f32 %v4360, %v4432
        %s4443 = sld [smem:[#allocation3 + $0x284]]
        %v4444 = vstv %s4443
        %v4445 = vmul.f32 %v4191, %v4444
        %v4446 = vmul.f32 %v4192, %v4444
        %v4447 = vmul.f32 %v4193, %v4444
        %v4448 = vmul.f32 %v4194, %v4444
        %v4449 = vmul.f32 %v4195, %v4444
        %v4450 = vmul.f32 %v4196, %v4444
        %4457 = vrot.lane.b32.xlu0 %v4445, 124
        %v4458 = vpop.permute.xlu0 %4457
        %4459 = vrot.lane.b32.xlu0 %v4446, 124
        %v4460 = vpop.permute.xlu0 %4459
        %4461 = vrot.lane.b32.xlu0 %v4447, 124
        %v4462 = vpop.permute.xlu0 %4461
        %4463 = vrot.lane.b32.xlu0 %v4448, 124
        %v4464 = vpop.permute.xlu0 %4463
        %4465 = vrot.lane.b32.xlu0 %v4449, 124
        %v4466 = vpop.permute.xlu0 %4465
        %4467 = vrot.lane.b32.xlu0 %v4450, 124
        %v4468 = vpop.permute.xlu0 %4467
        %v4469 = vsel %vm589, %v4458, %v4460
        %v4470 = vsel %vm589, %v4460, %v4462
        %v4471 = vsel %vm589, %v4462, %v4464
        %v4472 = vsel %vm589, %v4464, %v4466
        %v4473 = vsel %vm589, %v4466, %v4468
        %v4479 = vadd.f32 %v4397, %v4469
        %v4480 = vadd.f32 %v4398, %v4470
        %v4481 = vadd.f32 %v4399, %v4471
        %v4482 = vadd.f32 %v4400, %v4472
        %v4483 = vadd.f32 %v4401, %v4473
        %s4484 = sld [smem:[#allocation3 + $0x684]]
        %v4485 = vstv %s4484
        %v4486 = vmul.f32 %v4191, %v4485
        %v4487 = vmul.f32 %v4192, %v4485
        %v4488 = vmul.f32 %v4193, %v4485
        %v4489 = vmul.f32 %v4194, %v4485
        %v4490 = vmul.f32 %v4195, %v4485
        %v4491 = vmul.f32 %v4196, %v4485
        %4498 = vrot.lane.b32.xlu0 %v4486, 124
        %v4499 = vpop.permute.xlu0 %4498
        %4500 = vrot.lane.b32.xlu0 %v4487, 124
        %v4501 = vpop.permute.xlu0 %4500
        %4502 = vrot.lane.b32.xlu0 %v4488, 124
        %v4503 = vpop.permute.xlu0 %4502
        %4504 = vrot.lane.b32.xlu0 %v4489, 124
        %v4505 = vpop.permute.xlu0 %4504
        %4506 = vrot.lane.b32.xlu0 %v4490, 124
        %v4507 = vpop.permute.xlu0 %4506
        %4508 = vrot.lane.b32.xlu0 %v4491, 124
        %v4509 = vpop.permute.xlu0 %4508
        %v4510 = vsel %vm589, %v4499, %v4501
        %v4511 = vsel %vm589, %v4501, %v4503
        %v4512 = vsel %vm589, %v4503, %v4505
        %v4513 = vsel %vm589, %v4505, %v4507
        %v4514 = vsel %vm589, %v4507, %v4509
        %v4520 = vadd.f32 %v4438, %v4510
        %v4521 = vadd.f32 %v4439, %v4511
        %v4522 = vadd.f32 %v4440, %v4512
        %v4523 = vadd.f32 %v4441, %v4513
        %v4524 = vadd.f32 %v4442, %v4514
        %s4525 = sld [smem:[#allocation3 + $0x285]]
        %v4526 = vstv %s4525
        %v4527 = vmul.f32 %v4191, %v4526
        %v4528 = vmul.f32 %v4192, %v4526
        %v4529 = vmul.f32 %v4193, %v4526
        %v4530 = vmul.f32 %v4194, %v4526
        %v4531 = vmul.f32 %v4195, %v4526
        %v4532 = vmul.f32 %v4196, %v4526
        %4539 = vrot.lane.b32.xlu0 %v4527, 123
        %v4540 = vpop.permute.xlu0 %4539
        %4541 = vrot.lane.b32.xlu0 %v4528, 123
        %v4542 = vpop.permute.xlu0 %4541
        %4543 = vrot.lane.b32.xlu0 %v4529, 123
        %v4544 = vpop.permute.xlu0 %4543
        %4545 = vrot.lane.b32.xlu0 %v4530, 123
        %v4546 = vpop.permute.xlu0 %4545
        %4547 = vrot.lane.b32.xlu0 %v4531, 123
        %v4548 = vpop.permute.xlu0 %4547
        %4549 = vrot.lane.b32.xlu0 %v4532, 123
        %v4550 = vpop.permute.xlu0 %4549
        %v4551 = vsel %vm672, %v4540, %v4542
        %v4552 = vsel %vm672, %v4542, %v4544
        %v4553 = vsel %vm672, %v4544, %v4546
        %v4554 = vsel %vm672, %v4546, %v4548
        %v4555 = vsel %vm672, %v4548, %v4550
        %v4561 = vadd.f32 %v4479, %v4551
        %v4562 = vadd.f32 %v4480, %v4552
        %v4563 = vadd.f32 %v4481, %v4553
        %v4564 = vadd.f32 %v4482, %v4554
        %v4565 = vadd.f32 %v4483, %v4555
        %s4566 = sld [smem:[#allocation3 + $0x685]]
        %v4567 = vstv %s4566
        %v4568 = vmul.f32 %v4191, %v4567
        %v4569 = vmul.f32 %v4192, %v4567
        %v4570 = vmul.f32 %v4193, %v4567
        %v4571 = vmul.f32 %v4194, %v4567
        %v4572 = vmul.f32 %v4195, %v4567
        %v4573 = vmul.f32 %v4196, %v4567
        %4580 = vrot.lane.b32.xlu0 %v4568, 123
        %v4581 = vpop.permute.xlu0 %4580
        %4582 = vrot.lane.b32.xlu0 %v4569, 123
        %v4583 = vpop.permute.xlu0 %4582
        %4584 = vrot.lane.b32.xlu0 %v4570, 123
        %v4585 = vpop.permute.xlu0 %4584
        %4586 = vrot.lane.b32.xlu0 %v4571, 123
        %v4587 = vpop.permute.xlu0 %4586
        %4588 = vrot.lane.b32.xlu0 %v4572, 123
        %v4589 = vpop.permute.xlu0 %4588
        %4590 = vrot.lane.b32.xlu0 %v4573, 123
        %v4591 = vpop.permute.xlu0 %4590
        %v4592 = vsel %vm672, %v4581, %v4583
        %v4593 = vsel %vm672, %v4583, %v4585
        %v4594 = vsel %vm672, %v4585, %v4587
        %v4595 = vsel %vm672, %v4587, %v4589
        %v4596 = vsel %vm672, %v4589, %v4591
        %v4602 = vadd.f32 %v4520, %v4592
        %v4603 = vadd.f32 %v4521, %v4593
        %v4604 = vadd.f32 %v4522, %v4594
        %v4605 = vadd.f32 %v4523, %v4595
        %v4606 = vadd.f32 %v4524, %v4596
        %s4607 = sld [smem:[#allocation3 + $0x286]]
        %v4608 = vstv %s4607
        %v4609 = vmul.f32 %v4191, %v4608
        %v4610 = vmul.f32 %v4192, %v4608
        %v4611 = vmul.f32 %v4193, %v4608
        %v4612 = vmul.f32 %v4194, %v4608
        %v4613 = vmul.f32 %v4195, %v4608
        %v4614 = vmul.f32 %v4196, %v4608
        %4621 = vrot.lane.b32.xlu0 %v4609, 122
        %v4622 = vpop.permute.xlu0 %4621
        %4623 = vrot.lane.b32.xlu0 %v4610, 122
        %v4624 = vpop.permute.xlu0 %4623
        %4625 = vrot.lane.b32.xlu0 %v4611, 122
        %v4626 = vpop.permute.xlu0 %4625
        %4627 = vrot.lane.b32.xlu0 %v4612, 122
        %v4628 = vpop.permute.xlu0 %4627
        %4629 = vrot.lane.b32.xlu0 %v4613, 122
        %v4630 = vpop.permute.xlu0 %4629
        %4631 = vrot.lane.b32.xlu0 %v4614, 122
        %v4632 = vpop.permute.xlu0 %4631
        %v4633 = vsel %vm755, %v4622, %v4624
        %v4634 = vsel %vm755, %v4624, %v4626
        %v4635 = vsel %vm755, %v4626, %v4628
        %v4636 = vsel %vm755, %v4628, %v4630
        %v4637 = vsel %vm755, %v4630, %v4632
        %v4643 = vadd.f32 %v4561, %v4633
        %v4644 = vadd.f32 %v4562, %v4634
        %v4645 = vadd.f32 %v4563, %v4635
        %v4646 = vadd.f32 %v4564, %v4636
        %v4647 = vadd.f32 %v4565, %v4637
        %s4648 = sld [smem:[#allocation3 + $0x686]]
        %v4649 = vstv %s4648
        %v4650 = vmul.f32 %v4191, %v4649
        %v4651 = vmul.f32 %v4192, %v4649
        %v4652 = vmul.f32 %v4193, %v4649
        %v4653 = vmul.f32 %v4194, %v4649
        %v4654 = vmul.f32 %v4195, %v4649
        %v4655 = vmul.f32 %v4196, %v4649
        %4662 = vrot.lane.b32.xlu0 %v4650, 122
        %v4663 = vpop.permute.xlu0 %4662
        %4664 = vrot.lane.b32.xlu0 %v4651, 122
        %v4665 = vpop.permute.xlu0 %4664
        %4666 = vrot.lane.b32.xlu0 %v4652, 122
        %v4667 = vpop.permute.xlu0 %4666
        %4668 = vrot.lane.b32.xlu0 %v4653, 122
        %v4669 = vpop.permute.xlu0 %4668
        %4670 = vrot.lane.b32.xlu0 %v4654, 122
        %v4671 = vpop.permute.xlu0 %4670
        %4672 = vrot.lane.b32.xlu0 %v4655, 122
        %v4673 = vpop.permute.xlu0 %4672
        %v4674 = vsel %vm755, %v4663, %v4665
        %v4675 = vsel %vm755, %v4665, %v4667
        %v4676 = vsel %vm755, %v4667, %v4669
        %v4677 = vsel %vm755, %v4669, %v4671
        %v4678 = vsel %vm755, %v4671, %v4673
        %v4684 = vadd.f32 %v4602, %v4674
        %v4685 = vadd.f32 %v4603, %v4675
        %v4686 = vadd.f32 %v4604, %v4676
        %v4687 = vadd.f32 %v4605, %v4677
        %v4688 = vadd.f32 %v4606, %v4678
        %s4689 = sld [smem:[#allocation3 + $0x287]]
        %v4690 = vstv %s4689
        %v4691 = vmul.f32 %v4191, %v4690
        %v4692 = vmul.f32 %v4192, %v4690
        %v4693 = vmul.f32 %v4193, %v4690
        %v4694 = vmul.f32 %v4194, %v4690
        %v4695 = vmul.f32 %v4195, %v4690
        %v4696 = vmul.f32 %v4196, %v4690
        %4703 = vrot.lane.b32.xlu0 %v4691, 121
        %v4704 = vpop.permute.xlu0 %4703
        %4705 = vrot.lane.b32.xlu0 %v4692, 121
        %v4706 = vpop.permute.xlu0 %4705
        %4707 = vrot.lane.b32.xlu0 %v4693, 121
        %v4708 = vpop.permute.xlu0 %4707
        %4709 = vrot.lane.b32.xlu0 %v4694, 121
        %v4710 = vpop.permute.xlu0 %4709
        %4711 = vrot.lane.b32.xlu0 %v4695, 121
        %v4712 = vpop.permute.xlu0 %4711
        %4713 = vrot.lane.b32.xlu0 %v4696, 121
        %v4714 = vpop.permute.xlu0 %4713
        %v4715 = vsel %vm838, %v4704, %v4706
        %v4716 = vsel %vm838, %v4706, %v4708
        %v4717 = vsel %vm838, %v4708, %v4710
        %v4718 = vsel %vm838, %v4710, %v4712
        %v4719 = vsel %vm838, %v4712, %v4714
        %v4725 = vadd.f32 %v4643, %v4715
        %v4726 = vadd.f32 %v4644, %v4716
        %v4727 = vadd.f32 %v4645, %v4717
        %v4728 = vadd.f32 %v4646, %v4718
        %v4729 = vadd.f32 %v4647, %v4719
        %s4730 = sld [smem:[#allocation3 + $0x687]]
        %v4731 = vstv %s4730
        %v4732 = vmul.f32 %v4191, %v4731
        %v4733 = vmul.f32 %v4192, %v4731
        %v4734 = vmul.f32 %v4193, %v4731
        %v4735 = vmul.f32 %v4194, %v4731
        %v4736 = vmul.f32 %v4195, %v4731
        %v4737 = vmul.f32 %v4196, %v4731
        %4744 = vrot.lane.b32.xlu0 %v4732, 121
        %v4745 = vpop.permute.xlu0 %4744
        %4746 = vrot.lane.b32.xlu0 %v4733, 121
        %v4747 = vpop.permute.xlu0 %4746
        %4748 = vrot.lane.b32.xlu0 %v4734, 121
        %v4749 = vpop.permute.xlu0 %4748
        %4750 = vrot.lane.b32.xlu0 %v4735, 121
        %v4751 = vpop.permute.xlu0 %4750
        %4752 = vrot.lane.b32.xlu0 %v4736, 121
        %v4753 = vpop.permute.xlu0 %4752
        %4754 = vrot.lane.b32.xlu0 %v4737, 121
        %v4755 = vpop.permute.xlu0 %4754
        %v4756 = vsel %vm838, %v4745, %v4747
        %v4757 = vsel %vm838, %v4747, %v4749
        %v4758 = vsel %vm838, %v4749, %v4751
        %v4759 = vsel %vm838, %v4751, %v4753
        %v4760 = vsel %vm838, %v4753, %v4755
        %v4766 = vadd.f32 %v4684, %v4756
        %v4767 = vadd.f32 %v4685, %v4757
        %v4768 = vadd.f32 %v4686, %v4758
        %v4769 = vadd.f32 %v4687, %v4759
        %v4770 = vadd.f32 %v4688, %v4760
        %s4771 = sld [smem:[#allocation3 + $0x288]]
        %v4772 = vstv %s4771
        %v4773 = vmul.f32 %v4191, %v4772
        %v4774 = vmul.f32 %v4192, %v4772
        %v4775 = vmul.f32 %v4193, %v4772
        %v4776 = vmul.f32 %v4194, %v4772
        %v4777 = vmul.f32 %v4195, %v4772
        %v4778 = vmul.f32 %v4196, %v4772
        %4785 = vrot.lane.b32.xlu0 %v4773, 120
        %v4786 = vpop.permute.xlu0 %4785
        %4787 = vrot.lane.b32.xlu0 %v4774, 120
        %v4788 = vpop.permute.xlu0 %4787
        %4789 = vrot.lane.b32.xlu0 %v4775, 120
        %v4790 = vpop.permute.xlu0 %4789
        %4791 = vrot.lane.b32.xlu0 %v4776, 120
        %v4792 = vpop.permute.xlu0 %4791
        %4793 = vrot.lane.b32.xlu0 %v4777, 120
        %v4794 = vpop.permute.xlu0 %4793
        %4795 = vrot.lane.b32.xlu0 %v4778, 120
        %v4796 = vpop.permute.xlu0 %4795
        %v4797 = vsel %vm921, %v4786, %v4788
        %v4798 = vsel %vm921, %v4788, %v4790
        %v4799 = vsel %vm921, %v4790, %v4792
        %v4800 = vsel %vm921, %v4792, %v4794
        %v4801 = vsel %vm921, %v4794, %v4796
        %v4807 = vadd.f32 %v4725, %v4797
        %v4808 = vadd.f32 %v4726, %v4798
        %v4809 = vadd.f32 %v4727, %v4799
        %v4810 = vadd.f32 %v4728, %v4800
        %v4811 = vadd.f32 %v4729, %v4801
        %s4812 = sld [smem:[#allocation3 + $0x688]]
        %v4813 = vstv %s4812
        %v4814 = vmul.f32 %v4191, %v4813
        %v4815 = vmul.f32 %v4192, %v4813
        %v4816 = vmul.f32 %v4193, %v4813
        %v4817 = vmul.f32 %v4194, %v4813
        %v4818 = vmul.f32 %v4195, %v4813
        %v4819 = vmul.f32 %v4196, %v4813
        %4826 = vrot.lane.b32.xlu0 %v4814, 120
        %v4827 = vpop.permute.xlu0 %4826
        %4828 = vrot.lane.b32.xlu0 %v4815, 120
        %v4829 = vpop.permute.xlu0 %4828
        %4830 = vrot.lane.b32.xlu0 %v4816, 120
        %v4831 = vpop.permute.xlu0 %4830
        %4832 = vrot.lane.b32.xlu0 %v4817, 120
        %v4833 = vpop.permute.xlu0 %4832
        %4834 = vrot.lane.b32.xlu0 %v4818, 120
        %v4835 = vpop.permute.xlu0 %4834
        %4836 = vrot.lane.b32.xlu0 %v4819, 120
        %v4837 = vpop.permute.xlu0 %4836
        %v4838 = vsel %vm921, %v4827, %v4829
        %v4839 = vsel %vm921, %v4829, %v4831
        %v4840 = vsel %vm921, %v4831, %v4833
        %v4841 = vsel %vm921, %v4833, %v4835
        %v4842 = vsel %vm921, %v4835, %v4837
        %v4848 = vadd.f32 %v4766, %v4838
        %v4849 = vadd.f32 %v4767, %v4839
        %v4850 = vadd.f32 %v4768, %v4840
        %v4851 = vadd.f32 %v4769, %v4841
        %v4852 = vadd.f32 %v4770, %v4842
        %s4853 = sld [smem:[#allocation3 + $0x289]]
        %v4854 = vstv %s4853
        %v4855 = vmul.f32 %v4191, %v4854
        %v4856 = vmul.f32 %v4192, %v4854
        %v4857 = vmul.f32 %v4193, %v4854
        %v4858 = vmul.f32 %v4194, %v4854
        %v4859 = vmul.f32 %v4195, %v4854
        %v4860 = vmul.f32 %v4196, %v4854
        %4867 = vrot.lane.b32.xlu0 %v4855, 119
        %v4868 = vpop.permute.xlu0 %4867
        %4869 = vrot.lane.b32.xlu0 %v4856, 119
        %v4870 = vpop.permute.xlu0 %4869
        %4871 = vrot.lane.b32.xlu0 %v4857, 119
        %v4872 = vpop.permute.xlu0 %4871
        %4873 = vrot.lane.b32.xlu0 %v4858, 119
        %v4874 = vpop.permute.xlu0 %4873
        %4875 = vrot.lane.b32.xlu0 %v4859, 119
        %v4876 = vpop.permute.xlu0 %4875
        %4877 = vrot.lane.b32.xlu0 %v4860, 119
        %v4878 = vpop.permute.xlu0 %4877
        %v4879 = vsel %vm1004, %v4868, %v4870
        %v4880 = vsel %vm1004, %v4870, %v4872
        %v4881 = vsel %vm1004, %v4872, %v4874
        %v4882 = vsel %vm1004, %v4874, %v4876
        %v4883 = vsel %vm1004, %v4876, %v4878
        %v4889 = vadd.f32 %v4807, %v4879
        %v4890 = vadd.f32 %v4808, %v4880
        %v4891 = vadd.f32 %v4809, %v4881
        %v4892 = vadd.f32 %v4810, %v4882
        %v4893 = vadd.f32 %v4811, %v4883
        %s4894 = sld [smem:[#allocation3 + $0x689]]
        %v4895 = vstv %s4894
        %v4896 = vmul.f32 %v4191, %v4895
        %v4897 = vmul.f32 %v4192, %v4895
        %v4898 = vmul.f32 %v4193, %v4895
        %v4899 = vmul.f32 %v4194, %v4895
        %v4900 = vmul.f32 %v4195, %v4895
        %v4901 = vmul.f32 %v4196, %v4895
        %4908 = vrot.lane.b32.xlu0 %v4896, 119
        %v4909 = vpop.permute.xlu0 %4908
        %4910 = vrot.lane.b32.xlu0 %v4897, 119
        %v4911 = vpop.permute.xlu0 %4910
        %4912 = vrot.lane.b32.xlu0 %v4898, 119
        %v4913 = vpop.permute.xlu0 %4912
        %4914 = vrot.lane.b32.xlu0 %v4899, 119
        %v4915 = vpop.permute.xlu0 %4914
        %4916 = vrot.lane.b32.xlu0 %v4900, 119
        %v4917 = vpop.permute.xlu0 %4916
        %4918 = vrot.lane.b32.xlu0 %v4901, 119
        %v4919 = vpop.permute.xlu0 %4918
        %v4920 = vsel %vm1004, %v4909, %v4911
        %v4921 = vsel %vm1004, %v4911, %v4913
        %v4922 = vsel %vm1004, %v4913, %v4915
        %v4923 = vsel %vm1004, %v4915, %v4917
        %v4924 = vsel %vm1004, %v4917, %v4919
        %v4930 = vadd.f32 %v4848, %v4920
        %v4931 = vadd.f32 %v4849, %v4921
        %v4932 = vadd.f32 %v4850, %v4922
        %v4933 = vadd.f32 %v4851, %v4923
        %v4934 = vadd.f32 %v4852, %v4924
        %s4935 = scalar_lea.vmem %s245, 200 [#allocation5]
        %4936 = vst [vmem:[%s4935] sm:$0xff] %v4889
        %4937 = vst [vmem:[%s4935 + $0x8] sm:$0xff] %v4890
        %4938 = vst [vmem:[%s4935 + $0x10] sm:$0xff] %v4891
        %4939 = vst [vmem:[%s4935 + $0x18] sm:$0xff] %v4892
        %4940 = vst [vmem:[%s4935 + $0x20] sm:$0xff] %v4893
        %s4941 = scalar_lea.vmem %s245, 520 [#allocation5]
        %4942 = vst [vmem:[%s4941] sm:$0xff] %v4930
        %4943 = vst [vmem:[%s4941 + $0x8] sm:$0xff] %v4931
        %4944 = vst [vmem:[%s4941 + $0x10] sm:$0xff] %v4932
        %4945 = vst [vmem:[%s4941 + $0x18] sm:$0xff] %v4933
        %4946 = vst [vmem:[%s4941 + $0x20] sm:$0xff] %v4934
        %v4947 = vld [vmem:[#allocation2] sm:$0xff]
        %v4948 = vld [vmem:[#allocation2 + $0x8] sm:$0xff]
        %v4949 = vld [vmem:[#allocation2 + $0x10] sm:$0xff]
        %v4950 = vld [vmem:[#allocation2 + $0x18] sm:$0xff]
        %v4951 = vld [vmem:[#allocation2 + $0x20] sm:$0xff]
        %s4952 = sld [smem:[#allocation3 + $0x300]]
        %v4953 = vstv %s4952
        %v4954 = vmul.f32 %v4947, %v4953
        %v4955 = vmul.f32 %v4948, %v4953
        %v4956 = vmul.f32 %v4949, %v4953
        %v4957 = vmul.f32 %v4950, %v4953
        %v4958 = vmul.f32 %v4951, %v4953
        %s4959 = sld [smem:[#allocation3 + $0x700]]
        %v4960 = vstv %s4959
        %v4961 = vmul.f32 %v4947, %v4960
        %v4962 = vmul.f32 %v4948, %v4960
        %v4963 = vmul.f32 %v4949, %v4960
        %v4964 = vmul.f32 %v4950, %v4960
        %v4965 = vmul.f32 %v4951, %v4960
        %v4966 = vld [vmem:[#allocation2] sm:$0xff]
        %v4967 = vld [vmem:[#allocation2 + $0x8] sm:$0xff]
        %v4968 = vld [vmem:[#allocation2 + $0x10] sm:$0xff]
        %v4969 = vld [vmem:[#allocation2 + $0x18] sm:$0xff]
        %v4970 = vld [vmem:[#allocation2 + $0x20] sm:$0xff]
        %v4971 = vld [vmem:[#allocation2 + $0x28] sm:$0xff]
        %s4972 = sld [smem:[#allocation3 + $0x301]]
        %v4973 = vstv %s4972
        %v4974 = vmul.f32 %v4966, %v4973
        %v4975 = vmul.f32 %v4967, %v4973
        %v4976 = vmul.f32 %v4968, %v4973
        %v4977 = vmul.f32 %v4969, %v4973
        %v4978 = vmul.f32 %v4970, %v4973
        %v4979 = vmul.f32 %v4971, %v4973
        %4986 = vrot.lane.b32.xlu0 %v4974, 127
        %v4987 = vpop.permute.xlu0 %4986
        %4988 = vrot.lane.b32.xlu0 %v4975, 127
        %v4989 = vpop.permute.xlu0 %4988
        %4990 = vrot.lane.b32.xlu0 %v4976, 127
        %v4991 = vpop.permute.xlu0 %4990
        %4992 = vrot.lane.b32.xlu0 %v4977, 127
        %v4993 = vpop.permute.xlu0 %4992
        %4994 = vrot.lane.b32.xlu0 %v4978, 127
        %v4995 = vpop.permute.xlu0 %4994
        %4996 = vrot.lane.b32.xlu0 %v4979, 127
        %v4997 = vpop.permute.xlu0 %4996
        %v4998 = vsel %vm340, %v4987, %v4989
        %v4999 = vsel %vm340, %v4989, %v4991
        %v5000 = vsel %vm340, %v4991, %v4993
        %v5001 = vsel %vm340, %v4993, %v4995
        %v5002 = vsel %vm340, %v4995, %v4997
        %v5008 = vadd.f32 %v4954, %v4998
        %v5009 = vadd.f32 %v4955, %v4999
        %v5010 = vadd.f32 %v4956, %v5000
        %v5011 = vadd.f32 %v4957, %v5001
        %v5012 = vadd.f32 %v4958, %v5002
        %s5013 = sld [smem:[#allocation3 + $0x701]]
        %v5014 = vstv %s5013
        %v5015 = vmul.f32 %v4966, %v5014
        %v5016 = vmul.f32 %v4967, %v5014
        %v5017 = vmul.f32 %v4968, %v5014
        %v5018 = vmul.f32 %v4969, %v5014
        %v5019 = vmul.f32 %v4970, %v5014
        %v5020 = vmul.f32 %v4971, %v5014
        %5027 = vrot.lane.b32.xlu0 %v5015, 127
        %v5028 = vpop.permute.xlu0 %5027
        %5029 = vrot.lane.b32.xlu0 %v5016, 127
        %v5030 = vpop.permute.xlu0 %5029
        %5031 = vrot.lane.b32.xlu0 %v5017, 127
        %v5032 = vpop.permute.xlu0 %5031
        %5033 = vrot.lane.b32.xlu0 %v5018, 127
        %v5034 = vpop.permute.xlu0 %5033
        %5035 = vrot.lane.b32.xlu0 %v5019, 127
        %v5036 = vpop.permute.xlu0 %5035
        %5037 = vrot.lane.b32.xlu0 %v5020, 127
        %v5038 = vpop.permute.xlu0 %5037
        %v5039 = vsel %vm340, %v5028, %v5030
        %v5040 = vsel %vm340, %v5030, %v5032
        %v5041 = vsel %vm340, %v5032, %v5034
        %v5042 = vsel %vm340, %v5034, %v5036
        %v5043 = vsel %vm340, %v5036, %v5038
        %v5049 = vadd.f32 %v4961, %v5039
        %v5050 = vadd.f32 %v4962, %v5040
        %v5051 = vadd.f32 %v4963, %v5041
        %v5052 = vadd.f32 %v4964, %v5042
        %v5053 = vadd.f32 %v4965, %v5043
        %s5054 = sld [smem:[#allocation3 + $0x302]]
        %v5055 = vstv %s5054
        %v5056 = vmul.f32 %v4966, %v5055
        %v5057 = vmul.f32 %v4967, %v5055
        %v5058 = vmul.f32 %v4968, %v5055
        %v5059 = vmul.f32 %v4969, %v5055
        %v5060 = vmul.f32 %v4970, %v5055
        %v5061 = vmul.f32 %v4971, %v5055
        %5068 = vrot.lane.b32.xlu0 %v5056, 126
        %v5069 = vpop.permute.xlu0 %5068
        %5070 = vrot.lane.b32.xlu0 %v5057, 126
        %v5071 = vpop.permute.xlu0 %5070
        %5072 = vrot.lane.b32.xlu0 %v5058, 126
        %v5073 = vpop.permute.xlu0 %5072
        %5074 = vrot.lane.b32.xlu0 %v5059, 126
        %v5075 = vpop.permute.xlu0 %5074
        %5076 = vrot.lane.b32.xlu0 %v5060, 126
        %v5077 = vpop.permute.xlu0 %5076
        %5078 = vrot.lane.b32.xlu0 %v5061, 126
        %v5079 = vpop.permute.xlu0 %5078
        %v5080 = vsel %vm423, %v5069, %v5071
        %v5081 = vsel %vm423, %v5071, %v5073
        %v5082 = vsel %vm423, %v5073, %v5075
        %v5083 = vsel %vm423, %v5075, %v5077
        %v5084 = vsel %vm423, %v5077, %v5079
        %v5090 = vadd.f32 %v5008, %v5080
        %v5091 = vadd.f32 %v5009, %v5081
        %v5092 = vadd.f32 %v5010, %v5082
        %v5093 = vadd.f32 %v5011, %v5083
        %v5094 = vadd.f32 %v5012, %v5084
        %s5095 = sld [smem:[#allocation3 + $0x702]]
        %v5096 = vstv %s5095
        %v5097 = vmul.f32 %v4966, %v5096
        %v5098 = vmul.f32 %v4967, %v5096
        %v5099 = vmul.f32 %v4968, %v5096
        %v5100 = vmul.f32 %v4969, %v5096
        %v5101 = vmul.f32 %v4970, %v5096
        %v5102 = vmul.f32 %v4971, %v5096
        %5109 = vrot.lane.b32.xlu0 %v5097, 126
        %v5110 = vpop.permute.xlu0 %5109
        %5111 = vrot.lane.b32.xlu0 %v5098, 126
        %v5112 = vpop.permute.xlu0 %5111
        %5113 = vrot.lane.b32.xlu0 %v5099, 126
        %v5114 = vpop.permute.xlu0 %5113
        %5115 = vrot.lane.b32.xlu0 %v5100, 126
        %v5116 = vpop.permute.xlu0 %5115
        %5117 = vrot.lane.b32.xlu0 %v5101, 126
        %v5118 = vpop.permute.xlu0 %5117
        %5119 = vrot.lane.b32.xlu0 %v5102, 126
        %v5120 = vpop.permute.xlu0 %5119
        %v5121 = vsel %vm423, %v5110, %v5112
        %v5122 = vsel %vm423, %v5112, %v5114
        %v5123 = vsel %vm423, %v5114, %v5116
        %v5124 = vsel %vm423, %v5116, %v5118
        %v5125 = vsel %vm423, %v5118, %v5120
        %v5131 = vadd.f32 %v5049, %v5121
        %v5132 = vadd.f32 %v5050, %v5122
        %v5133 = vadd.f32 %v5051, %v5123
        %v5134 = vadd.f32 %v5052, %v5124
        %v5135 = vadd.f32 %v5053, %v5125
        %s5136 = sld [smem:[#allocation3 + $0x303]]
        %v5137 = vstv %s5136
        %v5138 = vmul.f32 %v4966, %v5137
        %v5139 = vmul.f32 %v4967, %v5137
        %v5140 = vmul.f32 %v4968, %v5137
        %v5141 = vmul.f32 %v4969, %v5137
        %v5142 = vmul.f32 %v4970, %v5137
        %v5143 = vmul.f32 %v4971, %v5137
        %5150 = vrot.lane.b32.xlu0 %v5138, 125
        %v5151 = vpop.permute.xlu0 %5150
        %5152 = vrot.lane.b32.xlu0 %v5139, 125
        %v5153 = vpop.permute.xlu0 %5152
        %5154 = vrot.lane.b32.xlu0 %v5140, 125
        %v5155 = vpop.permute.xlu0 %5154
        %5156 = vrot.lane.b32.xlu0 %v5141, 125
        %v5157 = vpop.permute.xlu0 %5156
        %5158 = vrot.lane.b32.xlu0 %v5142, 125
        %v5159 = vpop.permute.xlu0 %5158
        %5160 = vrot.lane.b32.xlu0 %v5143, 125
        %v5161 = vpop.permute.xlu0 %5160
        %v5162 = vsel %vm506, %v5151, %v5153
        %v5163 = vsel %vm506, %v5153, %v5155
        %v5164 = vsel %vm506, %v5155, %v5157
        %v5165 = vsel %vm506, %v5157, %v5159
        %v5166 = vsel %vm506, %v5159, %v5161
        %v5172 = vadd.f32 %v5090, %v5162
        %v5173 = vadd.f32 %v5091, %v5163
        %v5174 = vadd.f32 %v5092, %v5164
        %v5175 = vadd.f32 %v5093, %v5165
        %v5176 = vadd.f32 %v5094, %v5166
        %s5177 = sld [smem:[#allocation3 + $0x703]]
        %v5178 = vstv %s5177
        %v5179 = vmul.f32 %v4966, %v5178
        %v5180 = vmul.f32 %v4967, %v5178
        %v5181 = vmul.f32 %v4968, %v5178
        %v5182 = vmul.f32 %v4969, %v5178
        %v5183 = vmul.f32 %v4970, %v5178
        %v5184 = vmul.f32 %v4971, %v5178
        %5191 = vrot.lane.b32.xlu0 %v5179, 125
        %v5192 = vpop.permute.xlu0 %5191
        %5193 = vrot.lane.b32.xlu0 %v5180, 125
        %v5194 = vpop.permute.xlu0 %5193
        %5195 = vrot.lane.b32.xlu0 %v5181, 125
        %v5196 = vpop.permute.xlu0 %5195
        %5197 = vrot.lane.b32.xlu0 %v5182, 125
        %v5198 = vpop.permute.xlu0 %5197
        %5199 = vrot.lane.b32.xlu0 %v5183, 125
        %v5200 = vpop.permute.xlu0 %5199
        %5201 = vrot.lane.b32.xlu0 %v5184, 125
        %v5202 = vpop.permute.xlu0 %5201
        %v5203 = vsel %vm506, %v5192, %v5194
        %v5204 = vsel %vm506, %v5194, %v5196
        %v5205 = vsel %vm506, %v5196, %v5198
        %v5206 = vsel %vm506, %v5198, %v5200
        %v5207 = vsel %vm506, %v5200, %v5202
        %v5213 = vadd.f32 %v5131, %v5203
        %v5214 = vadd.f32 %v5132, %v5204
        %v5215 = vadd.f32 %v5133, %v5205
        %v5216 = vadd.f32 %v5134, %v5206
        %v5217 = vadd.f32 %v5135, %v5207
        %s5218 = sld [smem:[#allocation3 + $0x304]]
        %v5219 = vstv %s5218
        %v5220 = vmul.f32 %v4966, %v5219
        %v5221 = vmul.f32 %v4967, %v5219
        %v5222 = vmul.f32 %v4968, %v5219
        %v5223 = vmul.f32 %v4969, %v5219
        %v5224 = vmul.f32 %v4970, %v5219
        %v5225 = vmul.f32 %v4971, %v5219
        %5232 = vrot.lane.b32.xlu0 %v5220, 124
        %v5233 = vpop.permute.xlu0 %5232
        %5234 = vrot.lane.b32.xlu0 %v5221, 124
        %v5235 = vpop.permute.xlu0 %5234
        %5236 = vrot.lane.b32.xlu0 %v5222, 124
        %v5237 = vpop.permute.xlu0 %5236
        %5238 = vrot.lane.b32.xlu0 %v5223, 124
        %v5239 = vpop.permute.xlu0 %5238
        %5240 = vrot.lane.b32.xlu0 %v5224, 124
        %v5241 = vpop.permute.xlu0 %5240
        %5242 = vrot.lane.b32.xlu0 %v5225, 124
        %v5243 = vpop.permute.xlu0 %5242
        %v5244 = vsel %vm589, %v5233, %v5235
        %v5245 = vsel %vm589, %v5235, %v5237
        %v5246 = vsel %vm589, %v5237, %v5239
        %v5247 = vsel %vm589, %v5239, %v5241
        %v5248 = vsel %vm589, %v5241, %v5243
        %v5254 = vadd.f32 %v5172, %v5244
        %v5255 = vadd.f32 %v5173, %v5245
        %v5256 = vadd.f32 %v5174, %v5246
        %v5257 = vadd.f32 %v5175, %v5247
        %v5258 = vadd.f32 %v5176, %v5248
        %s5259 = sld [smem:[#allocation3 + $0x704]]
        %v5260 = vstv %s5259
        %v5261 = vmul.f32 %v4966, %v5260
        %v5262 = vmul.f32 %v4967, %v5260
        %v5263 = vmul.f32 %v4968, %v5260
        %v5264 = vmul.f32 %v4969, %v5260
        %v5265 = vmul.f32 %v4970, %v5260
        %v5266 = vmul.f32 %v4971, %v5260
        %5273 = vrot.lane.b32.xlu0 %v5261, 124
        %v5274 = vpop.permute.xlu0 %5273
        %5275 = vrot.lane.b32.xlu0 %v5262, 124
        %v5276 = vpop.permute.xlu0 %5275
        %5277 = vrot.lane.b32.xlu0 %v5263, 124
        %v5278 = vpop.permute.xlu0 %5277
        %5279 = vrot.lane.b32.xlu0 %v5264, 124
        %v5280 = vpop.permute.xlu0 %5279
        %5281 = vrot.lane.b32.xlu0 %v5265, 124
        %v5282 = vpop.permute.xlu0 %5281
        %5283 = vrot.lane.b32.xlu0 %v5266, 124
        %v5284 = vpop.permute.xlu0 %5283
        %v5285 = vsel %vm589, %v5274, %v5276
        %v5286 = vsel %vm589, %v5276, %v5278
        %v5287 = vsel %vm589, %v5278, %v5280
        %v5288 = vsel %vm589, %v5280, %v5282
        %v5289 = vsel %vm589, %v5282, %v5284
        %v5295 = vadd.f32 %v5213, %v5285
        %v5296 = vadd.f32 %v5214, %v5286
        %v5297 = vadd.f32 %v5215, %v5287
        %v5298 = vadd.f32 %v5216, %v5288
        %v5299 = vadd.f32 %v5217, %v5289
        %s5300 = sld [smem:[#allocation3 + $0x305]]
        %v5301 = vstv %s5300
        %v5302 = vmul.f32 %v4966, %v5301
        %v5303 = vmul.f32 %v4967, %v5301
        %v5304 = vmul.f32 %v4968, %v5301
        %v5305 = vmul.f32 %v4969, %v5301
        %v5306 = vmul.f32 %v4970, %v5301
        %v5307 = vmul.f32 %v4971, %v5301
        %5314 = vrot.lane.b32.xlu0 %v5302, 123
        %v5315 = vpop.permute.xlu0 %5314
        %5316 = vrot.lane.b32.xlu0 %v5303, 123
        %v5317 = vpop.permute.xlu0 %5316
        %5318 = vrot.lane.b32.xlu0 %v5304, 123
        %v5319 = vpop.permute.xlu0 %5318
        %5320 = vrot.lane.b32.xlu0 %v5305, 123
        %v5321 = vpop.permute.xlu0 %5320
        %5322 = vrot.lane.b32.xlu0 %v5306, 123
        %v5323 = vpop.permute.xlu0 %5322
        %5324 = vrot.lane.b32.xlu0 %v5307, 123
        %v5325 = vpop.permute.xlu0 %5324
        %v5326 = vsel %vm672, %v5315, %v5317
        %v5327 = vsel %vm672, %v5317, %v5319
        %v5328 = vsel %vm672, %v5319, %v5321
        %v5329 = vsel %vm672, %v5321, %v5323
        %v5330 = vsel %vm672, %v5323, %v5325
        %v5336 = vadd.f32 %v5254, %v5326
        %v5337 = vadd.f32 %v5255, %v5327
        %v5338 = vadd.f32 %v5256, %v5328
        %v5339 = vadd.f32 %v5257, %v5329
        %v5340 = vadd.f32 %v5258, %v5330
        %s5341 = sld [smem:[#allocation3 + $0x705]]
        %v5342 = vstv %s5341
        %v5343 = vmul.f32 %v4966, %v5342
        %v5344 = vmul.f32 %v4967, %v5342
        %v5345 = vmul.f32 %v4968, %v5342
        %v5346 = vmul.f32 %v4969, %v5342
        %v5347 = vmul.f32 %v4970, %v5342
        %v5348 = vmul.f32 %v4971, %v5342
        %5355 = vrot.lane.b32.xlu0 %v5343, 123
        %v5356 = vpop.permute.xlu0 %5355
        %5357 = vrot.lane.b32.xlu0 %v5344, 123
        %v5358 = vpop.permute.xlu0 %5357
        %5359 = vrot.lane.b32.xlu0 %v5345, 123
        %v5360 = vpop.permute.xlu0 %5359
        %5361 = vrot.lane.b32.xlu0 %v5346, 123
        %v5362 = vpop.permute.xlu0 %5361
        %5363 = vrot.lane.b32.xlu0 %v5347, 123
        %v5364 = vpop.permute.xlu0 %5363
        %5365 = vrot.lane.b32.xlu0 %v5348, 123
        %v5366 = vpop.permute.xlu0 %5365
        %v5367 = vsel %vm672, %v5356, %v5358
        %v5368 = vsel %vm672, %v5358, %v5360
        %v5369 = vsel %vm672, %v5360, %v5362
        %v5370 = vsel %vm672, %v5362, %v5364
        %v5371 = vsel %vm672, %v5364, %v5366
        %v5377 = vadd.f32 %v5295, %v5367
        %v5378 = vadd.f32 %v5296, %v5368
        %v5379 = vadd.f32 %v5297, %v5369
        %v5380 = vadd.f32 %v5298, %v5370
        %v5381 = vadd.f32 %v5299, %v5371
        %s5382 = sld [smem:[#allocation3 + $0x306]]
        %v5383 = vstv %s5382
        %v5384 = vmul.f32 %v4966, %v5383
        %v5385 = vmul.f32 %v4967, %v5383
        %v5386 = vmul.f32 %v4968, %v5383
        %v5387 = vmul.f32 %v4969, %v5383
        %v5388 = vmul.f32 %v4970, %v5383
        %v5389 = vmul.f32 %v4971, %v5383
        %5396 = vrot.lane.b32.xlu0 %v5384, 122
        %v5397 = vpop.permute.xlu0 %5396
        %5398 = vrot.lane.b32.xlu0 %v5385, 122
        %v5399 = vpop.permute.xlu0 %5398
        %5400 = vrot.lane.b32.xlu0 %v5386, 122
        %v5401 = vpop.permute.xlu0 %5400
        %5402 = vrot.lane.b32.xlu0 %v5387, 122
        %v5403 = vpop.permute.xlu0 %5402
        %5404 = vrot.lane.b32.xlu0 %v5388, 122
        %v5405 = vpop.permute.xlu0 %5404
        %5406 = vrot.lane.b32.xlu0 %v5389, 122
        %v5407 = vpop.permute.xlu0 %5406
        %v5408 = vsel %vm755, %v5397, %v5399
        %v5409 = vsel %vm755, %v5399, %v5401
        %v5410 = vsel %vm755, %v5401, %v5403
        %v5411 = vsel %vm755, %v5403, %v5405
        %v5412 = vsel %vm755, %v5405, %v5407
        %v5418 = vadd.f32 %v5336, %v5408
        %v5419 = vadd.f32 %v5337, %v5409
        %v5420 = vadd.f32 %v5338, %v5410
        %v5421 = vadd.f32 %v5339, %v5411
        %v5422 = vadd.f32 %v5340, %v5412
        %s5423 = sld [smem:[#allocation3 + $0x706]]
        %v5424 = vstv %s5423
        %v5425 = vmul.f32 %v4966, %v5424
        %v5426 = vmul.f32 %v4967, %v5424
        %v5427 = vmul.f32 %v4968, %v5424
        %v5428 = vmul.f32 %v4969, %v5424
        %v5429 = vmul.f32 %v4970, %v5424
        %v5430 = vmul.f32 %v4971, %v5424
        %5437 = vrot.lane.b32.xlu0 %v5425, 122
        %v5438 = vpop.permute.xlu0 %5437
        %5439 = vrot.lane.b32.xlu0 %v5426, 122
        %v5440 = vpop.permute.xlu0 %5439
        %5441 = vrot.lane.b32.xlu0 %v5427, 122
        %v5442 = vpop.permute.xlu0 %5441
        %5443 = vrot.lane.b32.xlu0 %v5428, 122
        %v5444 = vpop.permute.xlu0 %5443
        %5445 = vrot.lane.b32.xlu0 %v5429, 122
        %v5446 = vpop.permute.xlu0 %5445
        %5447 = vrot.lane.b32.xlu0 %v5430, 122
        %v5448 = vpop.permute.xlu0 %5447
        %v5449 = vsel %vm755, %v5438, %v5440
        %v5450 = vsel %vm755, %v5440, %v5442
        %v5451 = vsel %vm755, %v5442, %v5444
        %v5452 = vsel %vm755, %v5444, %v5446
        %v5453 = vsel %vm755, %v5446, %v5448
        %v5459 = vadd.f32 %v5377, %v5449
        %v5460 = vadd.f32 %v5378, %v5450
        %v5461 = vadd.f32 %v5379, %v5451
        %v5462 = vadd.f32 %v5380, %v5452
        %v5463 = vadd.f32 %v5381, %v5453
        %s5464 = sld [smem:[#allocation3 + $0x307]]
        %v5465 = vstv %s5464
        %v5466 = vmul.f32 %v4966, %v5465
        %v5467 = vmul.f32 %v4967, %v5465
        %v5468 = vmul.f32 %v4968, %v5465
        %v5469 = vmul.f32 %v4969, %v5465
        %v5470 = vmul.f32 %v4970, %v5465
        %v5471 = vmul.f32 %v4971, %v5465
        %5478 = vrot.lane.b32.xlu0 %v5466, 121
        %v5479 = vpop.permute.xlu0 %5478
        %5480 = vrot.lane.b32.xlu0 %v5467, 121
        %v5481 = vpop.permute.xlu0 %5480
        %5482 = vrot.lane.b32.xlu0 %v5468, 121
        %v5483 = vpop.permute.xlu0 %5482
        %5484 = vrot.lane.b32.xlu0 %v5469, 121
        %v5485 = vpop.permute.xlu0 %5484
        %5486 = vrot.lane.b32.xlu0 %v5470, 121
        %v5487 = vpop.permute.xlu0 %5486
        %5488 = vrot.lane.b32.xlu0 %v5471, 121
        %v5489 = vpop.permute.xlu0 %5488
        %v5490 = vsel %vm838, %v5479, %v5481
        %v5491 = vsel %vm838, %v5481, %v5483
        %v5492 = vsel %vm838, %v5483, %v5485
        %v5493 = vsel %vm838, %v5485, %v5487
        %v5494 = vsel %vm838, %v5487, %v5489
        %v5500 = vadd.f32 %v5418, %v5490
        %v5501 = vadd.f32 %v5419, %v5491
        %v5502 = vadd.f32 %v5420, %v5492
        %v5503 = vadd.f32 %v5421, %v5493
        %v5504 = vadd.f32 %v5422, %v5494
        %s5505 = sld [smem:[#allocation3 + $0x707]]
        %v5506 = vstv %s5505
        %v5507 = vmul.f32 %v4966, %v5506
        %v5508 = vmul.f32 %v4967, %v5506
        %v5509 = vmul.f32 %v4968, %v5506
        %v5510 = vmul.f32 %v4969, %v5506
        %v5511 = vmul.f32 %v4970, %v5506
        %v5512 = vmul.f32 %v4971, %v5506
        %5519 = vrot.lane.b32.xlu0 %v5507, 121
        %v5520 = vpop.permute.xlu0 %5519
        %5521 = vrot.lane.b32.xlu0 %v5508, 121
        %v5522 = vpop.permute.xlu0 %5521
        %5523 = vrot.lane.b32.xlu0 %v5509, 121
        %v5524 = vpop.permute.xlu0 %5523
        %5525 = vrot.lane.b32.xlu0 %v5510, 121
        %v5526 = vpop.permute.xlu0 %5525
        %5527 = vrot.lane.b32.xlu0 %v5511, 121
        %v5528 = vpop.permute.xlu0 %5527
        %5529 = vrot.lane.b32.xlu0 %v5512, 121
        %v5530 = vpop.permute.xlu0 %5529
        %v5531 = vsel %vm838, %v5520, %v5522
        %v5532 = vsel %vm838, %v5522, %v5524
        %v5533 = vsel %vm838, %v5524, %v5526
        %v5534 = vsel %vm838, %v5526, %v5528
        %v5535 = vsel %vm838, %v5528, %v5530
        %v5541 = vadd.f32 %v5459, %v5531
        %v5542 = vadd.f32 %v5460, %v5532
        %v5543 = vadd.f32 %v5461, %v5533
        %v5544 = vadd.f32 %v5462, %v5534
        %v5545 = vadd.f32 %v5463, %v5535
        %s5546 = sld [smem:[#allocation3 + $0x308]]
        %v5547 = vstv %s5546
        %v5548 = vmul.f32 %v4966, %v5547
        %v5549 = vmul.f32 %v4967, %v5547
        %v5550 = vmul.f32 %v4968, %v5547
        %v5551 = vmul.f32 %v4969, %v5547
        %v5552 = vmul.f32 %v4970, %v5547
        %v5553 = vmul.f32 %v4971, %v5547
        %5560 = vrot.lane.b32.xlu0 %v5548, 120
        %v5561 = vpop.permute.xlu0 %5560
        %5562 = vrot.lane.b32.xlu0 %v5549, 120
        %v5563 = vpop.permute.xlu0 %5562
        %5564 = vrot.lane.b32.xlu0 %v5550, 120
        %v5565 = vpop.permute.xlu0 %5564
        %5566 = vrot.lane.b32.xlu0 %v5551, 120
        %v5567 = vpop.permute.xlu0 %5566
        %5568 = vrot.lane.b32.xlu0 %v5552, 120
        %v5569 = vpop.permute.xlu0 %5568
        %5570 = vrot.lane.b32.xlu0 %v5553, 120
        %v5571 = vpop.permute.xlu0 %5570
        %v5572 = vsel %vm921, %v5561, %v5563
        %v5573 = vsel %vm921, %v5563, %v5565
        %v5574 = vsel %vm921, %v5565, %v5567
        %v5575 = vsel %vm921, %v5567, %v5569
        %v5576 = vsel %vm921, %v5569, %v5571
        %v5582 = vadd.f32 %v5500, %v5572
        %v5583 = vadd.f32 %v5501, %v5573
        %v5584 = vadd.f32 %v5502, %v5574
        %v5585 = vadd.f32 %v5503, %v5575
        %v5586 = vadd.f32 %v5504, %v5576
        %s5587 = sld [smem:[#allocation3 + $0x708]]
        %v5588 = vstv %s5587
        %v5589 = vmul.f32 %v4966, %v5588
        %v5590 = vmul.f32 %v4967, %v5588
        %v5591 = vmul.f32 %v4968, %v5588
        %v5592 = vmul.f32 %v4969, %v5588
        %v5593 = vmul.f32 %v4970, %v5588
        %v5594 = vmul.f32 %v4971, %v5588
        %5601 = vrot.lane.b32.xlu0 %v5589, 120
        %v5602 = vpop.permute.xlu0 %5601
        %5603 = vrot.lane.b32.xlu0 %v5590, 120
        %v5604 = vpop.permute.xlu0 %5603
        %5605 = vrot.lane.b32.xlu0 %v5591, 120
        %v5606 = vpop.permute.xlu0 %5605
        %5607 = vrot.lane.b32.xlu0 %v5592, 120
        %v5608 = vpop.permute.xlu0 %5607
        %5609 = vrot.lane.b32.xlu0 %v5593, 120
        %v5610 = vpop.permute.xlu0 %5609
        %5611 = vrot.lane.b32.xlu0 %v5594, 120
        %v5612 = vpop.permute.xlu0 %5611
        %v5613 = vsel %vm921, %v5602, %v5604
        %v5614 = vsel %vm921, %v5604, %v5606
        %v5615 = vsel %vm921, %v5606, %v5608
        %v5616 = vsel %vm921, %v5608, %v5610
        %v5617 = vsel %vm921, %v5610, %v5612
        %v5623 = vadd.f32 %v5541, %v5613
        %v5624 = vadd.f32 %v5542, %v5614
        %v5625 = vadd.f32 %v5543, %v5615
        %v5626 = vadd.f32 %v5544, %v5616
        %v5627 = vadd.f32 %v5545, %v5617
        %s5628 = sld [smem:[#allocation3 + $0x309]]
        %v5629 = vstv %s5628
        %v5630 = vmul.f32 %v4966, %v5629
        %v5631 = vmul.f32 %v4967, %v5629
        %v5632 = vmul.f32 %v4968, %v5629
        %v5633 = vmul.f32 %v4969, %v5629
        %v5634 = vmul.f32 %v4970, %v5629
        %v5635 = vmul.f32 %v4971, %v5629
        %5642 = vrot.lane.b32.xlu0 %v5630, 119
        %v5643 = vpop.permute.xlu0 %5642
        %5644 = vrot.lane.b32.xlu0 %v5631, 119
        %v5645 = vpop.permute.xlu0 %5644
        %5646 = vrot.lane.b32.xlu0 %v5632, 119
        %v5647 = vpop.permute.xlu0 %5646
        %5648 = vrot.lane.b32.xlu0 %v5633, 119
        %v5649 = vpop.permute.xlu0 %5648
        %5650 = vrot.lane.b32.xlu0 %v5634, 119
        %v5651 = vpop.permute.xlu0 %5650
        %5652 = vrot.lane.b32.xlu0 %v5635, 119
        %v5653 = vpop.permute.xlu0 %5652
        %v5654 = vsel %vm1004, %v5643, %v5645
        %v5655 = vsel %vm1004, %v5645, %v5647
        %v5656 = vsel %vm1004, %v5647, %v5649
        %v5657 = vsel %vm1004, %v5649, %v5651
        %v5658 = vsel %vm1004, %v5651, %v5653
        %v5664 = vadd.f32 %v5582, %v5654
        %v5665 = vadd.f32 %v5583, %v5655
        %v5666 = vadd.f32 %v5584, %v5656
        %v5667 = vadd.f32 %v5585, %v5657
        %v5668 = vadd.f32 %v5586, %v5658
        %s5669 = sld [smem:[#allocation3 + $0x709]]
        %v5670 = vstv %s5669
        %v5671 = vmul.f32 %v4966, %v5670
        %v5672 = vmul.f32 %v4967, %v5670
        %v5673 = vmul.f32 %v4968, %v5670
        %v5674 = vmul.f32 %v4969, %v5670
        %v5675 = vmul.f32 %v4970, %v5670
        %v5676 = vmul.f32 %v4971, %v5670
        %5683 = vrot.lane.b32.xlu0 %v5671, 119
        %v5684 = vpop.permute.xlu0 %5683
        %5685 = vrot.lane.b32.xlu0 %v5672, 119
        %v5686 = vpop.permute.xlu0 %5685
        %5687 = vrot.lane.b32.xlu0 %v5673, 119
        %v5688 = vpop.permute.xlu0 %5687
        %5689 = vrot.lane.b32.xlu0 %v5674, 119
        %v5690 = vpop.permute.xlu0 %5689
        %5691 = vrot.lane.b32.xlu0 %v5675, 119
        %v5692 = vpop.permute.xlu0 %5691
        %5693 = vrot.lane.b32.xlu0 %v5676, 119
        %v5694 = vpop.permute.xlu0 %5693
        %v5695 = vsel %vm1004, %v5684, %v5686
        %v5696 = vsel %vm1004, %v5686, %v5688
        %v5697 = vsel %vm1004, %v5688, %v5690
        %v5698 = vsel %vm1004, %v5690, %v5692
        %v5699 = vsel %vm1004, %v5692, %v5694
        %v5705 = vadd.f32 %v5623, %v5695
        %v5706 = vadd.f32 %v5624, %v5696
        %v5707 = vadd.f32 %v5625, %v5697
        %v5708 = vadd.f32 %v5626, %v5698
        %v5709 = vadd.f32 %v5627, %v5699
        %s5710 = scalar_lea.vmem %s245, 240 [#allocation5]
        %5711 = vst [vmem:[%s5710] sm:$0xff] %v5664
        %5712 = vst [vmem:[%s5710 + $0x8] sm:$0xff] %v5665
        %5713 = vst [vmem:[%s5710 + $0x10] sm:$0xff] %v5666
        %5714 = vst [vmem:[%s5710 + $0x18] sm:$0xff] %v5667
        %5715 = vst [vmem:[%s5710 + $0x20] sm:$0xff] %v5668
        %s5716 = scalar_lea.vmem %s245, 560 [#allocation5]
        %5717 = vst [vmem:[%s5716] sm:$0xff] %v5705
        %5718 = vst [vmem:[%s5716 + $0x8] sm:$0xff] %v5706
        %5719 = vst [vmem:[%s5716 + $0x10] sm:$0xff] %v5707
        %5720 = vst [vmem:[%s5716 + $0x18] sm:$0xff] %v5708
        %5721 = vst [vmem:[%s5716 + $0x20] sm:$0xff] %v5709
        %v5722 = vld [vmem:[#allocation2] sm:$0xff]
        %v5723 = vld [vmem:[#allocation2 + $0x8] sm:$0xff]
        %v5724 = vld [vmem:[#allocation2 + $0x10] sm:$0xff]
        %v5725 = vld [vmem:[#allocation2 + $0x18] sm:$0xff]
        %v5726 = vld [vmem:[#allocation2 + $0x20] sm:$0xff]
        %s5727 = sld [smem:[#allocation3 + $0x380]]
        %v5728 = vstv %s5727
        %v5729 = vmul.f32 %v5722, %v5728
        %v5730 = vmul.f32 %v5723, %v5728
        %v5731 = vmul.f32 %v5724, %v5728
        %v5732 = vmul.f32 %v5725, %v5728
        %v5733 = vmul.f32 %v5726, %v5728
        %s5734 = sld [smem:[#allocation3 + $0x780]]
        %v5735 = vstv %s5734
        %v5736 = vmul.f32 %v5722, %v5735
        %v5737 = vmul.f32 %v5723, %v5735
        %v5738 = vmul.f32 %v5724, %v5735
        %v5739 = vmul.f32 %v5725, %v5735
        %v5740 = vmul.f32 %v5726, %v5735
        %v5741 = vld [vmem:[#allocation2] sm:$0xff]
        %v5742 = vld [vmem:[#allocation2 + $0x8] sm:$0xff]
        %v5743 = vld [vmem:[#allocation2 + $0x10] sm:$0xff]
        %v5744 = vld [vmem:[#allocation2 + $0x18] sm:$0xff]
        %v5745 = vld [vmem:[#allocation2 + $0x20] sm:$0xff]
        %v5746 = vld [vmem:[#allocation2 + $0x28] sm:$0xff]
        %s5747 = sld [smem:[#allocation3 + $0x381]]
        %v5748 = vstv %s5747
        %v5749 = vmul.f32 %v5741, %v5748
        %v5750 = vmul.f32 %v5742, %v5748
        %v5751 = vmul.f32 %v5743, %v5748
        %v5752 = vmul.f32 %v5744, %v5748
        %v5753 = vmul.f32 %v5745, %v5748
        %v5754 = vmul.f32 %v5746, %v5748
        %5761 = vrot.lane.b32.xlu0 %v5749, 127
        %v5762 = vpop.permute.xlu0 %5761
        %5763 = vrot.lane.b32.xlu0 %v5750, 127
        %v5764 = vpop.permute.xlu0 %5763
        %5765 = vrot.lane.b32.xlu0 %v5751, 127
        %v5766 = vpop.permute.xlu0 %5765
        %5767 = vrot.lane.b32.xlu0 %v5752, 127
        %v5768 = vpop.permute.xlu0 %5767
        %5769 = vrot.lane.b32.xlu0 %v5753, 127
        %v5770 = vpop.permute.xlu0 %5769
        %5771 = vrot.lane.b32.xlu0 %v5754, 127
        %v5772 = vpop.permute.xlu0 %5771
        %v5773 = vsel %vm340, %v5762, %v5764
        %v5774 = vsel %vm340, %v5764, %v5766
        %v5775 = vsel %vm340, %v5766, %v5768
        %v5776 = vsel %vm340, %v5768, %v5770
        %v5777 = vsel %vm340, %v5770, %v5772
        %v5783 = vadd.f32 %v5729, %v5773
        %v5784 = vadd.f32 %v5730, %v5774
        %v5785 = vadd.f32 %v5731, %v5775
        %v5786 = vadd.f32 %v5732, %v5776
        %v5787 = vadd.f32 %v5733, %v5777
        %s5788 = sld [smem:[#allocation3 + $0x781]]
        %v5789 = vstv %s5788
        %v5790 = vmul.f32 %v5741, %v5789
        %v5791 = vmul.f32 %v5742, %v5789
        %v5792 = vmul.f32 %v5743, %v5789
        %v5793 = vmul.f32 %v5744, %v5789
        %v5794 = vmul.f32 %v5745, %v5789
        %v5795 = vmul.f32 %v5746, %v5789
        %5802 = vrot.lane.b32.xlu0 %v5790, 127
        %v5803 = vpop.permute.xlu0 %5802
        %5804 = vrot.lane.b32.xlu0 %v5791, 127
        %v5805 = vpop.permute.xlu0 %5804
        %5806 = vrot.lane.b32.xlu0 %v5792, 127
        %v5807 = vpop.permute.xlu0 %5806
        %5808 = vrot.lane.b32.xlu0 %v5793, 127
        %v5809 = vpop.permute.xlu0 %5808
        %5810 = vrot.lane.b32.xlu0 %v5794, 127
        %v5811 = vpop.permute.xlu0 %5810
        %5812 = vrot.lane.b32.xlu0 %v5795, 127
        %v5813 = vpop.permute.xlu0 %5812
        %v5814 = vsel %vm340, %v5803, %v5805
        %v5815 = vsel %vm340, %v5805, %v5807
        %v5816 = vsel %vm340, %v5807, %v5809
        %v5817 = vsel %vm340, %v5809, %v5811
        %v5818 = vsel %vm340, %v5811, %v5813
        %v5824 = vadd.f32 %v5736, %v5814
        %v5825 = vadd.f32 %v5737, %v5815
        %v5826 = vadd.f32 %v5738, %v5816
        %v5827 = vadd.f32 %v5739, %v5817
        %v5828 = vadd.f32 %v5740, %v5818
        %s5829 = sld [smem:[#allocation3 + $0x382]]
        %v5830 = vstv %s5829
        %v5831 = vmul.f32 %v5741, %v5830
        %v5832 = vmul.f32 %v5742, %v5830
        %v5833 = vmul.f32 %v5743, %v5830
        %v5834 = vmul.f32 %v5744, %v5830
        %v5835 = vmul.f32 %v5745, %v5830
        %v5836 = vmul.f32 %v5746, %v5830
        %5843 = vrot.lane.b32.xlu0 %v5831, 126
        %v5844 = vpop.permute.xlu0 %5843
        %5845 = vrot.lane.b32.xlu0 %v5832, 126
        %v5846 = vpop.permute.xlu0 %5845
        %5847 = vrot.lane.b32.xlu0 %v5833, 126
        %v5848 = vpop.permute.xlu0 %5847
        %5849 = vrot.lane.b32.xlu0 %v5834, 126
        %v5850 = vpop.permute.xlu0 %5849
        %5851 = vrot.lane.b32.xlu0 %v5835, 126
        %v5852 = vpop.permute.xlu0 %5851
        %5853 = vrot.lane.b32.xlu0 %v5836, 126
        %v5854 = vpop.permute.xlu0 %5853
        %v5855 = vsel %vm423, %v5844, %v5846
        %v5856 = vsel %vm423, %v5846, %v5848
        %v5857 = vsel %vm423, %v5848, %v5850
        %v5858 = vsel %vm423, %v5850, %v5852
        %v5859 = vsel %vm423, %v5852, %v5854
        %v5865 = vadd.f32 %v5783, %v5855
        %v5866 = vadd.f32 %v5784, %v5856
        %v5867 = vadd.f32 %v5785, %v5857
        %v5868 = vadd.f32 %v5786, %v5858
        %v5869 = vadd.f32 %v5787, %v5859
        %s5870 = sld [smem:[#allocation3 + $0x782]]
        %v5871 = vstv %s5870
        %v5872 = vmul.f32 %v5741, %v5871
        %v5873 = vmul.f32 %v5742, %v5871
        %v5874 = vmul.f32 %v5743, %v5871
        %v5875 = vmul.f32 %v5744, %v5871
        %v5876 = vmul.f32 %v5745, %v5871
        %v5877 = vmul.f32 %v5746, %v5871
        %5884 = vrot.lane.b32.xlu0 %v5872, 126
        %v5885 = vpop.permute.xlu0 %5884
        %5886 = vrot.lane.b32.xlu0 %v5873, 126
        %v5887 = vpop.permute.xlu0 %5886
        %5888 = vrot.lane.b32.xlu0 %v5874, 126
        %v5889 = vpop.permute.xlu0 %5888
        %5890 = vrot.lane.b32.xlu0 %v5875, 126
        %v5891 = vpop.permute.xlu0 %5890
        %5892 = vrot.lane.b32.xlu0 %v5876, 126
        %v5893 = vpop.permute.xlu0 %5892
        %5894 = vrot.lane.b32.xlu0 %v5877, 126
        %v5895 = vpop.permute.xlu0 %5894
        %v5896 = vsel %vm423, %v5885, %v5887
        %v5897 = vsel %vm423, %v5887, %v5889
        %v5898 = vsel %vm423, %v5889, %v5891
        %v5899 = vsel %vm423, %v5891, %v5893
        %v5900 = vsel %vm423, %v5893, %v5895
        %v5906 = vadd.f32 %v5824, %v5896
        %v5907 = vadd.f32 %v5825, %v5897
        %v5908 = vadd.f32 %v5826, %v5898
        %v5909 = vadd.f32 %v5827, %v5899
        %v5910 = vadd.f32 %v5828, %v5900
        %s5911 = sld [smem:[#allocation3 + $0x383]]
        %v5912 = vstv %s5911
        %v5913 = vmul.f32 %v5741, %v5912
        %v5914 = vmul.f32 %v5742, %v5912
        %v5915 = vmul.f32 %v5743, %v5912
        %v5916 = vmul.f32 %v5744, %v5912
        %v5917 = vmul.f32 %v5745, %v5912
        %v5918 = vmul.f32 %v5746, %v5912
        %5925 = vrot.lane.b32.xlu0 %v5913, 125
        %v5926 = vpop.permute.xlu0 %5925
        %5927 = vrot.lane.b32.xlu0 %v5914, 125
        %v5928 = vpop.permute.xlu0 %5927
        %5929 = vrot.lane.b32.xlu0 %v5915, 125
        %v5930 = vpop.permute.xlu0 %5929
        %5931 = vrot.lane.b32.xlu0 %v5916, 125
        %v5932 = vpop.permute.xlu0 %5931
        %5933 = vrot.lane.b32.xlu0 %v5917, 125
        %v5934 = vpop.permute.xlu0 %5933
        %5935 = vrot.lane.b32.xlu0 %v5918, 125
        %v5936 = vpop.permute.xlu0 %5935
        %v5937 = vsel %vm506, %v5926, %v5928
        %v5938 = vsel %vm506, %v5928, %v5930
        %v5939 = vsel %vm506, %v5930, %v5932
        %v5940 = vsel %vm506, %v5932, %v5934
        %v5941 = vsel %vm506, %v5934, %v5936
        %v5947 = vadd.f32 %v5865, %v5937
        %v5948 = vadd.f32 %v5866, %v5938
        %v5949 = vadd.f32 %v5867, %v5939
        %v5950 = vadd.f32 %v5868, %v5940
        %v5951 = vadd.f32 %v5869, %v5941
        %s5952 = sld [smem:[#allocation3 + $0x783]]
        %v5953 = vstv %s5952
        %v5954 = vmul.f32 %v5741, %v5953
        %v5955 = vmul.f32 %v5742, %v5953
        %v5956 = vmul.f32 %v5743, %v5953
        %v5957 = vmul.f32 %v5744, %v5953
        %v5958 = vmul.f32 %v5745, %v5953
        %v5959 = vmul.f32 %v5746, %v5953
        %5966 = vrot.lane.b32.xlu0 %v5954, 125
        %v5967 = vpop.permute.xlu0 %5966
        %5968 = vrot.lane.b32.xlu0 %v5955, 125
        %v5969 = vpop.permute.xlu0 %5968
        %5970 = vrot.lane.b32.xlu0 %v5956, 125
        %v5971 = vpop.permute.xlu0 %5970
        %5972 = vrot.lane.b32.xlu0 %v5957, 125
        %v5973 = vpop.permute.xlu0 %5972
        %5974 = vrot.lane.b32.xlu0 %v5958, 125
        %v5975 = vpop.permute.xlu0 %5974
        %5976 = vrot.lane.b32.xlu0 %v5959, 125
        %v5977 = vpop.permute.xlu0 %5976
        %v5978 = vsel %vm506, %v5967, %v5969
        %v5979 = vsel %vm506, %v5969, %v5971
        %v5980 = vsel %vm506, %v5971, %v5973
        %v5981 = vsel %vm506, %v5973, %v5975
        %v5982 = vsel %vm506, %v5975, %v5977
        %v5988 = vadd.f32 %v5906, %v5978
        %v5989 = vadd.f32 %v5907, %v5979
        %v5990 = vadd.f32 %v5908, %v5980
        %v5991 = vadd.f32 %v5909, %v5981
        %v5992 = vadd.f32 %v5910, %v5982
        %s5993 = sld [smem:[#allocation3 + $0x384]]
        %v5994 = vstv %s5993
        %v5995 = vmul.f32 %v5741, %v5994
        %v5996 = vmul.f32 %v5742, %v5994
        %v5997 = vmul.f32 %v5743, %v5994
        %v5998 = vmul.f32 %v5744, %v5994
        %v5999 = vmul.f32 %v5745, %v5994
        %v6000 = vmul.f32 %v5746, %v5994
        %6007 = vrot.lane.b32.xlu0 %v5995, 124
        %v6008 = vpop.permute.xlu0 %6007
        %6009 = vrot.lane.b32.xlu0 %v5996, 124
        %v6010 = vpop.permute.xlu0 %6009
        %6011 = vrot.lane.b32.xlu0 %v5997, 124
        %v6012 = vpop.permute.xlu0 %6011
        %6013 = vrot.lane.b32.xlu0 %v5998, 124
        %v6014 = vpop.permute.xlu0 %6013
        %6015 = vrot.lane.b32.xlu0 %v5999, 124
        %v6016 = vpop.permute.xlu0 %6015
        %6017 = vrot.lane.b32.xlu0 %v6000, 124
        %v6018 = vpop.permute.xlu0 %6017
        %v6019 = vsel %vm589, %v6008, %v6010
        %v6020 = vsel %vm589, %v6010, %v6012
        %v6021 = vsel %vm589, %v6012, %v6014
        %v6022 = vsel %vm589, %v6014, %v6016
        %v6023 = vsel %vm589, %v6016, %v6018
        %v6029 = vadd.f32 %v5947, %v6019
        %v6030 = vadd.f32 %v5948, %v6020
        %v6031 = vadd.f32 %v5949, %v6021
        %v6032 = vadd.f32 %v5950, %v6022
        %v6033 = vadd.f32 %v5951, %v6023
        %s6034 = sld [smem:[#allocation3 + $0x784]]
        %v6035 = vstv %s6034
        %v6036 = vmul.f32 %v5741, %v6035
        %v6037 = vmul.f32 %v5742, %v6035
        %v6038 = vmul.f32 %v5743, %v6035
        %v6039 = vmul.f32 %v5744, %v6035
        %v6040 = vmul.f32 %v5745, %v6035
        %v6041 = vmul.f32 %v5746, %v6035
        %6048 = vrot.lane.b32.xlu0 %v6036, 124
        %v6049 = vpop.permute.xlu0 %6048
        %6050 = vrot.lane.b32.xlu0 %v6037, 124
        %v6051 = vpop.permute.xlu0 %6050
        %6052 = vrot.lane.b32.xlu0 %v6038, 124
        %v6053 = vpop.permute.xlu0 %6052
        %6054 = vrot.lane.b32.xlu0 %v6039, 124
        %v6055 = vpop.permute.xlu0 %6054
        %6056 = vrot.lane.b32.xlu0 %v6040, 124
        %v6057 = vpop.permute.xlu0 %6056
        %6058 = vrot.lane.b32.xlu0 %v6041, 124
        %v6059 = vpop.permute.xlu0 %6058
        %v6060 = vsel %vm589, %v6049, %v6051
        %v6061 = vsel %vm589, %v6051, %v6053
        %v6062 = vsel %vm589, %v6053, %v6055
        %v6063 = vsel %vm589, %v6055, %v6057
        %v6064 = vsel %vm589, %v6057, %v6059
        %v6070 = vadd.f32 %v5988, %v6060
        %v6071 = vadd.f32 %v5989, %v6061
        %v6072 = vadd.f32 %v5990, %v6062
        %v6073 = vadd.f32 %v5991, %v6063
        %v6074 = vadd.f32 %v5992, %v6064
        %s6075 = sld [smem:[#allocation3 + $0x385]]
        %v6076 = vstv %s6075
        %v6077 = vmul.f32 %v5741, %v6076
        %v6078 = vmul.f32 %v5742, %v6076
        %v6079 = vmul.f32 %v5743, %v6076
        %v6080 = vmul.f32 %v5744, %v6076
        %v6081 = vmul.f32 %v5745, %v6076
        %v6082 = vmul.f32 %v5746, %v6076
        %6089 = vrot.lane.b32.xlu0 %v6077, 123
        %v6090 = vpop.permute.xlu0 %6089
        %6091 = vrot.lane.b32.xlu0 %v6078, 123
        %v6092 = vpop.permute.xlu0 %6091
        %6093 = vrot.lane.b32.xlu0 %v6079, 123
        %v6094 = vpop.permute.xlu0 %6093
        %6095 = vrot.lane.b32.xlu0 %v6080, 123
        %v6096 = vpop.permute.xlu0 %6095
        %6097 = vrot.lane.b32.xlu0 %v6081, 123
        %v6098 = vpop.permute.xlu0 %6097
        %6099 = vrot.lane.b32.xlu0 %v6082, 123
        %v6100 = vpop.permute.xlu0 %6099
        %v6101 = vsel %vm672, %v6090, %v6092
        %v6102 = vsel %vm672, %v6092, %v6094
        %v6103 = vsel %vm672, %v6094, %v6096
        %v6104 = vsel %vm672, %v6096, %v6098
        %v6105 = vsel %vm672, %v6098, %v6100
        %v6111 = vadd.f32 %v6029, %v6101
        %v6112 = vadd.f32 %v6030, %v6102
        %v6113 = vadd.f32 %v6031, %v6103
        %v6114 = vadd.f32 %v6032, %v6104
        %v6115 = vadd.f32 %v6033, %v6105
        %s6116 = sld [smem:[#allocation3 + $0x785]]
        %v6117 = vstv %s6116
        %v6118 = vmul.f32 %v5741, %v6117
        %v6119 = vmul.f32 %v5742, %v6117
        %v6120 = vmul.f32 %v5743, %v6117
        %v6121 = vmul.f32 %v5744, %v6117
        %v6122 = vmul.f32 %v5745, %v6117
        %v6123 = vmul.f32 %v5746, %v6117
        %6130 = vrot.lane.b32.xlu0 %v6118, 123
        %v6131 = vpop.permute.xlu0 %6130
        %6132 = vrot.lane.b32.xlu0 %v6119, 123
        %v6133 = vpop.permute.xlu0 %6132
        %6134 = vrot.lane.b32.xlu0 %v6120, 123
        %v6135 = vpop.permute.xlu0 %6134
        %6136 = vrot.lane.b32.xlu0 %v6121, 123
        %v6137 = vpop.permute.xlu0 %6136
        %6138 = vrot.lane.b32.xlu0 %v6122, 123
        %v6139 = vpop.permute.xlu0 %6138
        %6140 = vrot.lane.b32.xlu0 %v6123, 123
        %v6141 = vpop.permute.xlu0 %6140
        %v6142 = vsel %vm672, %v6131, %v6133
        %v6143 = vsel %vm672, %v6133, %v6135
        %v6144 = vsel %vm672, %v6135, %v6137
        %v6145 = vsel %vm672, %v6137, %v6139
        %v6146 = vsel %vm672, %v6139, %v6141
        %v6152 = vadd.f32 %v6070, %v6142
        %v6153 = vadd.f32 %v6071, %v6143
        %v6154 = vadd.f32 %v6072, %v6144
        %v6155 = vadd.f32 %v6073, %v6145
        %v6156 = vadd.f32 %v6074, %v6146
        %s6157 = sld [smem:[#allocation3 + $0x386]]
        %v6158 = vstv %s6157
        %v6159 = vmul.f32 %v5741, %v6158
        %v6160 = vmul.f32 %v5742, %v6158
        %v6161 = vmul.f32 %v5743, %v6158
        %v6162 = vmul.f32 %v5744, %v6158
        %v6163 = vmul.f32 %v5745, %v6158
        %v6164 = vmul.f32 %v5746, %v6158
        %6171 = vrot.lane.b32.xlu0 %v6159, 122
        %v6172 = vpop.permute.xlu0 %6171
        %6173 = vrot.lane.b32.xlu0 %v6160, 122
        %v6174 = vpop.permute.xlu0 %6173
        %6175 = vrot.lane.b32.xlu0 %v6161, 122
        %v6176 = vpop.permute.xlu0 %6175
        %6177 = vrot.lane.b32.xlu0 %v6162, 122
        %v6178 = vpop.permute.xlu0 %6177
        %6179 = vrot.lane.b32.xlu0 %v6163, 122
        %v6180 = vpop.permute.xlu0 %6179
        %6181 = vrot.lane.b32.xlu0 %v6164, 122
        %v6182 = vpop.permute.xlu0 %6181
        %v6183 = vsel %vm755, %v6172, %v6174
        %v6184 = vsel %vm755, %v6174, %v6176
        %v6185 = vsel %vm755, %v6176, %v6178
        %v6186 = vsel %vm755, %v6178, %v6180
        %v6187 = vsel %vm755, %v6180, %v6182
        %v6193 = vadd.f32 %v6111, %v6183
        %v6194 = vadd.f32 %v6112, %v6184
        %v6195 = vadd.f32 %v6113, %v6185
        %v6196 = vadd.f32 %v6114, %v6186
        %v6197 = vadd.f32 %v6115, %v6187
        %s6198 = sld [smem:[#allocation3 + $0x786]]
        %v6199 = vstv %s6198
        %v6200 = vmul.f32 %v5741, %v6199
        %v6201 = vmul.f32 %v5742, %v6199
        %v6202 = vmul.f32 %v5743, %v6199
        %v6203 = vmul.f32 %v5744, %v6199
        %v6204 = vmul.f32 %v5745, %v6199
        %v6205 = vmul.f32 %v5746, %v6199
        %6212 = vrot.lane.b32.xlu0 %v6200, 122
        %v6213 = vpop.permute.xlu0 %6212
        %6214 = vrot.lane.b32.xlu0 %v6201, 122
        %v6215 = vpop.permute.xlu0 %6214
        %6216 = vrot.lane.b32.xlu0 %v6202, 122
        %v6217 = vpop.permute.xlu0 %6216
        %6218 = vrot.lane.b32.xlu0 %v6203, 122
        %v6219 = vpop.permute.xlu0 %6218
        %6220 = vrot.lane.b32.xlu0 %v6204, 122
        %v6221 = vpop.permute.xlu0 %6220
        %6222 = vrot.lane.b32.xlu0 %v6205, 122
        %v6223 = vpop.permute.xlu0 %6222
        %v6224 = vsel %vm755, %v6213, %v6215
        %v6225 = vsel %vm755, %v6215, %v6217
        %v6226 = vsel %vm755, %v6217, %v6219
        %v6227 = vsel %vm755, %v6219, %v6221
        %v6228 = vsel %vm755, %v6221, %v6223
        %v6234 = vadd.f32 %v6152, %v6224
        %v6235 = vadd.f32 %v6153, %v6225
        %v6236 = vadd.f32 %v6154, %v6226
        %v6237 = vadd.f32 %v6155, %v6227
        %v6238 = vadd.f32 %v6156, %v6228
        %s6239 = sld [smem:[#allocation3 + $0x387]]
        %v6240 = vstv %s6239
        %v6241 = vmul.f32 %v5741, %v6240
        %v6242 = vmul.f32 %v5742, %v6240
        %v6243 = vmul.f32 %v5743, %v6240
        %v6244 = vmul.f32 %v5744, %v6240
        %v6245 = vmul.f32 %v5745, %v6240
        %v6246 = vmul.f32 %v5746, %v6240
        %6253 = vrot.lane.b32.xlu0 %v6241, 121
        %v6254 = vpop.permute.xlu0 %6253
        %6255 = vrot.lane.b32.xlu0 %v6242, 121
        %v6256 = vpop.permute.xlu0 %6255
        %6257 = vrot.lane.b32.xlu0 %v6243, 121
        %v6258 = vpop.permute.xlu0 %6257
        %6259 = vrot.lane.b32.xlu0 %v6244, 121
        %v6260 = vpop.permute.xlu0 %6259
        %6261 = vrot.lane.b32.xlu0 %v6245, 121
        %v6262 = vpop.permute.xlu0 %6261
        %6263 = vrot.lane.b32.xlu0 %v6246, 121
        %v6264 = vpop.permute.xlu0 %6263
        %v6265 = vsel %vm838, %v6254, %v6256
        %v6266 = vsel %vm838, %v6256, %v6258
        %v6267 = vsel %vm838, %v6258, %v6260
        %v6268 = vsel %vm838, %v6260, %v6262
        %v6269 = vsel %vm838, %v6262, %v6264
        %v6275 = vadd.f32 %v6193, %v6265
        %v6276 = vadd.f32 %v6194, %v6266
        %v6277 = vadd.f32 %v6195, %v6267
        %v6278 = vadd.f32 %v6196, %v6268
        %v6279 = vadd.f32 %v6197, %v6269
        %s6280 = sld [smem:[#allocation3 + $0x787]]
        %v6281 = vstv %s6280
        %v6282 = vmul.f32 %v5741, %v6281
        %v6283 = vmul.f32 %v5742, %v6281
        %v6284 = vmul.f32 %v5743, %v6281
        %v6285 = vmul.f32 %v5744, %v6281
        %v6286 = vmul.f32 %v5745, %v6281
        %v6287 = vmul.f32 %v5746, %v6281
        %6294 = vrot.lane.b32.xlu0 %v6282, 121
        %v6295 = vpop.permute.xlu0 %6294
        %6296 = vrot.lane.b32.xlu0 %v6283, 121
        %v6297 = vpop.permute.xlu0 %6296
        %6298 = vrot.lane.b32.xlu0 %v6284, 121
        %v6299 = vpop.permute.xlu0 %6298
        %6300 = vrot.lane.b32.xlu0 %v6285, 121
        %v6301 = vpop.permute.xlu0 %6300
        %6302 = vrot.lane.b32.xlu0 %v6286, 121
        %v6303 = vpop.permute.xlu0 %6302
        %6304 = vrot.lane.b32.xlu0 %v6287, 121
        %v6305 = vpop.permute.xlu0 %6304
        %v6306 = vsel %vm838, %v6295, %v6297
        %v6307 = vsel %vm838, %v6297, %v6299
        %v6308 = vsel %vm838, %v6299, %v6301
        %v6309 = vsel %vm838, %v6301, %v6303
        %v6310 = vsel %vm838, %v6303, %v6305
        %v6316 = vadd.f32 %v6234, %v6306
        %v6317 = vadd.f32 %v6235, %v6307
        %v6318 = vadd.f32 %v6236, %v6308
        %v6319 = vadd.f32 %v6237, %v6309
        %v6320 = vadd.f32 %v6238, %v6310
        %s6321 = sld [smem:[#allocation3 + $0x388]]
        %v6322 = vstv %s6321
        %v6323 = vmul.f32 %v5741, %v6322
        %v6324 = vmul.f32 %v5742, %v6322
        %v6325 = vmul.f32 %v5743, %v6322
        %v6326 = vmul.f32 %v5744, %v6322
        %v6327 = vmul.f32 %v5745, %v6322
        %v6328 = vmul.f32 %v5746, %v6322
        %6335 = vrot.lane.b32.xlu0 %v6323, 120
        %v6336 = vpop.permute.xlu0 %6335
        %6337 = vrot.lane.b32.xlu0 %v6324, 120
        %v6338 = vpop.permute.xlu0 %6337
        %6339 = vrot.lane.b32.xlu0 %v6325, 120
        %v6340 = vpop.permute.xlu0 %6339
        %6341 = vrot.lane.b32.xlu0 %v6326, 120
        %v6342 = vpop.permute.xlu0 %6341
        %6343 = vrot.lane.b32.xlu0 %v6327, 120
        %v6344 = vpop.permute.xlu0 %6343
        %6345 = vrot.lane.b32.xlu0 %v6328, 120
        %v6346 = vpop.permute.xlu0 %6345
        %v6347 = vsel %vm921, %v6336, %v6338
        %v6348 = vsel %vm921, %v6338, %v6340
        %v6349 = vsel %vm921, %v6340, %v6342
        %v6350 = vsel %vm921, %v6342, %v6344
        %v6351 = vsel %vm921, %v6344, %v6346
        %v6357 = vadd.f32 %v6275, %v6347
        %v6358 = vadd.f32 %v6276, %v6348
        %v6359 = vadd.f32 %v6277, %v6349
        %v6360 = vadd.f32 %v6278, %v6350
        %v6361 = vadd.f32 %v6279, %v6351
        %s6362 = sld [smem:[#allocation3 + $0x788]]
        %v6363 = vstv %s6362
        %v6364 = vmul.f32 %v5741, %v6363
        %v6365 = vmul.f32 %v5742, %v6363
        %v6366 = vmul.f32 %v5743, %v6363
        %v6367 = vmul.f32 %v5744, %v6363
        %v6368 = vmul.f32 %v5745, %v6363
        %v6369 = vmul.f32 %v5746, %v6363
        %6376 = vrot.lane.b32.xlu0 %v6364, 120
        %v6377 = vpop.permute.xlu0 %6376
        %6378 = vrot.lane.b32.xlu0 %v6365, 120
        %v6379 = vpop.permute.xlu0 %6378
        %6380 = vrot.lane.b32.xlu0 %v6366, 120
        %v6381 = vpop.permute.xlu0 %6380
        %6382 = vrot.lane.b32.xlu0 %v6367, 120
        %v6383 = vpop.permute.xlu0 %6382
        %6384 = vrot.lane.b32.xlu0 %v6368, 120
        %v6385 = vpop.permute.xlu0 %6384
        %6386 = vrot.lane.b32.xlu0 %v6369, 120
        %v6387 = vpop.permute.xlu0 %6386
        %v6388 = vsel %vm921, %v6377, %v6379
        %v6389 = vsel %vm921, %v6379, %v6381
        %v6390 = vsel %vm921, %v6381, %v6383
        %v6391 = vsel %vm921, %v6383, %v6385
        %v6392 = vsel %vm921, %v6385, %v6387
        %v6398 = vadd.f32 %v6316, %v6388
        %v6399 = vadd.f32 %v6317, %v6389
        %v6400 = vadd.f32 %v6318, %v6390
        %v6401 = vadd.f32 %v6319, %v6391
        %v6402 = vadd.f32 %v6320, %v6392
        %s6403 = sld [smem:[#allocation3 + $0x389]]
        %v6404 = vstv %s6403
        %v6405 = vmul.f32 %v5741, %v6404
        %v6406 = vmul.f32 %v5742, %v6404
        %v6407 = vmul.f32 %v5743, %v6404
        %v6408 = vmul.f32 %v5744, %v6404
        %v6409 = vmul.f32 %v5745, %v6404
        %v6410 = vmul.f32 %v5746, %v6404
        %6417 = vrot.lane.b32.xlu0 %v6405, 119
        %v6418 = vpop.permute.xlu0 %6417
        %6419 = vrot.lane.b32.xlu0 %v6406, 119
        %v6420 = vpop.permute.xlu0 %6419
        %6421 = vrot.lane.b32.xlu0 %v6407, 119
        %v6422 = vpop.permute.xlu0 %6421
        %6423 = vrot.lane.b32.xlu0 %v6408, 119
        %v6424 = vpop.permute.xlu0 %6423
        %6425 = vrot.lane.b32.xlu0 %v6409, 119
        %v6426 = vpop.permute.xlu0 %6425
        %6427 = vrot.lane.b32.xlu0 %v6410, 119
        %v6428 = vpop.permute.xlu0 %6427
        %v6429 = vsel %vm1004, %v6418, %v6420
        %v6430 = vsel %vm1004, %v6420, %v6422
        %v6431 = vsel %vm1004, %v6422, %v6424
        %v6432 = vsel %vm1004, %v6424, %v6426
        %v6433 = vsel %vm1004, %v6426, %v6428
        %v6439 = vadd.f32 %v6357, %v6429
        %v6440 = vadd.f32 %v6358, %v6430
        %v6441 = vadd.f32 %v6359, %v6431
        %v6442 = vadd.f32 %v6360, %v6432
        %v6443 = vadd.f32 %v6361, %v6433
        %s6444 = sld [smem:[#allocation3 + $0x789]]
        %v6445 = vstv %s6444
        %v6446 = vmul.f32 %v5741, %v6445
        %v6447 = vmul.f32 %v5742, %v6445
        %v6448 = vmul.f32 %v5743, %v6445
        %v6449 = vmul.f32 %v5744, %v6445
        %v6450 = vmul.f32 %v5745, %v6445
        %v6451 = vmul.f32 %v5746, %v6445
        %6458 = vrot.lane.b32.xlu0 %v6446, 119
        %v6459 = vpop.permute.xlu0 %6458
        %6460 = vrot.lane.b32.xlu0 %v6447, 119
        %v6461 = vpop.permute.xlu0 %6460
        %6462 = vrot.lane.b32.xlu0 %v6448, 119
        %v6463 = vpop.permute.xlu0 %6462
        %6464 = vrot.lane.b32.xlu0 %v6449, 119
        %v6465 = vpop.permute.xlu0 %6464
        %6466 = vrot.lane.b32.xlu0 %v6450, 119
        %v6467 = vpop.permute.xlu0 %6466
        %6468 = vrot.lane.b32.xlu0 %v6451, 119
        %v6469 = vpop.permute.xlu0 %6468
        %v6470 = vsel %vm1004, %v6459, %v6461
        %v6471 = vsel %vm1004, %v6461, %v6463
        %v6472 = vsel %vm1004, %v6463, %v6465
        %v6473 = vsel %vm1004, %v6465, %v6467
        %v6474 = vsel %vm1004, %v6467, %v6469
        %v6480 = vadd.f32 %v6398, %v6470
        %v6481 = vadd.f32 %v6399, %v6471
        %v6482 = vadd.f32 %v6400, %v6472
        %v6483 = vadd.f32 %v6401, %v6473
        %v6484 = vadd.f32 %v6402, %v6474
        %s6485 = scalar_lea.vmem %s245, 280 [#allocation5]
        %6486 = vst [vmem:[%s6485] sm:$0xff] %v6439
        %6487 = vst [vmem:[%s6485 + $0x8] sm:$0xff] %v6440
        %6488 = vst [vmem:[%s6485 + $0x10] sm:$0xff] %v6441
        %6489 = vst [vmem:[%s6485 + $0x18] sm:$0xff] %v6442
        %6490 = vst [vmem:[%s6485 + $0x20] sm:$0xff] %v6443
        %s6491 = scalar_lea.vmem %s245, 600 [#allocation5]
        %6492 = vst [vmem:[%s6491] sm:$0xff] %v6480
        %6493 = vst [vmem:[%s6491 + $0x8] sm:$0xff] %v6481
        %6494 = vst [vmem:[%s6491 + $0x10] sm:$0xff] %v6482
        %6495 = vst [vmem:[%s6491 + $0x18] sm:$0xff] %v6483
        %6496 = vst [vmem:[%s6491 + $0x20] sm:$0xff] %v6484
        %s6497 = sand.u32 %s118, 1
        %s6498 = sand.u32 %s118, 1
        %s6499 = smul.addr %s6498, 640
        %s6500 = scalar_lea.vmem [#allocation5], %s6499
        // Predicated region
        $region37: #{gabor_filter_forward.1} parent=31 // pred_check
          %p6501 = pneg %p128
        $region38: #{gabor_filter_forward.1} parent=31 // pred_check_branch
          %6503 = sbr.rel (%p6501) target = $region40
        $region39: #{gabor_filter_forward.1} parent=31 // pred_region
          %s6504 = smul.u32 5, %s20
          %s6505 = smul.addr %s19, 20
          %s6506 = sadd.s32 %s6504, %s6505
          %s6507 = smul.addr %s6506, 8
          %s6508 = scalar_lea.vmem %s3, %s6507
          // Predicated region
          $region41: #{gabor_filter_forward.1} parent=39 // pred_check
            _
          $region42: #{gabor_filter_forward.1} parent=39 // pred_check_branch
            %6510 = sbr.rel (0) target = $region44
          $region43: #{gabor_filter_forward.1} parent=39 // pred_region
            // Predicated region
            $region45: #{gabor_filter_forward.1} parent=43 // pred_check
              _
            $region46: #{gabor_filter_forward.1} parent=43 // pred_check_branch
              %6512 = sbr.rel (0) target = $region48
            $region47: #{gabor_filter_forward.1} parent=43 // pred_region
              loop: start=0, step=1, limit=1
              $region49: #{gabor_filter_forward.1} parent=47 // loop_pre_header
                _
              $region50: #{gabor_filter_forward.1} parent=47 // loop_header
                %s6514 = sphi 0, %s6518
                %p6515 = scmp.ge.s32.totalorder %s6514, 1
                %s6519 = sphi %s6500, %s6500
                %s6520 = sphi %s6508, %s6508
              $region51: #{gabor_filter_forward.1} parent=47 // loop_header_branch
                %6517 = sbr.rel (%p6515) target = $region55
              $region52: #{gabor_filter_forward.1} parent=47 // loop_body
                %v6521 = vld [vmem:[%s6519] sm:$0xff]
                %6522 = vst [vmem:[%s6520] sm:$0xff] %v6521
                %v6523 = vld [vmem:[%s6519 + $0x8] sm:$0xff]
                %6524 = vst [vmem:[%s6520 + $0x8] sm:$0xff] %v6523
                %v6525 = vld [vmem:[%s6519 + $0x10] sm:$0xff]
                %6526 = vst [vmem:[%s6520 + $0x10] sm:$0xff] %v6525
                %v6527 = vld [vmem:[%s6519 + $0x18] sm:$0xff]
                %6528 = vst [vmem:[%s6520 + $0x18] sm:$0xff] %v6527
                %v6529 = vld [vmem:[%s6519 + $0x20] sm:$0xff]
                %6530 = vst [vmem:[%s6520 + $0x20] sm:$0xff] %v6529
                %v6531 = vld [vmem:[%s6519 + $0x28] sm:$0xff]
                %6532 = vst [vmem:[%s6520 + $0xa0] sm:$0xff] %v6531
                %v6533 = vld [vmem:[%s6519 + $0x30] sm:$0xff]
                %6534 = vst [vmem:[%s6520 + $0xa8] sm:$0xff] %v6533
                %v6535 = vld [vmem:[%s6519 + $0x38] sm:$0xff]
                %6536 = vst [vmem:[%s6520 + $0xb0] sm:$0xff] %v6535
                %v6537 = vld [vmem:[%s6519 + $0x40] sm:$0xff]
                %6538 = vst [vmem:[%s6520 + $0xb8] sm:$0xff] %v6537
                %v6539 = vld [vmem:[%s6519 + $0x48] sm:$0xff]
                %6540 = vst [vmem:[%s6520 + $0xc0] sm:$0xff] %v6539
                %v6541 = vld [vmem:[%s6519 + $0x50] sm:$0xff]
                %6542 = vst [vmem:[%s6520 + $0x140] sm:$0xff] %v6541
                %v6543 = vld [vmem:[%s6519 + $0x58] sm:$0xff]
                %6544 = vst [vmem:[%s6520 + $0x148] sm:$0xff] %v6543
                %v6545 = vld [vmem:[%s6519 + $0x60] sm:$0xff]
                %6546 = vst [vmem:[%s6520 + $0x150] sm:$0xff] %v6545
                %v6547 = vld [vmem:[%s6519 + $0x68] sm:$0xff]
                %6548 = vst [vmem:[%s6520 + $0x158] sm:$0xff] %v6547
                %v6549 = vld [vmem:[%s6519 + $0x70] sm:$0xff]
                %6550 = vst [vmem:[%s6520 + $0x160] sm:$0xff] %v6549
                %v6551 = vld [vmem:[%s6519 + $0x78] sm:$0xff]
                %6552 = vst [vmem:[%s6520 + $0x1e0] sm:$0xff] %v6551
                %v6553 = vld [vmem:[%s6519 + $0x80] sm:$0xff]
                %6554 = vst [vmem:[%s6520 + $0x1e8] sm:$0xff] %v6553
                %v6555 = vld [vmem:[%s6519 + $0x88] sm:$0xff]
                %6556 = vst [vmem:[%s6520 + $0x1f0] sm:$0xff] %v6555
                %v6557 = vld [vmem:[%s6519 + $0x90] sm:$0xff]
                %6558 = vst [vmem:[%s6520 + $0x1f8] sm:$0xff] %v6557
                %v6559 = vld [vmem:[%s6519 + $0x98] sm:$0xff]
                %6560 = vst [vmem:[%s6520 + $0x200] sm:$0xff] %v6559
                %v6561 = vld [vmem:[%s6519 + $0xa0] sm:$0xff]
                %6562 = vst [vmem:[%s6520 + $0x280] sm:$0xff] %v6561
                %v6563 = vld [vmem:[%s6519 + $0xa8] sm:$0xff]
                %6564 = vst [vmem:[%s6520 + $0x288] sm:$0xff] %v6563
                %v6565 = vld [vmem:[%s6519 + $0xb0] sm:$0xff]
                %6566 = vst [vmem:[%s6520 + $0x290] sm:$0xff] %v6565
                %v6567 = vld [vmem:[%s6519 + $0xb8] sm:$0xff]
                %6568 = vst [vmem:[%s6520 + $0x298] sm:$0xff] %v6567
                %v6569 = vld [vmem:[%s6519 + $0xc0] sm:$0xff]
                %6570 = vst [vmem:[%s6520 + $0x2a0] sm:$0xff] %v6569
                %v6571 = vld [vmem:[%s6519 + $0xc8] sm:$0xff]
                %6572 = vst [vmem:[%s6520 + $0x320] sm:$0xff] %v6571
                %v6573 = vld [vmem:[%s6519 + $0xd0] sm:$0xff]
                %6574 = vst [vmem:[%s6520 + $0x328] sm:$0xff] %v6573
                %v6575 = vld [vmem:[%s6519 + $0xd8] sm:$0xff]
                %6576 = vst [vmem:[%s6520 + $0x330] sm:$0xff] %v6575
                %v6577 = vld [vmem:[%s6519 + $0xe0] sm:$0xff]
                %6578 = vst [vmem:[%s6520 + $0x338] sm:$0xff] %v6577
                %v6579 = vld [vmem:[%s6519 + $0xe8] sm:$0xff]
                %6580 = vst [vmem:[%s6520 + $0x340] sm:$0xff] %v6579
                %v6581 = vld [vmem:[%s6519 + $0xf0] sm:$0xff]
                %6582 = vst [vmem:[%s6520 + $0x3c0] sm:$0xff] %v6581
                %v6583 = vld [vmem:[%s6519 + $0xf8] sm:$0xff]
                %6584 = vst [vmem:[%s6520 + $0x3c8] sm:$0xff] %v6583
                %v6585 = vld [vmem:[%s6519 + $0x100] sm:$0xff]
                %6586 = vst [vmem:[%s6520 + $0x3d0] sm:$0xff] %v6585
                %v6587 = vld [vmem:[%s6519 + $0x108] sm:$0xff]
                %6588 = vst [vmem:[%s6520 + $0x3d8] sm:$0xff] %v6587
                %v6589 = vld [vmem:[%s6519 + $0x110] sm:$0xff]
                %6590 = vst [vmem:[%s6520 + $0x3e0] sm:$0xff] %v6589
                %v6591 = vld [vmem:[%s6519 + $0x118] sm:$0xff]
                %6592 = vst [vmem:[%s6520 + $0x460] sm:$0xff] %v6591
                %v6593 = vld [vmem:[%s6519 + $0x120] sm:$0xff]
                %6594 = vst [vmem:[%s6520 + $0x468] sm:$0xff] %v6593
                %v6595 = vld [vmem:[%s6519 + $0x128] sm:$0xff]
                %6596 = vst [vmem:[%s6520 + $0x470] sm:$0xff] %v6595
                %v6597 = vld [vmem:[%s6519 + $0x130] sm:$0xff]
                %6598 = vst [vmem:[%s6520 + $0x478] sm:$0xff] %v6597
                %v6599 = vld [vmem:[%s6519 + $0x138] sm:$0xff]
                %6600 = vst [vmem:[%s6520 + $0x480] sm:$0xff] %v6599
                %v6601 = vld [vmem:[%s6519 + $0x140] sm:$0xff]
                %6602 = vst [vmem:[%s6520 + $0x500] sm:$0xff] %v6601
                %v6603 = vld [vmem:[%s6519 + $0x148] sm:$0xff]
                %6604 = vst [vmem:[%s6520 + $0x508] sm:$0xff] %v6603
                %v6605 = vld [vmem:[%s6519 + $0x150] sm:$0xff]
                %6606 = vst [vmem:[%s6520 + $0x510] sm:$0xff] %v6605
                %v6607 = vld [vmem:[%s6519 + $0x158] sm:$0xff]
                %6608 = vst [vmem:[%s6520 + $0x518] sm:$0xff] %v6607
                %v6609 = vld [vmem:[%s6519 + $0x160] sm:$0xff]
                %6610 = vst [vmem:[%s6520 + $0x520] sm:$0xff] %v6609
                %v6611 = vld [vmem:[%s6519 + $0x168] sm:$0xff]
                %6612 = vst [vmem:[%s6520 + $0x5a0] sm:$0xff] %v6611
                %v6613 = vld [vmem:[%s6519 + $0x170] sm:$0xff]
                %6614 = vst [vmem:[%s6520 + $0x5a8] sm:$0xff] %v6613
                %v6615 = vld [vmem:[%s6519 + $0x178] sm:$0xff]
                %6616 = vst [vmem:[%s6520 + $0x5b0] sm:$0xff] %v6615
                %v6617 = vld [vmem:[%s6519 + $0x180] sm:$0xff]
                %6618 = vst [vmem:[%s6520 + $0x5b8] sm:$0xff] %v6617
                %v6619 = vld [vmem:[%s6519 + $0x188] sm:$0xff]
                %6620 = vst [vmem:[%s6520 + $0x5c0] sm:$0xff] %v6619
                %v6621 = vld [vmem:[%s6519 + $0x190] sm:$0xff]
                %6622 = vst [vmem:[%s6520 + $0x640] sm:$0xff] %v6621
                %v6623 = vld [vmem:[%s6519 + $0x198] sm:$0xff]
                %6624 = vst [vmem:[%s6520 + $0x648] sm:$0xff] %v6623
                %v6625 = vld [vmem:[%s6519 + $0x1a0] sm:$0xff]
                %6626 = vst [vmem:[%s6520 + $0x650] sm:$0xff] %v6625
                %v6627 = vld [vmem:[%s6519 + $0x1a8] sm:$0xff]
                %6628 = vst [vmem:[%s6520 + $0x658] sm:$0xff] %v6627
                %v6629 = vld [vmem:[%s6519 + $0x1b0] sm:$0xff]
                %6630 = vst [vmem:[%s6520 + $0x660] sm:$0xff] %v6629
                %v6631 = vld [vmem:[%s6519 + $0x1b8] sm:$0xff]
                %6632 = vst [vmem:[%s6520 + $0x6e0] sm:$0xff] %v6631
                %v6633 = vld [vmem:[%s6519 + $0x1c0] sm:$0xff]
                %6634 = vst [vmem:[%s6520 + $0x6e8] sm:$0xff] %v6633
                %v6635 = vld [vmem:[%s6519 + $0x1c8] sm:$0xff]
                %6636 = vst [vmem:[%s6520 + $0x6f0] sm:$0xff] %v6635
                %v6637 = vld [vmem:[%s6519 + $0x1d0] sm:$0xff]
                %6638 = vst [vmem:[%s6520 + $0x6f8] sm:$0xff] %v6637
                %v6639 = vld [vmem:[%s6519 + $0x1d8] sm:$0xff]
                %6640 = vst [vmem:[%s6520 + $0x700] sm:$0xff] %v6639
                %v6641 = vld [vmem:[%s6519 + $0x1e0] sm:$0xff]
                %6642 = vst [vmem:[%s6520 + $0x780] sm:$0xff] %v6641
                %v6643 = vld [vmem:[%s6519 + $0x1e8] sm:$0xff]
                %6644 = vst [vmem:[%s6520 + $0x788] sm:$0xff] %v6643
                %v6645 = vld [vmem:[%s6519 + $0x1f0] sm:$0xff]
                %6646 = vst [vmem:[%s6520 + $0x790] sm:$0xff] %v6645
                %v6647 = vld [vmem:[%s6519 + $0x1f8] sm:$0xff]
                %6648 = vst [vmem:[%s6520 + $0x798] sm:$0xff] %v6647
                %v6649 = vld [vmem:[%s6519 + $0x200] sm:$0xff]
                %6650 = vst [vmem:[%s6520 + $0x7a0] sm:$0xff] %v6649
                %v6651 = vld [vmem:[%s6519 + $0x208] sm:$0xff]
                %6652 = vst [vmem:[%s6520 + $0x820] sm:$0xff] %v6651
                %v6653 = vld [vmem:[%s6519 + $0x210] sm:$0xff]
                %6654 = vst [vmem:[%s6520 + $0x828] sm:$0xff] %v6653
                %v6655 = vld [vmem:[%s6519 + $0x218] sm:$0xff]
                %6656 = vst [vmem:[%s6520 + $0x830] sm:$0xff] %v6655
                %v6657 = vld [vmem:[%s6519 + $0x220] sm:$0xff]
                %6658 = vst [vmem:[%s6520 + $0x838] sm:$0xff] %v6657
                %v6659 = vld [vmem:[%s6519 + $0x228] sm:$0xff]
                %6660 = vst [vmem:[%s6520 + $0x840] sm:$0xff] %v6659
                %v6661 = vld [vmem:[%s6519 + $0x230] sm:$0xff]
                %6662 = vst [vmem:[%s6520 + $0x8c0] sm:$0xff] %v6661
                %v6663 = vld [vmem:[%s6519 + $0x238] sm:$0xff]
                %6664 = vst [vmem:[%s6520 + $0x8c8] sm:$0xff] %v6663
                %v6665 = vld [vmem:[%s6519 + $0x240] sm:$0xff]
                %6666 = vst [vmem:[%s6520 + $0x8d0] sm:$0xff] %v6665
                %v6667 = vld [vmem:[%s6519 + $0x248] sm:$0xff]
                %6668 = vst [vmem:[%s6520 + $0x8d8] sm:$0xff] %v6667
                %v6669 = vld [vmem:[%s6519 + $0x250] sm:$0xff]
                %6670 = vst [vmem:[%s6520 + $0x8e0] sm:$0xff] %v6669
                %v6671 = vld [vmem:[%s6519 + $0x258] sm:$0xff]
                %6672 = vst [vmem:[%s6520 + $0x960] sm:$0xff] %v6671
                %v6673 = vld [vmem:[%s6519 + $0x260] sm:$0xff]
                %6674 = vst [vmem:[%s6520 + $0x968] sm:$0xff] %v6673
                %v6675 = vld [vmem:[%s6519 + $0x268] sm:$0xff]
                %6676 = vst [vmem:[%s6520 + $0x970] sm:$0xff] %v6675
                %v6677 = vld [vmem:[%s6519 + $0x270] sm:$0xff]
                %6678 = vst [vmem:[%s6520 + $0x978] sm:$0xff] %v6677
                %v6679 = vld [vmem:[%s6519 + $0x278] sm:$0xff]
                %6680 = vst [vmem:[%s6520 + $0x980] sm:$0xff] %v6679
              $region53: #{gabor_filter_forward.1} parent=47 // loop_footer
                %s6518 = sadd.s32 1, %s6514
              $region54: #{gabor_filter_forward.1} parent=47 // loop_footer_branch
                %6513 = sbr.rel target = $region50
              $region55: #{gabor_filter_forward.1} parent=47 // loop_exit
                _
            $region48: #{gabor_filter_forward.1} parent=43 // pred_fallthru
              _
            // Predicated region
            $region56: #{gabor_filter_forward.1} parent=43 // pred_check
              _
            $region57: #{gabor_filter_forward.1} parent=43 // pred_check_branch
              %6682 = sbr.rel target = $region59
            $region58: #{gabor_filter_forward.1} parent=43 // pred_region
              _
            $region59: #{gabor_filter_forward.1} parent=43 // pred_fallthru
              _
          $region44: #{gabor_filter_forward.1} parent=39 // pred_fallthru
            _
          %6683 = vnop
        $region40: #{gabor_filter_forward.1} parent=31 // pred_fallthru
          _
      $region32: #{gabor_filter_forward.1} parent=5 // pred_fallthru
        _
      %p6684 = scmp.le.s32.totalorder 2, %s10
      // Predicated region
      $region60: #{gabor_filter_forward.1} parent=5 // pred_check
        %p6685 = pneg %p6684
      $region61: #{gabor_filter_forward.1} parent=5 // pred_check_branch
        %6687 = sbr.rel (%p6685) target = $region63
      $region62: #{gabor_filter_forward.1} parent=5 // pred_region
        %s6688 = ssub.s32 %s10, 2
        // Predicated region
        $region64: #{gabor_filter_forward.1} parent=62 // pred_check
          %p6689 = pneg %p134
        $region65: #{gabor_filter_forward.1} parent=62 // pred_check_branch
          %6691 = sbr.rel (%p6689) target = $region67
        $region66: #{gabor_filter_forward.1} parent=62 // pred_region
          %s6692 = sand.u32 %s119, 1
          %s6693 = sand.u32 %s119, 1
          %s6694 = smul.addr %s6693, 640
          %s6695 = scalar_lea.vmem [#allocation5], %s6694
        $region67: #{gabor_filter_forward.1} parent=62 // pred_fallthru
          _
      $region63: #{gabor_filter_forward.1} parent=5 // pred_fallthru
        _
    $region6: #{gabor_filter_forward.1} parent=1 // loop_footer
      %s14 = sadd.s32 1, %s10
    $region7: #{gabor_filter_forward.1} parent=1 // loop_footer_branch
      %9 = sbr.rel target = $region3
    $region8: #{gabor_filter_forward.1} parent=1 // loop_exit
      _
    %6696 = vsyncpa [#allocation4], 1
    %s6697 = scalar_lea.sflag [#allocation4], 1
    %6698 = vsyncpa %s6697, 1

</llo_original>
